<compile_context>
chip_gen: v6e
topology: v6e:2x2x1
jax: 0.10.0
libtpu: 0.0.40
codegen_flags: <defaults>
</compile_context>

<pallas_src>
import numpy as np

import jax
import jax.numpy as jnp
from jax.experimental import pallas as pl
from jax.experimental.pallas import tpu as pltpu


# ----------------------------------------------------------------------------
# Constant 0/1 gather matrices for 2x2/stride-2 max pooling on flattened (H*W)
# pixel indices: pooled = max_k (sel[k] @ act).
# ----------------------------------------------------------------------------
def _pool_selectors(H, W):
    H2, W2 = H // 2, W // 2
    sel = np.zeros((4, H2 * W2, H * W), np.float32)
    k = 0
    for ky in range(2):
        for kx in range(2):
            for i in range(H2):
                for j in range(W2):
                    sel[k, i * W2 + j, (2 * i + ky) * W + (2 * j + kx)] = 1.0
            k += 1
    return jnp.asarray(sel)


# ----------------------------------------------------------------------------
# Fused kernel: the full 5-conv / 2-pool network for one batch element.
# ----------------------------------------------------------------------------
def _make_fused_kernel(H, W):
    H2, W2 = H // 2, W // 2        # after pool2
    H4, W4 = H2 // 2, W2 // 2      # after pool4

    def kernel(im1_ref, w1_ref, b1_ref, s1_ref, t1_ref,
               w2_ref, b2_ref, s2_ref, t2_ref,
               w3_ref, b3_ref, s3_ref, t3_ref,
               w4_ref, b4_ref, s4_ref, t4_ref,
               w5_ref, b5_ref,
               p2_ref, p4_ref,
               c1_ref, c2_ref, c3_ref, c4_ref, c5_ref,
               pad2_s, pad3_s, pad4_s, pad5_s):

        def conv3x3(act_flat, h, w, pad_s, wk_ref, bk_ref):
            # act_flat: (h*w, Cin), channels-last, row-major over (h, w).
            cin = act_flat.shape[-1]
            cout = wk_ref.shape[-1]
            # Zero-pad via a VMEM scratch: interior lands at row offset 1 and
            # sublane-aligned column offset 8 (columns 7 and 8+w stay zero).
            pad_s[...] = jnp.zeros(pad_s.shape, jnp.float32)
            pad_s[1:h + 1, 8:8 + w, :] = act_flat.reshape(h, w, cin)
            acc = jnp.zeros((h * w, cout), jnp.float32)
            for dy in range(3):            # 9 MXU matmuls, f32 accumulation
                for dx in range(3):
                    patch = pad_s[dy:dy + h, 7 + dx:7 + dx + w, :]
                    acc = acc + jnp.dot(patch.reshape(h * w, cin),
                                        wk_ref[dy * 3 + dx],
                                        preferred_element_type=jnp.float32)
            return acc + bk_ref[...]

        def bn_relu(x, s_ref, t_ref):
            return jnp.maximum(x * s_ref[...] + t_ref[...], 0.0)

        def pool(x, sel_ref):
            m0 = jnp.dot(sel_ref[0], x, preferred_element_type=jnp.float32)
            m1 = jnp.dot(sel_ref[1], x, preferred_element_type=jnp.float32)
            m2 = jnp.dot(sel_ref[2], x, preferred_element_type=jnp.float32)
            m3 = jnp.dot(sel_ref[3], x, preferred_element_type=jnp.float32)
            return jnp.maximum(jnp.maximum(m0, m1), jnp.maximum(m2, m3))

        # -- layer 1: single matmul on the wrapper-built im2col (K=27 pad 32) --
        conv1 = jnp.dot(im1_ref[0], w1_ref[...],
                        preferred_element_type=jnp.float32) + b1_ref[...]
        c1_ref[0] = conv1                                     # (H*W, 64)
        act = bn_relu(conv1, s1_ref, t1_ref)

        # -- layer 2 + pool2 --
        conv2 = conv3x3(act, H, W, pad2_s, w2_ref, b2_ref)    # (H*W, 64)
        c2_ref[0] = conv2
        act = pool(bn_relu(conv2, s2_ref, t2_ref), p2_ref)    # (H2*W2, 64)

        # -- layer 3 --
        conv3 = conv3x3(act, H2, W2, pad3_s, w3_ref, b3_ref)  # (H2*W2, 128)
        c3_ref[0] = conv3
        act = bn_relu(conv3, s3_ref, t3_ref)

        # -- layer 4 + pool4 --
        conv4 = conv3x3(act, H2, W2, pad4_s, w4_ref, b4_ref)  # (H2*W2, 128)
        c4_ref[0] = conv4
        act = pool(bn_relu(conv4, s4_ref, t4_ref), p4_ref)    # (H4*W4, 128)

        # -- layer 5 (bn5/relu5 is dead in the module's return: not computed) --
        conv5 = conv3x3(act, H4, W4, pad5_s, w5_ref, b5_ref)  # (H4*W4, 256)
        c5_ref[0] = conv5

    return kernel


# ----------------------------------------------------------------------------
# Parameters (deterministic synthetic init, shapes from the module __init__).
# ----------------------------------------------------------------------------
def init_params(key):
    cfgs = [(3, 64), (64, 64), (64, 128), (128, 128), (128, 256)]
    eps = 1e-5
    params = []
    for (cin, cout) in cfgs:
        key, k1, k2, k3, k4 = jax.random.split(key, 5)
        w = jax.random.normal(k1, (3, 3, cin, cout), jnp.float32) * (9.0 * cin) ** -0.5
        b = 0.01 * jax.random.normal(k2, (cout,), jnp.float32)
        gamma = 1.0 + 0.01 * jax.random.normal(k3, (cout,), jnp.float32)
        beta = 0.01 * jax.random.normal(k4, (cout,), jnp.float32)
        run_mean = jnp.zeros((cout,), jnp.float32)     # BatchNorm2d init defaults
        run_var = jnp.ones((cout,), jnp.float32)
        scale = gamma / jnp.sqrt(run_var + eps)
        shift = beta - run_mean * scale
        params.append((w, b, scale, shift))
    return params


# ----------------------------------------------------------------------------
# Full forward pass (matches similarity_VGG_bn.forward).
# ----------------------------------------------------------------------------
@jax.jit
def similarity_vgg_bn_forward(x_nchw, params):
    N, Cin, H, W = x_nchw.shape
    H2, W2 = H // 2, W // 2
    H4, W4 = H2 // 2, W2 // 2
    x = jnp.transpose(x_nchw, (0, 2, 3, 1)).astype(jnp.float32)   # NCHW -> NHWC

    # Layer-1 im2col built in the wrapper (pure XLA glue): K = 9*Cin -> pad 32.
    K1 = 32
    xp = jnp.pad(x, ((0, 0), (1, 1), (1, 1), (0, 0)))
    cols = [xp[:, dy:dy + H, dx:dx + W, :] for dy in range(3) for dx in range(3)]
    im1 = jnp.concatenate(cols, axis=-1).reshape(N, H * W, 9 * Cin)
    im1 = jnp.pad(im1, ((0, 0), (0, 0), (0, K1 - 9 * Cin)))

    def prep(i):
        w, b, s, t = params[i]
        cin, cout = w.shape[2], w.shape[3]
        wr = w.astype(jnp.float32).reshape(9, cin, cout)
        return (wr,
                b.reshape(1, cout).astype(jnp.float32),
                s.reshape(1, cout).astype(jnp.float32),
                t.reshape(1, cout).astype(jnp.float32))

    w1, b1, s1, t1 = prep(0)
    w1r = jnp.pad(w1.reshape(9 * Cin, 64), ((0, K1 - 9 * Cin), (0, 0)))
    w2, b2, s2, t2 = prep(1)
    w3, b3, s3, t3 = prep(2)
    w4, b4, s4, t4 = prep(3)
    w5, b5, _, _ = prep(4)

    p2 = _pool_selectors(H, W)        # (4, H2*W2, H*W)
    p4 = _pool_selectors(H2, W2)      # (4, H4*W4, H2*W2)

    def whole(a):
        nd = a.ndim
        return pl.BlockSpec(a.shape, lambda n: (0,) * nd)

    outs = pl.pallas_call(
        _make_fused_kernel(H, W),
        out_shape=(
            jax.ShapeDtypeStruct((N, H * W, 64), jnp.float32),
            jax.ShapeDtypeStruct((N, H * W, 64), jnp.float32),
            jax.ShapeDtypeStruct((N, H2 * W2, 128), jnp.float32),
            jax.ShapeDtypeStruct((N, H2 * W2, 128), jnp.float32),
            jax.ShapeDtypeStruct((N, H4 * W4, 256), jnp.float32),
        ),
        grid_spec=pltpu.PrefetchScalarGridSpec(
            num_scalar_prefetch=0,
            grid=(N,),
            in_specs=[
                pl.BlockSpec((1, H * W, K1), lambda n: (n, 0, 0)),
                whole(w1r), whole(b1), whole(s1), whole(t1),
                whole(w2), whole(b2), whole(s2), whole(t2),
                whole(w3), whole(b3), whole(s3), whole(t3),
                whole(w4), whole(b4), whole(s4), whole(t4),
                whole(w5), whole(b5),
                whole(p2), whole(p4),
            ],
            out_specs=[
                pl.BlockSpec((1, H * W, 64), lambda n: (n, 0, 0)),
                pl.BlockSpec((1, H * W, 64), lambda n: (n, 0, 0)),
                pl.BlockSpec((1, H2 * W2, 128), lambda n: (n, 0, 0)),
                pl.BlockSpec((1, H2 * W2, 128), lambda n: (n, 0, 0)),
                pl.BlockSpec((1, H4 * W4, 256), lambda n: (n, 0, 0)),
            ],
            scratch_shapes=[
                pltpu.VMEM((H + 2, W + 16, 64), jnp.float32),     # pad buf conv2
                pltpu.VMEM((H2 + 2, W2 + 16, 64), jnp.float32),   # pad buf conv3
                pltpu.VMEM((H2 + 2, W2 + 16, 128), jnp.float32),  # pad buf conv4
                pltpu.VMEM((H4 + 2, W4 + 16, 128), jnp.float32),  # pad buf conv5
            ]),
        compiler_params=pltpu.CompilerParams(
            dimension_semantics=("parallel",)),
    )(im1, w1r, b1, s1, t1, w2, b2, s2, t2, w3, b3, s3, t3,
      w4, b4, s4, t4, w5, b5, p2, p4)

    c1, c2, c3, c4, c5 = outs

    def to_nchw(o, h, w):
        n, _, c = o.shape
        return jnp.transpose(o.reshape(n, h, w, c), (0, 3, 1, 2))

    return [to_nchw(c1, H, W), to_nchw(c2, H, W),
            to_nchw(c3, H2, W2), to_nchw(c4, H2, W2),
            to_nchw(c5, H4, W4)]


# ----------------------------------------------------------------------------
# Pure-JAX (XLA) reference of the same forward pass, for validation.
# ----------------------------------------------------------------------------
def reference_forward(x_nchw, params):
    act = jnp.transpose(x_nchw, (0, 2, 3, 1)).astype(jnp.float32)
    outs = []
    for i, (w, b, s, t) in enumerate(params):
        conv = jax.lax.conv_general_dilated(
            act, w.astype(jnp.float32), window_strides=(1, 1), padding="SAME",
            dimension_numbers=("NHWC", "HWIO", "NHWC"),
            precision=jax.lax.Precision.HIGHEST) + b
        outs.append(jnp.transpose(conv, (0, 3, 1, 2)))
        if i < 4:
            act = jnp.maximum(conv * s + t, 0.0)
            if i in (1, 3):
                act = jax.lax.reduce_window(act, -jnp.inf, jax.lax.max,
                                            (1, 2, 2, 1), (1, 2, 2, 1), "VALID")
    return outs


if __name__ == "__main__":
    key = jax.random.PRNGKey(0)
    key, pkey, xkey = jax.random.split(key, 3)
    params = init_params(pkey)

    # Small input consistent with the module: batch=2, 3 input channels, 16x16.
    x = jax.random.normal(xkey, (2, 3, 16, 16), jnp.float32)

    outs = jax.block_until_ready(similarity_vgg_bn_forward(x, params))

    expected_shapes = [(2, 64, 16, 16), (2, 64, 16, 16), (2, 128, 8, 8),
                       (2, 128, 8, 8), (2, 256, 4, 4)]
    assert [tuple(o.shape) for o in outs] == expected_shapes

    refs = reference_forward(x, params)
    for o, r in zip(outs, refs):
        assert bool(jnp.all(jnp.isfinite(o)))
        err = float(jnp.max(jnp.abs(o - r)))
        assert err < 5e-3, f"max abs err vs XLA reference: {err}"
    print("KERNEL_OK")
</pallas_src>

<mosaic_0001>
module attributes {stable_mosaic.version = 11 : i64} {
  func.func @kernel(%arg0: i32, %arg1: memref<1x256x32xf32, #tpu.memory_space<vmem>>, %arg2: memref<32x64xf32, #tpu.memory_space<vmem>>, %arg3: memref<1x64xf32, #tpu.memory_space<vmem>>, %arg4: memref<1x64xf32, #tpu.memory_space<vmem>>, %arg5: memref<1x64xf32, #tpu.memory_space<vmem>>, %arg6: memref<9x64x64xf32, #tpu.memory_space<vmem>>, %arg7: memref<1x64xf32, #tpu.memory_space<vmem>>, %arg8: memref<1x64xf32, #tpu.memory_space<vmem>>, %arg9: memref<1x64xf32, #tpu.memory_space<vmem>>, %arg10: memref<9x64x128xf32, #tpu.memory_space<vmem>>, %arg11: memref<1x128xf32, #tpu.memory_space<vmem>>, %arg12: memref<1x128xf32, #tpu.memory_space<vmem>>, %arg13: memref<1x128xf32, #tpu.memory_space<vmem>>, %arg14: memref<9x128x128xf32, #tpu.memory_space<vmem>>, %arg15: memref<1x128xf32, #tpu.memory_space<vmem>>, %arg16: memref<1x128xf32, #tpu.memory_space<vmem>>, %arg17: memref<1x128xf32, #tpu.memory_space<vmem>>, %arg18: memref<9x128x256xf32, #tpu.memory_space<vmem>>, %arg19: memref<1x256xf32, #tpu.memory_space<vmem>>, %arg20: memref<4x64x256xf32, #tpu.memory_space<vmem>>, %arg21: memref<4x16x64xf32, #tpu.memory_space<vmem>>, %arg22: memref<1x256x64xf32, #tpu.memory_space<vmem>>, %arg23: memref<1x256x64xf32, #tpu.memory_space<vmem>>, %arg24: memref<1x64x128xf32, #tpu.memory_space<vmem>>, %arg25: memref<1x64x128xf32, #tpu.memory_space<vmem>>, %arg26: memref<1x16x256xf32, #tpu.memory_space<vmem>>, %arg27: memref<18x32x64xf32, #tpu.memory_space<vmem>>, %arg28: memref<10x24x64xf32, #tpu.memory_space<vmem>>, %arg29: memref<10x24x128xf32, #tpu.memory_space<vmem>>, %arg30: memref<6x20x128xf32, #tpu.memory_space<vmem>>) attributes {dimension_semantics = [#tpu.dimension_semantics<parallel>], iteration_bounds = array<i64: 2>, scalar_prefetch = 0 : i64, scratch_operands = 4 : i64, tpu.core_type = #tpu.core_type<tc>, window_params = [{transform_indices = @transform_0, window_bounds = array<i64: 1, 256, 32>}, {pipeline_mode = #tpu.pipeline_mode<synchronous>, transform_indices = @transform_1, window_bounds = array<i64: 32, 64>}, {pipeline_mode = #tpu.pipeline_mode<synchronous>, transform_indices = @transform_2, window_bounds = array<i64: 1, 64>}, {pipeline_mode = #tpu.pipeline_mode<synchronous>, transform_indices = @transform_3, window_bounds = array<i64: 1, 64>}, {pipeline_mode = #tpu.pipeline_mode<synchronous>, transform_indices = @transform_4, window_bounds = array<i64: 1, 64>}, {pipeline_mode = #tpu.pipeline_mode<synchronous>, transform_indices = @transform_5, window_bounds = array<i64: 9, 64, 64>}, {pipeline_mode = #tpu.pipeline_mode<synchronous>, transform_indices = @transform_6, window_bounds = array<i64: 1, 64>}, {pipeline_mode = #tpu.pipeline_mode<synchronous>, transform_indices = @transform_7, window_bounds = array<i64: 1, 64>}, {pipeline_mode = #tpu.pipeline_mode<synchronous>, transform_indices = @transform_8, window_bounds = array<i64: 1, 64>}, {pipeline_mode = #tpu.pipeline_mode<synchronous>, transform_indices = @transform_9, window_bounds = array<i64: 9, 64, 128>}, {pipeline_mode = #tpu.pipeline_mode<synchronous>, transform_indices = @transform_10, window_bounds = array<i64: 1, 128>}, {pipeline_mode = #tpu.pipeline_mode<synchronous>, transform_indices = @transform_11, window_bounds = array<i64: 1, 128>}, {pipeline_mode = #tpu.pipeline_mode<synchronous>, transform_indices = @transform_12, window_bounds = array<i64: 1, 128>}, {pipeline_mode = #tpu.pipeline_mode<synchronous>, transform_indices = @transform_13, window_bounds = array<i64: 9, 128, 128>}, {pipeline_mode = #tpu.pipeline_mode<synchronous>, transform_indices = @transform_14, window_bounds = array<i64: 1, 128>}, {pipeline_mode = #tpu.pipeline_mode<synchronous>, transform_indices = @transform_15, window_bounds = array<i64: 1, 128>}, {pipeline_mode = #tpu.pipeline_mode<synchronous>, transform_indices = @transform_16, window_bounds = array<i64: 1, 128>}, {pipeline_mode = #tpu.pipeline_mode<synchronous>, transform_indices = @transform_17, window_bounds = array<i64: 9, 128, 256>}, {pipeline_mode = #tpu.pipeline_mode<synchronous>, transform_indices = @transform_18, window_bounds = array<i64: 1, 256>}, {pipeline_mode = #tpu.pipeline_mode<synchronous>, transform_indices = @transform_19, window_bounds = array<i64: 4, 64, 256>}, {pipeline_mode = #tpu.pipeline_mode<synchronous>, transform_indices = @transform_20, window_bounds = array<i64: 4, 16, 64>}, {transform_indices = @transform_21, window_bounds = array<i64: 1, 256, 64>}, {transform_indices = @transform_22, window_bounds = array<i64: 1, 256, 64>}, {transform_indices = @transform_23, window_bounds = array<i64: 1, 64, 128>}, {transform_indices = @transform_24, window_bounds = array<i64: 1, 64, 128>}, {transform_indices = @transform_25, window_bounds = array<i64: 1, 16, 256>}]} {
    %c0 = arith.constant 0 : index
    %c0_0 = arith.constant 0 : index
    %c0_1 = arith.constant 0 : index
    %0 = vector.load %arg1[%c0, %c0_0, %c0_1] : memref<1x256x32xf32, #tpu.memory_space<vmem>>, vector<1x256x32xf32>
    %1 = vector.shape_cast %0 : vector<1x256x32xf32> to vector<256x32xf32>
    %c0_2 = arith.constant 0 : index
    %c0_3 = arith.constant 0 : index
    %2 = vector.load %arg2[%c0_2, %c0_3] : memref<32x64xf32, #tpu.memory_space<vmem>>, vector<32x64xf32>
    %cst = arith.constant dense<0.000000e+00> : vector<256x64xf32>
    %3 = tpu.matmul %1, %2, %cst {dimension_numbers = #tpu.dot_dimension_numbers<[1], [0], [0], [1], [0, 0, 1, 1], [], []>} : vector<256x32xf32>, vector<32x64xf32>, vector<256x64xf32> -> vector<256x64xf32>
    %c0_4 = arith.constant 0 : index
    %c0_5 = arith.constant 0 : index
    %4 = vector.load %arg3[%c0_4, %c0_5] : memref<1x64xf32, #tpu.memory_space<vmem>>, vector<1x64xf32>
    %5 = vector.broadcast %4 : vector<1x64xf32> to vector<256x64xf32>
    %6 = arith.addf %3, %5 : vector<256x64xf32>
    %c0_6 = arith.constant 0 : index
    %c0_7 = arith.constant 0 : index
    %c0_8 = arith.constant 0 : index
    %7 = vector.load %arg22[%c0_6, %c0_7, %c0_8] : memref<1x256x64xf32, #tpu.memory_space<vmem>>, vector<1x256x64xf32>
    %8 = vector.shape_cast %7 : vector<1x256x64xf32> to vector<256x64xf32>
    %9 = vector.shape_cast %6 : vector<256x64xf32> to vector<1x256x64xf32>
    tpu.vector_store %arg22[%c0_6, %c0_7, %c0_8], %9 {strides = array<i32>} : memref<1x256x64xf32, #tpu.memory_space<vmem>>, vector<1x256x64xf32>,
    %c0_9 = arith.constant 0 : index
    %c0_10 = arith.constant 0 : index
    %10 = vector.load %arg4[%c0_9, %c0_10] : memref<1x64xf32, #tpu.memory_space<vmem>>, vector<1x64xf32>
    %11 = vector.broadcast %10 : vector<1x64xf32> to vector<256x64xf32>
    %12 = arith.mulf %6, %11 : vector<256x64xf32>
    %c0_11 = arith.constant 0 : index
    %c0_12 = arith.constant 0 : index
    %13 = vector.load %arg5[%c0_11, %c0_12] : memref<1x64xf32, #tpu.memory_space<vmem>>, vector<1x64xf32>
    %14 = vector.broadcast %13 : vector<1x64xf32> to vector<256x64xf32>
    %15 = arith.addf %12, %14 : vector<256x64xf32>
    %cst_13 = arith.constant 0.000000e+00 : f32
    %16 = vector.broadcast %cst_13 : f32 to vector<256x64xf32>
    %17 = arith.maximumf %15, %16 : vector<256x64xf32>
    %cst_14 = arith.constant 0.000000e+00 : f32
    %18 = vector.broadcast %cst_14 : f32 to vector<18x32x64xf32>
    %c0_15 = arith.constant 0 : index
    %c0_16 = arith.constant 0 : index
    %c0_17 = arith.constant 0 : index
    %19 = vector.load %arg27[%c0_15, %c0_16, %c0_17] : memref<18x32x64xf32, #tpu.memory_space<vmem>>, vector<18x32x64xf32>
    tpu.vector_store %arg27[%c0_15, %c0_16, %c0_17], %18 {strides = array<i32>} : memref<18x32x64xf32, #tpu.memory_space<vmem>>, vector<18x32x64xf32>,
    %20 = vector.shape_cast %17 : vector<256x64xf32> to vector<16x16x64xf32>
    %c1 = arith.constant 1 : index
    %c8 = arith.constant 8 : index
    %c0_18 = arith.constant 0 : index
    %21 = vector.load %arg27[%c1, %c8, %c0_18] : memref<18x32x64xf32, #tpu.memory_space<vmem>>, vector<16x16x64xf32>
    tpu.vector_store %arg27[%c1, %c8, %c0_18], %20 {strides = array<i32>} : memref<18x32x64xf32, #tpu.memory_space<vmem>>, vector<16x16x64xf32>,
    %cst_19 = arith.constant 0.000000e+00 : f32
    %22 = vector.broadcast %cst_19 : f32 to vector<256x64xf32>
    %c0_20 = arith.constant 0 : index
    %c7 = arith.constant 7 : index
    %c0_21 = arith.constant 0 : index
    %23 = vector.load %arg27[%c0_20, %c7, %c0_21] : memref<18x32x64xf32, #tpu.memory_space<vmem>>, vector<16x16x64xf32>
    %24 = vector.shape_cast %23 : vector<16x16x64xf32> to vector<256x64xf32>
    %c0_22 = arith.constant 0 : index
    %c0_23 = arith.constant 0 : index
    %c0_24 = arith.constant 0 : index
    %25 = vector.load %arg6[%c0_22, %c0_23, %c0_24] : memref<9x64x64xf32, #tpu.memory_space<vmem>>, vector<1x64x64xf32>
    %26 = vector.shape_cast %25 : vector<1x64x64xf32> to vector<64x64xf32>
    %cst_25 = arith.constant dense<0.000000e+00> : vector<256x64xf32>
    %27 = tpu.matmul %24, %26, %cst_25 {dimension_numbers = #tpu.dot_dimension_numbers<[1], [0], [0], [1], [0, 0, 1, 1], [], []>} : vector<256x64xf32>, vector<64x64xf32>, vector<256x64xf32> -> vector<256x64xf32>
    %28 = arith.addf %22, %27 : vector<256x64xf32>
    %c0_26 = arith.constant 0 : index
    %c8_27 = arith.constant 8 : index
    %c0_28 = arith.constant 0 : index
    %29 = vector.load %arg27[%c0_26, %c8_27, %c0_28] : memref<18x32x64xf32, #tpu.memory_space<vmem>>, vector<16x16x64xf32>
    %30 = vector.shape_cast %29 : vector<16x16x64xf32> to vector<256x64xf32>
    %c1_29 = arith.constant 1 : index
    %c0_30 = arith.constant 0 : index
    %c0_31 = arith.constant 0 : index
    %31 = vector.load %arg6[%c1_29, %c0_30, %c0_31] : memref<9x64x64xf32, #tpu.memory_space<vmem>>, vector<1x64x64xf32>
    %32 = vector.shape_cast %31 : vector<1x64x64xf32> to vector<64x64xf32>
    %cst_32 = arith.constant dense<0.000000e+00> : vector<256x64xf32>
    %33 = tpu.matmul %30, %32, %cst_32 {dimension_numbers = #tpu.dot_dimension_numbers<[1], [0], [0], [1], [0, 0, 1, 1], [], []>} : vector<256x64xf32>, vector<64x64xf32>, vector<256x64xf32> -> vector<256x64xf32>
    %34 = arith.addf %28, %33 : vector<256x64xf32>
    %c0_33 = arith.constant 0 : index
    %c9 = arith.constant 9 : index
    %c0_34 = arith.constant 0 : index
    %35 = vector.load %arg27[%c0_33, %c9, %c0_34] : memref<18x32x64xf32, #tpu.memory_space<vmem>>, vector<16x16x64xf32>
    %36 = vector.shape_cast %35 : vector<16x16x64xf32> to vector<256x64xf32>
    %c2 = arith.constant 2 : index
    %c0_35 = arith.constant 0 : index
    %c0_36 = arith.constant 0 : index
    %37 = vector.load %arg6[%c2, %c0_35, %c0_36] : memref<9x64x64xf32, #tpu.memory_space<vmem>>, vector<1x64x64xf32>
    %38 = vector.shape_cast %37 : vector<1x64x64xf32> to vector<64x64xf32>
    %cst_37 = arith.constant dense<0.000000e+00> : vector<256x64xf32>
    %39 = tpu.matmul %36, %38, %cst_37 {dimension_numbers = #tpu.dot_dimension_numbers<[1], [0], [0], [1], [0, 0, 1, 1], [], []>} : vector<256x64xf32>, vector<64x64xf32>, vector<256x64xf32> -> vector<256x64xf32>
    %40 = arith.addf %34, %39 : vector<256x64xf32>
    %c1_38 = arith.constant 1 : index
    %c7_39 = arith.constant 7 : index
    %c0_40 = arith.constant 0 : index
    %41 = vector.load %arg27[%c1_38, %c7_39, %c0_40] : memref<18x32x64xf32, #tpu.memory_space<vmem>>, vector<16x16x64xf32>
    %42 = vector.shape_cast %41 : vector<16x16x64xf32> to vector<256x64xf32>
    %c3 = arith.constant 3 : index
    %c0_41 = arith.constant 0 : index
    %c0_42 = arith.constant 0 : index
    %43 = vector.load %arg6[%c3, %c0_41, %c0_42] : memref<9x64x64xf32, #tpu.memory_space<vmem>>, vector<1x64x64xf32>
    %44 = vector.shape_cast %43 : vector<1x64x64xf32> to vector<64x64xf32>
    %cst_43 = arith.constant dense<0.000000e+00> : vector<256x64xf32>
    %45 = tpu.matmul %42, %44, %cst_43 {dimension_numbers = #tpu.dot_dimension_numbers<[1], [0], [0], [1], [0, 0, 1, 1], [], []>} : vector<256x64xf32>, vector<64x64xf32>, vector<256x64xf32> -> vector<256x64xf32>
    %46 = arith.addf %40, %45 : vector<256x64xf32>
    %c1_44 = arith.constant 1 : index
    %c8_45 = arith.constant 8 : index
    %c0_46 = arith.constant 0 : index
    %47 = vector.load %arg27[%c1_44, %c8_45, %c0_46] : memref<18x32x64xf32, #tpu.memory_space<vmem>>, vector<16x16x64xf32>
    %48 = vector.shape_cast %47 : vector<16x16x64xf32> to vector<256x64xf32>
    %c4 = arith.constant 4 : index
    %c0_47 = arith.constant 0 : index
    %c0_48 = arith.constant 0 : index
    %49 = vector.load %arg6[%c4, %c0_47, %c0_48] : memref<9x64x64xf32, #tpu.memory_space<vmem>>, vector<1x64x64xf32>
    %50 = vector.shape_cast %49 : vector<1x64x64xf32> to vector<64x64xf32>
    %cst_49 = arith.constant dense<0.000000e+00> : vector<256x64xf32>
    %51 = tpu.matmul %48, %50, %cst_49 {dimension_numbers = #tpu.dot_dimension_numbers<[1], [0], [0], [1], [0, 0, 1, 1], [], []>} : vector<256x64xf32>, vector<64x64xf32>, vector<256x64xf32> -> vector<256x64xf32>
    %52 = arith.addf %46, %51 : vector<256x64xf32>
    %c1_50 = arith.constant 1 : index
    %c9_51 = arith.constant 9 : index
    %c0_52 = arith.constant 0 : index
    %53 = vector.load %arg27[%c1_50, %c9_51, %c0_52] : memref<18x32x64xf32, #tpu.memory_space<vmem>>, vector<16x16x64xf32>
    %54 = vector.shape_cast %53 : vector<16x16x64xf32> to vector<256x64xf32>
    %c5 = arith.constant 5 : index
    %c0_53 = arith.constant 0 : index
    %c0_54 = arith.constant 0 : index
    %55 = vector.load %arg6[%c5, %c0_53, %c0_54] : memref<9x64x64xf32, #tpu.memory_space<vmem>>, vector<1x64x64xf32>
    %56 = vector.shape_cast %55 : vector<1x64x64xf32> to vector<64x64xf32>
    %cst_55 = arith.constant dense<0.000000e+00> : vector<256x64xf32>
    %57 = tpu.matmul %54, %56, %cst_55 {dimension_numbers = #tpu.dot_dimension_numbers<[1], [0], [0], [1], [0, 0, 1, 1], [], []>} : vector<256x64xf32>, vector<64x64xf32>, vector<256x64xf32> -> vector<256x64xf32>
    %58 = arith.addf %52, %57 : vector<256x64xf32>
    %c2_56 = arith.constant 2 : index
    %c7_57 = arith.constant 7 : index
    %c0_58 = arith.constant 0 : index
    %59 = vector.load %arg27[%c2_56, %c7_57, %c0_58] : memref<18x32x64xf32, #tpu.memory_space<vmem>>, vector<16x16x64xf32>
    %60 = vector.shape_cast %59 : vector<16x16x64xf32> to vector<256x64xf32>
    %c6 = arith.constant 6 : index
    %c0_59 = arith.constant 0 : index
    %c0_60 = arith.constant 0 : index
    %61 = vector.load %arg6[%c6, %c0_59, %c0_60] : memref<9x64x64xf32, #tpu.memory_space<vmem>>, vector<1x64x64xf32>
    %62 = vector.shape_cast %61 : vector<1x64x64xf32> to vector<64x64xf32>
    %cst_61 = arith.constant dense<0.000000e+00> : vector<256x64xf32>
    %63 = tpu.matmul %60, %62, %cst_61 {dimension_numbers = #tpu.dot_dimension_numbers<[1], [0], [0], [1], [0, 0, 1, 1], [], []>} : vector<256x64xf32>, vector<64x64xf32>, vector<256x64xf32> -> vector<256x64xf32>
    %64 = arith.addf %58, %63 : vector<256x64xf32>
    %c2_62 = arith.constant 2 : index
    %c8_63 = arith.constant 8 : index
    %c0_64 = arith.constant 0 : index
    %65 = vector.load %arg27[%c2_62, %c8_63, %c0_64] : memref<18x32x64xf32, #tpu.memory_space<vmem>>, vector<16x16x64xf32>
    %66 = vector.shape_cast %65 : vector<16x16x64xf32> to vector<256x64xf32>
    %c7_65 = arith.constant 7 : index
    %c0_66 = arith.constant 0 : index
    %c0_67 = arith.constant 0 : index
    %67 = vector.load %arg6[%c7_65, %c0_66, %c0_67] : memref<9x64x64xf32, #tpu.memory_space<vmem>>, vector<1x64x64xf32>
    %68 = vector.shape_cast %67 : vector<1x64x64xf32> to vector<64x64xf32>
    %cst_68 = arith.constant dense<0.000000e+00> : vector<256x64xf32>
    %69 = tpu.matmul %66, %68, %cst_68 {dimension_numbers = #tpu.dot_dimension_numbers<[1], [0], [0], [1], [0, 0, 1, 1], [], []>} : vector<256x64xf32>, vector<64x64xf32>, vector<256x64xf32> -> vector<256x64xf32>
    %70 = arith.addf %64, %69 : vector<256x64xf32>
    %c2_69 = arith.constant 2 : index
    %c9_70 = arith.constant 9 : index
    %c0_71 = arith.constant 0 : index
    %71 = vector.load %arg27[%c2_69, %c9_70, %c0_71] : memref<18x32x64xf32, #tpu.memory_space<vmem>>, vector<16x16x64xf32>
    %72 = vector.shape_cast %71 : vector<16x16x64xf32> to vector<256x64xf32>
    %c8_72 = arith.constant 8 : index
    %c0_73 = arith.constant 0 : index
    %c0_74 = arith.constant 0 : index
    %73 = vector.load %arg6[%c8_72, %c0_73, %c0_74] : memref<9x64x64xf32, #tpu.memory_space<vmem>>, vector<1x64x64xf32>
    %74 = vector.shape_cast %73 : vector<1x64x64xf32> to vector<64x64xf32>
    %cst_75 = arith.constant dense<0.000000e+00> : vector<256x64xf32>
    %75 = tpu.matmul %72, %74, %cst_75 {dimension_numbers = #tpu.dot_dimension_numbers<[1], [0], [0], [1], [0, 0, 1, 1], [], []>} : vector<256x64xf32>, vector<64x64xf32>, vector<256x64xf32> -> vector<256x64xf32>
    %76 = arith.addf %70, %75 : vector<256x64xf32>
    %c0_76 = arith.constant 0 : index
    %c0_77 = arith.constant 0 : index
    %77 = vector.load %arg7[%c0_76, %c0_77] : memref<1x64xf32, #tpu.memory_space<vmem>>, vector<1x64xf32>
    %78 = vector.broadcast %77 : vector<1x64xf32> to vector<256x64xf32>
    %79 = arith.addf %76, %78 : vector<256x64xf32>
    %c0_78 = arith.constant 0 : index
    %c0_79 = arith.constant 0 : index
    %c0_80 = arith.constant 0 : index
    %80 = vector.load %arg23[%c0_78, %c0_79, %c0_80] : memref<1x256x64xf32, #tpu.memory_space<vmem>>, vector<1x256x64xf32>
    %81 = vector.shape_cast %80 : vector<1x256x64xf32> to vector<256x64xf32>
    %82 = vector.shape_cast %79 : vector<256x64xf32> to vector<1x256x64xf32>
    tpu.vector_store %arg23[%c0_78, %c0_79, %c0_80], %82 {strides = array<i32>} : memref<1x256x64xf32, #tpu.memory_space<vmem>>, vector<1x256x64xf32>,
    %c0_81 = arith.constant 0 : index
    %c0_82 = arith.constant 0 : index
    %83 = vector.load %arg8[%c0_81, %c0_82] : memref<1x64xf32, #tpu.memory_space<vmem>>, vector<1x64xf32>
    %84 = vector.broadcast %83 : vector<1x64xf32> to vector<256x64xf32>
    %85 = arith.mulf %79, %84 : vector<256x64xf32>
    %c0_83 = arith.constant 0 : index
    %c0_84 = arith.constant 0 : index
    %86 = vector.load %arg9[%c0_83, %c0_84] : memref<1x64xf32, #tpu.memory_space<vmem>>, vector<1x64xf32>
    %87 = vector.broadcast %86 : vector<1x64xf32> to vector<256x64xf32>
    %88 = arith.addf %85, %87 : vector<256x64xf32>
    %cst_85 = arith.constant 0.000000e+00 : f32
    %89 = vector.broadcast %cst_85 : f32 to vector<256x64xf32>
    %90 = arith.maximumf %88, %89 : vector<256x64xf32>
    %c0_86 = arith.constant 0 : index
    %c0_87 = arith.constant 0 : index
    %c0_88 = arith.constant 0 : index
    %91 = vector.load %arg20[%c0_86, %c0_87, %c0_88] : memref<4x64x256xf32, #tpu.memory_space<vmem>>, vector<1x64x256xf32>
    %92 = vector.shape_cast %91 : vector<1x64x256xf32> to vector<64x256xf32>
    %cst_89 = arith.constant dense<0.000000e+00> : vector<64x64xf32>
    %93 = tpu.matmul %92, %90, %cst_89 {dimension_numbers = #tpu.dot_dimension_numbers<[1], [0], [0], [1], [0, 0, 1, 1], [], []>} : vector<64x256xf32>, vector<256x64xf32>, vector<64x64xf32> -> vector<64x64xf32>
    %c1_90 = arith.constant 1 : index
    %c0_91 = arith.constant 0 : index
    %c0_92 = arith.constant 0 : index
    %94 = vector.load %arg20[%c1_90, %c0_91, %c0_92] : memref<4x64x256xf32, #tpu.memory_space<vmem>>, vector<1x64x256xf32>
    %95 = vector.shape_cast %94 : vector<1x64x256xf32> to vector<64x256xf32>
    %cst_93 = arith.constant dense<0.000000e+00> : vector<64x64xf32>
    %96 = tpu.matmul %95, %90, %cst_93 {dimension_numbers = #tpu.dot_dimension_numbers<[1], [0], [0], [1], [0, 0, 1, 1], [], []>} : vector<64x256xf32>, vector<256x64xf32>, vector<64x64xf32> -> vector<64x64xf32>
    %c2_94 = arith.constant 2 : index
    %c0_95 = arith.constant 0 : index
    %c0_96 = arith.constant 0 : index
    %97 = vector.load %arg20[%c2_94, %c0_95, %c0_96] : memref<4x64x256xf32, #tpu.memory_space<vmem>>, vector<1x64x256xf32>
    %98 = vector.shape_cast %97 : vector<1x64x256xf32> to vector<64x256xf32>
    %cst_97 = arith.constant dense<0.000000e+00> : vector<64x64xf32>
    %99 = tpu.matmul %98, %90, %cst_97 {dimension_numbers = #tpu.dot_dimension_numbers<[1], [0], [0], [1], [0, 0, 1, 1], [], []>} : vector<64x256xf32>, vector<256x64xf32>, vector<64x64xf32> -> vector<64x64xf32>
    %c3_98 = arith.constant 3 : index
    %c0_99 = arith.constant 0 : index
    %c0_100 = arith.constant 0 : index
    %100 = vector.load %arg20[%c3_98, %c0_99, %c0_100] : memref<4x64x256xf32, #tpu.memory_space<vmem>>, vector<1x64x256xf32>
    %101 = vector.shape_cast %100 : vector<1x64x256xf32> to vector<64x256xf32>
    %cst_101 = arith.constant dense<0.000000e+00> : vector<64x64xf32>
    %102 = tpu.matmul %101, %90, %cst_101 {dimension_numbers = #tpu.dot_dimension_numbers<[1], [0], [0], [1], [0, 0, 1, 1], [], []>} : vector<64x256xf32>, vector<256x64xf32>, vector<64x64xf32> -> vector<64x64xf32>
    %103 = arith.maximumf %93, %96 : vector<64x64xf32>
    %104 = arith.maximumf %99, %102 : vector<64x64xf32>
    %105 = arith.maximumf %103, %104 : vector<64x64xf32>
    %cst_102 = arith.constant 0.000000e+00 : f32
    %106 = vector.broadcast %cst_102 : f32 to vector<10x24x64xf32>
    %c0_103 = arith.constant 0 : index
    %c0_104 = arith.constant 0 : index
    %c0_105 = arith.constant 0 : index
    %107 = vector.load %arg28[%c0_103, %c0_104, %c0_105] : memref<10x24x64xf32, #tpu.memory_space<vmem>>, vector<10x24x64xf32>
    tpu.vector_store %arg28[%c0_103, %c0_104, %c0_105], %106 {strides = array<i32>} : memref<10x24x64xf32, #tpu.memory_space<vmem>>, vector<10x24x64xf32>,
    %108 = vector.shape_cast %105 : vector<64x64xf32> to vector<8x8x64xf32>
    %c1_106 = arith.constant 1 : index
    %c8_107 = arith.constant 8 : index
    %c0_108 = arith.constant 0 : index
    %109 = vector.load %arg28[%c1_106, %c8_107, %c0_108] : memref<10x24x64xf32, #tpu.memory_space<vmem>>, vector<8x8x64xf32>
    tpu.vector_store %arg28[%c1_106, %c8_107, %c0_108], %108 {strides = array<i32>} : memref<10x24x64xf32, #tpu.memory_space<vmem>>, vector<8x8x64xf32>,
    %cst_109 = arith.constant 0.000000e+00 : f32
    %110 = vector.broadcast %cst_109 : f32 to vector<64x128xf32>
    %c0_110 = arith.constant 0 : index
    %c7_111 = arith.constant 7 : index
    %c0_112 = arith.constant 0 : index
    %111 = vector.load %arg28[%c0_110, %c7_111, %c0_112] : memref<10x24x64xf32, #tpu.memory_space<vmem>>, vector<8x8x64xf32>
    %112 = vector.shape_cast %111 : vector<8x8x64xf32> to vector<64x64xf32>
    %c0_113 = arith.constant 0 : index
    %c0_114 = arith.constant 0 : index
    %c0_115 = arith.constant 0 : index
    %113 = vector.load %arg10[%c0_113, %c0_114, %c0_115] : memref<9x64x128xf32, #tpu.memory_space<vmem>>, vector<1x64x128xf32>
    %114 = vector.shape_cast %113 : vector<1x64x128xf32> to vector<64x128xf32>
    %cst_116 = arith.constant dense<0.000000e+00> : vector<64x128xf32>
    %115 = tpu.matmul %112, %114, %cst_116 {dimension_numbers = #tpu.dot_dimension_numbers<[1], [0], [0], [1], [0, 0, 1, 1], [], []>} : vector<64x64xf32>, vector<64x128xf32>, vector<64x128xf32> -> vector<64x128xf32>
    %116 = arith.addf %110, %115 : vector<64x128xf32>
    %c0_117 = arith.constant 0 : index
    %c8_118 = arith.constant 8 : index
    %c0_119 = arith.constant 0 : index
    %117 = vector.load %arg28[%c0_117, %c8_118, %c0_119] : memref<10x24x64xf32, #tpu.memory_space<vmem>>, vector<8x8x64xf32>
    %118 = vector.shape_cast %117 : vector<8x8x64xf32> to vector<64x64xf32>
    %c1_120 = arith.constant 1 : index
    %c0_121 = arith.constant 0 : index
    %c0_122 = arith.constant 0 : index
    %119 = vector.load %arg10[%c1_120, %c0_121, %c0_122] : memref<9x64x128xf32, #tpu.memory_space<vmem>>, vector<1x64x128xf32>
    %120 = vector.shape_cast %119 : vector<1x64x128xf32> to vector<64x128xf32>
    %cst_123 = arith.constant dense<0.000000e+00> : vector<64x128xf32>
    %121 = tpu.matmul %118, %120, %cst_123 {dimension_numbers = #tpu.dot_dimension_numbers<[1], [0], [0], [1], [0, 0, 1, 1], [], []>} : vector<64x64xf32>, vector<64x128xf32>, vector<64x128xf32> -> vector<64x128xf32>
    %122 = arith.addf %116, %121 : vector<64x128xf32>
    %c0_124 = arith.constant 0 : index
    %c9_125 = arith.constant 9 : index
    %c0_126 = arith.constant 0 : index
    %123 = vector.load %arg28[%c0_124, %c9_125, %c0_126] : memref<10x24x64xf32, #tpu.memory_space<vmem>>, vector<8x8x64xf32>
    %124 = vector.shape_cast %123 : vector<8x8x64xf32> to vector<64x64xf32>
    %c2_127 = arith.constant 2 : index
    %c0_128 = arith.constant 0 : index
    %c0_129 = arith.constant 0 : index
    %125 = vector.load %arg10[%c2_127, %c0_128, %c0_129] : memref<9x64x128xf32, #tpu.memory_space<vmem>>, vector<1x64x128xf32>
    %126 = vector.shape_cast %125 : vector<1x64x128xf32> to vector<64x128xf32>
    %cst_130 = arith.constant dense<0.000000e+00> : vector<64x128xf32>
    %127 = tpu.matmul %124, %126, %cst_130 {dimension_numbers = #tpu.dot_dimension_numbers<[1], [0], [0], [1], [0, 0, 1, 1], [], []>} : vector<64x64xf32>, vector<64x128xf32>, vector<64x128xf32> -> vector<64x128xf32>
    %128 = arith.addf %122, %127 : vector<64x128xf32>
    %c1_131 = arith.constant 1 : index
    %c7_132 = arith.constant 7 : index
    %c0_133 = arith.constant 0 : index
    %129 = vector.load %arg28[%c1_131, %c7_132, %c0_133] : memref<10x24x64xf32, #tpu.memory_space<vmem>>, vector<8x8x64xf32>
    %130 = vector.shape_cast %129 : vector<8x8x64xf32> to vector<64x64xf32>
    %c3_134 = arith.constant 3 : index
    %c0_135 = arith.constant 0 : index
    %c0_136 = arith.constant 0 : index
    %131 = vector.load %arg10[%c3_134, %c0_135, %c0_136] : memref<9x64x128xf32, #tpu.memory_space<vmem>>, vector<1x64x128xf32>
    %132 = vector.shape_cast %131 : vector<1x64x128xf32> to vector<64x128xf32>
    %cst_137 = arith.constant dense<0.000000e+00> : vector<64x128xf32>
    %133 = tpu.matmul %130, %132, %cst_137 {dimension_numbers = #tpu.dot_dimension_numbers<[1], [0], [0], [1], [0, 0, 1, 1], [], []>} : vector<64x64xf32>, vector<64x128xf32>, vector<64x128xf32> -> vector<64x128xf32>
    %134 = arith.addf %128, %133 : vector<64x128xf32>
    %c1_138 = arith.constant 1 : index
    %c8_139 = arith.constant 8 : index
    %c0_140 = arith.constant 0 : index
    %135 = vector.load %arg28[%c1_138, %c8_139, %c0_140] : memref<10x24x64xf32, #tpu.memory_space<vmem>>, vector<8x8x64xf32>
    %136 = vector.shape_cast %135 : vector<8x8x64xf32> to vector<64x64xf32>
    %c4_141 = arith.constant 4 : index
    %c0_142 = arith.constant 0 : index
    %c0_143 = arith.constant 0 : index
    %137 = vector.load %arg10[%c4_141, %c0_142, %c0_143] : memref<9x64x128xf32, #tpu.memory_space<vmem>>, vector<1x64x128xf32>
    %138 = vector.shape_cast %137 : vector<1x64x128xf32> to vector<64x128xf32>
    %cst_144 = arith.constant dense<0.000000e+00> : vector<64x128xf32>
    %139 = tpu.matmul %136, %138, %cst_144 {dimension_numbers = #tpu.dot_dimension_numbers<[1], [0], [0], [1], [0, 0, 1, 1], [], []>} : vector<64x64xf32>, vector<64x128xf32>, vector<64x128xf32> -> vector<64x128xf32>
    %140 = arith.addf %134, %139 : vector<64x128xf32>
    %c1_145 = arith.constant 1 : index
    %c9_146 = arith.constant 9 : index
    %c0_147 = arith.constant 0 : index
    %141 = vector.load %arg28[%c1_145, %c9_146, %c0_147] : memref<10x24x64xf32, #tpu.memory_space<vmem>>, vector<8x8x64xf32>
    %142 = vector.shape_cast %141 : vector<8x8x64xf32> to vector<64x64xf32>
    %c5_148 = arith.constant 5 : index
    %c0_149 = arith.constant 0 : index
    %c0_150 = arith.constant 0 : index
    %143 = vector.load %arg10[%c5_148, %c0_149, %c0_150] : memref<9x64x128xf32, #tpu.memory_space<vmem>>, vector<1x64x128xf32>
    %144 = vector.shape_cast %143 : vector<1x64x128xf32> to vector<64x128xf32>
    %cst_151 = arith.constant dense<0.000000e+00> : vector<64x128xf32>
    %145 = tpu.matmul %142, %144, %cst_151 {dimension_numbers = #tpu.dot_dimension_numbers<[1], [0], [0], [1], [0, 0, 1, 1], [], []>} : vector<64x64xf32>, vector<64x128xf32>, vector<64x128xf32> -> vector<64x128xf32>
    %146 = arith.addf %140, %145 : vector<64x128xf32>
    %c2_152 = arith.constant 2 : index
    %c7_153 = arith.constant 7 : index
    %c0_154 = arith.constant 0 : index
    %147 = vector.load %arg28[%c2_152, %c7_153, %c0_154] : memref<10x24x64xf32, #tpu.memory_space<vmem>>, vector<8x8x64xf32>
    %148 = vector.shape_cast %147 : vector<8x8x64xf32> to vector<64x64xf32>
    %c6_155 = arith.constant 6 : index
    %c0_156 = arith.constant 0 : index
    %c0_157 = arith.constant 0 : index
    %149 = vector.load %arg10[%c6_155, %c0_156, %c0_157] : memref<9x64x128xf32, #tpu.memory_space<vmem>>, vector<1x64x128xf32>
    %150 = vector.shape_cast %149 : vector<1x64x128xf32> to vector<64x128xf32>
    %cst_158 = arith.constant dense<0.000000e+00> : vector<64x128xf32>
    %151 = tpu.matmul %148, %150, %cst_158 {dimension_numbers = #tpu.dot_dimension_numbers<[1], [0], [0], [1], [0, 0, 1, 1], [], []>} : vector<64x64xf32>, vector<64x128xf32>, vector<64x128xf32> -> vector<64x128xf32>
    %152 = arith.addf %146, %151 : vector<64x128xf32>
    %c2_159 = arith.constant 2 : index
    %c8_160 = arith.constant 8 : index
    %c0_161 = arith.constant 0 : index
    %153 = vector.load %arg28[%c2_159, %c8_160, %c0_161] : memref<10x24x64xf32, #tpu.memory_space<vmem>>, vector<8x8x64xf32>
    %154 = vector.shape_cast %153 : vector<8x8x64xf32> to vector<64x64xf32>
    %c7_162 = arith.constant 7 : index
    %c0_163 = arith.constant 0 : index
    %c0_164 = arith.constant 0 : index
    %155 = vector.load %arg10[%c7_162, %c0_163, %c0_164] : memref<9x64x128xf32, #tpu.memory_space<vmem>>, vector<1x64x128xf32>
    %156 = vector.shape_cast %155 : vector<1x64x128xf32> to vector<64x128xf32>
    %cst_165 = arith.constant dense<0.000000e+00> : vector<64x128xf32>
    %157 = tpu.matmul %154, %156, %cst_165 {dimension_numbers = #tpu.dot_dimension_numbers<[1], [0], [0], [1], [0, 0, 1, 1], [], []>} : vector<64x64xf32>, vector<64x128xf32>, vector<64x128xf32> -> vector<64x128xf32>
    %158 = arith.addf %152, %157 : vector<64x128xf32>
    %c2_166 = arith.constant 2 : index
    %c9_167 = arith.constant 9 : index
    %c0_168 = arith.constant 0 : index
    %159 = vector.load %arg28[%c2_166, %c9_167, %c0_168] : memref<10x24x64xf32, #tpu.memory_space<vmem>>, vector<8x8x64xf32>
    %160 = vector.shape_cast %159 : vector<8x8x64xf32> to vector<64x64xf32>
    %c8_169 = arith.constant 8 : index
    %c0_170 = arith.constant 0 : index
    %c0_171 = arith.constant 0 : index
    %161 = vector.load %arg10[%c8_169, %c0_170, %c0_171] : memref<9x64x128xf32, #tpu.memory_space<vmem>>, vector<1x64x128xf32>
    %162 = vector.shape_cast %161 : vector<1x64x128xf32> to vector<64x128xf32>
    %cst_172 = arith.constant dense<0.000000e+00> : vector<64x128xf32>
    %163 = tpu.matmul %160, %162, %cst_172 {dimension_numbers = #tpu.dot_dimension_numbers<[1], [0], [0], [1], [0, 0, 1, 1], [], []>} : vector<64x64xf32>, vector<64x128xf32>, vector<64x128xf32> -> vector<64x128xf32>
    %164 = arith.addf %158, %163 : vector<64x128xf32>
    %c0_173 = arith.constant 0 : index
    %c0_174 = arith.constant 0 : index
    %165 = vector.load %arg11[%c0_173, %c0_174] : memref<1x128xf32, #tpu.memory_space<vmem>>, vector<1x128xf32>
    %166 = vector.broadcast %165 : vector<1x128xf32> to vector<64x128xf32>
    %167 = arith.addf %164, %166 : vector<64x128xf32>
    %c0_175 = arith.constant 0 : index
    %c0_176 = arith.constant 0 : index
    %c0_177 = arith.constant 0 : index
    %168 = vector.load %arg24[%c0_175, %c0_176, %c0_177] : memref<1x64x128xf32, #tpu.memory_space<vmem>>, vector<1x64x128xf32>
    %169 = vector.shape_cast %168 : vector<1x64x128xf32> to vector<64x128xf32>
    %170 = vector.shape_cast %167 : vector<64x128xf32> to vector<1x64x128xf32>
    tpu.vector_store %arg24[%c0_175, %c0_176, %c0_177], %170 {strides = array<i32>} : memref<1x64x128xf32, #tpu.memory_space<vmem>>, vector<1x64x128xf32>,
    %c0_178 = arith.constant 0 : index
    %c0_179 = arith.constant 0 : index
    %171 = vector.load %arg12[%c0_178, %c0_179] : memref<1x128xf32, #tpu.memory_space<vmem>>, vector<1x128xf32>
    %172 = vector.broadcast %171 : vector<1x128xf32> to vector<64x128xf32>
    %173 = arith.mulf %167, %172 : vector<64x128xf32>
    %c0_180 = arith.constant 0 : index
    %c0_181 = arith.constant 0 : index
    %174 = vector.load %arg13[%c0_180, %c0_181] : memref<1x128xf32, #tpu.memory_space<vmem>>, vector<1x128xf32>
    %175 = vector.broadcast %174 : vector<1x128xf32> to vector<64x128xf32>
    %176 = arith.addf %173, %175 : vector<64x128xf32>
    %cst_182 = arith.constant 0.000000e+00 : f32
    %177 = vector.broadcast %cst_182 : f32 to vector<64x128xf32>
    %178 = arith.maximumf %176, %177 : vector<64x128xf32>
    %cst_183 = arith.constant 0.000000e+00 : f32
    %179 = vector.broadcast %cst_183 : f32 to vector<10x24x128xf32>
    %c0_184 = arith.constant 0 : index
    %c0_185 = arith.constant 0 : index
    %c0_186 = arith.constant 0 : index
    %180 = vector.load %arg29[%c0_184, %c0_185, %c0_186] : memref<10x24x128xf32, #tpu.memory_space<vmem>>, vector<10x24x128xf32>
    tpu.vector_store %arg29[%c0_184, %c0_185, %c0_186], %179 {strides = array<i32>} : memref<10x24x128xf32, #tpu.memory_space<vmem>>, vector<10x24x128xf32>,
    %181 = vector.shape_cast %178 : vector<64x128xf32> to vector<8x8x128xf32>
    %c1_187 = arith.constant 1 : index
    %c8_188 = arith.constant 8 : index
    %c0_189 = arith.constant 0 : index
    %182 = vector.load %arg29[%c1_187, %c8_188, %c0_189] : memref<10x24x128xf32, #tpu.memory_space<vmem>>, vector<8x8x128xf32>
    tpu.vector_store %arg29[%c1_187, %c8_188, %c0_189], %181 {strides = array<i32>} : memref<10x24x128xf32, #tpu.memory_space<vmem>>, vector<8x8x128xf32>,
    %cst_190 = arith.constant 0.000000e+00 : f32
    %183 = vector.broadcast %cst_190 : f32 to vector<64x128xf32>
    %c0_191 = arith.constant 0 : index
    %c7_192 = arith.constant 7 : index
    %c0_193 = arith.constant 0 : index
    %184 = vector.load %arg29[%c0_191, %c7_192, %c0_193] : memref<10x24x128xf32, #tpu.memory_space<vmem>>, vector<8x8x128xf32>
    %185 = vector.shape_cast %184 : vector<8x8x128xf32> to vector<64x128xf32>
    %c0_194 = arith.constant 0 : index
    %c0_195 = arith.constant 0 : index
    %c0_196 = arith.constant 0 : index
    %186 = vector.load %arg14[%c0_194, %c0_195, %c0_196] : memref<9x128x128xf32, #tpu.memory_space<vmem>>, vector<1x128x128xf32>
    %187 = vector.shape_cast %186 : vector<1x128x128xf32> to vector<128x128xf32>
    %cst_197 = arith.constant dense<0.000000e+00> : vector<64x128xf32>
    %188 = tpu.matmul %185, %187, %cst_197 {dimension_numbers = #tpu.dot_dimension_numbers<[1], [0], [0], [1], [0, 0, 1, 1], [], []>} : vector<64x128xf32>, vector<128x128xf32>, vector<64x128xf32> -> vector<64x128xf32>
    %189 = arith.addf %183, %188 : vector<64x128xf32>
    %c0_198 = arith.constant 0 : index
    %c8_199 = arith.constant 8 : index
    %c0_200 = arith.constant 0 : index
    %190 = vector.load %arg29[%c0_198, %c8_199, %c0_200] : memref<10x24x128xf32, #tpu.memory_space<vmem>>, vector<8x8x128xf32>
    %191 = vector.shape_cast %190 : vector<8x8x128xf32> to vector<64x128xf32>
    %c1_201 = arith.constant 1 : index
    %c0_202 = arith.constant 0 : index
    %c0_203 = arith.constant 0 : index
    %192 = vector.load %arg14[%c1_201, %c0_202, %c0_203] : memref<9x128x128xf32, #tpu.memory_space<vmem>>, vector<1x128x128xf32>
    %193 = vector.shape_cast %192 : vector<1x128x128xf32> to vector<128x128xf32>
    %cst_204 = arith.constant dense<0.000000e+00> : vector<64x128xf32>
    %194 = tpu.matmul %191, %193, %cst_204 {dimension_numbers = #tpu.dot_dimension_numbers<[1], [0], [0], [1], [0, 0, 1, 1], [], []>} : vector<64x128xf32>, vector<128x128xf32>, vector<64x128xf32> -> vector<64x128xf32>
    %195 = arith.addf %189, %194 : vector<64x128xf32>
    %c0_205 = arith.constant 0 : index
    %c9_206 = arith.constant 9 : index
    %c0_207 = arith.constant 0 : index
    %196 = vector.load %arg29[%c0_205, %c9_206, %c0_207] : memref<10x24x128xf32, #tpu.memory_space<vmem>>, vector<8x8x128xf32>
    %197 = vector.shape_cast %196 : vector<8x8x128xf32> to vector<64x128xf32>
    %c2_208 = arith.constant 2 : index
    %c0_209 = arith.constant 0 : index
    %c0_210 = arith.constant 0 : index
    %198 = vector.load %arg14[%c2_208, %c0_209, %c0_210] : memref<9x128x128xf32, #tpu.memory_space<vmem>>, vector<1x128x128xf32>
    %199 = vector.shape_cast %198 : vector<1x128x128xf32> to vector<128x128xf32>
    %cst_211 = arith.constant dense<0.000000e+00> : vector<64x128xf32>
    %200 = tpu.matmul %197, %199, %cst_211 {dimension_numbers = #tpu.dot_dimension_numbers<[1], [0], [0], [1], [0, 0, 1, 1], [], []>} : vector<64x128xf32>, vector<128x128xf32>, vector<64x128xf32> -> vector<64x128xf32>
    %201 = arith.addf %195, %200 : vector<64x128xf32>
    %c1_212 = arith.constant 1 : index
    %c7_213 = arith.constant 7 : index
    %c0_214 = arith.constant 0 : index
    %202 = vector.load %arg29[%c1_212, %c7_213, %c0_214] : memref<10x24x128xf32, #tpu.memory_space<vmem>>, vector<8x8x128xf32>
    %203 = vector.shape_cast %202 : vector<8x8x128xf32> to vector<64x128xf32>
    %c3_215 = arith.constant 3 : index
    %c0_216 = arith.constant 0 : index
    %c0_217 = arith.constant 0 : index
    %204 = vector.load %arg14[%c3_215, %c0_216, %c0_217] : memref<9x128x128xf32, #tpu.memory_space<vmem>>, vector<1x128x128xf32>
    %205 = vector.shape_cast %204 : vector<1x128x128xf32> to vector<128x128xf32>
    %cst_218 = arith.constant dense<0.000000e+00> : vector<64x128xf32>
    %206 = tpu.matmul %203, %205, %cst_218 {dimension_numbers = #tpu.dot_dimension_numbers<[1], [0], [0], [1], [0, 0, 1, 1], [], []>} : vector<64x128xf32>, vector<128x128xf32>, vector<64x128xf32> -> vector<64x128xf32>
    %207 = arith.addf %201, %206 : vector<64x128xf32>
    %c1_219 = arith.constant 1 : index
    %c8_220 = arith.constant 8 : index
    %c0_221 = arith.constant 0 : index
    %208 = vector.load %arg29[%c1_219, %c8_220, %c0_221] : memref<10x24x128xf32, #tpu.memory_space<vmem>>, vector<8x8x128xf32>
    %209 = vector.shape_cast %208 : vector<8x8x128xf32> to vector<64x128xf32>
    %c4_222 = arith.constant 4 : index
    %c0_223 = arith.constant 0 : index
    %c0_224 = arith.constant 0 : index
    %210 = vector.load %arg14[%c4_222, %c0_223, %c0_224] : memref<9x128x128xf32, #tpu.memory_space<vmem>>, vector<1x128x128xf32>
    %211 = vector.shape_cast %210 : vector<1x128x128xf32> to vector<128x128xf32>
    %cst_225 = arith.constant dense<0.000000e+00> : vector<64x128xf32>
    %212 = tpu.matmul %209, %211, %cst_225 {dimension_numbers = #tpu.dot_dimension_numbers<[1], [0], [0], [1], [0, 0, 1, 1], [], []>} : vector<64x128xf32>, vector<128x128xf32>, vector<64x128xf32> -> vector<64x128xf32>
    %213 = arith.addf %207, %212 : vector<64x128xf32>
    %c1_226 = arith.constant 1 : index
    %c9_227 = arith.constant 9 : index
    %c0_228 = arith.constant 0 : index
    %214 = vector.load %arg29[%c1_226, %c9_227, %c0_228] : memref<10x24x128xf32, #tpu.memory_space<vmem>>, vector<8x8x128xf32>
    %215 = vector.shape_cast %214 : vector<8x8x128xf32> to vector<64x128xf32>
    %c5_229 = arith.constant 5 : index
    %c0_230 = arith.constant 0 : index
    %c0_231 = arith.constant 0 : index
    %216 = vector.load %arg14[%c5_229, %c0_230, %c0_231] : memref<9x128x128xf32, #tpu.memory_space<vmem>>, vector<1x128x128xf32>
    %217 = vector.shape_cast %216 : vector<1x128x128xf32> to vector<128x128xf32>
    %cst_232 = arith.constant dense<0.000000e+00> : vector<64x128xf32>
    %218 = tpu.matmul %215, %217, %cst_232 {dimension_numbers = #tpu.dot_dimension_numbers<[1], [0], [0], [1], [0, 0, 1, 1], [], []>} : vector<64x128xf32>, vector<128x128xf32>, vector<64x128xf32> -> vector<64x128xf32>
    %219 = arith.addf %213, %218 : vector<64x128xf32>
    %c2_233 = arith.constant 2 : index
    %c7_234 = arith.constant 7 : index
    %c0_235 = arith.constant 0 : index
    %220 = vector.load %arg29[%c2_233, %c7_234, %c0_235] : memref<10x24x128xf32, #tpu.memory_space<vmem>>, vector<8x8x128xf32>
    %221 = vector.shape_cast %220 : vector<8x8x128xf32> to vector<64x128xf32>
    %c6_236 = arith.constant 6 : index
    %c0_237 = arith.constant 0 : index
    %c0_238 = arith.constant 0 : index
    %222 = vector.load %arg14[%c6_236, %c0_237, %c0_238] : memref<9x128x128xf32, #tpu.memory_space<vmem>>, vector<1x128x128xf32>
    %223 = vector.shape_cast %222 : vector<1x128x128xf32> to vector<128x128xf32>
    %cst_239 = arith.constant dense<0.000000e+00> : vector<64x128xf32>
    %224 = tpu.matmul %221, %223, %cst_239 {dimension_numbers = #tpu.dot_dimension_numbers<[1], [0], [0], [1], [0, 0, 1, 1], [], []>} : vector<64x128xf32>, vector<128x128xf32>, vector<64x128xf32> -> vector<64x128xf32>
    %225 = arith.addf %219, %224 : vector<64x128xf32>
    %c2_240 = arith.constant 2 : index
    %c8_241 = arith.constant 8 : index
    %c0_242 = arith.constant 0 : index
    %226 = vector.load %arg29[%c2_240, %c8_241, %c0_242] : memref<10x24x128xf32, #tpu.memory_space<vmem>>, vector<8x8x128xf32>
    %227 = vector.shape_cast %226 : vector<8x8x128xf32> to vector<64x128xf32>
    %c7_243 = arith.constant 7 : index
    %c0_244 = arith.constant 0 : index
    %c0_245 = arith.constant 0 : index
    %228 = vector.load %arg14[%c7_243, %c0_244, %c0_245] : memref<9x128x128xf32, #tpu.memory_space<vmem>>, vector<1x128x128xf32>
    %229 = vector.shape_cast %228 : vector<1x128x128xf32> to vector<128x128xf32>
    %cst_246 = arith.constant dense<0.000000e+00> : vector<64x128xf32>
    %230 = tpu.matmul %227, %229, %cst_246 {dimension_numbers = #tpu.dot_dimension_numbers<[1], [0], [0], [1], [0, 0, 1, 1], [], []>} : vector<64x128xf32>, vector<128x128xf32>, vector<64x128xf32> -> vector<64x128xf32>
    %231 = arith.addf %225, %230 : vector<64x128xf32>
    %c2_247 = arith.constant 2 : index
    %c9_248 = arith.constant 9 : index
    %c0_249 = arith.constant 0 : index
    %232 = vector.load %arg29[%c2_247, %c9_248, %c0_249] : memref<10x24x128xf32, #tpu.memory_space<vmem>>, vector<8x8x128xf32>
    %233 = vector.shape_cast %232 : vector<8x8x128xf32> to vector<64x128xf32>
    %c8_250 = arith.constant 8 : index
    %c0_251 = arith.constant 0 : index
    %c0_252 = arith.constant 0 : index
    %234 = vector.load %arg14[%c8_250, %c0_251, %c0_252] : memref<9x128x128xf32, #tpu.memory_space<vmem>>, vector<1x128x128xf32>
    %235 = vector.shape_cast %234 : vector<1x128x128xf32> to vector<128x128xf32>
    %cst_253 = arith.constant dense<0.000000e+00> : vector<64x128xf32>
    %236 = tpu.matmul %233, %235, %cst_253 {dimension_numbers = #tpu.dot_dimension_numbers<[1], [0], [0], [1], [0, 0, 1, 1], [], []>} : vector<64x128xf32>, vector<128x128xf32>, vector<64x128xf32> -> vector<64x128xf32>
    %237 = arith.addf %231, %236 : vector<64x128xf32>
    %c0_254 = arith.constant 0 : index
    %c0_255 = arith.constant 0 : index
    %238 = vector.load %arg15[%c0_254, %c0_255] : memref<1x128xf32, #tpu.memory_space<vmem>>, vector<1x128xf32>
    %239 = vector.broadcast %238 : vector<1x128xf32> to vector<64x128xf32>
    %240 = arith.addf %237, %239 : vector<64x128xf32>
    %c0_256 = arith.constant 0 : index
    %c0_257 = arith.constant 0 : index
    %c0_258 = arith.constant 0 : index
    %241 = vector.load %arg25[%c0_256, %c0_257, %c0_258] : memref<1x64x128xf32, #tpu.memory_space<vmem>>, vector<1x64x128xf32>
    %242 = vector.shape_cast %241 : vector<1x64x128xf32> to vector<64x128xf32>
    %243 = vector.shape_cast %240 : vector<64x128xf32> to vector<1x64x128xf32>
    tpu.vector_store %arg25[%c0_256, %c0_257, %c0_258], %243 {strides = array<i32>} : memref<1x64x128xf32, #tpu.memory_space<vmem>>, vector<1x64x128xf32>,
    %c0_259 = arith.constant 0 : index
    %c0_260 = arith.constant 0 : index
    %244 = vector.load %arg16[%c0_259, %c0_260] : memref<1x128xf32, #tpu.memory_space<vmem>>, vector<1x128xf32>
    %245 = vector.broadcast %244 : vector<1x128xf32> to vector<64x128xf32>
    %246 = arith.mulf %240, %245 : vector<64x128xf32>
    %c0_261 = arith.constant 0 : index
    %c0_262 = arith.constant 0 : index
    %247 = vector.load %arg17[%c0_261, %c0_262] : memref<1x128xf32, #tpu.memory_space<vmem>>, vector<1x128xf32>
    %248 = vector.broadcast %247 : vector<1x128xf32> to vector<64x128xf32>
    %249 = arith.addf %246, %248 : vector<64x128xf32>
    %cst_263 = arith.constant 0.000000e+00 : f32
    %250 = vector.broadcast %cst_263 : f32 to vector<64x128xf32>
    %251 = arith.maximumf %249, %250 : vector<64x128xf32>
    %c0_264 = arith.constant 0 : index
    %c0_265 = arith.constant 0 : index
    %c0_266 = arith.constant 0 : index
    %252 = vector.load %arg21[%c0_264, %c0_265, %c0_266] : memref<4x16x64xf32, #tpu.memory_space<vmem>>, vector<1x16x64xf32>
    %253 = vector.shape_cast %252 : vector<1x16x64xf32> to vector<16x64xf32>
    %cst_267 = arith.constant dense<0.000000e+00> : vector<16x128xf32>
    %254 = tpu.matmul %253, %251, %cst_267 {dimension_numbers = #tpu.dot_dimension_numbers<[1], [0], [0], [1], [0, 0, 1, 1], [], []>} : vector<16x64xf32>, vector<64x128xf32>, vector<16x128xf32> -> vector<16x128xf32>
    %c1_268 = arith.constant 1 : index
    %c0_269 = arith.constant 0 : index
    %c0_270 = arith.constant 0 : index
    %255 = vector.load %arg21[%c1_268, %c0_269, %c0_270] : memref<4x16x64xf32, #tpu.memory_space<vmem>>, vector<1x16x64xf32>
    %256 = vector.shape_cast %255 : vector<1x16x64xf32> to vector<16x64xf32>
    %cst_271 = arith.constant dense<0.000000e+00> : vector<16x128xf32>
    %257 = tpu.matmul %256, %251, %cst_271 {dimension_numbers = #tpu.dot_dimension_numbers<[1], [0], [0], [1], [0, 0, 1, 1], [], []>} : vector<16x64xf32>, vector<64x128xf32>, vector<16x128xf32> -> vector<16x128xf32>
    %c2_272 = arith.constant 2 : index
    %c0_273 = arith.constant 0 : index
    %c0_274 = arith.constant 0 : index
    %258 = vector.load %arg21[%c2_272, %c0_273, %c0_274] : memref<4x16x64xf32, #tpu.memory_space<vmem>>, vector<1x16x64xf32>
    %259 = vector.shape_cast %258 : vector<1x16x64xf32> to vector<16x64xf32>
    %cst_275 = arith.constant dense<0.000000e+00> : vector<16x128xf32>
    %260 = tpu.matmul %259, %251, %cst_275 {dimension_numbers = #tpu.dot_dimension_numbers<[1], [0], [0], [1], [0, 0, 1, 1], [], []>} : vector<16x64xf32>, vector<64x128xf32>, vector<16x128xf32> -> vector<16x128xf32>
    %c3_276 = arith.constant 3 : index
    %c0_277 = arith.constant 0 : index
    %c0_278 = arith.constant 0 : index
    %261 = vector.load %arg21[%c3_276, %c0_277, %c0_278] : memref<4x16x64xf32, #tpu.memory_space<vmem>>, vector<1x16x64xf32>
    %262 = vector.shape_cast %261 : vector<1x16x64xf32> to vector<16x64xf32>
    %cst_279 = arith.constant dense<0.000000e+00> : vector<16x128xf32>
    %263 = tpu.matmul %262, %251, %cst_279 {dimension_numbers = #tpu.dot_dimension_numbers<[1], [0], [0], [1], [0, 0, 1, 1], [], []>} : vector<16x64xf32>, vector<64x128xf32>, vector<16x128xf32> -> vector<16x128xf32>
    %264 = arith.maximumf %254, %257 : vector<16x128xf32>
    %265 = arith.maximumf %260, %263 : vector<16x128xf32>
    %266 = arith.maximumf %264, %265 : vector<16x128xf32>
    %cst_280 = arith.constant 0.000000e+00 : f32
    %267 = vector.broadcast %cst_280 : f32 to vector<6x20x128xf32>
    %c0_281 = arith.constant 0 : index
    %c0_282 = arith.constant 0 : index
    %c0_283 = arith.constant 0 : index
    %268 = vector.load %arg30[%c0_281, %c0_282, %c0_283] : memref<6x20x128xf32, #tpu.memory_space<vmem>>, vector<6x20x128xf32>
    tpu.vector_store %arg30[%c0_281, %c0_282, %c0_283], %267 {strides = array<i32>} : memref<6x20x128xf32, #tpu.memory_space<vmem>>, vector<6x20x128xf32>,
    %269 = vector.shape_cast %266 : vector<16x128xf32> to vector<4x4x128xf32>
    %c1_284 = arith.constant 1 : index
    %c8_285 = arith.constant 8 : index
    %c0_286 = arith.constant 0 : index
    %270 = vector.load %arg30[%c1_284, %c8_285, %c0_286] : memref<6x20x128xf32, #tpu.memory_space<vmem>>, vector<4x4x128xf32>
    tpu.vector_store %arg30[%c1_284, %c8_285, %c0_286], %269 {strides = array<i32>} : memref<6x20x128xf32, #tpu.memory_space<vmem>>, vector<4x4x128xf32>,
    %cst_287 = arith.constant 0.000000e+00 : f32
    %271 = vector.broadcast %cst_287 : f32 to vector<16x256xf32>
    %c0_288 = arith.constant 0 : index
    %c7_289 = arith.constant 7 : index
    %c0_290 = arith.constant 0 : index
    %272 = vector.load %arg30[%c0_288, %c7_289, %c0_290] : memref<6x20x128xf32, #tpu.memory_space<vmem>>, vector<4x4x128xf32>
    %273 = vector.shape_cast %272 : vector<4x4x128xf32> to vector<16x128xf32>
    %c0_291 = arith.constant 0 : index
    %c0_292 = arith.constant 0 : index
    %c0_293 = arith.constant 0 : index
    %274 = vector.load %arg18[%c0_291, %c0_292, %c0_293] : memref<9x128x256xf32, #tpu.memory_space<vmem>>, vector<1x128x256xf32>
    %275 = vector.shape_cast %274 : vector<1x128x256xf32> to vector<128x256xf32>
    %cst_294 = arith.constant dense<0.000000e+00> : vector<16x256xf32>
    %276 = tpu.matmul %273, %275, %cst_294 {dimension_numbers = #tpu.dot_dimension_numbers<[1], [0], [0], [1], [0, 0, 1, 1], [], []>} : vector<16x128xf32>, vector<128x256xf32>, vector<16x256xf32> -> vector<16x256xf32>
    %277 = arith.addf %271, %276 : vector<16x256xf32>
    %c0_295 = arith.constant 0 : index
    %c8_296 = arith.constant 8 : index
    %c0_297 = arith.constant 0 : index
    %278 = vector.load %arg30[%c0_295, %c8_296, %c0_297] : memref<6x20x128xf32, #tpu.memory_space<vmem>>, vector<4x4x128xf32>
    %279 = vector.shape_cast %278 : vector<4x4x128xf32> to vector<16x128xf32>
    %c1_298 = arith.constant 1 : index
    %c0_299 = arith.constant 0 : index
    %c0_300 = arith.constant 0 : index
    %280 = vector.load %arg18[%c1_298, %c0_299, %c0_300] : memref<9x128x256xf32, #tpu.memory_space<vmem>>, vector<1x128x256xf32>
    %281 = vector.shape_cast %280 : vector<1x128x256xf32> to vector<128x256xf32>
    %cst_301 = arith.constant dense<0.000000e+00> : vector<16x256xf32>
    %282 = tpu.matmul %279, %281, %cst_301 {dimension_numbers = #tpu.dot_dimension_numbers<[1], [0], [0], [1], [0, 0, 1, 1], [], []>} : vector<16x128xf32>, vector<128x256xf32>, vector<16x256xf32> -> vector<16x256xf32>
    %283 = arith.addf %277, %282 : vector<16x256xf32>
    %c0_302 = arith.constant 0 : index
    %c9_303 = arith.constant 9 : index
    %c0_304 = arith.constant 0 : index
    %284 = vector.load %arg30[%c0_302, %c9_303, %c0_304] : memref<6x20x128xf32, #tpu.memory_space<vmem>>, vector<4x4x128xf32>
    %285 = vector.shape_cast %284 : vector<4x4x128xf32> to vector<16x128xf32>
    %c2_305 = arith.constant 2 : index
    %c0_306 = arith.constant 0 : index
    %c0_307 = arith.constant 0 : index
    %286 = vector.load %arg18[%c2_305, %c0_306, %c0_307] : memref<9x128x256xf32, #tpu.memory_space<vmem>>, vector<1x128x256xf32>
    %287 = vector.shape_cast %286 : vector<1x128x256xf32> to vector<128x256xf32>
    %cst_308 = arith.constant dense<0.000000e+00> : vector<16x256xf32>
    %288 = tpu.matmul %285, %287, %cst_308 {dimension_numbers = #tpu.dot_dimension_numbers<[1], [0], [0], [1], [0, 0, 1, 1], [], []>} : vector<16x128xf32>, vector<128x256xf32>, vector<16x256xf32> -> vector<16x256xf32>
    %289 = arith.addf %283, %288 : vector<16x256xf32>
    %c1_309 = arith.constant 1 : index
    %c7_310 = arith.constant 7 : index
    %c0_311 = arith.constant 0 : index
    %290 = vector.load %arg30[%c1_309, %c7_310, %c0_311] : memref<6x20x128xf32, #tpu.memory_space<vmem>>, vector<4x4x128xf32>
    %291 = vector.shape_cast %290 : vector<4x4x128xf32> to vector<16x128xf32>
    %c3_312 = arith.constant 3 : index
    %c0_313 = arith.constant 0 : index
    %c0_314 = arith.constant 0 : index
    %292 = vector.load %arg18[%c3_312, %c0_313, %c0_314] : memref<9x128x256xf32, #tpu.memory_space<vmem>>, vector<1x128x256xf32>
    %293 = vector.shape_cast %292 : vector<1x128x256xf32> to vector<128x256xf32>
    %cst_315 = arith.constant dense<0.000000e+00> : vector<16x256xf32>
    %294 = tpu.matmul %291, %293, %cst_315 {dimension_numbers = #tpu.dot_dimension_numbers<[1], [0], [0], [1], [0, 0, 1, 1], [], []>} : vector<16x128xf32>, vector<128x256xf32>, vector<16x256xf32> -> vector<16x256xf32>
    %295 = arith.addf %289, %294 : vector<16x256xf32>
    %c1_316 = arith.constant 1 : index
    %c8_317 = arith.constant 8 : index
    %c0_318 = arith.constant 0 : index
    %296 = vector.load %arg30[%c1_316, %c8_317, %c0_318] : memref<6x20x128xf32, #tpu.memory_space<vmem>>, vector<4x4x128xf32>
    %297 = vector.shape_cast %296 : vector<4x4x128xf32> to vector<16x128xf32>
    %c4_319 = arith.constant 4 : index
    %c0_320 = arith.constant 0 : index
    %c0_321 = arith.constant 0 : index
    %298 = vector.load %arg18[%c4_319, %c0_320, %c0_321] : memref<9x128x256xf32, #tpu.memory_space<vmem>>, vector<1x128x256xf32>
    %299 = vector.shape_cast %298 : vector<1x128x256xf32> to vector<128x256xf32>
    %cst_322 = arith.constant dense<0.000000e+00> : vector<16x256xf32>
    %300 = tpu.matmul %297, %299, %cst_322 {dimension_numbers = #tpu.dot_dimension_numbers<[1], [0], [0], [1], [0, 0, 1, 1], [], []>} : vector<16x128xf32>, vector<128x256xf32>, vector<16x256xf32> -> vector<16x256xf32>
    %301 = arith.addf %295, %300 : vector<16x256xf32>
    %c1_323 = arith.constant 1 : index
    %c9_324 = arith.constant 9 : index
    %c0_325 = arith.constant 0 : index
    %302 = vector.load %arg30[%c1_323, %c9_324, %c0_325] : memref<6x20x128xf32, #tpu.memory_space<vmem>>, vector<4x4x128xf32>
    %303 = vector.shape_cast %302 : vector<4x4x128xf32> to vector<16x128xf32>
    %c5_326 = arith.constant 5 : index
    %c0_327 = arith.constant 0 : index
    %c0_328 = arith.constant 0 : index
    %304 = vector.load %arg18[%c5_326, %c0_327, %c0_328] : memref<9x128x256xf32, #tpu.memory_space<vmem>>, vector<1x128x256xf32>
    %305 = vector.shape_cast %304 : vector<1x128x256xf32> to vector<128x256xf32>
    %cst_329 = arith.constant dense<0.000000e+00> : vector<16x256xf32>
    %306 = tpu.matmul %303, %305, %cst_329 {dimension_numbers = #tpu.dot_dimension_numbers<[1], [0], [0], [1], [0, 0, 1, 1], [], []>} : vector<16x128xf32>, vector<128x256xf32>, vector<16x256xf32> -> vector<16x256xf32>
    %307 = arith.addf %301, %306 : vector<16x256xf32>
    %c2_330 = arith.constant 2 : index
    %c7_331 = arith.constant 7 : index
    %c0_332 = arith.constant 0 : index
    %308 = vector.load %arg30[%c2_330, %c7_331, %c0_332] : memref<6x20x128xf32, #tpu.memory_space<vmem>>, vector<4x4x128xf32>
    %309 = vector.shape_cast %308 : vector<4x4x128xf32> to vector<16x128xf32>
    %c6_333 = arith.constant 6 : index
    %c0_334 = arith.constant 0 : index
    %c0_335 = arith.constant 0 : index
    %310 = vector.load %arg18[%c6_333, %c0_334, %c0_335] : memref<9x128x256xf32, #tpu.memory_space<vmem>>, vector<1x128x256xf32>
    %311 = vector.shape_cast %310 : vector<1x128x256xf32> to vector<128x256xf32>
    %cst_336 = arith.constant dense<0.000000e+00> : vector<16x256xf32>
    %312 = tpu.matmul %309, %311, %cst_336 {dimension_numbers = #tpu.dot_dimension_numbers<[1], [0], [0], [1], [0, 0, 1, 1], [], []>} : vector<16x128xf32>, vector<128x256xf32>, vector<16x256xf32> -> vector<16x256xf32>
    %313 = arith.addf %307, %312 : vector<16x256xf32>
    %c2_337 = arith.constant 2 : index
    %c8_338 = arith.constant 8 : index
    %c0_339 = arith.constant 0 : index
    %314 = vector.load %arg30[%c2_337, %c8_338, %c0_339] : memref<6x20x128xf32, #tpu.memory_space<vmem>>, vector<4x4x128xf32>
    %315 = vector.shape_cast %314 : vector<4x4x128xf32> to vector<16x128xf32>
    %c7_340 = arith.constant 7 : index
    %c0_341 = arith.constant 0 : index
    %c0_342 = arith.constant 0 : index
    %316 = vector.load %arg18[%c7_340, %c0_341, %c0_342] : memref<9x128x256xf32, #tpu.memory_space<vmem>>, vector<1x128x256xf32>
    %317 = vector.shape_cast %316 : vector<1x128x256xf32> to vector<128x256xf32>
    %cst_343 = arith.constant dense<0.000000e+00> : vector<16x256xf32>
    %318 = tpu.matmul %315, %317, %cst_343 {dimension_numbers = #tpu.dot_dimension_numbers<[1], [0], [0], [1], [0, 0, 1, 1], [], []>} : vector<16x128xf32>, vector<128x256xf32>, vector<16x256xf32> -> vector<16x256xf32>
    %319 = arith.addf %313, %318 : vector<16x256xf32>
    %c2_344 = arith.constant 2 : index
    %c9_345 = arith.constant 9 : index
    %c0_346 = arith.constant 0 : index
    %320 = vector.load %arg30[%c2_344, %c9_345, %c0_346] : memref<6x20x128xf32, #tpu.memory_space<vmem>>, vector<4x4x128xf32>
    %321 = vector.shape_cast %320 : vector<4x4x128xf32> to vector<16x128xf32>
    %c8_347 = arith.constant 8 : index
    %c0_348 = arith.constant 0 : index
    %c0_349 = arith.constant 0 : index
    %322 = vector.load %arg18[%c8_347, %c0_348, %c0_349] : memref<9x128x256xf32, #tpu.memory_space<vmem>>, vector<1x128x256xf32>
    %323 = vector.shape_cast %322 : vector<1x128x256xf32> to vector<128x256xf32>
    %cst_350 = arith.constant dense<0.000000e+00> : vector<16x256xf32>
    %324 = tpu.matmul %321, %323, %cst_350 {dimension_numbers = #tpu.dot_dimension_numbers<[1], [0], [0], [1], [0, 0, 1, 1], [], []>} : vector<16x128xf32>, vector<128x256xf32>, vector<16x256xf32> -> vector<16x256xf32>
    %325 = arith.addf %319, %324 : vector<16x256xf32>
    %c0_351 = arith.constant 0 : index
    %c0_352 = arith.constant 0 : index
    %326 = vector.load %arg19[%c0_351, %c0_352] : memref<1x256xf32, #tpu.memory_space<vmem>>, vector<1x256xf32>
    %327 = vector.broadcast %326 : vector<1x256xf32> to vector<16x256xf32>
    %328 = arith.addf %325, %327 : vector<16x256xf32>
    %c0_353 = arith.constant 0 : index
    %c0_354 = arith.constant 0 : index
    %c0_355 = arith.constant 0 : index
    %329 = vector.load %arg26[%c0_353, %c0_354, %c0_355] : memref<1x16x256xf32, #tpu.memory_space<vmem>>, vector<1x16x256xf32>
    %330 = vector.shape_cast %329 : vector<1x16x256xf32> to vector<16x256xf32>
    %331 = vector.shape_cast %328 : vector<16x256xf32> to vector<1x16x256xf32>
    tpu.vector_store %arg26[%c0_353, %c0_354, %c0_355], %331 {strides = array<i32>} : memref<1x16x256xf32, #tpu.memory_space<vmem>>, vector<1x16x256xf32>,
    return
  }
  func.func @transform_0(%arg0: i32) -> (i32, i32, i32) {
    %c0_i32 = arith.constant 0 : i32
    %c0_i32_0 = arith.constant 0 : i32
    %c0_i32_1 = arith.constant 0 : i32
    return %arg0, %c0_i32, %c0_i32_0 : i32, i32, i32
  }
  func.func @transform_1(%arg0: i32) -> (i32, i32) {
    %c0_i32 = arith.constant 0 : i32
    %c0_i32_0 = arith.constant 0 : i32
    %c0_i32_1 = arith.constant 0 : i32
    return %c0_i32, %c0_i32_0 : i32, i32
  }
  func.func @transform_2(%arg0: i32) -> (i32, i32) {
    %c0_i32 = arith.constant 0 : i32
    %c0_i32_0 = arith.constant 0 : i32
    %c0_i32_1 = arith.constant 0 : i32
    return %c0_i32, %c0_i32_0 : i32, i32
  }
  func.func @transform_3(%arg0: i32) -> (i32, i32) {
    %c0_i32 = arith.constant 0 : i32
    %c0_i32_0 = arith.constant 0 : i32
    %c0_i32_1 = arith.constant 0 : i32
    return %c0_i32, %c0_i32_0 : i32, i32
  }
  func.func @transform_4(%arg0: i32) -> (i32, i32) {
    %c0_i32 = arith.constant 0 : i32
    %c0_i32_0 = arith.constant 0 : i32
    %c0_i32_1 = arith.constant 0 : i32
    return %c0_i32, %c0_i32_0 : i32, i32
  }
  func.func @transform_5(%arg0: i32) -> (i32, i32, i32) {
    %c0_i32 = arith.constant 0 : i32
    %c0_i32_0 = arith.constant 0 : i32
    %c0_i32_1 = arith.constant 0 : i32
    %c0_i32_2 = arith.constant 0 : i32
    return %c0_i32, %c0_i32_0, %c0_i32_1 : i32, i32, i32
  }
  func.func @transform_6(%arg0: i32) -> (i32, i32) {
    %c0_i32 = arith.constant 0 : i32
    %c0_i32_0 = arith.constant 0 : i32
    %c0_i32_1 = arith.constant 0 : i32
    return %c0_i32, %c0_i32_0 : i32, i32
  }
  func.func @transform_7(%arg0: i32) -> (i32, i32) {
    %c0_i32 = arith.constant 0 : i32
    %c0_i32_0 = arith.constant 0 : i32
    %c0_i32_1 = arith.constant 0 : i32
    return %c0_i32, %c0_i32_0 : i32, i32
  }
  func.func @transform_8(%arg0: i32) -> (i32, i32) {
    %c0_i32 = arith.constant 0 : i32
    %c0_i32_0 = arith.constant 0 : i32
    %c0_i32_1 = arith.constant 0 : i32
    return %c0_i32, %c0_i32_0 : i32, i32
  }
  func.func @transform_9(%arg0: i32) -> (i32, i32, i32) {
    %c0_i32 = arith.constant 0 : i32
    %c0_i32_0 = arith.constant 0 : i32
    %c0_i32_1 = arith.constant 0 : i32
    %c0_i32_2 = arith.constant 0 : i32
    return %c0_i32, %c0_i32_0, %c0_i32_1 : i32, i32, i32
  }
  func.func @transform_10(%arg0: i32) -> (i32, i32) {
    %c0_i32 = arith.constant 0 : i32
    %c0_i32_0 = arith.constant 0 : i32
    %c0_i32_1 = arith.constant 0 : i32
    return %c0_i32, %c0_i32_0 : i32, i32
  }
  func.func @transform_11(%arg0: i32) -> (i32, i32) {
    %c0_i32 = arith.constant 0 : i32
    %c0_i32_0 = arith.constant 0 : i32
    %c0_i32_1 = arith.constant 0 : i32
    return %c0_i32, %c0_i32_0 : i32, i32
  }
  func.func @transform_12(%arg0: i32) -> (i32, i32) {
    %c0_i32 = arith.constant 0 : i32
    %c0_i32_0 = arith.constant 0 : i32
    %c0_i32_1 = arith.constant 0 : i32
    return %c0_i32, %c0_i32_0 : i32, i32
  }
  func.func @transform_13(%arg0: i32) -> (i32, i32, i32) {
    %c0_i32 = arith.constant 0 : i32
    %c0_i32_0 = arith.constant 0 : i32
    %c0_i32_1 = arith.constant 0 : i32
    %c0_i32_2 = arith.constant 0 : i32
    return %c0_i32, %c0_i32_0, %c0_i32_1 : i32, i32, i32
  }
  func.func @transform_14(%arg0: i32) -> (i32, i32) {
    %c0_i32 = arith.constant 0 : i32
    %c0_i32_0 = arith.constant 0 : i32
    %c0_i32_1 = arith.constant 0 : i32
    return %c0_i32, %c0_i32_0 : i32, i32
  }
  func.func @transform_15(%arg0: i32) -> (i32, i32) {
    %c0_i32 = arith.constant 0 : i32
    %c0_i32_0 = arith.constant 0 : i32
    %c0_i32_1 = arith.constant 0 : i32
    return %c0_i32, %c0_i32_0 : i32, i32
  }
  func.func @transform_16(%arg0: i32) -> (i32, i32) {
    %c0_i32 = arith.constant 0 : i32
    %c0_i32_0 = arith.constant 0 : i32
    %c0_i32_1 = arith.constant 0 : i32
    return %c0_i32, %c0_i32_0 : i32, i32
  }
  func.func @transform_17(%arg0: i32) -> (i32, i32, i32) {
    %c0_i32 = arith.constant 0 : i32
    %c0_i32_0 = arith.constant 0 : i32
    %c0_i32_1 = arith.constant 0 : i32
    %c0_i32_2 = arith.constant 0 : i32
    return %c0_i32, %c0_i32_0, %c0_i32_1 : i32, i32, i32
  }
  func.func @transform_18(%arg0: i32) -> (i32, i32) {
    %c0_i32 = arith.constant 0 : i32
    %c0_i32_0 = arith.constant 0 : i32
    %c0_i32_1 = arith.constant 0 : i32
    return %c0_i32, %c0_i32_0 : i32, i32
  }
  func.func @transform_19(%arg0: i32) -> (i32, i32, i32) {
    %c0_i32 = arith.constant 0 : i32
    %c0_i32_0 = arith.constant 0 : i32
    %c0_i32_1 = arith.constant 0 : i32
    %c0_i32_2 = arith.constant 0 : i32
    return %c0_i32, %c0_i32_0, %c0_i32_1 : i32, i32, i32
  }
  func.func @transform_20(%arg0: i32) -> (i32, i32, i32) {
    %c0_i32 = arith.constant 0 : i32
    %c0_i32_0 = arith.constant 0 : i32
    %c0_i32_1 = arith.constant 0 : i32
    %c0_i32_2 = arith.constant 0 : i32
    return %c0_i32, %c0_i32_0, %c0_i32_1 : i32, i32, i32
  }
  func.func @transform_21(%arg0: i32) -> (i32, i32, i32) {
    %c0_i32 = arith.constant 0 : i32
    %c0_i32_0 = arith.constant 0 : i32
    %c0_i32_1 = arith.constant 0 : i32
    return %arg0, %c0_i32, %c0_i32_0 : i32, i32, i32
  }
  func.func @transform_22(%arg0: i32) -> (i32, i32, i32) {
    %c0_i32 = arith.constant 0 : i32
    %c0_i32_0 = arith.constant 0 : i32
    %c0_i32_1 = arith.constant 0 : i32
    return %arg0, %c0_i32, %c0_i32_0 : i32, i32, i32
  }
  func.func @transform_23(%arg0: i32) -> (i32, i32, i32) {
    %c0_i32 = arith.constant 0 : i32
    %c0_i32_0 = arith.constant 0 : i32
    %c0_i32_1 = arith.constant 0 : i32
    return %arg0, %c0_i32, %c0_i32_0 : i32, i32, i32
  }
  func.func @transform_24(%arg0: i32) -> (i32, i32, i32) {
    %c0_i32 = arith.constant 0 : i32
    %c0_i32_0 = arith.constant 0 : i32
    %c0_i32_1 = arith.constant 0 : i32
    return %arg0, %c0_i32, %c0_i32_0 : i32, i32, i32
  }
  func.func @transform_25(%arg0: i32) -> (i32, i32, i32) {
    %c0_i32 = arith.constant 0 : i32
    %c0_i32_0 = arith.constant 0 : i32
    %c0_i32_1 = arith.constant 0 : i32
    return %arg0, %c0_i32, %c0_i32_0 : i32, i32, i32
  }
}

</mosaic_0001>

<llo_original>
// kernel: similarity_vgg_bn_forward.1
$region0: #{similarity_vgg_bn_forward.1}
  #allocation0 [shape = 'u32[]', space=smem, size = 0x4, offset = 0x4, fixed_abs, tag = 'smem constant byte address 0x4 - core index']
  #allocation1 [shape = 'u32[144,128]{1,0:T(1,128)}', space=vmem, size = 0x12000, scoped, tag = 'internal scratch']
  #allocation2 [shape = 'f32[18,32,64]{2,1,0:T(8,128)}', space=vmem, size = 0x48000, scoped, tag = 'scratch operand']
  #allocation3 [shape = 'f32[10,24,64]{2,1,0:T(8,128)}', space=vmem, size = 0x1e000, scoped, tag = 'scratch operand']
  #allocation4 [shape = 'f32[10,24,128]{2,1,0:T(8,128)}', space=vmem, size = 0x1e000, scoped, tag = 'scratch operand']
  #allocation5 [shape = 'f32[6,20,128]{2,1,0:T(8,128)}', space=vmem, size = 0x12000, scoped, tag = 'scratch operand']
  %s0 = inlined_call_operand.vmem [shape: f32[2,256,32], index: 0, kind: input, shape index: {}]
  %s1 = inlined_call_operand.vmem [shape: f32[32,64], index: 1, kind: input, shape index: {}]
  %s2 = inlined_call_operand.vmem [shape: f32[1,64], index: 2, kind: input, shape index: {}]
  %s3 = inlined_call_operand.vmem [shape: f32[1,64], index: 3, kind: input, shape index: {}]
  %s4 = inlined_call_operand.vmem [shape: f32[1,64], index: 4, kind: input, shape index: {}]
  %s5 = inlined_call_operand.vmem [shape: f32[9,64,64], index: 5, kind: input, shape index: {}]
  %s6 = inlined_call_operand.vmem [shape: f32[1,64], index: 6, kind: input, shape index: {}]
  %s7 = inlined_call_operand.vmem [shape: f32[1,64], index: 7, kind: input, shape index: {}]
  %s8 = inlined_call_operand.vmem [shape: f32[1,64], index: 8, kind: input, shape index: {}]
  %s9 = inlined_call_operand.hbm [shape: f32[9,64,128], index: 9, kind: input, shape index: {}]
  %s10 = inlined_call_operand.vmem [shape: f32[1,128], index: 10, kind: input, shape index: {}]
  %s11 = inlined_call_operand.vmem [shape: f32[1,128], index: 11, kind: input, shape index: {}]
  %s12 = inlined_call_operand.vmem [shape: f32[1,128], index: 12, kind: input, shape index: {}]
  %s13 = inlined_call_operand.vmem [shape: f32[9,128,128], index: 13, kind: input, shape index: {}]
  %s14 = inlined_call_operand.vmem [shape: f32[1,128], index: 14, kind: input, shape index: {}]
  %s15 = inlined_call_operand.vmem [shape: f32[1,128], index: 15, kind: input, shape index: {}]
  %s16 = inlined_call_operand.vmem [shape: f32[1,128], index: 16, kind: input, shape index: {}]
  %s17 = inlined_call_operand.vmem [shape: f32[9,128,256], index: 17, kind: input, shape index: {}]
  %s18 = inlined_call_operand.vmem [shape: f32[1,256], index: 18, kind: input, shape index: {}]
  %s19 = inlined_call_operand.hbm [shape: f32[4,64,256], index: 19, kind: input, shape index: {}]
  %s20 = inlined_call_operand.vmem [shape: f32[4,16,64], index: 20, kind: input, shape index: {}]
  %s21 = inlined_call_operand.hbm [shape: f32[2,256,64], index: 21, kind: output, shape index: {0}]
  %s22 = inlined_call_operand.hbm [shape: f32[2,256,64], index: 22, kind: output, shape index: {1}]
  %s23 = inlined_call_operand.hbm [shape: f32[2,64,128], index: 23, kind: output, shape index: {2}]
  %s24 = inlined_call_operand.hbm [shape: f32[2,64,128], index: 24, kind: output, shape index: {3}]
  %s25 = inlined_call_operand.vmem [shape: f32[2,16,256], index: 25, kind: output, shape index: {4}]
  %26 = xla_tuple %s21, %s22, %s23, %s24, %s25
  %s27 = sld [smem:[#allocation0]]
  $region157: #{similarity_vgg_bn_forward.1} parent=0
    _
  %s29 = ssub.s32 1, %s27
  %s30 = scalar_select 0, %s29, %s27
  $region1: #{similarity_vgg_bn_forward.1} parent=0
    #allocation6 [shape = 'u8[294912]{0}', space=vmem, size = 0x48000, scoped, tag = 'input window, operand 9, single buffered']
    #allocation7 [shape = 's32[2]{0}', space=sflag, size = 0x8, scoped, tag = 'scoped memory for similarity_vgg_bn_forward.1']
    #allocation8 [shape = 's32[2]{0}', space=sflag, size = 0x8, scoped, tag = 'scoped memory for similarity_vgg_bn_forward.1']
    #allocation9 [shape = 'u8[262144]{0}', space=vmem, size = 0x40000, scoped, tag = 'input window, operand 19, single buffered']
    #allocation10 [shape = 's32[1]{0}', space=sflag, size = 0x4, scoped, tag = 'scoped memory for similarity_vgg_bn_forward.1']
    #allocation11 [shape = 'u8[262144]{0}', space=vmem, size = 0x40000, scoped, tag = 'output window, operand 0']
    #allocation12 [shape = 'u8[262144]{0}', space=vmem, size = 0x40000, scoped, tag = 'output window, operand 1']
    #allocation13 [shape = 's32[2]{0}', space=sflag, size = 0x8, scoped, tag = 'scoped memory for similarity_vgg_bn_forward.1']
    #allocation14 [shape = 'u8[65536]{0}', space=vmem, size = 0x10000, scoped, tag = 'output window, operand 2']
    #allocation15 [shape = 'u8[65536]{0}', space=vmem, size = 0x10000, scoped, tag = 'output window, operand 3']
    #allocation16 [shape = 's32[2]{0}', space=sflag, size = 0x8, scoped, tag = 'scoped memory for similarity_vgg_bn_forward.1']
    %31 = vsyncpa [#allocation7], 0
    %32 = vsyncpa [#allocation10], 0
    %33 = vsyncpa [#allocation8], 0
    %s34 = scalar_lea.sflag [#allocation8], 1
    %35 = vsyncpa %s34, 0
    %36 = vsyncpa [#allocation13], 0
    %s37 = scalar_lea.sflag [#allocation13], 1
    %38 = vsyncpa %s37, 0
    %39 = vsyncpa [#allocation16], 0
    %s40 = scalar_lea.sflag [#allocation16], 1
    %41 = vsyncpa %s40, 0
    loop: start=0, step=1, limit=4
    $region2: #{similarity_vgg_bn_forward.1} parent=1 // loop_pre_header
      _
    $region3: #{similarity_vgg_bn_forward.1} parent=1 // loop_header
      %s43 = sphi 0, %s47
      %p44 = scmp.ge.s32.totalorder %s43, 4
      %s53 = sphi 0, %s55
      %s56 = sphi 0, %s53
      %s57 = sphi 0, %s56
      %s73 = sphi 0, %s57
      %s77 = sphi 0, %s77
      %s79 = sphi 0, %s77
      %s80 = sphi 0, %s79
      %s94 = sphi 0, %s80
      %s98 = sphi 0, %s98
      %s100 = sphi 0, %s98
      %s101 = sphi 0, %s100
      %s115 = sphi 0, %s101
      %s119 = sphi 0, %s119
      %s121 = sphi 0, %s119
      %s122 = sphi 0, %s121
      %s136 = sphi 0, %s122
      %s140 = sphi 0, %s140
      %s142 = sphi 0, %s140
      %s143 = sphi 0, %s142
      %s157 = sphi 0, %s143
      %s161 = sphi 0, %s161
      %s163 = sphi 0, %s161
      %s164 = sphi 0, %s163
      %s178 = sphi 0, %s164
      %s182 = sphi 0, %s182
      %s184 = sphi 0, %s182
      %s185 = sphi 0, %s184
      %s199 = sphi 0, %s185
      %s203 = sphi 0, %s203
      %s205 = sphi 0, %s203
      %s206 = sphi 0, %s205
      %s220 = sphi 0, %s206
      %s224 = sphi 0, %s224
      %s226 = sphi 0, %s224
      %s227 = sphi 0, %s226
      %s241 = sphi 0, %s227
      %s245 = sphi 0, %s245
      %s247 = sphi 0, %s245
      %s248 = sphi 0, %s247
      %s262 = sphi 0, %s248
      %s266 = sphi 0, %s266
      %s268 = sphi 0, %s266
      %s269 = sphi 0, %s268
      %s283 = sphi 0, %s269
      %s287 = sphi 0, %s287
      %s289 = sphi 0, %s287
      %s290 = sphi 0, %s289
      %s304 = sphi 0, %s290
      %s308 = sphi 0, %s308
      %s310 = sphi 0, %s308
      %s311 = sphi 0, %s310
      %s325 = sphi 0, %s311
      %s329 = sphi 0, %s329
      %s331 = sphi 0, %s329
      %s332 = sphi 0, %s331
      %s346 = sphi 0, %s332
      %s350 = sphi 0, %s350
      %s352 = sphi 0, %s350
      %s353 = sphi 0, %s352
      %s367 = sphi 0, %s353
      %s371 = sphi 0, %s371
      %s373 = sphi 0, %s371
      %s374 = sphi 0, %s373
      %s388 = sphi 0, %s374
      %s392 = sphi 0, %s392
      %s394 = sphi 0, %s392
      %s395 = sphi 0, %s394
      %s409 = sphi 0, %s395
      %s413 = sphi 0, %s413
      %s415 = sphi 0, %s413
      %s416 = sphi 0, %s415
      %s430 = sphi 0, %s416
      %s434 = sphi 0, %s434
      %s436 = sphi 0, %s434
      %s437 = sphi 0, %s436
      %s451 = sphi 0, %s437
      %s455 = sphi 0, %s455
      %s457 = sphi 0, %s455
      %s458 = sphi 0, %s457
      %s472 = sphi 0, %s458
      %s476 = sphi 0, %s476
      %s478 = sphi 0, %s476
      %s479 = sphi 0, %s478
      %s493 = sphi 0, %s479
      %s499 = sphi 0, %s501
      %s502 = sphi 0, %s499
      %s503 = sphi 0, %s502
      %s519 = sphi 0, %s503
      %s525 = sphi 0, %s527
      %s528 = sphi 0, %s525
      %s529 = sphi 0, %s528
      %s545 = sphi 0, %s529
      %s551 = sphi 0, %s553
      %s554 = sphi 0, %s551
      %s555 = sphi 0, %s554
      %s571 = sphi 0, %s555
      %s577 = sphi 0, %s579
      %s580 = sphi 0, %s577
      %s581 = sphi 0, %s580
      %s597 = sphi 0, %s581
      %s603 = sphi 0, %s605
      %s606 = sphi 0, %s603
      %s607 = sphi 0, %s606
      %s623 = sphi 0, %s607
    $region4: #{similarity_vgg_bn_forward.1} parent=1 // loop_header_branch
      %46 = sbr.rel (%p44) target = $region8
    $region5: #{similarity_vgg_bn_forward.1} parent=1 // loop_body
      %s48 = ssub.s32 %s43, 1
      %s49 = ssub.s32 %s43, 2
      %s50 = sadd.s32 %s43, 1
      %s51 = ssub.s32 %s43, %s50
      %p52 = scmp.eq.s32.totalorder %s51, 0
      %s54 = sadd.s32 %s53, 1
      %s55 = scalar_select %p52, %s53, %s54
      %p58 = pneg %p52
      %p59 = scmp.eq.s32.totalorder %s43, 1
      %p60 = por %p58, %p59
      %p61 = scmp.ne.s32.totalorder %s53, %s56
      %p62 = scmp.eq.s32.totalorder %s43, 0
      %p63 = por %p61, %p62
      %p64 = scmp.ne.s32.totalorder %s53, %s56
      %p65 = scmp.eq.s32.totalorder %s48, 1
      %p66 = por %p64, %p65
      %p67 = scmp.ne.s32.totalorder %s56, %s57
      %p68 = scmp.eq.s32.totalorder %s48, 0
      %p69 = por %p67, %p68
      %p70 = scmp.ne.s32.totalorder %s56, %s57
      %p71 = scmp.eq.s32.totalorder %s49, 1
      %p72 = por %p70, %p71
      %p74 = scmp.ne.s32.totalorder %s57, %s73
      %p75 = scmp.eq.s32.totalorder %s49, 0
      %p76 = por %p74, %p75
      %s78 = sadd.s32 %s77, 1
      %p81 = scmp.eq.s32.totalorder %s43, 1
      %p82 = scmp.ne.s32.totalorder %s77, %s79
      %p83 = scmp.eq.s32.totalorder %s43, 0
      %p84 = por %p82, %p83
      %p85 = scmp.ne.s32.totalorder %s77, %s79
      %p86 = scmp.eq.s32.totalorder %s48, 1
      %p87 = por %p85, %p86
      %p88 = scmp.ne.s32.totalorder %s79, %s80
      %p89 = scmp.eq.s32.totalorder %s48, 0
      %p90 = por %p88, %p89
      %p91 = scmp.ne.s32.totalorder %s79, %s80
      %p92 = scmp.eq.s32.totalorder %s49, 1
      %p93 = por %p91, %p92
      %p95 = scmp.ne.s32.totalorder %s80, %s94
      %p96 = scmp.eq.s32.totalorder %s49, 0
      %p97 = por %p95, %p96
      %s99 = sadd.s32 %s98, 1
      %p102 = scmp.eq.s32.totalorder %s43, 1
      %p103 = scmp.ne.s32.totalorder %s98, %s100
      %p104 = scmp.eq.s32.totalorder %s43, 0
      %p105 = por %p103, %p104
      %p106 = scmp.ne.s32.totalorder %s98, %s100
      %p107 = scmp.eq.s32.totalorder %s48, 1
      %p108 = por %p106, %p107
      %p109 = scmp.ne.s32.totalorder %s100, %s101
      %p110 = scmp.eq.s32.totalorder %s48, 0
      %p111 = por %p109, %p110
      %p112 = scmp.ne.s32.totalorder %s100, %s101
      %p113 = scmp.eq.s32.totalorder %s49, 1
      %p114 = por %p112, %p113
      %p116 = scmp.ne.s32.totalorder %s101, %s115
      %p117 = scmp.eq.s32.totalorder %s49, 0
      %p118 = por %p116, %p117
      %s120 = sadd.s32 %s119, 1
      %p123 = scmp.eq.s32.totalorder %s43, 1
      %p124 = scmp.ne.s32.totalorder %s119, %s121
      %p125 = scmp.eq.s32.totalorder %s43, 0
      %p126 = por %p124, %p125
      %p127 = scmp.ne.s32.totalorder %s119, %s121
      %p128 = scmp.eq.s32.totalorder %s48, 1
      %p129 = por %p127, %p128
      %p130 = scmp.ne.s32.totalorder %s121, %s122
      %p131 = scmp.eq.s32.totalorder %s48, 0
      %p132 = por %p130, %p131
      %p133 = scmp.ne.s32.totalorder %s121, %s122
      %p134 = scmp.eq.s32.totalorder %s49, 1
      %p135 = por %p133, %p134
      %p137 = scmp.ne.s32.totalorder %s122, %s136
      %p138 = scmp.eq.s32.totalorder %s49, 0
      %p139 = por %p137, %p138
      %s141 = sadd.s32 %s140, 1
      %p144 = scmp.eq.s32.totalorder %s43, 1
      %p145 = scmp.ne.s32.totalorder %s140, %s142
      %p146 = scmp.eq.s32.totalorder %s43, 0
      %p147 = por %p145, %p146
      %p148 = scmp.ne.s32.totalorder %s140, %s142
      %p149 = scmp.eq.s32.totalorder %s48, 1
      %p150 = por %p148, %p149
      %p151 = scmp.ne.s32.totalorder %s142, %s143
      %p152 = scmp.eq.s32.totalorder %s48, 0
      %p153 = por %p151, %p152
      %p154 = scmp.ne.s32.totalorder %s142, %s143
      %p155 = scmp.eq.s32.totalorder %s49, 1
      %p156 = por %p154, %p155
      %p158 = scmp.ne.s32.totalorder %s143, %s157
      %p159 = scmp.eq.s32.totalorder %s49, 0
      %p160 = por %p158, %p159
      %s162 = sadd.s32 %s161, 1
      %p165 = scmp.eq.s32.totalorder %s43, 1
      %p166 = scmp.ne.s32.totalorder %s161, %s163
      %p167 = scmp.eq.s32.totalorder %s43, 0
      %p168 = por %p166, %p167
      %p169 = scmp.ne.s32.totalorder %s161, %s163
      %p170 = scmp.eq.s32.totalorder %s48, 1
      %p171 = por %p169, %p170
      %p172 = scmp.ne.s32.totalorder %s163, %s164
      %p173 = scmp.eq.s32.totalorder %s48, 0
      %p174 = por %p172, %p173
      %p175 = scmp.ne.s32.totalorder %s163, %s164
      %p176 = scmp.eq.s32.totalorder %s49, 1
      %p177 = por %p175, %p176
      %p179 = scmp.ne.s32.totalorder %s164, %s178
      %p180 = scmp.eq.s32.totalorder %s49, 0
      %p181 = por %p179, %p180
      %s183 = sadd.s32 %s182, 1
      %p186 = scmp.eq.s32.totalorder %s43, 1
      %p187 = scmp.ne.s32.totalorder %s182, %s184
      %p188 = scmp.eq.s32.totalorder %s43, 0
      %p189 = por %p187, %p188
      %p190 = scmp.ne.s32.totalorder %s182, %s184
      %p191 = scmp.eq.s32.totalorder %s48, 1
      %p192 = por %p190, %p191
      %p193 = scmp.ne.s32.totalorder %s184, %s185
      %p194 = scmp.eq.s32.totalorder %s48, 0
      %p195 = por %p193, %p194
      %p196 = scmp.ne.s32.totalorder %s184, %s185
      %p197 = scmp.eq.s32.totalorder %s49, 1
      %p198 = por %p196, %p197
      %p200 = scmp.ne.s32.totalorder %s185, %s199
      %p201 = scmp.eq.s32.totalorder %s49, 0
      %p202 = por %p200, %p201
      %s204 = sadd.s32 %s203, 1
      %p207 = scmp.eq.s32.totalorder %s43, 1
      %p208 = scmp.ne.s32.totalorder %s203, %s205
      %p209 = scmp.eq.s32.totalorder %s43, 0
      %p210 = por %p208, %p209
      %p211 = scmp.ne.s32.totalorder %s203, %s205
      %p212 = scmp.eq.s32.totalorder %s48, 1
      %p213 = por %p211, %p212
      %p214 = scmp.ne.s32.totalorder %s205, %s206
      %p215 = scmp.eq.s32.totalorder %s48, 0
      %p216 = por %p214, %p215
      %p217 = scmp.ne.s32.totalorder %s205, %s206
      %p218 = scmp.eq.s32.totalorder %s49, 1
      %p219 = por %p217, %p218
      %p221 = scmp.ne.s32.totalorder %s206, %s220
      %p222 = scmp.eq.s32.totalorder %s49, 0
      %p223 = por %p221, %p222
      %s225 = sadd.s32 %s224, 1
      %p228 = scmp.eq.s32.totalorder %s43, 1
      %p229 = scmp.ne.s32.totalorder %s224, %s226
      %p230 = scmp.eq.s32.totalorder %s43, 0
      %p231 = por %p229, %p230
      %p232 = scmp.ne.s32.totalorder %s224, %s226
      %p233 = scmp.eq.s32.totalorder %s48, 1
      %p234 = por %p232, %p233
      %p235 = scmp.ne.s32.totalorder %s226, %s227
      %p236 = scmp.eq.s32.totalorder %s48, 0
      %p237 = por %p235, %p236
      %p238 = scmp.ne.s32.totalorder %s226, %s227
      %p239 = scmp.eq.s32.totalorder %s49, 1
      %p240 = por %p238, %p239
      %p242 = scmp.ne.s32.totalorder %s227, %s241
      %p243 = scmp.eq.s32.totalorder %s49, 0
      %p244 = por %p242, %p243
      %s246 = sadd.s32 %s245, 1
      %p249 = scmp.eq.s32.totalorder %s43, 1
      %p250 = scmp.ne.s32.totalorder %s245, %s247
      %p251 = scmp.eq.s32.totalorder %s43, 0
      %p252 = por %p250, %p251
      %p253 = scmp.ne.s32.totalorder %s245, %s247
      %p254 = scmp.eq.s32.totalorder %s48, 1
      %p255 = por %p253, %p254
      %p256 = scmp.ne.s32.totalorder %s247, %s248
      %p257 = scmp.eq.s32.totalorder %s48, 0
      %p258 = por %p256, %p257
      %p259 = scmp.ne.s32.totalorder %s247, %s248
      %p260 = scmp.eq.s32.totalorder %s49, 1
      %p261 = por %p259, %p260
      %p263 = scmp.ne.s32.totalorder %s248, %s262
      %p264 = scmp.eq.s32.totalorder %s49, 0
      %p265 = por %p263, %p264
      %s267 = sadd.s32 %s266, 1
      %p270 = scmp.eq.s32.totalorder %s43, 1
      %p271 = scmp.ne.s32.totalorder %s266, %s268
      %p272 = scmp.eq.s32.totalorder %s43, 0
      %p273 = por %p271, %p272
      %p274 = scmp.ne.s32.totalorder %s266, %s268
      %p275 = scmp.eq.s32.totalorder %s48, 1
      %p276 = por %p274, %p275
      %p277 = scmp.ne.s32.totalorder %s268, %s269
      %p278 = scmp.eq.s32.totalorder %s48, 0
      %p279 = por %p277, %p278
      %p280 = scmp.ne.s32.totalorder %s268, %s269
      %p281 = scmp.eq.s32.totalorder %s49, 1
      %p282 = por %p280, %p281
      %p284 = scmp.ne.s32.totalorder %s269, %s283
      %p285 = scmp.eq.s32.totalorder %s49, 0
      %p286 = por %p284, %p285
      %s288 = sadd.s32 %s287, 1
      %p291 = scmp.eq.s32.totalorder %s43, 1
      %p292 = scmp.ne.s32.totalorder %s287, %s289
      %p293 = scmp.eq.s32.totalorder %s43, 0
      %p294 = por %p292, %p293
      %p295 = scmp.ne.s32.totalorder %s287, %s289
      %p296 = scmp.eq.s32.totalorder %s48, 1
      %p297 = por %p295, %p296
      %p298 = scmp.ne.s32.totalorder %s289, %s290
      %p299 = scmp.eq.s32.totalorder %s48, 0
      %p300 = por %p298, %p299
      %p301 = scmp.ne.s32.totalorder %s289, %s290
      %p302 = scmp.eq.s32.totalorder %s49, 1
      %p303 = por %p301, %p302
      %p305 = scmp.ne.s32.totalorder %s290, %s304
      %p306 = scmp.eq.s32.totalorder %s49, 0
      %p307 = por %p305, %p306
      %s309 = sadd.s32 %s308, 1
      %p312 = scmp.eq.s32.totalorder %s43, 1
      %p313 = scmp.ne.s32.totalorder %s308, %s310
      %p314 = scmp.eq.s32.totalorder %s43, 0
      %p315 = por %p313, %p314
      %p316 = scmp.ne.s32.totalorder %s308, %s310
      %p317 = scmp.eq.s32.totalorder %s48, 1
      %p318 = por %p316, %p317
      %p319 = scmp.ne.s32.totalorder %s310, %s311
      %p320 = scmp.eq.s32.totalorder %s48, 0
      %p321 = por %p319, %p320
      %p322 = scmp.ne.s32.totalorder %s310, %s311
      %p323 = scmp.eq.s32.totalorder %s49, 1
      %p324 = por %p322, %p323
      %p326 = scmp.ne.s32.totalorder %s311, %s325
      %p327 = scmp.eq.s32.totalorder %s49, 0
      %p328 = por %p326, %p327
      %s330 = sadd.s32 %s329, 1
      %p333 = scmp.eq.s32.totalorder %s43, 1
      %p334 = scmp.ne.s32.totalorder %s329, %s331
      %p335 = scmp.eq.s32.totalorder %s43, 0
      %p336 = por %p334, %p335
      %p337 = scmp.ne.s32.totalorder %s329, %s331
      %p338 = scmp.eq.s32.totalorder %s48, 1
      %p339 = por %p337, %p338
      %p340 = scmp.ne.s32.totalorder %s331, %s332
      %p341 = scmp.eq.s32.totalorder %s48, 0
      %p342 = por %p340, %p341
      %p343 = scmp.ne.s32.totalorder %s331, %s332
      %p344 = scmp.eq.s32.totalorder %s49, 1
      %p345 = por %p343, %p344
      %p347 = scmp.ne.s32.totalorder %s332, %s346
      %p348 = scmp.eq.s32.totalorder %s49, 0
      %p349 = por %p347, %p348
      %s351 = sadd.s32 %s350, 1
      %p354 = scmp.eq.s32.totalorder %s43, 1
      %p355 = scmp.ne.s32.totalorder %s350, %s352
      %p356 = scmp.eq.s32.totalorder %s43, 0
      %p357 = por %p355, %p356
      %p358 = scmp.ne.s32.totalorder %s350, %s352
      %p359 = scmp.eq.s32.totalorder %s48, 1
      %p360 = por %p358, %p359
      %p361 = scmp.ne.s32.totalorder %s352, %s353
      %p362 = scmp.eq.s32.totalorder %s48, 0
      %p363 = por %p361, %p362
      %p364 = scmp.ne.s32.totalorder %s352, %s353
      %p365 = scmp.eq.s32.totalorder %s49, 1
      %p366 = por %p364, %p365
      %p368 = scmp.ne.s32.totalorder %s353, %s367
      %p369 = scmp.eq.s32.totalorder %s49, 0
      %p370 = por %p368, %p369
      %s372 = sadd.s32 %s371, 1
      %p375 = scmp.eq.s32.totalorder %s43, 1
      %p376 = scmp.ne.s32.totalorder %s371, %s373
      %p377 = scmp.eq.s32.totalorder %s43, 0
      %p378 = por %p376, %p377
      %p379 = scmp.ne.s32.totalorder %s371, %s373
      %p380 = scmp.eq.s32.totalorder %s48, 1
      %p381 = por %p379, %p380
      %p382 = scmp.ne.s32.totalorder %s373, %s374
      %p383 = scmp.eq.s32.totalorder %s48, 0
      %p384 = por %p382, %p383
      %p385 = scmp.ne.s32.totalorder %s373, %s374
      %p386 = scmp.eq.s32.totalorder %s49, 1
      %p387 = por %p385, %p386
      %p389 = scmp.ne.s32.totalorder %s374, %s388
      %p390 = scmp.eq.s32.totalorder %s49, 0
      %p391 = por %p389, %p390
      %s393 = sadd.s32 %s392, 1
      %p396 = scmp.eq.s32.totalorder %s43, 1
      %p397 = scmp.ne.s32.totalorder %s392, %s394
      %p398 = scmp.eq.s32.totalorder %s43, 0
      %p399 = por %p397, %p398
      %p400 = scmp.ne.s32.totalorder %s392, %s394
      %p401 = scmp.eq.s32.totalorder %s48, 1
      %p402 = por %p400, %p401
      %p403 = scmp.ne.s32.totalorder %s394, %s395
      %p404 = scmp.eq.s32.totalorder %s48, 0
      %p405 = por %p403, %p404
      %p406 = scmp.ne.s32.totalorder %s394, %s395
      %p407 = scmp.eq.s32.totalorder %s49, 1
      %p408 = por %p406, %p407
      %p410 = scmp.ne.s32.totalorder %s395, %s409
      %p411 = scmp.eq.s32.totalorder %s49, 0
      %p412 = por %p410, %p411
      %s414 = sadd.s32 %s413, 1
      %p417 = scmp.eq.s32.totalorder %s43, 1
      %p418 = scmp.ne.s32.totalorder %s413, %s415
      %p419 = scmp.eq.s32.totalorder %s43, 0
      %p420 = por %p418, %p419
      %p421 = scmp.ne.s32.totalorder %s413, %s415
      %p422 = scmp.eq.s32.totalorder %s48, 1
      %p423 = por %p421, %p422
      %p424 = scmp.ne.s32.totalorder %s415, %s416
      %p425 = scmp.eq.s32.totalorder %s48, 0
      %p426 = por %p424, %p425
      %p427 = scmp.ne.s32.totalorder %s415, %s416
      %p428 = scmp.eq.s32.totalorder %s49, 1
      %p429 = por %p427, %p428
      %p431 = scmp.ne.s32.totalorder %s416, %s430
      %p432 = scmp.eq.s32.totalorder %s49, 0
      %p433 = por %p431, %p432
      %s435 = sadd.s32 %s434, 1
      %p438 = scmp.eq.s32.totalorder %s43, 1
      %p439 = scmp.ne.s32.totalorder %s434, %s436
      %p440 = scmp.eq.s32.totalorder %s43, 0
      %p441 = por %p439, %p440
      %p442 = scmp.ne.s32.totalorder %s434, %s436
      %p443 = scmp.eq.s32.totalorder %s48, 1
      %p444 = por %p442, %p443
      %p445 = scmp.ne.s32.totalorder %s436, %s437
      %p446 = scmp.eq.s32.totalorder %s48, 0
      %p447 = por %p445, %p446
      %p448 = scmp.ne.s32.totalorder %s436, %s437
      %p449 = scmp.eq.s32.totalorder %s49, 1
      %p450 = por %p448, %p449
      %p452 = scmp.ne.s32.totalorder %s437, %s451
      %p453 = scmp.eq.s32.totalorder %s49, 0
      %p454 = por %p452, %p453
      %s456 = sadd.s32 %s455, 1
      %p459 = scmp.eq.s32.totalorder %s43, 1
      %p460 = scmp.ne.s32.totalorder %s455, %s457
      %p461 = scmp.eq.s32.totalorder %s43, 0
      %p462 = por %p460, %p461
      %p463 = scmp.ne.s32.totalorder %s455, %s457
      %p464 = scmp.eq.s32.totalorder %s48, 1
      %p465 = por %p463, %p464
      %p466 = scmp.ne.s32.totalorder %s457, %s458
      %p467 = scmp.eq.s32.totalorder %s48, 0
      %p468 = por %p466, %p467
      %p469 = scmp.ne.s32.totalorder %s457, %s458
      %p470 = scmp.eq.s32.totalorder %s49, 1
      %p471 = por %p469, %p470
      %p473 = scmp.ne.s32.totalorder %s458, %s472
      %p474 = scmp.eq.s32.totalorder %s49, 0
      %p475 = por %p473, %p474
      %s477 = sadd.s32 %s476, 1
      %p480 = scmp.eq.s32.totalorder %s43, 1
      %p481 = scmp.ne.s32.totalorder %s476, %s478
      %p482 = scmp.eq.s32.totalorder %s43, 0
      %p483 = por %p481, %p482
      %p484 = scmp.ne.s32.totalorder %s476, %s478
      %p485 = scmp.eq.s32.totalorder %s48, 1
      %p486 = por %p484, %p485
      %p487 = scmp.ne.s32.totalorder %s478, %s479
      %p488 = scmp.eq.s32.totalorder %s48, 0
      %p489 = por %p487, %p488
      %p490 = scmp.ne.s32.totalorder %s478, %s479
      %p491 = scmp.eq.s32.totalorder %s49, 1
      %p492 = por %p490, %p491
      %p494 = scmp.ne.s32.totalorder %s479, %s493
      %p495 = scmp.eq.s32.totalorder %s49, 0
      %p496 = por %p494, %p495
      %s497 = ssub.s32 %s43, %s50
      %p498 = scmp.eq.s32.totalorder %s497, 0
      %s500 = sadd.s32 %s499, 1
      %s501 = scalar_select %p498, %s499, %s500
      %p504 = pneg %p498
      %p505 = scmp.eq.s32.totalorder %s43, 1
      %p506 = por %p504, %p505
      %p507 = scmp.ne.s32.totalorder %s499, %s502
      %p508 = scmp.eq.s32.totalorder %s43, 0
      %p509 = por %p507, %p508
      %p510 = scmp.ne.s32.totalorder %s499, %s502
      %p511 = scmp.eq.s32.totalorder %s48, 1
      %p512 = por %p510, %p511
      %p513 = scmp.ne.s32.totalorder %s502, %s503
      %p514 = scmp.eq.s32.totalorder %s48, 0
      %p515 = por %p513, %p514
      %p516 = scmp.ne.s32.totalorder %s502, %s503
      %p517 = scmp.eq.s32.totalorder %s49, 1
      %p518 = por %p516, %p517
      %p520 = scmp.ne.s32.totalorder %s503, %s519
      %p521 = scmp.eq.s32.totalorder %s49, 0
      %p522 = por %p520, %p521
      %s523 = ssub.s32 %s43, %s50
      %p524 = scmp.eq.s32.totalorder %s523, 0
      %s526 = sadd.s32 %s525, 1
      %s527 = scalar_select %p524, %s525, %s526
      %p530 = pneg %p524
      %p531 = scmp.eq.s32.totalorder %s43, 1
      %p532 = por %p530, %p531
      %p533 = scmp.ne.s32.totalorder %s525, %s528
      %p534 = scmp.eq.s32.totalorder %s43, 0
      %p535 = por %p533, %p534
      %p536 = scmp.ne.s32.totalorder %s525, %s528
      %p537 = scmp.eq.s32.totalorder %s48, 1
      %p538 = por %p536, %p537
      %p539 = scmp.ne.s32.totalorder %s528, %s529
      %p540 = scmp.eq.s32.totalorder %s48, 0
      %p541 = por %p539, %p540
      %p542 = scmp.ne.s32.totalorder %s528, %s529
      %p543 = scmp.eq.s32.totalorder %s49, 1
      %p544 = por %p542, %p543
      %p546 = scmp.ne.s32.totalorder %s529, %s545
      %p547 = scmp.eq.s32.totalorder %s49, 0
      %p548 = por %p546, %p547
      %s549 = ssub.s32 %s43, %s50
      %p550 = scmp.eq.s32.totalorder %s549, 0
      %s552 = sadd.s32 %s551, 1
      %s553 = scalar_select %p550, %s551, %s552
      %p556 = pneg %p550
      %p557 = scmp.eq.s32.totalorder %s43, 1
      %p558 = por %p556, %p557
      %p559 = scmp.ne.s32.totalorder %s551, %s554
      %p560 = scmp.eq.s32.totalorder %s43, 0
      %p561 = por %p559, %p560
      %p562 = scmp.ne.s32.totalorder %s551, %s554
      %p563 = scmp.eq.s32.totalorder %s48, 1
      %p564 = por %p562, %p563
      %p565 = scmp.ne.s32.totalorder %s554, %s555
      %p566 = scmp.eq.s32.totalorder %s48, 0
      %p567 = por %p565, %p566
      %p568 = scmp.ne.s32.totalorder %s554, %s555
      %p569 = scmp.eq.s32.totalorder %s49, 1
      %p570 = por %p568, %p569
      %p572 = scmp.ne.s32.totalorder %s555, %s571
      %p573 = scmp.eq.s32.totalorder %s49, 0
      %p574 = por %p572, %p573
      %s575 = ssub.s32 %s43, %s50
      %p576 = scmp.eq.s32.totalorder %s575, 0
      %s578 = sadd.s32 %s577, 1
      %s579 = scalar_select %p576, %s577, %s578
      %p582 = pneg %p576
      %p583 = scmp.eq.s32.totalorder %s43, 1
      %p584 = por %p582, %p583
      %p585 = scmp.ne.s32.totalorder %s577, %s580
      %p586 = scmp.eq.s32.totalorder %s43, 0
      %p587 = por %p585, %p586
      %p588 = scmp.ne.s32.totalorder %s577, %s580
      %p589 = scmp.eq.s32.totalorder %s48, 1
      %p590 = por %p588, %p589
      %p591 = scmp.ne.s32.totalorder %s580, %s581
      %p592 = scmp.eq.s32.totalorder %s48, 0
      %p593 = por %p591, %p592
      %p594 = scmp.ne.s32.totalorder %s580, %s581
      %p595 = scmp.eq.s32.totalorder %s49, 1
      %p596 = por %p594, %p595
      %p598 = scmp.ne.s32.totalorder %s581, %s597
      %p599 = scmp.eq.s32.totalorder %s49, 0
      %p600 = por %p598, %p599
      %s601 = ssub.s32 %s43, %s50
      %p602 = scmp.eq.s32.totalorder %s601, 0
      %s604 = sadd.s32 %s603, 1
      %s605 = scalar_select %p602, %s603, %s604
      %p608 = pneg %p602
      %p609 = scmp.eq.s32.totalorder %s43, 1
      %p610 = por %p608, %p609
      %p611 = scmp.ne.s32.totalorder %s603, %s606
      %p612 = scmp.eq.s32.totalorder %s43, 0
      %p613 = por %p611, %p612
      %p614 = scmp.ne.s32.totalorder %s603, %s606
      %p615 = scmp.eq.s32.totalorder %s48, 1
      %p616 = por %p614, %p615
      %p617 = scmp.ne.s32.totalorder %s606, %s607
      %p618 = scmp.eq.s32.totalorder %s48, 0
      %p619 = por %p617, %p618
      %p620 = scmp.ne.s32.totalorder %s606, %s607
      %p621 = scmp.eq.s32.totalorder %s49, 1
      %p622 = por %p620, %p621
      %p624 = scmp.ne.s32.totalorder %s607, %s623
      %p625 = scmp.eq.s32.totalorder %s49, 0
      %p626 = por %p624, %p625
      %p627 = scmp.le.s32.totalorder 1, %s43
      %p628 = scmp.lt.s32.totalorder %s43, 3
      %p629 = pnand %p627, %p628
      %p630 = pneg %p629
      // Predicated region
      $region9: #{similarity_vgg_bn_forward.1} parent=5 // pred_check
        _
      $region10: #{similarity_vgg_bn_forward.1} parent=5 // pred_check_branch
        %632 = sbr.rel (%p629) target = $region12
      $region11: #{similarity_vgg_bn_forward.1} parent=5 // pred_region
        %s633 = ssub.s32 %s43, 1
        // Predicated region
        $region13: #{similarity_vgg_bn_forward.1} parent=11 // pred_check
          %p634 = pneg %p90
        $region14: #{similarity_vgg_bn_forward.1} parent=11 // pred_check_branch
          %636 = sbr.rel (%p634) target = $region16
        $region15: #{similarity_vgg_bn_forward.1} parent=11 // pred_region
          _
        $region16: #{similarity_vgg_bn_forward.1} parent=11 // pred_fallthru
          _
        // Predicated region
        $region17: #{similarity_vgg_bn_forward.1} parent=11 // pred_check
          %p637 = pneg %p111
        $region18: #{similarity_vgg_bn_forward.1} parent=11 // pred_check_branch
          %639 = sbr.rel (%p637) target = $region20
        $region19: #{similarity_vgg_bn_forward.1} parent=11 // pred_region
          _
        $region20: #{similarity_vgg_bn_forward.1} parent=11 // pred_fallthru
          _
        // Predicated region
        $region21: #{similarity_vgg_bn_forward.1} parent=11 // pred_check
          %p640 = pneg %p132
        $region22: #{similarity_vgg_bn_forward.1} parent=11 // pred_check_branch
          %642 = sbr.rel (%p640) target = $region24
        $region23: #{similarity_vgg_bn_forward.1} parent=11 // pred_region
          _
        $region24: #{similarity_vgg_bn_forward.1} parent=11 // pred_fallthru
          _
        // Predicated region
        $region25: #{similarity_vgg_bn_forward.1} parent=11 // pred_check
          %p643 = pneg %p153
        $region26: #{similarity_vgg_bn_forward.1} parent=11 // pred_check_branch
          %645 = sbr.rel (%p643) target = $region28
        $region27: #{similarity_vgg_bn_forward.1} parent=11 // pred_region
          _
        $region28: #{similarity_vgg_bn_forward.1} parent=11 // pred_fallthru
          _
        // Predicated region
        $region29: #{similarity_vgg_bn_forward.1} parent=11 // pred_check
          %p646 = pneg %p174
        $region30: #{similarity_vgg_bn_forward.1} parent=11 // pred_check_branch
          %648 = sbr.rel (%p646) target = $region32
        $region31: #{similarity_vgg_bn_forward.1} parent=11 // pred_region
          _
        $region32: #{similarity_vgg_bn_forward.1} parent=11 // pred_fallthru
          _
        // Predicated region
        $region33: #{similarity_vgg_bn_forward.1} parent=11 // pred_check
          %p649 = pneg %p195
        $region34: #{similarity_vgg_bn_forward.1} parent=11 // pred_check_branch
          %651 = sbr.rel (%p649) target = $region36
        $region35: #{similarity_vgg_bn_forward.1} parent=11 // pred_region
          _
        $region36: #{similarity_vgg_bn_forward.1} parent=11 // pred_fallthru
          _
        // Predicated region
        $region37: #{similarity_vgg_bn_forward.1} parent=11 // pred_check
          %p652 = pneg %p216
        $region38: #{similarity_vgg_bn_forward.1} parent=11 // pred_check_branch
          %654 = sbr.rel (%p652) target = $region40
        $region39: #{similarity_vgg_bn_forward.1} parent=11 // pred_region
          _
        $region40: #{similarity_vgg_bn_forward.1} parent=11 // pred_fallthru
          _
        // Predicated region
        $region41: #{similarity_vgg_bn_forward.1} parent=11 // pred_check
          %p655 = pneg %p237
        $region42: #{similarity_vgg_bn_forward.1} parent=11 // pred_check_branch
          %657 = sbr.rel (%p655) target = $region44
        $region43: #{similarity_vgg_bn_forward.1} parent=11 // pred_region
          _
        $region44: #{similarity_vgg_bn_forward.1} parent=11 // pred_fallthru
          _
        // Predicated region
        $region45: #{similarity_vgg_bn_forward.1} parent=11 // pred_check
          %p658 = pneg %p258
        $region46: #{similarity_vgg_bn_forward.1} parent=11 // pred_check_branch
          %660 = sbr.rel (%p658) target = $region48
        $region47: #{similarity_vgg_bn_forward.1} parent=11 // pred_region
          %s662 = ssub.s32 9216, 9216
          %663 = vsyncadd [#allocation7], %s662
          %s664 = sshll.u32 [#allocation6], 4
          %s665 = int_to_ptr.vmem [resolvable:$true] %s664
          %670 = dma.hbm_to_vmem [thread:$0]  %s9, 9216, %s665, [#allocation7], 128, 128, 8
        $region48: #{similarity_vgg_bn_forward.1} parent=11 // pred_fallthru
          _
        // Predicated region
        $region49: #{similarity_vgg_bn_forward.1} parent=11 // pred_check
          %p671 = pneg %p279
        $region50: #{similarity_vgg_bn_forward.1} parent=11 // pred_check_branch
          %673 = sbr.rel (%p671) target = $region52
        $region51: #{similarity_vgg_bn_forward.1} parent=11 // pred_region
          _
        $region52: #{similarity_vgg_bn_forward.1} parent=11 // pred_fallthru
          _
        // Predicated region
        $region53: #{similarity_vgg_bn_forward.1} parent=11 // pred_check
          %p674 = pneg %p300
        $region54: #{similarity_vgg_bn_forward.1} parent=11 // pred_check_branch
          %676 = sbr.rel (%p674) target = $region56
        $region55: #{similarity_vgg_bn_forward.1} parent=11 // pred_region
          _
        $region56: #{similarity_vgg_bn_forward.1} parent=11 // pred_fallthru
          _
        // Predicated region
        $region57: #{similarity_vgg_bn_forward.1} parent=11 // pred_check
          %p677 = pneg %p321
        $region58: #{similarity_vgg_bn_forward.1} parent=11 // pred_check_branch
          %679 = sbr.rel (%p677) target = $region60
        $region59: #{similarity_vgg_bn_forward.1} parent=11 // pred_region
          _
        $region60: #{similarity_vgg_bn_forward.1} parent=11 // pred_fallthru
          _
        // Predicated region
        $region61: #{similarity_vgg_bn_forward.1} parent=11 // pred_check
          %p680 = pneg %p342
        $region62: #{similarity_vgg_bn_forward.1} parent=11 // pred_check_branch
          %682 = sbr.rel (%p680) target = $region64
        $region63: #{similarity_vgg_bn_forward.1} parent=11 // pred_region
          _
        $region64: #{similarity_vgg_bn_forward.1} parent=11 // pred_fallthru
          _
        // Predicated region
        $region65: #{similarity_vgg_bn_forward.1} parent=11 // pred_check
          %p683 = pneg %p363
        $region66: #{similarity_vgg_bn_forward.1} parent=11 // pred_check_branch
          %685 = sbr.rel (%p683) target = $region68
        $region67: #{similarity_vgg_bn_forward.1} parent=11 // pred_region
          _
        $region68: #{similarity_vgg_bn_forward.1} parent=11 // pred_fallthru
          _
        // Predicated region
        $region69: #{similarity_vgg_bn_forward.1} parent=11 // pred_check
          %p686 = pneg %p384
        $region70: #{similarity_vgg_bn_forward.1} parent=11 // pred_check_branch
          %688 = sbr.rel (%p686) target = $region72
        $region71: #{similarity_vgg_bn_forward.1} parent=11 // pred_region
          _
        $region72: #{similarity_vgg_bn_forward.1} parent=11 // pred_fallthru
          _
        // Predicated region
        $region73: #{similarity_vgg_bn_forward.1} parent=11 // pred_check
          %p689 = pneg %p405
        $region74: #{similarity_vgg_bn_forward.1} parent=11 // pred_check_branch
          %691 = sbr.rel (%p689) target = $region76
        $region75: #{similarity_vgg_bn_forward.1} parent=11 // pred_region
          _
        $region76: #{similarity_vgg_bn_forward.1} parent=11 // pred_fallthru
          _
        // Predicated region
        $region77: #{similarity_vgg_bn_forward.1} parent=11 // pred_check
          %p692 = pneg %p426
        $region78: #{similarity_vgg_bn_forward.1} parent=11 // pred_check_branch
          %694 = sbr.rel (%p692) target = $region80
        $region79: #{similarity_vgg_bn_forward.1} parent=11 // pred_region
          _
        $region80: #{similarity_vgg_bn_forward.1} parent=11 // pred_fallthru
          _
        // Predicated region
        $region81: #{similarity_vgg_bn_forward.1} parent=11 // pred_check
          %p695 = pneg %p447
        $region82: #{similarity_vgg_bn_forward.1} parent=11 // pred_check_branch
          %697 = sbr.rel (%p695) target = $region84
        $region83: #{similarity_vgg_bn_forward.1} parent=11 // pred_region
          _
        $region84: #{similarity_vgg_bn_forward.1} parent=11 // pred_fallthru
          _
        // Predicated region
        $region85: #{similarity_vgg_bn_forward.1} parent=11 // pred_check
          %p698 = pneg %p468
        $region86: #{similarity_vgg_bn_forward.1} parent=11 // pred_check_branch
          %700 = sbr.rel (%p698) target = $region88
        $region87: #{similarity_vgg_bn_forward.1} parent=11 // pred_region
          %s702 = ssub.s32 8192, 8192
          %703 = vsyncadd [#allocation10], %s702
          %s704 = sshll.u32 [#allocation9], 4
          %s705 = int_to_ptr.vmem [resolvable:$true] %s704
          %710 = dma.hbm_to_vmem [thread:$0]  %s19, 8192, %s705, [#allocation10], 256, 256, 16
        $region88: #{similarity_vgg_bn_forward.1} parent=11 // pred_fallthru
          _
        // Predicated region
        $region89: #{similarity_vgg_bn_forward.1} parent=11 // pred_check
          %p711 = pneg %p489
        $region90: #{similarity_vgg_bn_forward.1} parent=11 // pred_check_branch
          %713 = sbr.rel (%p711) target = $region92
        $region91: #{similarity_vgg_bn_forward.1} parent=11 // pred_region
          _
        $region92: #{similarity_vgg_bn_forward.1} parent=11 // pred_fallthru
          _
      $region12: #{similarity_vgg_bn_forward.1} parent=5 // pred_fallthru
        _
      %p714 = scmp.lt.s32.totalorder %s43, 2
      // Predicated region
      $region93: #{similarity_vgg_bn_forward.1} parent=5 // pred_check
        %p715 = pneg %p714
      $region94: #{similarity_vgg_bn_forward.1} parent=5 // pred_check_branch
        %717 = sbr.rel (%p715) target = $region96
      $region95: #{similarity_vgg_bn_forward.1} parent=5 // pred_region
        // Predicated region
        $region97: #{similarity_vgg_bn_forward.1} parent=95 // pred_check
          %p718 = pneg %p63
        $region98: #{similarity_vgg_bn_forward.1} parent=95 // pred_check_branch
          %720 = sbr.rel (%p718) target = $region100
        $region99: #{similarity_vgg_bn_forward.1} parent=95 // pred_region
          %p721 = scmp.lt.s32.totalorder %s43, 1
          %s722 = scalar_select %p721, %s43, 1
          %s723 = smul.addr %s722, 32
          %s724 = smul.addr %s723, 8
          %s725 = scalar_lea.vmem %s0, %s724
        $region100: #{similarity_vgg_bn_forward.1} parent=95 // pred_fallthru
          _
      $region96: #{similarity_vgg_bn_forward.1} parent=5 // pred_fallthru
        _
      %p726 = scmp.le.s32.totalorder 1, %s43
      %p727 = scmp.lt.s32.totalorder %s43, 3
      %p728 = pnand %p726, %p727
      %p729 = pneg %p728
      // Predicated region
      $region101: #{similarity_vgg_bn_forward.1} parent=5 // pred_check
        _
      $region102: #{similarity_vgg_bn_forward.1} parent=5 // pred_check_branch
        %731 = sbr.rel (%p728) target = $region104
      $region103: #{similarity_vgg_bn_forward.1} parent=5 // pred_region
        %s732 = ssub.s32 %s43, 1
        // Predicated region
        $region105: #{similarity_vgg_bn_forward.1} parent=103 // pred_check
          %p733 = pneg %p258
        $region106: #{similarity_vgg_bn_forward.1} parent=103 // pred_check_branch
          %735 = sbr.rel (%p733) target = $region108
        $region107: #{similarity_vgg_bn_forward.1} parent=103 // pred_region
          %736 = dma.done [#allocation7], 9216
        $region108: #{similarity_vgg_bn_forward.1} parent=103 // pred_fallthru
          _
        // Predicated region
        $region109: #{similarity_vgg_bn_forward.1} parent=103 // pred_check
          %p737 = pneg %p468
        $region110: #{similarity_vgg_bn_forward.1} parent=103 // pred_check_branch
          %739 = sbr.rel (%p737) target = $region112
        $region111: #{similarity_vgg_bn_forward.1} parent=103 // pred_region
          %740 = dma.done [#allocation10], 8192
        $region112: #{similarity_vgg_bn_forward.1} parent=103 // pred_fallthru
          _
        %p741 = scmp.lt.s32.totalorder %s48, 1
        %s742 = scalar_select %p741, %s48, 1
        %s743 = smul.addr %s742, 32
        %s744 = smul.addr %s743, 8
        %s745 = scalar_lea.vmem %s0, %s744
        %p746 = pneg %p69
        %p747 = pneg %p66
        %p748 = pneg %p90
        %p749 = pneg %p87
        %p750 = pneg %p111
        %p751 = pneg %p108
        %p752 = pneg %p132
        %p753 = pneg %p129
        %p754 = pneg %p153
        %p755 = pneg %p150
        %p756 = pneg %p174
        %p757 = pneg %p171
        %p758 = pneg %p195
        %p759 = pneg %p192
        %p760 = pneg %p216
        %p761 = pneg %p213
        %p762 = pneg %p237
        %p763 = pneg %p234
        %p764 = pneg %p258
        %p765 = pneg %p255
        %p766 = pneg %p279
        %p767 = pneg %p276
        %p768 = pneg %p300
        %p769 = pneg %p297
        %p770 = pneg %p321
        %p771 = pneg %p318
        %p772 = pneg %p342
        %p773 = pneg %p339
        %p774 = pneg %p363
        %p775 = pneg %p360
        %p776 = pneg %p384
        %p777 = pneg %p381
        %p778 = pneg %p405
        %p779 = pneg %p402
        %p780 = pneg %p426
        %p781 = pneg %p423
        %p782 = pneg %p447
        %p783 = pneg %p444
        %p784 = pneg %p468
        %p785 = pneg %p465
        %p786 = pneg %p489
        %p787 = pneg %p486
        %p788 = pneg %p515
        %p789 = pneg %p512
        %s790 = sand.u32 %s502, 1
        %s791 = scalar_lea.sflag [#allocation8], %s790
        %s792 = sand.u32 %s502, 1
        %s793 = smul.addr %s792, 256
        %s794 = scalar_lea.vmem [#allocation11], %s793
        %p795 = pneg %p541
        %p796 = pneg %p538
        %s797 = sand.u32 %s48, 1
        %s798 = scalar_lea.sflag [#allocation13], %s797
        %s799 = sand.u32 %s528, 1
        %s800 = smul.addr %s799, 256
        %s801 = scalar_lea.vmem [#allocation12], %s800
        %p802 = pneg %p567
        %p803 = pneg %p564
        %s804 = sand.u32 %s48, 1
        %s805 = scalar_lea.sflag [#allocation13], %s804
        %s806 = sand.u32 %s554, 1
        %s807 = smul.addr %s806, 64
        %s808 = scalar_lea.vmem [#allocation14], %s807
        %p809 = pneg %p593
        %p810 = pneg %p590
        %s811 = sand.u32 %s580, 1
        %s812 = scalar_lea.sflag [#allocation16], %s811
        %s813 = sand.u32 %s580, 1
        %s814 = smul.addr %s813, 64
        %s815 = scalar_lea.vmem [#allocation15], %s814
        %p816 = pneg %p619
        %p817 = pneg %p616
        %p818 = scmp.lt.s32.totalorder %s48, 1
        %s819 = scalar_select %p818, %s48, 1
        %s820 = smul.addr %s819, 4
        %s821 = smul.addr %s820, 8
        %s822 = scalar_lea.vmem %s25, %s821
        %p823 = scmp.lt.s32.totalorder %s48, 1
        %s824 = scalar_select %p823, %s48, 1
        %s825 = smul.addr %s824, 32
        %s826 = smul.addr %s825, 8
        %s827 = scalar_lea.vmem %s0, %s826
        %p828 = scmp.lt.s32.totalorder %s48, 1
        %s829 = scalar_select %p828, %s48, 1
        %s830 = smul.addr %s829, 4
        %s831 = smul.addr %s830, 8
        %s832 = scalar_lea.vmem %s25, %s831
        %v833 = vld [vmem:[%s827] sm:$0xff]
        %v834 = vld [vmem:[%s827 + $0x8] sm:$0xff]
        %v835 = vld [vmem:[%s827 + $0x10] sm:$0xff]
        %v836 = vld [vmem:[%s827 + $0x18] sm:$0xff]
        %v837 = vld [vmem:[%s827 + $0x20] sm:$0xff]
        %v838 = vld [vmem:[%s827 + $0x28] sm:$0xff]
        %v839 = vld [vmem:[%s827 + $0x30] sm:$0xff]
        %v840 = vld [vmem:[%s827 + $0x38] sm:$0xff]
        %v841 = vld [vmem:[%s827 + $0x40] sm:$0xff]
        %v842 = vld [vmem:[%s827 + $0x48] sm:$0xff]
        %v843 = vld [vmem:[%s827 + $0x50] sm:$0xff]
        %v844 = vld [vmem:[%s827 + $0x58] sm:$0xff]
        %v845 = vld [vmem:[%s827 + $0x60] sm:$0xff]
        %v846 = vld [vmem:[%s827 + $0x68] sm:$0xff]
        %v847 = vld [vmem:[%s827 + $0x70] sm:$0xff]
        %v848 = vld [vmem:[%s827 + $0x78] sm:$0xff]
        %v849 = vld [vmem:[%s827 + $0x80] sm:$0xff]
        %v850 = vld [vmem:[%s827 + $0x88] sm:$0xff]
        %v851 = vld [vmem:[%s827 + $0x90] sm:$0xff]
        %v852 = vld [vmem:[%s827 + $0x98] sm:$0xff]
        %v853 = vld [vmem:[%s827 + $0xa0] sm:$0xff]
        %v854 = vld [vmem:[%s827 + $0xa8] sm:$0xff]
        %v855 = vld [vmem:[%s827 + $0xb0] sm:$0xff]
        %v856 = vld [vmem:[%s827 + $0xb8] sm:$0xff]
        %v857 = vld [vmem:[%s827 + $0xc0] sm:$0xff]
        %v858 = vld [vmem:[%s827 + $0xc8] sm:$0xff]
        %v859 = vld [vmem:[%s827 + $0xd0] sm:$0xff]
        %v860 = vld [vmem:[%s827 + $0xd8] sm:$0xff]
        %v861 = vld [vmem:[%s827 + $0xe0] sm:$0xff]
        %v862 = vld [vmem:[%s827 + $0xe8] sm:$0xff]
        %v863 = vld [vmem:[%s827 + $0xf0] sm:$0xff]
        %v864 = vld [vmem:[%s827 + $0xf8] sm:$0xff]
        %v865 = vld [vmem:[%s1] sm:$0xff]
        %v866 = vld [vmem:[%s1 + $0x8] sm:$0xff]
        %v867 = vld [vmem:[%s1 + $0x10] sm:$0xff]
        %v868 = vld [vmem:[%s1 + $0x18] sm:$0xff]
        %v869 = vld [vmem:[%s2] sm:$0x1]
        %v871 = vlaneseq
        %v872 = vshrl.u32 %v871, 7
        %v873 = vsub.s32 0, %v872
        %v874 = vrot.slane %v869, %v873
        %vm876 = vcmask 261120
        %v878 = vsel %vm876, %v833, 0
        %v881 = vsel %vm876, %v834, 0
        %v884 = vsel %vm876, %v835, 0
        %v887 = vsel %vm876, %v836, 0
        %v890 = vsel %vm876, %v837, 0
        %v893 = vsel %vm876, %v838, 0
        %v896 = vsel %vm876, %v839, 0
        %v899 = vsel %vm876, %v840, 0
        %v902 = vsel %vm876, %v841, 0
        %v905 = vsel %vm876, %v842, 0
        %v908 = vsel %vm876, %v843, 0
        %v911 = vsel %vm876, %v844, 0
        %v914 = vsel %vm876, %v845, 0
        %v917 = vsel %vm876, %v846, 0
        %v920 = vsel %vm876, %v847, 0
        %v923 = vsel %vm876, %v848, 0
        %v926 = vsel %vm876, %v849, 0
        %v929 = vsel %vm876, %v850, 0
        %v932 = vsel %vm876, %v851, 0
        %v935 = vsel %vm876, %v852, 0
        %v938 = vsel %vm876, %v853, 0
        %v941 = vsel %vm876, %v854, 0
        %v944 = vsel %vm876, %v855, 0
        %v947 = vsel %vm876, %v856, 0
        %v950 = vsel %vm876, %v857, 0
        %v953 = vsel %vm876, %v858, 0
        %v956 = vsel %vm876, %v859, 0
        %v959 = vsel %vm876, %v860, 0
        %v962 = vsel %vm876, %v861, 0
        %v965 = vsel %vm876, %v862, 0
        %v968 = vsel %vm876, %v863, 0
        %v971 = vsel %vm876, %v864, 0
        %973 = vmatprep.subr.mxu0 0.0
        %974 = vmatpush1.msra.mxu0 0.0
        %975 = vmatprep.subr.mxu0 0.0
        %976 = vmatpush1.msra.mxu0 0.0
        %977 = vmatprep.subr.mxu0 0.0
        %978 = vmatpush1.msra.mxu0 0.0
        %979 = vmatprep.subr.mxu0 0.0
        %980 = vmatpush1.msra.mxu0 0.0
        %981 = vmatprep.subr.mxu0 0.0
        %982 = vmatpush1.msra.mxu0 0.0
        %983 = vmatprep.subr.mxu0 0.0
        %984 = vmatpush1.msra.mxu0 0.0
        %985 = vmatprep.subr.mxu0 0.0
        %986 = vmatpush1.msra.mxu0 0.0
        %987 = vmatprep.subr.mxu0 0.0
        %988 = vmatpush1.msra.mxu0 0.0
        %989 = vmatprep.subr.mxu0 0.0
        %990 = vmatpush1.msra.mxu0 0.0
        %991 = vmatprep.subr.mxu0 0.0
        %992 = vmatpush1.msra.mxu0 0.0
        %993 = vmatprep.subr.mxu0 0.0
        %994 = vmatpush1.msra.mxu0 0.0
        %995 = vmatprep.subr.mxu0 0.0
        %996 = vmatpush1.msra.mxu0 0.0
        %997 = vmatprep.subr.mxu0 0.0
        %998 = vmatpush1.msra.mxu0 %v868
        %999 = vmatprep.subr.mxu0 0.0
        %1000 = vmatpush1.msra.mxu0 %v867
        %1001 = vmatprep.subr.mxu0 0.0
        %1002 = vmatpush1.msra.mxu0 %v866
        %1003 = vmatprep.subr.mxu0 0.0
        %1004 = vmatpush1.msra.mxu0 %v865
        %1005 = vmatprep.subr.mxu0 0.0
        %1006 = vmatpush2.msra.mxu0 0.0
        %1007 = vmatprep.subr.mxu0 0.0
        %1008 = vmatpush2.msra.mxu0 0.0
        %1009 = vmatprep.subr.mxu0 0.0
        %1010 = vmatpush2.msra.mxu0 0.0
        %1011 = vmatprep.subr.mxu0 0.0
        %1012 = vmatpush2.msra.mxu0 0.0
        %1013 = vmatprep.subr.mxu0 0.0
        %1014 = vmatpush2.msra.mxu0 0.0
        %1015 = vmatprep.subr.mxu0 0.0
        %1016 = vmatpush2.msra.mxu0 0.0
        %1017 = vmatprep.subr.mxu0 0.0
        %1018 = vmatpush2.msra.mxu0 0.0
        %1019 = vmatprep.subr.mxu0 0.0
        %1020 = vmatpush2.msra.mxu0 0.0
        %1021 = vmatprep.subr.mxu0 0.0
        %1022 = vmatpush2.msra.mxu0 0.0
        %1023 = vmatprep.subr.mxu0 0.0
        %1024 = vmatpush2.msra.mxu0 0.0
        %1025 = vmatprep.subr.mxu0 0.0
        %1026 = vmatpush2.msra.mxu0 0.0
        %1027 = vmatprep.subr.mxu0 0.0
        %1028 = vmatpush2.msra.mxu0 0.0
        %1029 = vmatprep.subr.mxu0 0.0
        %1030 = vmatpush2.msra.mxu0 0.0
        %1031 = vmatprep.subr.mxu0 0.0
        %1032 = vmatpush2.msra.mxu0 0.0
        %1033 = vmatprep.subr.mxu0 0.0
        %1034 = vmatpush2.msra.mxu0 0.0
        %1035 = vmatprep.subr.mxu0 0.0
        %1036 = vmatpush2.msra.mxu0 0.0
        %1037 = vmatprep.mubr.f32.mxu0 0.0
        %1038 = vmatmul.mubr.f32.gmra.mxu0 %v878
        %v1039 = vpop.f32.mrf.mxu0
        %v1040 = vadd.f32 %v874, %v1039
        %v1041 = vpop.f32.mrf.mxu0
        %1042 = vmatprep.mubr.f32.mxu0 0.0
        %1043 = vmatmul.mubr.f32.gmra.mxu0 %v881
        %v1044 = vpop.f32.mrf.mxu0
        %v1045 = vadd.f32 %v874, %v1044
        %v1046 = vpop.f32.mrf.mxu0
        %1047 = vmatprep.mubr.f32.mxu0 0.0
        %1048 = vmatmul.mubr.f32.gmra.mxu0 %v884
        %v1049 = vpop.f32.mrf.mxu0
        %v1050 = vadd.f32 %v874, %v1049
        %v1051 = vpop.f32.mrf.mxu0
        %1052 = vmatprep.mubr.f32.mxu0 0.0
        %1053 = vmatmul.mubr.f32.gmra.mxu0 %v887
        %v1054 = vpop.f32.mrf.mxu0
        %v1055 = vadd.f32 %v874, %v1054
        %v1056 = vpop.f32.mrf.mxu0
        %1057 = vmatprep.mubr.f32.mxu0 0.0
        %1058 = vmatmul.mubr.f32.gmra.mxu0 %v890
        %v1059 = vpop.f32.mrf.mxu0
        %v1060 = vadd.f32 %v874, %v1059
        %v1061 = vpop.f32.mrf.mxu0
        %1062 = vmatprep.mubr.f32.mxu0 0.0
        %1063 = vmatmul.mubr.f32.gmra.mxu0 %v893
        %v1064 = vpop.f32.mrf.mxu0
        %v1065 = vadd.f32 %v874, %v1064
        %v1066 = vpop.f32.mrf.mxu0
        %1067 = vmatprep.mubr.f32.mxu0 0.0
        %1068 = vmatmul.mubr.f32.gmra.mxu0 %v896
        %v1069 = vpop.f32.mrf.mxu0
        %v1070 = vadd.f32 %v874, %v1069
        %v1071 = vpop.f32.mrf.mxu0
        %1072 = vmatprep.mubr.f32.mxu0 0.0
        %1073 = vmatmul.mubr.f32.gmra.mxu0 %v899
        %v1074 = vpop.f32.mrf.mxu0
        %v1075 = vadd.f32 %v874, %v1074
        %v1076 = vpop.f32.mrf.mxu0
        %1077 = vmatprep.mubr.f32.mxu0 0.0
        %1078 = vmatmul.mubr.f32.gmra.mxu0 %v902
        %v1079 = vpop.f32.mrf.mxu0
        %v1080 = vadd.f32 %v874, %v1079
        %v1081 = vpop.f32.mrf.mxu0
        %1082 = vmatprep.mubr.f32.mxu0 0.0
        %1083 = vmatmul.mubr.f32.gmra.mxu0 %v905
        %v1084 = vpop.f32.mrf.mxu0
        %v1085 = vadd.f32 %v874, %v1084
        %v1086 = vpop.f32.mrf.mxu0
        %1087 = vmatprep.mubr.f32.mxu0 0.0
        %1088 = vmatmul.mubr.f32.gmra.mxu0 %v908
        %v1089 = vpop.f32.mrf.mxu0
        %v1090 = vadd.f32 %v874, %v1089
        %v1091 = vpop.f32.mrf.mxu0
        %1092 = vmatprep.mubr.f32.mxu0 0.0
        %1093 = vmatmul.mubr.f32.gmra.mxu0 %v911
        %v1094 = vpop.f32.mrf.mxu0
        %v1095 = vadd.f32 %v874, %v1094
        %v1096 = vpop.f32.mrf.mxu0
        %1097 = vmatprep.mubr.f32.mxu0 0.0
        %1098 = vmatmul.mubr.f32.gmra.mxu0 %v914
        %v1099 = vpop.f32.mrf.mxu0
        %v1100 = vadd.f32 %v874, %v1099
        %v1101 = vpop.f32.mrf.mxu0
        %1102 = vmatprep.mubr.f32.mxu0 0.0
        %1103 = vmatmul.mubr.f32.gmra.mxu0 %v917
        %v1104 = vpop.f32.mrf.mxu0
        %v1105 = vadd.f32 %v874, %v1104
        %v1106 = vpop.f32.mrf.mxu0
        %1107 = vmatprep.mubr.f32.mxu0 0.0
        %1108 = vmatmul.mubr.f32.gmra.mxu0 %v920
        %v1109 = vpop.f32.mrf.mxu0
        %v1110 = vadd.f32 %v874, %v1109
        %v1111 = vpop.f32.mrf.mxu0
        %1112 = vmatprep.mubr.f32.mxu0 0.0
        %1113 = vmatmul.mubr.f32.gmra.mxu0 %v923
        %v1114 = vpop.f32.mrf.mxu0
        %v1115 = vadd.f32 %v874, %v1114
        %v1116 = vpop.f32.mrf.mxu0
        %1117 = vmatprep.mubr.f32.mxu0 0.0
        %1118 = vmatmul.mubr.f32.gmra.mxu0 %v926
        %v1119 = vpop.f32.mrf.mxu0
        %v1120 = vadd.f32 %v874, %v1119
        %v1121 = vpop.f32.mrf.mxu0
        %1122 = vmatprep.mubr.f32.mxu0 0.0
        %1123 = vmatmul.mubr.f32.gmra.mxu0 %v929
        %v1124 = vpop.f32.mrf.mxu0
        %v1125 = vadd.f32 %v874, %v1124
        %v1126 = vpop.f32.mrf.mxu0
        %1127 = vmatprep.mubr.f32.mxu0 0.0
        %1128 = vmatmul.mubr.f32.gmra.mxu0 %v932
        %v1129 = vpop.f32.mrf.mxu0
        %v1130 = vadd.f32 %v874, %v1129
        %v1131 = vpop.f32.mrf.mxu0
        %1132 = vmatprep.mubr.f32.mxu0 0.0
        %1133 = vmatmul.mubr.f32.gmra.mxu0 %v935
        %v1134 = vpop.f32.mrf.mxu0
        %v1135 = vadd.f32 %v874, %v1134
        %v1136 = vpop.f32.mrf.mxu0
        %1137 = vmatprep.mubr.f32.mxu0 0.0
        %1138 = vmatmul.mubr.f32.gmra.mxu0 %v938
        %v1139 = vpop.f32.mrf.mxu0
        %v1140 = vadd.f32 %v874, %v1139
        %v1141 = vpop.f32.mrf.mxu0
        %1142 = vmatprep.mubr.f32.mxu0 0.0
        %1143 = vmatmul.mubr.f32.gmra.mxu0 %v941
        %v1144 = vpop.f32.mrf.mxu0
        %v1145 = vadd.f32 %v874, %v1144
        %v1146 = vpop.f32.mrf.mxu0
        %1147 = vmatprep.mubr.f32.mxu0 0.0
        %1148 = vmatmul.mubr.f32.gmra.mxu0 %v944
        %v1149 = vpop.f32.mrf.mxu0
        %v1150 = vadd.f32 %v874, %v1149
        %v1151 = vpop.f32.mrf.mxu0
        %1152 = vmatprep.mubr.f32.mxu0 0.0
        %1153 = vmatmul.mubr.f32.gmra.mxu0 %v947
        %v1154 = vpop.f32.mrf.mxu0
        %v1155 = vadd.f32 %v874, %v1154
        %v1156 = vpop.f32.mrf.mxu0
        %1157 = vmatprep.mubr.f32.mxu0 0.0
        %1158 = vmatmul.mubr.f32.gmra.mxu0 %v950
        %v1159 = vpop.f32.mrf.mxu0
        %v1160 = vadd.f32 %v874, %v1159
        %v1161 = vpop.f32.mrf.mxu0
        %1162 = vmatprep.mubr.f32.mxu0 0.0
        %1163 = vmatmul.mubr.f32.gmra.mxu0 %v953
        %v1164 = vpop.f32.mrf.mxu0
        %v1165 = vadd.f32 %v874, %v1164
        %v1166 = vpop.f32.mrf.mxu0
        %1167 = vmatprep.mubr.f32.mxu0 0.0
        %1168 = vmatmul.mubr.f32.gmra.mxu0 %v956
        %v1169 = vpop.f32.mrf.mxu0
        %v1170 = vadd.f32 %v874, %v1169
        %v1171 = vpop.f32.mrf.mxu0
        %1172 = vmatprep.mubr.f32.mxu0 0.0
        %1173 = vmatmul.mubr.f32.gmra.mxu0 %v959
        %v1174 = vpop.f32.mrf.mxu0
        %v1175 = vadd.f32 %v874, %v1174
        %v1176 = vpop.f32.mrf.mxu0
        %1177 = vmatprep.mubr.f32.mxu0 0.0
        %1178 = vmatmul.mubr.f32.gmra.mxu0 %v962
        %v1179 = vpop.f32.mrf.mxu0
        %v1180 = vadd.f32 %v874, %v1179
        %v1181 = vpop.f32.mrf.mxu0
        %1182 = vmatprep.mubr.f32.mxu0 0.0
        %1183 = vmatmul.mubr.f32.gmra.mxu0 %v965
        %v1184 = vpop.f32.mrf.mxu0
        %v1185 = vadd.f32 %v874, %v1184
        %v1186 = vpop.f32.mrf.mxu0
        %1187 = vmatprep.mubr.f32.mxu0 0.0
        %1188 = vmatmul.mubr.f32.gmra.mxu0 %v968
        %v1189 = vpop.f32.mrf.mxu0
        %v1190 = vadd.f32 %v874, %v1189
        %v1191 = vpop.f32.mrf.mxu0
        %1192 = vmatprep.mubr.f32.mxu0 0.0
        %1193 = vmatmul.mubr.f32.gmra.mxu0 %v971
        %v1194 = vpop.f32.mrf.mxu0
        %v1195 = vadd.f32 %v874, %v1194
        %v1196 = vpop.f32.mrf.mxu0
        %1197 = vdwg.mxu0
        %vm1198 = vcmask 523264
        %1199 = vst.msk [vmem:[%s794] sm:$0xff] %vm1198, %v1040
        %1200 = vst.msk [vmem:[%s794 + $0x8] sm:$0xff] %vm1198, %v1045
        %1201 = vst.msk [vmem:[%s794 + $0x10] sm:$0xff] %vm1198, %v1050
        %1202 = vst.msk [vmem:[%s794 + $0x18] sm:$0xff] %vm1198, %v1055
        %1203 = vst.msk [vmem:[%s794 + $0x20] sm:$0xff] %vm1198, %v1060
        %1204 = vst.msk [vmem:[%s794 + $0x28] sm:$0xff] %vm1198, %v1065
        %1205 = vst.msk [vmem:[%s794 + $0x30] sm:$0xff] %vm1198, %v1070
        %1206 = vst.msk [vmem:[%s794 + $0x38] sm:$0xff] %vm1198, %v1075
        %1207 = vst.msk [vmem:[%s794 + $0x40] sm:$0xff] %vm1198, %v1080
        %1208 = vst.msk [vmem:[%s794 + $0x48] sm:$0xff] %vm1198, %v1085
        %1209 = vst.msk [vmem:[%s794 + $0x50] sm:$0xff] %vm1198, %v1090
        %1210 = vst.msk [vmem:[%s794 + $0x58] sm:$0xff] %vm1198, %v1095
        %1211 = vst.msk [vmem:[%s794 + $0x60] sm:$0xff] %vm1198, %v1100
        %1212 = vst.msk [vmem:[%s794 + $0x68] sm:$0xff] %vm1198, %v1105
        %1213 = vst.msk [vmem:[%s794 + $0x70] sm:$0xff] %vm1198, %v1110
        %1214 = vst.msk [vmem:[%s794 + $0x78] sm:$0xff] %vm1198, %v1115
        %1215 = vst.msk [vmem:[%s794 + $0x80] sm:$0xff] %vm1198, %v1120
        %1216 = vst.msk [vmem:[%s794 + $0x88] sm:$0xff] %vm1198, %v1125
        %1217 = vst.msk [vmem:[%s794 + $0x90] sm:$0xff] %vm1198, %v1130
        %1218 = vst.msk [vmem:[%s794 + $0x98] sm:$0xff] %vm1198, %v1135
        %1219 = vst.msk [vmem:[%s794 + $0xa0] sm:$0xff] %vm1198, %v1140
        %1220 = vst.msk [vmem:[%s794 + $0xa8] sm:$0xff] %vm1198, %v1145
        %1221 = vst.msk [vmem:[%s794 + $0xb0] sm:$0xff] %vm1198, %v1150
        %1222 = vst.msk [vmem:[%s794 + $0xb8] sm:$0xff] %vm1198, %v1155
        %1223 = vst.msk [vmem:[%s794 + $0xc0] sm:$0xff] %vm1198, %v1160
        %1224 = vst.msk [vmem:[%s794 + $0xc8] sm:$0xff] %vm1198, %v1165
        %1225 = vst.msk [vmem:[%s794 + $0xd0] sm:$0xff] %vm1198, %v1170
        %1226 = vst.msk [vmem:[%s794 + $0xd8] sm:$0xff] %vm1198, %v1175
        %1227 = vst.msk [vmem:[%s794 + $0xe0] sm:$0xff] %vm1198, %v1180
        %1228 = vst.msk [vmem:[%s794 + $0xe8] sm:$0xff] %vm1198, %v1185
        %1229 = vst.msk [vmem:[%s794 + $0xf0] sm:$0xff] %vm1198, %v1190
        %1230 = vst.msk [vmem:[%s794 + $0xf8] sm:$0xff] %vm1198, %v1195
        %v1231 = vld [vmem:[%s3] sm:$0x1]
        %v1233 = vlaneseq
        %v1234 = vshrl.u32 %v1233, 7
        %v1235 = vsub.s32 0, %v1234
        %v1236 = vrot.slane %v1231, %v1235
        %v1238 = vmul.f32 %v1040, %v1236
        %v1239 = vmul.f32 %v1045, %v1236
        %v1240 = vmul.f32 %v1050, %v1236
        %v1241 = vmul.f32 %v1055, %v1236
        %v1242 = vmul.f32 %v1060, %v1236
        %v1243 = vmul.f32 %v1065, %v1236
        %v1244 = vmul.f32 %v1070, %v1236
        %v1245 = vmul.f32 %v1075, %v1236
        %v1246 = vmul.f32 %v1080, %v1236
        %v1247 = vmul.f32 %v1085, %v1236
        %v1248 = vmul.f32 %v1090, %v1236
        %v1249 = vmul.f32 %v1095, %v1236
        %v1250 = vmul.f32 %v1100, %v1236
        %v1251 = vmul.f32 %v1105, %v1236
        %v1252 = vmul.f32 %v1110, %v1236
        %v1253 = vmul.f32 %v1115, %v1236
        %v1254 = vmul.f32 %v1120, %v1236
        %v1255 = vmul.f32 %v1125, %v1236
        %v1256 = vmul.f32 %v1130, %v1236
        %v1257 = vmul.f32 %v1135, %v1236
        %v1258 = vmul.f32 %v1140, %v1236
        %v1259 = vmul.f32 %v1145, %v1236
        %v1260 = vmul.f32 %v1150, %v1236
        %v1261 = vmul.f32 %v1155, %v1236
        %v1262 = vmul.f32 %v1160, %v1236
        %v1263 = vmul.f32 %v1165, %v1236
        %v1264 = vmul.f32 %v1170, %v1236
        %v1265 = vmul.f32 %v1175, %v1236
        %v1266 = vmul.f32 %v1180, %v1236
        %v1267 = vmul.f32 %v1185, %v1236
        %v1268 = vmul.f32 %v1190, %v1236
        %v1269 = vmul.f32 %v1195, %v1236
        %v1270 = vld [vmem:[%s4] sm:$0x1]
        %v1272 = vlaneseq
        %v1273 = vshrl.u32 %v1272, 7
        %v1274 = vsub.s32 0, %v1273
        %v1275 = vrot.slane %v1270, %v1274
        %v1277 = vadd.f32 %v1238, %v1275
        %v1278 = vadd.f32 %v1239, %v1275
        %v1279 = vadd.f32 %v1240, %v1275
        %v1280 = vadd.f32 %v1241, %v1275
        %v1281 = vadd.f32 %v1242, %v1275
        %v1282 = vadd.f32 %v1243, %v1275
        %v1283 = vadd.f32 %v1244, %v1275
        %v1284 = vadd.f32 %v1245, %v1275
        %v1285 = vadd.f32 %v1246, %v1275
        %v1286 = vadd.f32 %v1247, %v1275
        %v1287 = vadd.f32 %v1248, %v1275
        %v1288 = vadd.f32 %v1249, %v1275
        %v1289 = vadd.f32 %v1250, %v1275
        %v1290 = vadd.f32 %v1251, %v1275
        %v1291 = vadd.f32 %v1252, %v1275
        %v1292 = vadd.f32 %v1253, %v1275
        %v1293 = vadd.f32 %v1254, %v1275
        %v1294 = vadd.f32 %v1255, %v1275
        %v1295 = vadd.f32 %v1256, %v1275
        %v1296 = vadd.f32 %v1257, %v1275
        %v1297 = vadd.f32 %v1258, %v1275
        %v1298 = vadd.f32 %v1259, %v1275
        %v1299 = vadd.f32 %v1260, %v1275
        %v1300 = vadd.f32 %v1261, %v1275
        %v1301 = vadd.f32 %v1262, %v1275
        %v1302 = vadd.f32 %v1263, %v1275
        %v1303 = vadd.f32 %v1264, %v1275
        %v1304 = vadd.f32 %v1265, %v1275
        %v1305 = vadd.f32 %v1266, %v1275
        %v1306 = vadd.f32 %v1267, %v1275
        %v1307 = vadd.f32 %v1268, %v1275
        %v1308 = vadd.f32 %v1269, %v1275
        %v1309 = vmax.f32 %v1277, 0.0
        %v1310 = vmax.f32 %v1278, 0.0
        %v1311 = vmax.f32 %v1279, 0.0
        %v1312 = vmax.f32 %v1280, 0.0
        %v1313 = vmax.f32 %v1281, 0.0
        %v1314 = vmax.f32 %v1282, 0.0
        %v1315 = vmax.f32 %v1283, 0.0
        %v1316 = vmax.f32 %v1284, 0.0
        %v1317 = vmax.f32 %v1285, 0.0
        %v1318 = vmax.f32 %v1286, 0.0
        %v1319 = vmax.f32 %v1287, 0.0
        %v1320 = vmax.f32 %v1288, 0.0
        %v1321 = vmax.f32 %v1289, 0.0
        %v1322 = vmax.f32 %v1290, 0.0
        %v1323 = vmax.f32 %v1291, 0.0
        %v1324 = vmax.f32 %v1292, 0.0
        %v1325 = vmax.f32 %v1293, 0.0
        %v1326 = vmax.f32 %v1294, 0.0
        %v1327 = vmax.f32 %v1295, 0.0
        %v1328 = vmax.f32 %v1296, 0.0
        %v1329 = vmax.f32 %v1297, 0.0
        %v1330 = vmax.f32 %v1298, 0.0
        %v1331 = vmax.f32 %v1299, 0.0
        %v1332 = vmax.f32 %v1300, 0.0
        %v1333 = vmax.f32 %v1301, 0.0
        %v1334 = vmax.f32 %v1302, 0.0
        %v1335 = vmax.f32 %v1303, 0.0
        %v1336 = vmax.f32 %v1304, 0.0
        %v1337 = vmax.f32 %v1305, 0.0
        %v1338 = vmax.f32 %v1306, 0.0
        %v1339 = vmax.f32 %v1307, 0.0
        %v1340 = vmax.f32 %v1308, 0.0
        %1341 = vst.msk [vmem:[#allocation2] sm:$0xff] %vm1198, 0.0
        %1342 = vst.msk [vmem:[#allocation2 + $0x8] sm:$0xff] %vm1198, 0.0
        %1343 = vst.msk [vmem:[#allocation2 + $0x10] sm:$0xff] %vm1198, 0.0
        %1344 = vst.msk [vmem:[#allocation2 + $0x18] sm:$0xff] %vm1198, 0.0
        %1345 = vst.msk [vmem:[#allocation2 + $0x20] sm:$0xff] %vm1198, 0.0
        %1346 = vst.msk [vmem:[#allocation2 + $0x28] sm:$0xff] %vm1198, 0.0
        %1347 = vst.msk [vmem:[#allocation2 + $0x30] sm:$0xff] %vm1198, 0.0
        %1348 = vst.msk [vmem:[#allocation2 + $0x38] sm:$0xff] %vm1198, 0.0
        %1349 = vst.msk [vmem:[#allocation2 + $0x40] sm:$0xff] %vm1198, 0.0
        %1350 = vst.msk [vmem:[#allocation2 + $0x48] sm:$0xff] %vm1198, 0.0
        %1351 = vst.msk [vmem:[#allocation2 + $0x50] sm:$0xff] %vm1198, 0.0
        %1352 = vst.msk [vmem:[#allocation2 + $0x58] sm:$0xff] %vm1198, 0.0
        %1353 = vst.msk [vmem:[#allocation2 + $0x60] sm:$0xff] %vm1198, 0.0
        %1354 = vst.msk [vmem:[#allocation2 + $0x68] sm:$0xff] %vm1198, 0.0
        %1355 = vst.msk [vmem:[#allocation2 + $0x70] sm:$0xff] %vm1198, 0.0
        %1356 = vst.msk [vmem:[#allocation2 + $0x78] sm:$0xff] %vm1198, 0.0
        %1357 = vst.msk [vmem:[#allocation2 + $0x80] sm:$0xff] %vm1198, 0.0
        %1358 = vst.msk [vmem:[#allocation2 + $0x88] sm:$0xff] %vm1198, 0.0
        %1359 = vst.msk [vmem:[#allocation2 + $0x90] sm:$0xff] %vm1198, 0.0
        %1360 = vst.msk [vmem:[#allocation2 + $0x98] sm:$0xff] %vm1198, 0.0
        %1361 = vst.msk [vmem:[#allocation2 + $0xa0] sm:$0xff] %vm1198, 0.0
        %1362 = vst.msk [vmem:[#allocation2 + $0xa8] sm:$0xff] %vm1198, 0.0
        %1363 = vst.msk [vmem:[#allocation2 + $0xb0] sm:$0xff] %vm1198, 0.0
        %1364 = vst.msk [vmem:[#allocation2 + $0xb8] sm:$0xff] %vm1198, 0.0
        %1365 = vst.msk [vmem:[#allocation2 + $0xc0] sm:$0xff] %vm1198, 0.0
        %1366 = vst.msk [vmem:[#allocation2 + $0xc8] sm:$0xff] %vm1198, 0.0
        %1367 = vst.msk [vmem:[#allocation2 + $0xd0] sm:$0xff] %vm1198, 0.0
        %1368 = vst.msk [vmem:[#allocation2 + $0xd8] sm:$0xff] %vm1198, 0.0
        %1369 = vst.msk [vmem:[#allocation2 + $0xe0] sm:$0xff] %vm1198, 0.0
        %1370 = vst.msk [vmem:[#allocation2 + $0xe8] sm:$0xff] %vm1198, 0.0
        %1371 = vst.msk [vmem:[#allocation2 + $0xf0] sm:$0xff] %vm1198, 0.0
        %1372 = vst.msk [vmem:[#allocation2 + $0xf8] sm:$0xff] %vm1198, 0.0
        %1373 = vst.msk [vmem:[#allocation2 + $0x100] sm:$0xff] %vm1198, 0.0
        %1374 = vst.msk [vmem:[#allocation2 + $0x108] sm:$0xff] %vm1198, 0.0
        %1375 = vst.msk [vmem:[#allocation2 + $0x110] sm:$0xff] %vm1198, 0.0
        %1376 = vst.msk [vmem:[#allocation2 + $0x118] sm:$0xff] %vm1198, 0.0
        %1377 = vst.msk [vmem:[#allocation2 + $0x120] sm:$0xff] %vm1198, 0.0
        %1378 = vst.msk [vmem:[#allocation2 + $0x128] sm:$0xff] %vm1198, 0.0
        %1379 = vst.msk [vmem:[#allocation2 + $0x130] sm:$0xff] %vm1198, 0.0
        %1380 = vst.msk [vmem:[#allocation2 + $0x138] sm:$0xff] %vm1198, 0.0
        %1381 = vst.msk [vmem:[#allocation2 + $0x140] sm:$0xff] %vm1198, 0.0
        %1382 = vst.msk [vmem:[#allocation2 + $0x148] sm:$0xff] %vm1198, 0.0
        %1383 = vst.msk [vmem:[#allocation2 + $0x150] sm:$0xff] %vm1198, 0.0
        %1384 = vst.msk [vmem:[#allocation2 + $0x158] sm:$0xff] %vm1198, 0.0
        %1385 = vst.msk [vmem:[#allocation2 + $0x160] sm:$0xff] %vm1198, 0.0
        %1386 = vst.msk [vmem:[#allocation2 + $0x168] sm:$0xff] %vm1198, 0.0
        %1387 = vst.msk [vmem:[#allocation2 + $0x170] sm:$0xff] %vm1198, 0.0
        %1388 = vst.msk [vmem:[#allocation2 + $0x178] sm:$0xff] %vm1198, 0.0
        %1389 = vst.msk [vmem:[#allocation2 + $0x180] sm:$0xff] %vm1198, 0.0
        %1390 = vst.msk [vmem:[#allocation2 + $0x188] sm:$0xff] %vm1198, 0.0
        %1391 = vst.msk [vmem:[#allocation2 + $0x190] sm:$0xff] %vm1198, 0.0
        %1392 = vst.msk [vmem:[#allocation2 + $0x198] sm:$0xff] %vm1198, 0.0
        %1393 = vst.msk [vmem:[#allocation2 + $0x1a0] sm:$0xff] %vm1198, 0.0
        %1394 = vst.msk [vmem:[#allocation2 + $0x1a8] sm:$0xff] %vm1198, 0.0
        %1395 = vst.msk [vmem:[#allocation2 + $0x1b0] sm:$0xff] %vm1198, 0.0
        %1396 = vst.msk [vmem:[#allocation2 + $0x1b8] sm:$0xff] %vm1198, 0.0
        %1397 = vst.msk [vmem:[#allocation2 + $0x1c0] sm:$0xff] %vm1198, 0.0
        %1398 = vst.msk [vmem:[#allocation2 + $0x1c8] sm:$0xff] %vm1198, 0.0
        %1399 = vst.msk [vmem:[#allocation2 + $0x1d0] sm:$0xff] %vm1198, 0.0
        %1400 = vst.msk [vmem:[#allocation2 + $0x1d8] sm:$0xff] %vm1198, 0.0
        %1401 = vst.msk [vmem:[#allocation2 + $0x1e0] sm:$0xff] %vm1198, 0.0
        %1402 = vst.msk [vmem:[#allocation2 + $0x1e8] sm:$0xff] %vm1198, 0.0
        %1403 = vst.msk [vmem:[#allocation2 + $0x1f0] sm:$0xff] %vm1198, 0.0
        %1404 = vst.msk [vmem:[#allocation2 + $0x1f8] sm:$0xff] %vm1198, 0.0
        %1405 = vst.msk [vmem:[#allocation2 + $0x200] sm:$0xff] %vm1198, 0.0
        %1406 = vst.msk [vmem:[#allocation2 + $0x208] sm:$0xff] %vm1198, 0.0
        %1407 = vst.msk [vmem:[#allocation2 + $0x210] sm:$0xff] %vm1198, 0.0
        %1408 = vst.msk [vmem:[#allocation2 + $0x218] sm:$0xff] %vm1198, 0.0
        %1409 = vst.msk [vmem:[#allocation2 + $0x220] sm:$0xff] %vm1198, 0.0
        %1410 = vst.msk [vmem:[#allocation2 + $0x228] sm:$0xff] %vm1198, 0.0
        %1411 = vst.msk [vmem:[#allocation2 + $0x230] sm:$0xff] %vm1198, 0.0
        %1412 = vst.msk [vmem:[#allocation2 + $0x238] sm:$0xff] %vm1198, 0.0
        %s1413 = scalar_lea.vmem [#allocation2], 32
        %1414 = vst.msk [vmem:[%s1413 + $0x8] sm:$0xff] %vm1198, %v1309
        %1415 = vst.msk [vmem:[%s1413 + $0x10] sm:$0xff] %vm1198, %v1310
        %1416 = vst.msk [vmem:[%s1413 + $0x28] sm:$0xff] %vm1198, %v1311
        %1417 = vst.msk [vmem:[%s1413 + $0x30] sm:$0xff] %vm1198, %v1312
        %1418 = vst.msk [vmem:[%s1413 + $0x48] sm:$0xff] %vm1198, %v1313
        %1419 = vst.msk [vmem:[%s1413 + $0x50] sm:$0xff] %vm1198, %v1314
        %1420 = vst.msk [vmem:[%s1413 + $0x68] sm:$0xff] %vm1198, %v1315
        %1421 = vst.msk [vmem:[%s1413 + $0x70] sm:$0xff] %vm1198, %v1316
        %1422 = vst.msk [vmem:[%s1413 + $0x88] sm:$0xff] %vm1198, %v1317
        %1423 = vst.msk [vmem:[%s1413 + $0x90] sm:$0xff] %vm1198, %v1318
        %1424 = vst.msk [vmem:[%s1413 + $0xa8] sm:$0xff] %vm1198, %v1319
        %1425 = vst.msk [vmem:[%s1413 + $0xb0] sm:$0xff] %vm1198, %v1320
        %1426 = vst.msk [vmem:[%s1413 + $0xc8] sm:$0xff] %vm1198, %v1321
        %1427 = vst.msk [vmem:[%s1413 + $0xd0] sm:$0xff] %vm1198, %v1322
        %1428 = vst.msk [vmem:[%s1413 + $0xe8] sm:$0xff] %vm1198, %v1323
        %1429 = vst.msk [vmem:[%s1413 + $0xf0] sm:$0xff] %vm1198, %v1324
        %1430 = vst.msk [vmem:[%s1413 + $0x108] sm:$0xff] %vm1198, %v1325
        %1431 = vst.msk [vmem:[%s1413 + $0x110] sm:$0xff] %vm1198, %v1326
        %1432 = vst.msk [vmem:[%s1413 + $0x128] sm:$0xff] %vm1198, %v1327
        %1433 = vst.msk [vmem:[%s1413 + $0x130] sm:$0xff] %vm1198, %v1328
        %1434 = vst.msk [vmem:[%s1413 + $0x148] sm:$0xff] %vm1198, %v1329
        %1435 = vst.msk [vmem:[%s1413 + $0x150] sm:$0xff] %vm1198, %v1330
        %1436 = vst.msk [vmem:[%s1413 + $0x168] sm:$0xff] %vm1198, %v1331
        %1437 = vst.msk [vmem:[%s1413 + $0x170] sm:$0xff] %vm1198, %v1332
        %1438 = vst.msk [vmem:[%s1413 + $0x188] sm:$0xff] %vm1198, %v1333
        %1439 = vst.msk [vmem:[%s1413 + $0x190] sm:$0xff] %vm1198, %v1334
        %1440 = vst.msk [vmem:[%s1413 + $0x1a8] sm:$0xff] %vm1198, %v1335
        %1441 = vst.msk [vmem:[%s1413 + $0x1b0] sm:$0xff] %vm1198, %v1336
        %1442 = vst.msk [vmem:[%s1413 + $0x1c8] sm:$0xff] %vm1198, %v1337
        %1443 = vst.msk [vmem:[%s1413 + $0x1d0] sm:$0xff] %vm1198, %v1338
        %1444 = vst.msk [vmem:[%s1413 + $0x1e8] sm:$0xff] %vm1198, %v1339
        %1445 = vst.msk [vmem:[%s1413 + $0x1f0] sm:$0xff] %vm1198, %v1340
        %v1446 = vld [vmem:[#allocation2 + $0x7] sm:$0xff]
        %v1447 = vld [vmem:[#allocation2 + $0xf] sm:$0xff]
        %v1448 = vld [vmem:[#allocation2 + $0x27] sm:$0xff]
        %v1449 = vld [vmem:[#allocation2 + $0x2f] sm:$0xff]
        %v1450 = vld [vmem:[#allocation2 + $0x47] sm:$0xff]
        %v1451 = vld [vmem:[#allocation2 + $0x4f] sm:$0xff]
        %v1452 = vld [vmem:[#allocation2 + $0x67] sm:$0xff]
        %v1453 = vld [vmem:[#allocation2 + $0x6f] sm:$0xff]
        %v1454 = vld [vmem:[#allocation2 + $0x87] sm:$0xff]
        %v1455 = vld [vmem:[#allocation2 + $0x8f] sm:$0xff]
        %v1456 = vld [vmem:[#allocation2 + $0xa7] sm:$0xff]
        %v1457 = vld [vmem:[#allocation2 + $0xaf] sm:$0xff]
        %v1458 = vld [vmem:[#allocation2 + $0xc7] sm:$0xff]
        %v1459 = vld [vmem:[#allocation2 + $0xcf] sm:$0xff]
        %v1460 = vld [vmem:[#allocation2 + $0xe7] sm:$0xff]
        %v1461 = vld [vmem:[#allocation2 + $0xef] sm:$0xff]
        %v1462 = vld [vmem:[#allocation2 + $0x107] sm:$0xff]
        %v1463 = vld [vmem:[#allocation2 + $0x10f] sm:$0xff]
        %v1464 = vld [vmem:[#allocation2 + $0x127] sm:$0xff]
        %v1465 = vld [vmem:[#allocation2 + $0x12f] sm:$0xff]
        %v1466 = vld [vmem:[#allocation2 + $0x147] sm:$0xff]
        %v1467 = vld [vmem:[#allocation2 + $0x14f] sm:$0xff]
        %v1468 = vld [vmem:[#allocation2 + $0x167] sm:$0xff]
        %v1469 = vld [vmem:[#allocation2 + $0x16f] sm:$0xff]
        %v1470 = vld [vmem:[#allocation2 + $0x187] sm:$0xff]
        %v1471 = vld [vmem:[#allocation2 + $0x18f] sm:$0xff]
        %v1472 = vld [vmem:[#allocation2 + $0x1a7] sm:$0xff]
        %v1473 = vld [vmem:[#allocation2 + $0x1af] sm:$0xff]
        %v1474 = vld [vmem:[#allocation2 + $0x1c7] sm:$0xff]
        %v1475 = vld [vmem:[#allocation2 + $0x1cf] sm:$0xff]
        %v1476 = vld [vmem:[#allocation2 + $0x1e7] sm:$0xff]
        %v1477 = vld [vmem:[#allocation2 + $0x1ef] sm:$0xff]
        %v1478 = vld [vmem:[%s5] sm:$0xff]
        %v1479 = vld [vmem:[%s5 + $0x8] sm:$0xff]
        %v1480 = vld [vmem:[%s5 + $0x10] sm:$0xff]
        %v1481 = vld [vmem:[%s5 + $0x18] sm:$0xff]
        %v1482 = vld [vmem:[%s5 + $0x20] sm:$0xff]
        %v1483 = vld [vmem:[%s5 + $0x28] sm:$0xff]
        %v1484 = vld [vmem:[%s5 + $0x30] sm:$0xff]
        %v1485 = vld [vmem:[%s5 + $0x38] sm:$0xff]
        %v1486 = vld [vmem:[#allocation2 + $0x8] sm:$0xff]
        %v1487 = vld [vmem:[#allocation2 + $0x10] sm:$0xff]
        %v1488 = vld [vmem:[#allocation2 + $0x28] sm:$0xff]
        %v1489 = vld [vmem:[#allocation2 + $0x30] sm:$0xff]
        %v1490 = vld [vmem:[#allocation2 + $0x48] sm:$0xff]
        %v1491 = vld [vmem:[#allocation2 + $0x50] sm:$0xff]
        %v1492 = vld [vmem:[#allocation2 + $0x68] sm:$0xff]
        %v1493 = vld [vmem:[#allocation2 + $0x70] sm:$0xff]
        %v1494 = vld [vmem:[#allocation2 + $0x88] sm:$0xff]
        %v1495 = vld [vmem:[#allocation2 + $0x90] sm:$0xff]
        %v1496 = vld [vmem:[#allocation2 + $0xa8] sm:$0xff]
        %v1497 = vld [vmem:[#allocation2 + $0xb0] sm:$0xff]
        %v1498 = vld [vmem:[#allocation2 + $0xc8] sm:$0xff]
        %v1499 = vld [vmem:[#allocation2 + $0xd0] sm:$0xff]
        %v1500 = vld [vmem:[#allocation2 + $0xe8] sm:$0xff]
        %v1501 = vld [vmem:[#allocation2 + $0xf0] sm:$0xff]
        %v1502 = vld [vmem:[#allocation2 + $0x108] sm:$0xff]
        %v1503 = vld [vmem:[#allocation2 + $0x110] sm:$0xff]
        %v1504 = vld [vmem:[#allocation2 + $0x128] sm:$0xff]
        %v1505 = vld [vmem:[#allocation2 + $0x130] sm:$0xff]
        %v1506 = vld [vmem:[#allocation2 + $0x148] sm:$0xff]
        %v1507 = vld [vmem:[#allocation2 + $0x150] sm:$0xff]
        %v1508 = vld [vmem:[#allocation2 + $0x168] sm:$0xff]
        %v1509 = vld [vmem:[#allocation2 + $0x170] sm:$0xff]
        %v1510 = vld [vmem:[#allocation2 + $0x188] sm:$0xff]
        %v1511 = vld [vmem:[#allocation2 + $0x190] sm:$0xff]
        %v1512 = vld [vmem:[#allocation2 + $0x1a8] sm:$0xff]
        %v1513 = vld [vmem:[#allocation2 + $0x1b0] sm:$0xff]
        %v1514 = vld [vmem:[#allocation2 + $0x1c8] sm:$0xff]
        %v1515 = vld [vmem:[#allocation2 + $0x1d0] sm:$0xff]
        %v1516 = vld [vmem:[#allocation2 + $0x1e8] sm:$0xff]
        %v1517 = vld [vmem:[#allocation2 + $0x1f0] sm:$0xff]
        %s1518 = scalar_lea.vmem %s5, 64
        %v1519 = vld [vmem:[%s1518] sm:$0xff]
        %v1520 = vld [vmem:[%s1518 + $0x8] sm:$0xff]
        %v1521 = vld [vmem:[%s1518 + $0x10] sm:$0xff]
        %v1522 = vld [vmem:[%s1518 + $0x18] sm:$0xff]
        %v1523 = vld [vmem:[%s1518 + $0x20] sm:$0xff]
        %v1524 = vld [vmem:[%s1518 + $0x28] sm:$0xff]
        %v1525 = vld [vmem:[%s1518 + $0x30] sm:$0xff]
        %v1526 = vld [vmem:[%s1518 + $0x38] sm:$0xff]
        %v1528 = vsel %vm1198, %v1486, 0
        %v1531 = vsel %vm1198, %v1487, 0
        %v1534 = vsel %vm1198, %v1488, 0
        %v1537 = vsel %vm1198, %v1489, 0
        %v1540 = vsel %vm1198, %v1490, 0
        %v1543 = vsel %vm1198, %v1491, 0
        %v1546 = vsel %vm1198, %v1492, 0
        %v1549 = vsel %vm1198, %v1493, 0
        %v1552 = vsel %vm1198, %v1494, 0
        %v1555 = vsel %vm1198, %v1495, 0
        %v1558 = vsel %vm1198, %v1496, 0
        %v1561 = vsel %vm1198, %v1497, 0
        %v1564 = vsel %vm1198, %v1498, 0
        %v1567 = vsel %vm1198, %v1499, 0
        %v1570 = vsel %vm1198, %v1500, 0
        %v1573 = vsel %vm1198, %v1501, 0
        %v1576 = vsel %vm1198, %v1502, 0
        %v1579 = vsel %vm1198, %v1503, 0
        %v1582 = vsel %vm1198, %v1504, 0
        %v1585 = vsel %vm1198, %v1505, 0
        %v1588 = vsel %vm1198, %v1506, 0
        %v1591 = vsel %vm1198, %v1507, 0
        %v1594 = vsel %vm1198, %v1508, 0
        %v1597 = vsel %vm1198, %v1509, 0
        %v1600 = vsel %vm1198, %v1510, 0
        %v1603 = vsel %vm1198, %v1511, 0
        %v1606 = vsel %vm1198, %v1512, 0
        %v1609 = vsel %vm1198, %v1513, 0
        %v1612 = vsel %vm1198, %v1514, 0
        %v1615 = vsel %vm1198, %v1515, 0
        %v1618 = vsel %vm1198, %v1516, 0
        %v1621 = vsel %vm1198, %v1517, 0
        %1623 = vmatprep.subr.mxu0 0.0
        %1624 = vmatpush1.msra.mxu0 0.0
        %1625 = vmatprep.subr.mxu0 0.0
        %1626 = vmatpush1.msra.mxu0 0.0
        %1627 = vmatprep.subr.mxu0 0.0
        %1628 = vmatpush1.msra.mxu0 0.0
        %1629 = vmatprep.subr.mxu0 0.0
        %1630 = vmatpush1.msra.mxu0 0.0
        %1631 = vmatprep.subr.mxu0 0.0
        %1632 = vmatpush1.msra.mxu0 0.0
        %1633 = vmatprep.subr.mxu0 0.0
        %1634 = vmatpush1.msra.mxu0 0.0
        %1635 = vmatprep.subr.mxu0 0.0
        %1636 = vmatpush1.msra.mxu0 0.0
        %1637 = vmatprep.subr.mxu0 0.0
        %1638 = vmatpush1.msra.mxu0 0.0
        %1639 = vmatprep.subr.mxu0 0.0
        %1640 = vmatpush1.msra.mxu0 %v1526
        %1641 = vmatprep.subr.mxu0 0.0
        %1642 = vmatpush1.msra.mxu0 %v1525
        %1643 = vmatprep.subr.mxu0 0.0
        %1644 = vmatpush1.msra.mxu0 %v1524
        %1645 = vmatprep.subr.mxu0 0.0
        %1646 = vmatpush1.msra.mxu0 %v1523
        %1647 = vmatprep.subr.mxu0 0.0
        %1648 = vmatpush1.msra.mxu0 %v1522
        %1649 = vmatprep.subr.mxu0 0.0
        %1650 = vmatpush1.msra.mxu0 %v1521
        %1651 = vmatprep.subr.mxu0 0.0
        %1652 = vmatpush1.msra.mxu0 %v1520
        %1653 = vmatprep.subr.mxu0 0.0
        %1654 = vmatpush1.msra.mxu0 %v1519
        %1655 = vmatprep.subr.mxu0 0.0
        %1656 = vmatpush2.msra.mxu0 0.0
        %1657 = vmatprep.subr.mxu0 0.0
        %1658 = vmatpush2.msra.mxu0 0.0
        %1659 = vmatprep.subr.mxu0 0.0
        %1660 = vmatpush2.msra.mxu0 0.0
        %1661 = vmatprep.subr.mxu0 0.0
        %1662 = vmatpush2.msra.mxu0 0.0
        %1663 = vmatprep.subr.mxu0 0.0
        %1664 = vmatpush2.msra.mxu0 0.0
        %1665 = vmatprep.subr.mxu0 0.0
        %1666 = vmatpush2.msra.mxu0 0.0
        %1667 = vmatprep.subr.mxu0 0.0
        %1668 = vmatpush2.msra.mxu0 0.0
        %1669 = vmatprep.subr.mxu0 0.0
        %1670 = vmatpush2.msra.mxu0 0.0
        %1671 = vmatprep.subr.mxu0 0.0
        %1672 = vmatpush2.msra.mxu0 0.0
        %1673 = vmatprep.subr.mxu0 0.0
        %1674 = vmatpush2.msra.mxu0 0.0
        %1675 = vmatprep.subr.mxu0 0.0
        %1676 = vmatpush2.msra.mxu0 0.0
        %1677 = vmatprep.subr.mxu0 0.0
        %1678 = vmatpush2.msra.mxu0 0.0
        %1679 = vmatprep.subr.mxu0 0.0
        %1680 = vmatpush2.msra.mxu0 0.0
        %1681 = vmatprep.subr.mxu0 0.0
        %1682 = vmatpush2.msra.mxu0 0.0
        %1683 = vmatprep.subr.mxu0 0.0
        %1684 = vmatpush2.msra.mxu0 0.0
        %1685 = vmatprep.subr.mxu0 0.0
        %1686 = vmatpush2.msra.mxu0 0.0
        %1687 = vmatprep.mubr.f32.mxu0 0.0
        %1688 = vmatmul.mubr.f32.gmra.mxu0 %v1528
        %v1689 = vpop.f32.mrf.mxu0
        %v1690 = vadd.f32 0.0, %v1689
        %v1691 = vpop.f32.mrf.mxu0
        %1692 = vmatprep.mubr.f32.mxu0 0.0
        %1693 = vmatmul.mubr.f32.gmra.mxu0 %v1531
        %v1694 = vpop.f32.mrf.mxu0
        %v1695 = vadd.f32 0.0, %v1694
        %v1696 = vpop.f32.mrf.mxu0
        %1697 = vmatprep.mubr.f32.mxu0 0.0
        %1698 = vmatmul.mubr.f32.gmra.mxu0 %v1534
        %v1699 = vpop.f32.mrf.mxu0
        %v1700 = vadd.f32 0.0, %v1699
        %v1701 = vpop.f32.mrf.mxu0
        %1702 = vmatprep.mubr.f32.mxu0 0.0
        %1703 = vmatmul.mubr.f32.gmra.mxu0 %v1537
        %v1704 = vpop.f32.mrf.mxu0
        %v1705 = vadd.f32 0.0, %v1704
        %v1706 = vpop.f32.mrf.mxu0
        %1707 = vmatprep.mubr.f32.mxu0 0.0
        %1708 = vmatmul.mubr.f32.gmra.mxu0 %v1540
        %v1709 = vpop.f32.mrf.mxu0
        %v1710 = vadd.f32 0.0, %v1709
        %v1711 = vpop.f32.mrf.mxu0
        %1712 = vmatprep.mubr.f32.mxu0 0.0
        %1713 = vmatmul.mubr.f32.gmra.mxu0 %v1543
        %v1714 = vpop.f32.mrf.mxu0
        %v1715 = vadd.f32 0.0, %v1714
        %v1716 = vpop.f32.mrf.mxu0
        %1717 = vmatprep.mubr.f32.mxu0 0.0
        %1718 = vmatmul.mubr.f32.gmra.mxu0 %v1546
        %v1719 = vpop.f32.mrf.mxu0
        %v1720 = vadd.f32 0.0, %v1719
        %v1721 = vpop.f32.mrf.mxu0
        %1722 = vmatprep.mubr.f32.mxu0 0.0
        %1723 = vmatmul.mubr.f32.gmra.mxu0 %v1549
        %v1724 = vpop.f32.mrf.mxu0
        %v1725 = vadd.f32 0.0, %v1724
        %v1726 = vpop.f32.mrf.mxu0
        %1727 = vmatprep.mubr.f32.mxu0 0.0
        %1728 = vmatmul.mubr.f32.gmra.mxu0 %v1552
        %v1729 = vpop.f32.mrf.mxu0
        %v1730 = vadd.f32 0.0, %v1729
        %v1731 = vpop.f32.mrf.mxu0
        %1732 = vmatprep.mubr.f32.mxu0 0.0
        %1733 = vmatmul.mubr.f32.gmra.mxu0 %v1555
        %v1734 = vpop.f32.mrf.mxu0
        %v1735 = vadd.f32 0.0, %v1734
        %v1736 = vpop.f32.mrf.mxu0
        %1737 = vmatprep.mubr.f32.mxu0 0.0
        %1738 = vmatmul.mubr.f32.gmra.mxu0 %v1558
        %v1739 = vpop.f32.mrf.mxu0
        %v1740 = vadd.f32 0.0, %v1739
        %v1741 = vpop.f32.mrf.mxu0
        %1742 = vmatprep.mubr.f32.mxu0 0.0
        %1743 = vmatmul.mubr.f32.gmra.mxu0 %v1561
        %v1744 = vpop.f32.mrf.mxu0
        %v1745 = vadd.f32 0.0, %v1744
        %v1746 = vpop.f32.mrf.mxu0
        %1747 = vmatprep.mubr.f32.mxu0 0.0
        %1748 = vmatmul.mubr.f32.gmra.mxu0 %v1564
        %v1749 = vpop.f32.mrf.mxu0
        %v1750 = vadd.f32 0.0, %v1749
        %v1751 = vpop.f32.mrf.mxu0
        %1752 = vmatprep.mubr.f32.mxu0 0.0
        %1753 = vmatmul.mubr.f32.gmra.mxu0 %v1567
        %v1754 = vpop.f32.mrf.mxu0
        %v1755 = vadd.f32 0.0, %v1754
        %v1756 = vpop.f32.mrf.mxu0
        %1757 = vmatprep.mubr.f32.mxu0 0.0
        %1758 = vmatmul.mubr.f32.gmra.mxu0 %v1570
        %v1759 = vpop.f32.mrf.mxu0
        %v1760 = vadd.f32 0.0, %v1759
        %v1761 = vpop.f32.mrf.mxu0
        %1762 = vmatprep.mubr.f32.mxu0 0.0
        %1763 = vmatmul.mubr.f32.gmra.mxu0 %v1573
        %v1764 = vpop.f32.mrf.mxu0
        %v1765 = vadd.f32 0.0, %v1764
        %v1766 = vpop.f32.mrf.mxu0
        %1767 = vmatprep.mubr.f32.mxu0 0.0
        %1768 = vmatmul.mubr.f32.gmra.mxu0 %v1576
        %v1769 = vpop.f32.mrf.mxu0
        %v1770 = vadd.f32 0.0, %v1769
        %v1771 = vpop.f32.mrf.mxu0
        %1772 = vmatprep.mubr.f32.mxu0 0.0
        %1773 = vmatmul.mubr.f32.gmra.mxu0 %v1579
        %v1774 = vpop.f32.mrf.mxu0
        %v1775 = vadd.f32 0.0, %v1774
        %v1776 = vpop.f32.mrf.mxu0
        %1777 = vmatprep.mubr.f32.mxu0 0.0
        %1778 = vmatmul.mubr.f32.gmra.mxu0 %v1582
        %v1779 = vpop.f32.mrf.mxu0
        %v1780 = vadd.f32 0.0, %v1779
        %v1781 = vpop.f32.mrf.mxu0
        %1782 = vmatprep.mubr.f32.mxu0 0.0
        %1783 = vmatmul.mubr.f32.gmra.mxu0 %v1585
        %v1784 = vpop.f32.mrf.mxu0
        %v1785 = vadd.f32 0.0, %v1784
        %v1786 = vpop.f32.mrf.mxu0
        %1787 = vmatprep.mubr.f32.mxu0 0.0
        %1788 = vmatmul.mubr.f32.gmra.mxu0 %v1588
        %v1789 = vpop.f32.mrf.mxu0
        %v1790 = vadd.f32 0.0, %v1789
        %v1791 = vpop.f32.mrf.mxu0
        %1792 = vmatprep.mubr.f32.mxu0 0.0
        %1793 = vmatmul.mubr.f32.gmra.mxu0 %v1591
        %v1794 = vpop.f32.mrf.mxu0
        %v1795 = vadd.f32 0.0, %v1794
        %v1796 = vpop.f32.mrf.mxu0
        %1797 = vmatprep.mubr.f32.mxu0 0.0
        %1798 = vmatmul.mubr.f32.gmra.mxu0 %v1594
        %v1799 = vpop.f32.mrf.mxu0
        %v1800 = vadd.f32 0.0, %v1799
        %v1801 = vpop.f32.mrf.mxu0
        %1802 = vmatprep.mubr.f32.mxu0 0.0
        %1803 = vmatmul.mubr.f32.gmra.mxu0 %v1597
        %v1804 = vpop.f32.mrf.mxu0
        %v1805 = vadd.f32 0.0, %v1804
        %v1806 = vpop.f32.mrf.mxu0
        %1807 = vmatprep.mubr.f32.mxu0 0.0
        %1808 = vmatmul.mubr.f32.gmra.mxu0 %v1600
        %v1809 = vpop.f32.mrf.mxu0
        %v1810 = vadd.f32 0.0, %v1809
        %v1811 = vpop.f32.mrf.mxu0
        %1812 = vmatprep.mubr.f32.mxu0 0.0
        %1813 = vmatmul.mubr.f32.gmra.mxu0 %v1603
        %v1814 = vpop.f32.mrf.mxu0
        %v1815 = vadd.f32 0.0, %v1814
        %v1816 = vpop.f32.mrf.mxu0
        %1817 = vmatprep.mubr.f32.mxu0 0.0
        %1818 = vmatmul.mubr.f32.gmra.mxu0 %v1606
        %v1819 = vpop.f32.mrf.mxu0
        %v1820 = vadd.f32 0.0, %v1819
        %v1821 = vpop.f32.mrf.mxu0
        %1822 = vmatprep.mubr.f32.mxu0 0.0
        %1823 = vmatmul.mubr.f32.gmra.mxu0 %v1609
        %v1824 = vpop.f32.mrf.mxu0
        %v1825 = vadd.f32 0.0, %v1824
        %v1826 = vpop.f32.mrf.mxu0
        %1827 = vmatprep.mubr.f32.mxu0 0.0
        %1828 = vmatmul.mubr.f32.gmra.mxu0 %v1612
        %v1829 = vpop.f32.mrf.mxu0
        %v1830 = vadd.f32 0.0, %v1829
        %v1831 = vpop.f32.mrf.mxu0
        %1832 = vmatprep.mubr.f32.mxu0 0.0
        %1833 = vmatmul.mubr.f32.gmra.mxu0 %v1615
        %v1834 = vpop.f32.mrf.mxu0
        %v1835 = vadd.f32 0.0, %v1834
        %v1836 = vpop.f32.mrf.mxu0
        %1837 = vmatprep.mubr.f32.mxu0 0.0
        %1838 = vmatmul.mubr.f32.gmra.mxu0 %v1618
        %v1839 = vpop.f32.mrf.mxu0
        %v1840 = vadd.f32 0.0, %v1839
        %v1841 = vpop.f32.mrf.mxu0
        %1842 = vmatprep.mubr.f32.mxu0 0.0
        %1843 = vmatmul.mubr.f32.gmra.mxu0 %v1621
        %v1844 = vpop.f32.mrf.mxu0
        %v1845 = vadd.f32 0.0, %v1844
        %v1846 = vpop.f32.mrf.mxu0
        %1847 = vdwg.mxu0
        %v1849 = vsel %vm1198, %v1446, 0
        %v1852 = vsel %vm1198, %v1447, 0
        %v1855 = vsel %vm1198, %v1448, 0
        %v1858 = vsel %vm1198, %v1449, 0
        %v1861 = vsel %vm1198, %v1450, 0
        %v1864 = vsel %vm1198, %v1451, 0
        %v1867 = vsel %vm1198, %v1452, 0
        %v1870 = vsel %vm1198, %v1453, 0
        %v1873 = vsel %vm1198, %v1454, 0
        %v1876 = vsel %vm1198, %v1455, 0
        %v1879 = vsel %vm1198, %v1456, 0
        %v1882 = vsel %vm1198, %v1457, 0
        %v1885 = vsel %vm1198, %v1458, 0
        %v1888 = vsel %vm1198, %v1459, 0
        %v1891 = vsel %vm1198, %v1460, 0
        %v1894 = vsel %vm1198, %v1461, 0
        %v1897 = vsel %vm1198, %v1462, 0
        %v1900 = vsel %vm1198, %v1463, 0
        %v1903 = vsel %vm1198, %v1464, 0
        %v1906 = vsel %vm1198, %v1465, 0
        %v1909 = vsel %vm1198, %v1466, 0
        %v1912 = vsel %vm1198, %v1467, 0
        %v1915 = vsel %vm1198, %v1468, 0
        %v1918 = vsel %vm1198, %v1469, 0
        %v1921 = vsel %vm1198, %v1470, 0
        %v1924 = vsel %vm1198, %v1471, 0
        %v1927 = vsel %vm1198, %v1472, 0
        %v1930 = vsel %vm1198, %v1473, 0
        %v1933 = vsel %vm1198, %v1474, 0
        %v1936 = vsel %vm1198, %v1475, 0
        %v1939 = vsel %vm1198, %v1476, 0
        %v1942 = vsel %vm1198, %v1477, 0
        %1944 = vmatprep.subr.mxu0 0.0
        %1945 = vmatpush1.msra.mxu0 0.0
        %1946 = vmatprep.subr.mxu0 0.0
        %1947 = vmatpush1.msra.mxu0 0.0
        %1948 = vmatprep.subr.mxu0 0.0
        %1949 = vmatpush1.msra.mxu0 0.0
        %1950 = vmatprep.subr.mxu0 0.0
        %1951 = vmatpush1.msra.mxu0 0.0
        %1952 = vmatprep.subr.mxu0 0.0
        %1953 = vmatpush1.msra.mxu0 0.0
        %1954 = vmatprep.subr.mxu0 0.0
        %1955 = vmatpush1.msra.mxu0 0.0
        %1956 = vmatprep.subr.mxu0 0.0
        %1957 = vmatpush1.msra.mxu0 0.0
        %1958 = vmatprep.subr.mxu0 0.0
        %1959 = vmatpush1.msra.mxu0 0.0
        %1960 = vmatprep.subr.mxu0 0.0
        %1961 = vmatpush1.msra.mxu0 %v1485
        %1962 = vmatprep.subr.mxu0 0.0
        %1963 = vmatpush1.msra.mxu0 %v1484
        %1964 = vmatprep.subr.mxu0 0.0
        %1965 = vmatpush1.msra.mxu0 %v1483
        %1966 = vmatprep.subr.mxu0 0.0
        %1967 = vmatpush1.msra.mxu0 %v1482
        %1968 = vmatprep.subr.mxu0 0.0
        %1969 = vmatpush1.msra.mxu0 %v1481
        %1970 = vmatprep.subr.mxu0 0.0
        %1971 = vmatpush1.msra.mxu0 %v1480
        %1972 = vmatprep.subr.mxu0 0.0
        %1973 = vmatpush1.msra.mxu0 %v1479
        %1974 = vmatprep.subr.mxu0 0.0
        %1975 = vmatpush1.msra.mxu0 %v1478
        %1976 = vmatprep.subr.mxu0 0.0
        %1977 = vmatpush2.msra.mxu0 0.0
        %1978 = vmatprep.subr.mxu0 0.0
        %1979 = vmatpush2.msra.mxu0 0.0
        %1980 = vmatprep.subr.mxu0 0.0
        %1981 = vmatpush2.msra.mxu0 0.0
        %1982 = vmatprep.subr.mxu0 0.0
        %1983 = vmatpush2.msra.mxu0 0.0
        %1984 = vmatprep.subr.mxu0 0.0
        %1985 = vmatpush2.msra.mxu0 0.0
        %1986 = vmatprep.subr.mxu0 0.0
        %1987 = vmatpush2.msra.mxu0 0.0
        %1988 = vmatprep.subr.mxu0 0.0
        %1989 = vmatpush2.msra.mxu0 0.0
        %1990 = vmatprep.subr.mxu0 0.0
        %1991 = vmatpush2.msra.mxu0 0.0
        %1992 = vmatprep.subr.mxu0 0.0
        %1993 = vmatpush2.msra.mxu0 0.0
        %1994 = vmatprep.subr.mxu0 0.0
        %1995 = vmatpush2.msra.mxu0 0.0
        %1996 = vmatprep.subr.mxu0 0.0
        %1997 = vmatpush2.msra.mxu0 0.0
        %1998 = vmatprep.subr.mxu0 0.0
        %1999 = vmatpush2.msra.mxu0 0.0
        %2000 = vmatprep.subr.mxu0 0.0
        %2001 = vmatpush2.msra.mxu0 0.0
        %2002 = vmatprep.subr.mxu0 0.0
        %2003 = vmatpush2.msra.mxu0 0.0
        %2004 = vmatprep.subr.mxu0 0.0
        %2005 = vmatpush2.msra.mxu0 0.0
        %2006 = vmatprep.subr.mxu0 0.0
        %2007 = vmatpush2.msra.mxu0 0.0
        %2008 = vmatprep.mubr.f32.mxu0 0.0
        %2009 = vmatmul.mubr.f32.gmra.mxu0 %v1849
        %v2010 = vpop.f32.mrf.mxu0
        %v2011 = vadd.f32 %v1690, %v2010
        %v2012 = vpop.f32.mrf.mxu0
        %2013 = vmatprep.mubr.f32.mxu0 0.0
        %2014 = vmatmul.mubr.f32.gmra.mxu0 %v1852
        %v2015 = vpop.f32.mrf.mxu0
        %v2016 = vadd.f32 %v1695, %v2015
        %v2017 = vpop.f32.mrf.mxu0
        %2018 = vmatprep.mubr.f32.mxu0 0.0
        %2019 = vmatmul.mubr.f32.gmra.mxu0 %v1855
        %v2020 = vpop.f32.mrf.mxu0
        %v2021 = vadd.f32 %v1700, %v2020
        %v2022 = vpop.f32.mrf.mxu0
        %2023 = vmatprep.mubr.f32.mxu0 0.0
        %2024 = vmatmul.mubr.f32.gmra.mxu0 %v1858
        %v2025 = vpop.f32.mrf.mxu0
        %v2026 = vadd.f32 %v1705, %v2025
        %v2027 = vpop.f32.mrf.mxu0
        %2028 = vmatprep.mubr.f32.mxu0 0.0
        %2029 = vmatmul.mubr.f32.gmra.mxu0 %v1861
        %v2030 = vpop.f32.mrf.mxu0
        %v2031 = vadd.f32 %v1710, %v2030
        %v2032 = vpop.f32.mrf.mxu0
        %2033 = vmatprep.mubr.f32.mxu0 0.0
        %2034 = vmatmul.mubr.f32.gmra.mxu0 %v1864
        %v2035 = vpop.f32.mrf.mxu0
        %v2036 = vadd.f32 %v1715, %v2035
        %v2037 = vpop.f32.mrf.mxu0
        %2038 = vmatprep.mubr.f32.mxu0 0.0
        %2039 = vmatmul.mubr.f32.gmra.mxu0 %v1867
        %v2040 = vpop.f32.mrf.mxu0
        %v2041 = vadd.f32 %v1720, %v2040
        %v2042 = vpop.f32.mrf.mxu0
        %2043 = vmatprep.mubr.f32.mxu0 0.0
        %2044 = vmatmul.mubr.f32.gmra.mxu0 %v1870
        %v2045 = vpop.f32.mrf.mxu0
        %v2046 = vadd.f32 %v1725, %v2045
        %v2047 = vpop.f32.mrf.mxu0
        %2048 = vmatprep.mubr.f32.mxu0 0.0
        %2049 = vmatmul.mubr.f32.gmra.mxu0 %v1873
        %v2050 = vpop.f32.mrf.mxu0
        %v2051 = vadd.f32 %v1730, %v2050
        %v2052 = vpop.f32.mrf.mxu0
        %2053 = vmatprep.mubr.f32.mxu0 0.0
        %2054 = vmatmul.mubr.f32.gmra.mxu0 %v1876
        %v2055 = vpop.f32.mrf.mxu0
        %v2056 = vadd.f32 %v1735, %v2055
        %v2057 = vpop.f32.mrf.mxu0
        %2058 = vmatprep.mubr.f32.mxu0 0.0
        %2059 = vmatmul.mubr.f32.gmra.mxu0 %v1879
        %v2060 = vpop.f32.mrf.mxu0
        %v2061 = vadd.f32 %v1740, %v2060
        %v2062 = vpop.f32.mrf.mxu0
        %2063 = vmatprep.mubr.f32.mxu0 0.0
        %2064 = vmatmul.mubr.f32.gmra.mxu0 %v1882
        %v2065 = vpop.f32.mrf.mxu0
        %v2066 = vadd.f32 %v1745, %v2065
        %v2067 = vpop.f32.mrf.mxu0
        %2068 = vmatprep.mubr.f32.mxu0 0.0
        %2069 = vmatmul.mubr.f32.gmra.mxu0 %v1885
        %v2070 = vpop.f32.mrf.mxu0
        %v2071 = vadd.f32 %v1750, %v2070
        %v2072 = vpop.f32.mrf.mxu0
        %2073 = vmatprep.mubr.f32.mxu0 0.0
        %2074 = vmatmul.mubr.f32.gmra.mxu0 %v1888
        %v2075 = vpop.f32.mrf.mxu0
        %v2076 = vadd.f32 %v1755, %v2075
        %v2077 = vpop.f32.mrf.mxu0
        %2078 = vmatprep.mubr.f32.mxu0 0.0
        %2079 = vmatmul.mubr.f32.gmra.mxu0 %v1891
        %v2080 = vpop.f32.mrf.mxu0
        %v2081 = vadd.f32 %v1760, %v2080
        %v2082 = vpop.f32.mrf.mxu0
        %2083 = vmatprep.mubr.f32.mxu0 0.0
        %2084 = vmatmul.mubr.f32.gmra.mxu0 %v1894
        %v2085 = vpop.f32.mrf.mxu0
        %v2086 = vadd.f32 %v1765, %v2085
        %v2087 = vpop.f32.mrf.mxu0
        %2088 = vmatprep.mubr.f32.mxu0 0.0
        %2089 = vmatmul.mubr.f32.gmra.mxu0 %v1897
        %v2090 = vpop.f32.mrf.mxu0
        %v2091 = vadd.f32 %v1770, %v2090
        %v2092 = vpop.f32.mrf.mxu0
        %2093 = vmatprep.mubr.f32.mxu0 0.0
        %2094 = vmatmul.mubr.f32.gmra.mxu0 %v1900
        %v2095 = vpop.f32.mrf.mxu0
        %v2096 = vadd.f32 %v1775, %v2095
        %v2097 = vpop.f32.mrf.mxu0
        %2098 = vmatprep.mubr.f32.mxu0 0.0
        %2099 = vmatmul.mubr.f32.gmra.mxu0 %v1903
        %v2100 = vpop.f32.mrf.mxu0
        %v2101 = vadd.f32 %v1780, %v2100
        %v2102 = vpop.f32.mrf.mxu0
        %2103 = vmatprep.mubr.f32.mxu0 0.0
        %2104 = vmatmul.mubr.f32.gmra.mxu0 %v1906
        %v2105 = vpop.f32.mrf.mxu0
        %v2106 = vadd.f32 %v1785, %v2105
        %v2107 = vpop.f32.mrf.mxu0
        %2108 = vmatprep.mubr.f32.mxu0 0.0
        %2109 = vmatmul.mubr.f32.gmra.mxu0 %v1909
        %v2110 = vpop.f32.mrf.mxu0
        %v2111 = vadd.f32 %v1790, %v2110
        %v2112 = vpop.f32.mrf.mxu0
        %2113 = vmatprep.mubr.f32.mxu0 0.0
        %2114 = vmatmul.mubr.f32.gmra.mxu0 %v1912
        %v2115 = vpop.f32.mrf.mxu0
        %v2116 = vadd.f32 %v1795, %v2115
        %v2117 = vpop.f32.mrf.mxu0
        %2118 = vmatprep.mubr.f32.mxu0 0.0
        %2119 = vmatmul.mubr.f32.gmra.mxu0 %v1915
        %v2120 = vpop.f32.mrf.mxu0
        %v2121 = vadd.f32 %v1800, %v2120
        %v2122 = vpop.f32.mrf.mxu0
        %2123 = vmatprep.mubr.f32.mxu0 0.0
        %2124 = vmatmul.mubr.f32.gmra.mxu0 %v1918
        %v2125 = vpop.f32.mrf.mxu0
        %v2126 = vadd.f32 %v1805, %v2125
        %v2127 = vpop.f32.mrf.mxu0
        %2128 = vmatprep.mubr.f32.mxu0 0.0
        %2129 = vmatmul.mubr.f32.gmra.mxu0 %v1921
        %v2130 = vpop.f32.mrf.mxu0
        %v2131 = vadd.f32 %v1810, %v2130
        %v2132 = vpop.f32.mrf.mxu0
        %2133 = vmatprep.mubr.f32.mxu0 0.0
        %2134 = vmatmul.mubr.f32.gmra.mxu0 %v1924
        %v2135 = vpop.f32.mrf.mxu0
        %v2136 = vadd.f32 %v1815, %v2135
        %v2137 = vpop.f32.mrf.mxu0
        %2138 = vmatprep.mubr.f32.mxu0 0.0
        %2139 = vmatmul.mubr.f32.gmra.mxu0 %v1927
        %v2140 = vpop.f32.mrf.mxu0
        %v2141 = vadd.f32 %v1820, %v2140
        %v2142 = vpop.f32.mrf.mxu0
        %2143 = vmatprep.mubr.f32.mxu0 0.0
        %2144 = vmatmul.mubr.f32.gmra.mxu0 %v1930
        %v2145 = vpop.f32.mrf.mxu0
        %v2146 = vadd.f32 %v1825, %v2145
        %v2147 = vpop.f32.mrf.mxu0
        %2148 = vmatprep.mubr.f32.mxu0 0.0
        %2149 = vmatmul.mubr.f32.gmra.mxu0 %v1933
        %v2150 = vpop.f32.mrf.mxu0
        %v2151 = vadd.f32 %v1830, %v2150
        %v2152 = vpop.f32.mrf.mxu0
        %2153 = vmatprep.mubr.f32.mxu0 0.0
        %2154 = vmatmul.mubr.f32.gmra.mxu0 %v1936
        %v2155 = vpop.f32.mrf.mxu0
        %v2156 = vadd.f32 %v1835, %v2155
        %v2157 = vpop.f32.mrf.mxu0
        %2158 = vmatprep.mubr.f32.mxu0 0.0
        %2159 = vmatmul.mubr.f32.gmra.mxu0 %v1939
        %v2160 = vpop.f32.mrf.mxu0
        %v2161 = vadd.f32 %v1840, %v2160
        %v2162 = vpop.f32.mrf.mxu0
        %2163 = vmatprep.mubr.f32.mxu0 0.0
        %2164 = vmatmul.mubr.f32.gmra.mxu0 %v1942
        %v2165 = vpop.f32.mrf.mxu0
        %v2166 = vadd.f32 %v1845, %v2165
        %v2167 = vpop.f32.mrf.mxu0
        %2168 = vdwg.mxu0
        %v2169 = vld [vmem:[#allocation2 + $0x9] sm:$0xff]
        %v2170 = vld [vmem:[#allocation2 + $0x11] sm:$0xff]
        %v2171 = vld [vmem:[#allocation2 + $0x29] sm:$0xff]
        %v2172 = vld [vmem:[#allocation2 + $0x31] sm:$0xff]
        %v2173 = vld [vmem:[#allocation2 + $0x49] sm:$0xff]
        %v2174 = vld [vmem:[#allocation2 + $0x51] sm:$0xff]
        %v2175 = vld [vmem:[#allocation2 + $0x69] sm:$0xff]
        %v2176 = vld [vmem:[#allocation2 + $0x71] sm:$0xff]
        %v2177 = vld [vmem:[#allocation2 + $0x89] sm:$0xff]
        %v2178 = vld [vmem:[#allocation2 + $0x91] sm:$0xff]
        %v2179 = vld [vmem:[#allocation2 + $0xa9] sm:$0xff]
        %v2180 = vld [vmem:[#allocation2 + $0xb1] sm:$0xff]
        %v2181 = vld [vmem:[#allocation2 + $0xc9] sm:$0xff]
        %v2182 = vld [vmem:[#allocation2 + $0xd1] sm:$0xff]
        %v2183 = vld [vmem:[#allocation2 + $0xe9] sm:$0xff]
        %v2184 = vld [vmem:[#allocation2 + $0xf1] sm:$0xff]
        %v2185 = vld [vmem:[#allocation2 + $0x109] sm:$0xff]
        %v2186 = vld [vmem:[#allocation2 + $0x111] sm:$0xff]
        %v2187 = vld [vmem:[#allocation2 + $0x129] sm:$0xff]
        %v2188 = vld [vmem:[#allocation2 + $0x131] sm:$0xff]
        %v2189 = vld [vmem:[#allocation2 + $0x149] sm:$0xff]
        %v2190 = vld [vmem:[#allocation2 + $0x151] sm:$0xff]
        %v2191 = vld [vmem:[#allocation2 + $0x169] sm:$0xff]
        %v2192 = vld [vmem:[#allocation2 + $0x171] sm:$0xff]
        %v2193 = vld [vmem:[#allocation2 + $0x189] sm:$0xff]
        %v2194 = vld [vmem:[#allocation2 + $0x191] sm:$0xff]
        %v2195 = vld [vmem:[#allocation2 + $0x1a9] sm:$0xff]
        %v2196 = vld [vmem:[#allocation2 + $0x1b1] sm:$0xff]
        %v2197 = vld [vmem:[#allocation2 + $0x1c9] sm:$0xff]
        %v2198 = vld [vmem:[#allocation2 + $0x1d1] sm:$0xff]
        %v2199 = vld [vmem:[#allocation2 + $0x1e9] sm:$0xff]
        %v2200 = vld [vmem:[#allocation2 + $0x1f1] sm:$0xff]
        %s2201 = scalar_lea.vmem %s5, 128
        %v2202 = vld [vmem:[%s2201] sm:$0xff]
        %v2203 = vld [vmem:[%s2201 + $0x8] sm:$0xff]
        %v2204 = vld [vmem:[%s2201 + $0x10] sm:$0xff]
        %v2205 = vld [vmem:[%s2201 + $0x18] sm:$0xff]
        %v2206 = vld [vmem:[%s2201 + $0x20] sm:$0xff]
        %v2207 = vld [vmem:[%s2201 + $0x28] sm:$0xff]
        %v2208 = vld [vmem:[%s2201 + $0x30] sm:$0xff]
        %v2209 = vld [vmem:[%s2201 + $0x38] sm:$0xff]
        %v2211 = vsel %vm1198, %v2169, 0
        %v2214 = vsel %vm1198, %v2170, 0
        %v2217 = vsel %vm1198, %v2171, 0
        %v2220 = vsel %vm1198, %v2172, 0
        %v2223 = vsel %vm1198, %v2173, 0
        %v2226 = vsel %vm1198, %v2174, 0
        %v2229 = vsel %vm1198, %v2175, 0
        %v2232 = vsel %vm1198, %v2176, 0
        %v2235 = vsel %vm1198, %v2177, 0
        %v2238 = vsel %vm1198, %v2178, 0
        %v2241 = vsel %vm1198, %v2179, 0
        %v2244 = vsel %vm1198, %v2180, 0
        %v2247 = vsel %vm1198, %v2181, 0
        %v2250 = vsel %vm1198, %v2182, 0
        %v2253 = vsel %vm1198, %v2183, 0
        %v2256 = vsel %vm1198, %v2184, 0
        %v2259 = vsel %vm1198, %v2185, 0
        %v2262 = vsel %vm1198, %v2186, 0
        %v2265 = vsel %vm1198, %v2187, 0
        %v2268 = vsel %vm1198, %v2188, 0
        %v2271 = vsel %vm1198, %v2189, 0
        %v2274 = vsel %vm1198, %v2190, 0
        %v2277 = vsel %vm1198, %v2191, 0
        %v2280 = vsel %vm1198, %v2192, 0
        %v2283 = vsel %vm1198, %v2193, 0
        %v2286 = vsel %vm1198, %v2194, 0
        %v2289 = vsel %vm1198, %v2195, 0
        %v2292 = vsel %vm1198, %v2196, 0
        %v2295 = vsel %vm1198, %v2197, 0
        %v2298 = vsel %vm1198, %v2198, 0
        %v2301 = vsel %vm1198, %v2199, 0
        %v2304 = vsel %vm1198, %v2200, 0
        %2306 = vmatprep.subr.mxu0 0.0
        %2307 = vmatpush1.msra.mxu0 0.0
        %2308 = vmatprep.subr.mxu0 0.0
        %2309 = vmatpush1.msra.mxu0 0.0
        %2310 = vmatprep.subr.mxu0 0.0
        %2311 = vmatpush1.msra.mxu0 0.0
        %2312 = vmatprep.subr.mxu0 0.0
        %2313 = vmatpush1.msra.mxu0 0.0
        %2314 = vmatprep.subr.mxu0 0.0
        %2315 = vmatpush1.msra.mxu0 0.0
        %2316 = vmatprep.subr.mxu0 0.0
        %2317 = vmatpush1.msra.mxu0 0.0
        %2318 = vmatprep.subr.mxu0 0.0
        %2319 = vmatpush1.msra.mxu0 0.0
        %2320 = vmatprep.subr.mxu0 0.0
        %2321 = vmatpush1.msra.mxu0 0.0
        %2322 = vmatprep.subr.mxu0 0.0
        %2323 = vmatpush1.msra.mxu0 %v2209
        %2324 = vmatprep.subr.mxu0 0.0
        %2325 = vmatpush1.msra.mxu0 %v2208
        %2326 = vmatprep.subr.mxu0 0.0
        %2327 = vmatpush1.msra.mxu0 %v2207
        %2328 = vmatprep.subr.mxu0 0.0
        %2329 = vmatpush1.msra.mxu0 %v2206
        %2330 = vmatprep.subr.mxu0 0.0
        %2331 = vmatpush1.msra.mxu0 %v2205
        %2332 = vmatprep.subr.mxu0 0.0
        %2333 = vmatpush1.msra.mxu0 %v2204
        %2334 = vmatprep.subr.mxu0 0.0
        %2335 = vmatpush1.msra.mxu0 %v2203
        %2336 = vmatprep.subr.mxu0 0.0
        %2337 = vmatpush1.msra.mxu0 %v2202
        %2338 = vmatprep.subr.mxu0 0.0
        %2339 = vmatpush2.msra.mxu0 0.0
        %2340 = vmatprep.subr.mxu0 0.0
        %2341 = vmatpush2.msra.mxu0 0.0
        %2342 = vmatprep.subr.mxu0 0.0
        %2343 = vmatpush2.msra.mxu0 0.0
        %2344 = vmatprep.subr.mxu0 0.0
        %2345 = vmatpush2.msra.mxu0 0.0
        %2346 = vmatprep.subr.mxu0 0.0
        %2347 = vmatpush2.msra.mxu0 0.0
        %2348 = vmatprep.subr.mxu0 0.0
        %2349 = vmatpush2.msra.mxu0 0.0
        %2350 = vmatprep.subr.mxu0 0.0
        %2351 = vmatpush2.msra.mxu0 0.0
        %2352 = vmatprep.subr.mxu0 0.0
        %2353 = vmatpush2.msra.mxu0 0.0
        %2354 = vmatprep.subr.mxu0 0.0
        %2355 = vmatpush2.msra.mxu0 0.0
        %2356 = vmatprep.subr.mxu0 0.0
        %2357 = vmatpush2.msra.mxu0 0.0
        %2358 = vmatprep.subr.mxu0 0.0
        %2359 = vmatpush2.msra.mxu0 0.0
        %2360 = vmatprep.subr.mxu0 0.0
        %2361 = vmatpush2.msra.mxu0 0.0
        %2362 = vmatprep.subr.mxu0 0.0
        %2363 = vmatpush2.msra.mxu0 0.0
        %2364 = vmatprep.subr.mxu0 0.0
        %2365 = vmatpush2.msra.mxu0 0.0
        %2366 = vmatprep.subr.mxu0 0.0
        %2367 = vmatpush2.msra.mxu0 0.0
        %2368 = vmatprep.subr.mxu0 0.0
        %2369 = vmatpush2.msra.mxu0 0.0
        %2370 = vmatprep.mubr.f32.mxu0 0.0
        %2371 = vmatmul.mubr.f32.gmra.mxu0 %v2211
        %v2372 = vpop.f32.mrf.mxu0
        %v2373 = vadd.f32 0.0, %v2372
        %v2374 = vpop.f32.mrf.mxu0
        %2375 = vmatprep.mubr.f32.mxu0 0.0
        %2376 = vmatmul.mubr.f32.gmra.mxu0 %v2214
        %v2377 = vpop.f32.mrf.mxu0
        %v2378 = vadd.f32 0.0, %v2377
        %v2379 = vpop.f32.mrf.mxu0
        %2380 = vmatprep.mubr.f32.mxu0 0.0
        %2381 = vmatmul.mubr.f32.gmra.mxu0 %v2217
        %v2382 = vpop.f32.mrf.mxu0
        %v2383 = vadd.f32 0.0, %v2382
        %v2384 = vpop.f32.mrf.mxu0
        %2385 = vmatprep.mubr.f32.mxu0 0.0
        %2386 = vmatmul.mubr.f32.gmra.mxu0 %v2220
        %v2387 = vpop.f32.mrf.mxu0
        %v2388 = vadd.f32 0.0, %v2387
        %v2389 = vpop.f32.mrf.mxu0
        %2390 = vmatprep.mubr.f32.mxu0 0.0
        %2391 = vmatmul.mubr.f32.gmra.mxu0 %v2223
        %v2392 = vpop.f32.mrf.mxu0
        %v2393 = vadd.f32 0.0, %v2392
        %v2394 = vpop.f32.mrf.mxu0
        %2395 = vmatprep.mubr.f32.mxu0 0.0
        %2396 = vmatmul.mubr.f32.gmra.mxu0 %v2226
        %v2397 = vpop.f32.mrf.mxu0
        %v2398 = vadd.f32 0.0, %v2397
        %v2399 = vpop.f32.mrf.mxu0
        %2400 = vmatprep.mubr.f32.mxu0 0.0
        %2401 = vmatmul.mubr.f32.gmra.mxu0 %v2229
        %v2402 = vpop.f32.mrf.mxu0
        %v2403 = vadd.f32 0.0, %v2402
        %v2404 = vpop.f32.mrf.mxu0
        %2405 = vmatprep.mubr.f32.mxu0 0.0
        %2406 = vmatmul.mubr.f32.gmra.mxu0 %v2232
        %v2407 = vpop.f32.mrf.mxu0
        %v2408 = vadd.f32 0.0, %v2407
        %v2409 = vpop.f32.mrf.mxu0
        %2410 = vmatprep.mubr.f32.mxu0 0.0
        %2411 = vmatmul.mubr.f32.gmra.mxu0 %v2235
        %v2412 = vpop.f32.mrf.mxu0
        %v2413 = vadd.f32 0.0, %v2412
        %v2414 = vpop.f32.mrf.mxu0
        %2415 = vmatprep.mubr.f32.mxu0 0.0
        %2416 = vmatmul.mubr.f32.gmra.mxu0 %v2238
        %v2417 = vpop.f32.mrf.mxu0
        %v2418 = vadd.f32 0.0, %v2417
        %v2419 = vpop.f32.mrf.mxu0
        %2420 = vmatprep.mubr.f32.mxu0 0.0
        %2421 = vmatmul.mubr.f32.gmra.mxu0 %v2241
        %v2422 = vpop.f32.mrf.mxu0
        %v2423 = vadd.f32 0.0, %v2422
        %v2424 = vpop.f32.mrf.mxu0
        %2425 = vmatprep.mubr.f32.mxu0 0.0
        %2426 = vmatmul.mubr.f32.gmra.mxu0 %v2244
        %v2427 = vpop.f32.mrf.mxu0
        %v2428 = vadd.f32 0.0, %v2427
        %v2429 = vpop.f32.mrf.mxu0
        %2430 = vmatprep.mubr.f32.mxu0 0.0
        %2431 = vmatmul.mubr.f32.gmra.mxu0 %v2247
        %v2432 = vpop.f32.mrf.mxu0
        %v2433 = vadd.f32 0.0, %v2432
        %v2434 = vpop.f32.mrf.mxu0
        %2435 = vmatprep.mubr.f32.mxu0 0.0
        %2436 = vmatmul.mubr.f32.gmra.mxu0 %v2250
        %v2437 = vpop.f32.mrf.mxu0
        %v2438 = vadd.f32 0.0, %v2437
        %v2439 = vpop.f32.mrf.mxu0
        %2440 = vmatprep.mubr.f32.mxu0 0.0
        %2441 = vmatmul.mubr.f32.gmra.mxu0 %v2253
        %v2442 = vpop.f32.mrf.mxu0
        %v2443 = vadd.f32 0.0, %v2442
        %v2444 = vpop.f32.mrf.mxu0
        %2445 = vmatprep.mubr.f32.mxu0 0.0
        %2446 = vmatmul.mubr.f32.gmra.mxu0 %v2256
        %v2447 = vpop.f32.mrf.mxu0
        %v2448 = vadd.f32 0.0, %v2447
        %v2449 = vpop.f32.mrf.mxu0
        %2450 = vmatprep.mubr.f32.mxu0 0.0
        %2451 = vmatmul.mubr.f32.gmra.mxu0 %v2259
        %v2452 = vpop.f32.mrf.mxu0
        %v2453 = vadd.f32 0.0, %v2452
        %v2454 = vpop.f32.mrf.mxu0
        %2455 = vmatprep.mubr.f32.mxu0 0.0
        %2456 = vmatmul.mubr.f32.gmra.mxu0 %v2262
        %v2457 = vpop.f32.mrf.mxu0
        %v2458 = vadd.f32 0.0, %v2457
        %v2459 = vpop.f32.mrf.mxu0
        %2460 = vmatprep.mubr.f32.mxu0 0.0
        %2461 = vmatmul.mubr.f32.gmra.mxu0 %v2265
        %v2462 = vpop.f32.mrf.mxu0
        %v2463 = vadd.f32 0.0, %v2462
        %v2464 = vpop.f32.mrf.mxu0
        %2465 = vmatprep.mubr.f32.mxu0 0.0
        %2466 = vmatmul.mubr.f32.gmra.mxu0 %v2268
        %v2467 = vpop.f32.mrf.mxu0
        %v2468 = vadd.f32 0.0, %v2467
        %v2469 = vpop.f32.mrf.mxu0
        %2470 = vmatprep.mubr.f32.mxu0 0.0
        %2471 = vmatmul.mubr.f32.gmra.mxu0 %v2271
        %v2472 = vpop.f32.mrf.mxu0
        %v2473 = vadd.f32 0.0, %v2472
        %v2474 = vpop.f32.mrf.mxu0
        %2475 = vmatprep.mubr.f32.mxu0 0.0
        %2476 = vmatmul.mubr.f32.gmra.mxu0 %v2274
        %v2477 = vpop.f32.mrf.mxu0
        %v2478 = vadd.f32 0.0, %v2477
        %v2479 = vpop.f32.mrf.mxu0
        %2480 = vmatprep.mubr.f32.mxu0 0.0
        %2481 = vmatmul.mubr.f32.gmra.mxu0 %v2277
        %v2482 = vpop.f32.mrf.mxu0
        %v2483 = vadd.f32 0.0, %v2482
        %v2484 = vpop.f32.mrf.mxu0
        %2485 = vmatprep.mubr.f32.mxu0 0.0
        %2486 = vmatmul.mubr.f32.gmra.mxu0 %v2280
        %v2487 = vpop.f32.mrf.mxu0
        %v2488 = vadd.f32 0.0, %v2487
        %v2489 = vpop.f32.mrf.mxu0
        %2490 = vmatprep.mubr.f32.mxu0 0.0
        %2491 = vmatmul.mubr.f32.gmra.mxu0 %v2283
        %v2492 = vpop.f32.mrf.mxu0
        %v2493 = vadd.f32 0.0, %v2492
        %v2494 = vpop.f32.mrf.mxu0
        %2495 = vmatprep.mubr.f32.mxu0 0.0
        %2496 = vmatmul.mubr.f32.gmra.mxu0 %v2286
        %v2497 = vpop.f32.mrf.mxu0
        %v2498 = vadd.f32 0.0, %v2497
        %v2499 = vpop.f32.mrf.mxu0
        %2500 = vmatprep.mubr.f32.mxu0 0.0
        %2501 = vmatmul.mubr.f32.gmra.mxu0 %v2289
        %v2502 = vpop.f32.mrf.mxu0
        %v2503 = vadd.f32 0.0, %v2502
        %v2504 = vpop.f32.mrf.mxu0
        %2505 = vmatprep.mubr.f32.mxu0 0.0
        %2506 = vmatmul.mubr.f32.gmra.mxu0 %v2292
        %v2507 = vpop.f32.mrf.mxu0
        %v2508 = vadd.f32 0.0, %v2507
        %v2509 = vpop.f32.mrf.mxu0
        %2510 = vmatprep.mubr.f32.mxu0 0.0
        %2511 = vmatmul.mubr.f32.gmra.mxu0 %v2295
        %v2512 = vpop.f32.mrf.mxu0
        %v2513 = vadd.f32 0.0, %v2512
        %v2514 = vpop.f32.mrf.mxu0
        %2515 = vmatprep.mubr.f32.mxu0 0.0
        %2516 = vmatmul.mubr.f32.gmra.mxu0 %v2298
        %v2517 = vpop.f32.mrf.mxu0
        %v2518 = vadd.f32 0.0, %v2517
        %v2519 = vpop.f32.mrf.mxu0
        %2520 = vmatprep.mubr.f32.mxu0 0.0
        %2521 = vmatmul.mubr.f32.gmra.mxu0 %v2301
        %v2522 = vpop.f32.mrf.mxu0
        %v2523 = vadd.f32 0.0, %v2522
        %v2524 = vpop.f32.mrf.mxu0
        %2525 = vmatprep.mubr.f32.mxu0 0.0
        %2526 = vmatmul.mubr.f32.gmra.mxu0 %v2304
        %v2527 = vpop.f32.mrf.mxu0
        %v2528 = vadd.f32 0.0, %v2527
        %v2529 = vpop.f32.mrf.mxu0
        %2530 = vdwg.mxu0
        %v2531 = vadd.f32 %v2011, %v2373
        %v2532 = vadd.f32 %v2016, %v2378
        %v2533 = vadd.f32 %v2021, %v2383
        %v2534 = vadd.f32 %v2026, %v2388
        %v2535 = vadd.f32 %v2031, %v2393
        %v2536 = vadd.f32 %v2036, %v2398
        %v2537 = vadd.f32 %v2041, %v2403
        %v2538 = vadd.f32 %v2046, %v2408
        %v2539 = vadd.f32 %v2051, %v2413
        %v2540 = vadd.f32 %v2056, %v2418
        %v2541 = vadd.f32 %v2061, %v2423
        %v2542 = vadd.f32 %v2066, %v2428
        %v2543 = vadd.f32 %v2071, %v2433
        %v2544 = vadd.f32 %v2076, %v2438
        %v2545 = vadd.f32 %v2081, %v2443
        %v2546 = vadd.f32 %v2086, %v2448
        %v2547 = vadd.f32 %v2091, %v2453
        %v2548 = vadd.f32 %v2096, %v2458
        %v2549 = vadd.f32 %v2101, %v2463
        %v2550 = vadd.f32 %v2106, %v2468
        %v2551 = vadd.f32 %v2111, %v2473
        %v2552 = vadd.f32 %v2116, %v2478
        %v2553 = vadd.f32 %v2121, %v2483
        %v2554 = vadd.f32 %v2126, %v2488
        %v2555 = vadd.f32 %v2131, %v2493
        %v2556 = vadd.f32 %v2136, %v2498
        %v2557 = vadd.f32 %v2141, %v2503
        %v2558 = vadd.f32 %v2146, %v2508
        %v2559 = vadd.f32 %v2151, %v2513
        %v2560 = vadd.f32 %v2156, %v2518
        %v2561 = vadd.f32 %v2161, %v2523
        %v2562 = vadd.f32 %v2166, %v2528
        %v2563 = vld [vmem:[%s1413 + $0x7] sm:$0xff]
        %v2564 = vld [vmem:[%s1413 + $0xf] sm:$0xff]
        %v2565 = vld [vmem:[%s1413 + $0x27] sm:$0xff]
        %v2566 = vld [vmem:[%s1413 + $0x2f] sm:$0xff]
        %v2567 = vld [vmem:[%s1413 + $0x47] sm:$0xff]
        %v2568 = vld [vmem:[%s1413 + $0x4f] sm:$0xff]
        %v2569 = vld [vmem:[%s1413 + $0x67] sm:$0xff]
        %v2570 = vld [vmem:[%s1413 + $0x6f] sm:$0xff]
        %v2571 = vld [vmem:[%s1413 + $0x87] sm:$0xff]
        %v2572 = vld [vmem:[%s1413 + $0x8f] sm:$0xff]
        %v2573 = vld [vmem:[%s1413 + $0xa7] sm:$0xff]
        %v2574 = vld [vmem:[%s1413 + $0xaf] sm:$0xff]
        %v2575 = vld [vmem:[%s1413 + $0xc7] sm:$0xff]
        %v2576 = vld [vmem:[%s1413 + $0xcf] sm:$0xff]
        %v2577 = vld [vmem:[%s1413 + $0xe7] sm:$0xff]
        %v2578 = vld [vmem:[%s1413 + $0xef] sm:$0xff]
        %v2579 = vld [vmem:[%s1413 + $0x107] sm:$0xff]
        %v2580 = vld [vmem:[%s1413 + $0x10f] sm:$0xff]
        %v2581 = vld [vmem:[%s1413 + $0x127] sm:$0xff]
        %v2582 = vld [vmem:[%s1413 + $0x12f] sm:$0xff]
        %v2583 = vld [vmem:[%s1413 + $0x147] sm:$0xff]
        %v2584 = vld [vmem:[%s1413 + $0x14f] sm:$0xff]
        %v2585 = vld [vmem:[%s1413 + $0x167] sm:$0xff]
        %v2586 = vld [vmem:[%s1413 + $0x16f] sm:$0xff]
        %v2587 = vld [vmem:[%s1413 + $0x187] sm:$0xff]
        %v2588 = vld [vmem:[%s1413 + $0x18f] sm:$0xff]
        %v2589 = vld [vmem:[%s1413 + $0x1a7] sm:$0xff]
        %v2590 = vld [vmem:[%s1413 + $0x1af] sm:$0xff]
        %v2591 = vld [vmem:[%s1413 + $0x1c7] sm:$0xff]
        %v2592 = vld [vmem:[%s1413 + $0x1cf] sm:$0xff]
        %v2593 = vld [vmem:[%s1413 + $0x1e7] sm:$0xff]
        %v2594 = vld [vmem:[%s1413 + $0x1ef] sm:$0xff]
        %s2595 = scalar_lea.vmem %s5, 192
        %v2596 = vld [vmem:[%s2595] sm:$0xff]
        %v2597 = vld [vmem:[%s2595 + $0x8] sm:$0xff]
        %v2598 = vld [vmem:[%s2595 + $0x10] sm:$0xff]
        %v2599 = vld [vmem:[%s2595 + $0x18] sm:$0xff]
        %v2600 = vld [vmem:[%s2595 + $0x20] sm:$0xff]
        %v2601 = vld [vmem:[%s2595 + $0x28] sm:$0xff]
        %v2602 = vld [vmem:[%s2595 + $0x30] sm:$0xff]
        %v2603 = vld [vmem:[%s2595 + $0x38] sm:$0xff]
        %v2605 = vsel %vm1198, %v2563, 0
        %v2608 = vsel %vm1198, %v2564, 0
        %v2611 = vsel %vm1198, %v2565, 0
        %v2614 = vsel %vm1198, %v2566, 0
        %v2617 = vsel %vm1198, %v2567, 0
        %v2620 = vsel %vm1198, %v2568, 0
        %v2623 = vsel %vm1198, %v2569, 0
        %v2626 = vsel %vm1198, %v2570, 0
        %v2629 = vsel %vm1198, %v2571, 0
        %v2632 = vsel %vm1198, %v2572, 0
        %v2635 = vsel %vm1198, %v2573, 0
        %v2638 = vsel %vm1198, %v2574, 0
        %v2641 = vsel %vm1198, %v2575, 0
        %v2644 = vsel %vm1198, %v2576, 0
        %v2647 = vsel %vm1198, %v2577, 0
        %v2650 = vsel %vm1198, %v2578, 0
        %v2653 = vsel %vm1198, %v2579, 0
        %v2656 = vsel %vm1198, %v2580, 0
        %v2659 = vsel %vm1198, %v2581, 0
        %v2662 = vsel %vm1198, %v2582, 0
        %v2665 = vsel %vm1198, %v2583, 0
        %v2668 = vsel %vm1198, %v2584, 0
        %v2671 = vsel %vm1198, %v2585, 0
        %v2674 = vsel %vm1198, %v2586, 0
        %v2677 = vsel %vm1198, %v2587, 0
        %v2680 = vsel %vm1198, %v2588, 0
        %v2683 = vsel %vm1198, %v2589, 0
        %v2686 = vsel %vm1198, %v2590, 0
        %v2689 = vsel %vm1198, %v2591, 0
        %v2692 = vsel %vm1198, %v2592, 0
        %v2695 = vsel %vm1198, %v2593, 0
        %v2698 = vsel %vm1198, %v2594, 0
        %2700 = vmatprep.subr.mxu0 0.0
        %2701 = vmatpush1.msra.mxu0 0.0
        %2702 = vmatprep.subr.mxu0 0.0
        %2703 = vmatpush1.msra.mxu0 0.0
        %2704 = vmatprep.subr.mxu0 0.0
        %2705 = vmatpush1.msra.mxu0 0.0
        %2706 = vmatprep.subr.mxu0 0.0
        %2707 = vmatpush1.msra.mxu0 0.0
        %2708 = vmatprep.subr.mxu0 0.0
        %2709 = vmatpush1.msra.mxu0 0.0
        %2710 = vmatprep.subr.mxu0 0.0
        %2711 = vmatpush1.msra.mxu0 0.0
        %2712 = vmatprep.subr.mxu0 0.0
        %2713 = vmatpush1.msra.mxu0 0.0
        %2714 = vmatprep.subr.mxu0 0.0
        %2715 = vmatpush1.msra.mxu0 0.0
        %2716 = vmatprep.subr.mxu0 0.0
        %2717 = vmatpush1.msra.mxu0 %v2603
        %2718 = vmatprep.subr.mxu0 0.0
        %2719 = vmatpush1.msra.mxu0 %v2602
        %2720 = vmatprep.subr.mxu0 0.0
        %2721 = vmatpush1.msra.mxu0 %v2601
        %2722 = vmatprep.subr.mxu0 0.0
        %2723 = vmatpush1.msra.mxu0 %v2600
        %2724 = vmatprep.subr.mxu0 0.0
        %2725 = vmatpush1.msra.mxu0 %v2599
        %2726 = vmatprep.subr.mxu0 0.0
        %2727 = vmatpush1.msra.mxu0 %v2598
        %2728 = vmatprep.subr.mxu0 0.0
        %2729 = vmatpush1.msra.mxu0 %v2597
        %2730 = vmatprep.subr.mxu0 0.0
        %2731 = vmatpush1.msra.mxu0 %v2596
        %2732 = vmatprep.subr.mxu0 0.0
        %2733 = vmatpush2.msra.mxu0 0.0
        %2734 = vmatprep.subr.mxu0 0.0
        %2735 = vmatpush2.msra.mxu0 0.0
        %2736 = vmatprep.subr.mxu0 0.0
        %2737 = vmatpush2.msra.mxu0 0.0
        %2738 = vmatprep.subr.mxu0 0.0
        %2739 = vmatpush2.msra.mxu0 0.0
        %2740 = vmatprep.subr.mxu0 0.0
        %2741 = vmatpush2.msra.mxu0 0.0
        %2742 = vmatprep.subr.mxu0 0.0
        %2743 = vmatpush2.msra.mxu0 0.0
        %2744 = vmatprep.subr.mxu0 0.0
        %2745 = vmatpush2.msra.mxu0 0.0
        %2746 = vmatprep.subr.mxu0 0.0
        %2747 = vmatpush2.msra.mxu0 0.0
        %2748 = vmatprep.subr.mxu0 0.0
        %2749 = vmatpush2.msra.mxu0 0.0
        %2750 = vmatprep.subr.mxu0 0.0
        %2751 = vmatpush2.msra.mxu0 0.0
        %2752 = vmatprep.subr.mxu0 0.0
        %2753 = vmatpush2.msra.mxu0 0.0
        %2754 = vmatprep.subr.mxu0 0.0
        %2755 = vmatpush2.msra.mxu0 0.0
        %2756 = vmatprep.subr.mxu0 0.0
        %2757 = vmatpush2.msra.mxu0 0.0
        %2758 = vmatprep.subr.mxu0 0.0
        %2759 = vmatpush2.msra.mxu0 0.0
        %2760 = vmatprep.subr.mxu0 0.0
        %2761 = vmatpush2.msra.mxu0 0.0
        %2762 = vmatprep.subr.mxu0 0.0
        %2763 = vmatpush2.msra.mxu0 0.0
        %2764 = vmatprep.mubr.f32.mxu0 0.0
        %2765 = vmatmul.mubr.f32.gmra.mxu0 %v2605
        %v2766 = vpop.f32.mrf.mxu0
        %v2767 = vadd.f32 0.0, %v2766
        %v2768 = vpop.f32.mrf.mxu0
        %2769 = vmatprep.mubr.f32.mxu0 0.0
        %2770 = vmatmul.mubr.f32.gmra.mxu0 %v2608
        %v2771 = vpop.f32.mrf.mxu0
        %v2772 = vadd.f32 0.0, %v2771
        %v2773 = vpop.f32.mrf.mxu0
        %2774 = vmatprep.mubr.f32.mxu0 0.0
        %2775 = vmatmul.mubr.f32.gmra.mxu0 %v2611
        %v2776 = vpop.f32.mrf.mxu0
        %v2777 = vadd.f32 0.0, %v2776
        %v2778 = vpop.f32.mrf.mxu0
        %2779 = vmatprep.mubr.f32.mxu0 0.0
        %2780 = vmatmul.mubr.f32.gmra.mxu0 %v2614
        %v2781 = vpop.f32.mrf.mxu0
        %v2782 = vadd.f32 0.0, %v2781
        %v2783 = vpop.f32.mrf.mxu0
        %2784 = vmatprep.mubr.f32.mxu0 0.0
        %2785 = vmatmul.mubr.f32.gmra.mxu0 %v2617
        %v2786 = vpop.f32.mrf.mxu0
        %v2787 = vadd.f32 0.0, %v2786
        %v2788 = vpop.f32.mrf.mxu0
        %2789 = vmatprep.mubr.f32.mxu0 0.0
        %2790 = vmatmul.mubr.f32.gmra.mxu0 %v2620
        %v2791 = vpop.f32.mrf.mxu0
        %v2792 = vadd.f32 0.0, %v2791
        %v2793 = vpop.f32.mrf.mxu0
        %2794 = vmatprep.mubr.f32.mxu0 0.0
        %2795 = vmatmul.mubr.f32.gmra.mxu0 %v2623
        %v2796 = vpop.f32.mrf.mxu0
        %v2797 = vadd.f32 0.0, %v2796
        %v2798 = vpop.f32.mrf.mxu0
        %2799 = vmatprep.mubr.f32.mxu0 0.0
        %2800 = vmatmul.mubr.f32.gmra.mxu0 %v2626
        %v2801 = vpop.f32.mrf.mxu0
        %v2802 = vadd.f32 0.0, %v2801
        %v2803 = vpop.f32.mrf.mxu0
        %2804 = vmatprep.mubr.f32.mxu0 0.0
        %2805 = vmatmul.mubr.f32.gmra.mxu0 %v2629
        %v2806 = vpop.f32.mrf.mxu0
        %v2807 = vadd.f32 0.0, %v2806
        %v2808 = vpop.f32.mrf.mxu0
        %2809 = vmatprep.mubr.f32.mxu0 0.0
        %2810 = vmatmul.mubr.f32.gmra.mxu0 %v2632
        %v2811 = vpop.f32.mrf.mxu0
        %v2812 = vadd.f32 0.0, %v2811
        %v2813 = vpop.f32.mrf.mxu0
        %2814 = vmatprep.mubr.f32.mxu0 0.0
        %2815 = vmatmul.mubr.f32.gmra.mxu0 %v2635
        %v2816 = vpop.f32.mrf.mxu0
        %v2817 = vadd.f32 0.0, %v2816
        %v2818 = vpop.f32.mrf.mxu0
        %2819 = vmatprep.mubr.f32.mxu0 0.0
        %2820 = vmatmul.mubr.f32.gmra.mxu0 %v2638
        %v2821 = vpop.f32.mrf.mxu0
        %v2822 = vadd.f32 0.0, %v2821
        %v2823 = vpop.f32.mrf.mxu0
        %2824 = vmatprep.mubr.f32.mxu0 0.0
        %2825 = vmatmul.mubr.f32.gmra.mxu0 %v2641
        %v2826 = vpop.f32.mrf.mxu0
        %v2827 = vadd.f32 0.0, %v2826
        %v2828 = vpop.f32.mrf.mxu0
        %2829 = vmatprep.mubr.f32.mxu0 0.0
        %2830 = vmatmul.mubr.f32.gmra.mxu0 %v2644
        %v2831 = vpop.f32.mrf.mxu0
        %v2832 = vadd.f32 0.0, %v2831
        %v2833 = vpop.f32.mrf.mxu0
        %2834 = vmatprep.mubr.f32.mxu0 0.0
        %2835 = vmatmul.mubr.f32.gmra.mxu0 %v2647
        %v2836 = vpop.f32.mrf.mxu0
        %v2837 = vadd.f32 0.0, %v2836
        %v2838 = vpop.f32.mrf.mxu0
        %2839 = vmatprep.mubr.f32.mxu0 0.0
        %2840 = vmatmul.mubr.f32.gmra.mxu0 %v2650
        %v2841 = vpop.f32.mrf.mxu0
        %v2842 = vadd.f32 0.0, %v2841
        %v2843 = vpop.f32.mrf.mxu0
        %2844 = vmatprep.mubr.f32.mxu0 0.0
        %2845 = vmatmul.mubr.f32.gmra.mxu0 %v2653
        %v2846 = vpop.f32.mrf.mxu0
        %v2847 = vadd.f32 0.0, %v2846
        %v2848 = vpop.f32.mrf.mxu0
        %2849 = vmatprep.mubr.f32.mxu0 0.0
        %2850 = vmatmul.mubr.f32.gmra.mxu0 %v2656
        %v2851 = vpop.f32.mrf.mxu0
        %v2852 = vadd.f32 0.0, %v2851
        %v2853 = vpop.f32.mrf.mxu0
        %2854 = vmatprep.mubr.f32.mxu0 0.0
        %2855 = vmatmul.mubr.f32.gmra.mxu0 %v2659
        %v2856 = vpop.f32.mrf.mxu0
        %v2857 = vadd.f32 0.0, %v2856
        %v2858 = vpop.f32.mrf.mxu0
        %2859 = vmatprep.mubr.f32.mxu0 0.0
        %2860 = vmatmul.mubr.f32.gmra.mxu0 %v2662
        %v2861 = vpop.f32.mrf.mxu0
        %v2862 = vadd.f32 0.0, %v2861
        %v2863 = vpop.f32.mrf.mxu0
        %2864 = vmatprep.mubr.f32.mxu0 0.0
        %2865 = vmatmul.mubr.f32.gmra.mxu0 %v2665
        %v2866 = vpop.f32.mrf.mxu0
        %v2867 = vadd.f32 0.0, %v2866
        %v2868 = vpop.f32.mrf.mxu0
        %2869 = vmatprep.mubr.f32.mxu0 0.0
        %2870 = vmatmul.mubr.f32.gmra.mxu0 %v2668
        %v2871 = vpop.f32.mrf.mxu0
        %v2872 = vadd.f32 0.0, %v2871
        %v2873 = vpop.f32.mrf.mxu0
        %2874 = vmatprep.mubr.f32.mxu0 0.0
        %2875 = vmatmul.mubr.f32.gmra.mxu0 %v2671
        %v2876 = vpop.f32.mrf.mxu0
        %v2877 = vadd.f32 0.0, %v2876
        %v2878 = vpop.f32.mrf.mxu0
        %2879 = vmatprep.mubr.f32.mxu0 0.0
        %2880 = vmatmul.mubr.f32.gmra.mxu0 %v2674
        %v2881 = vpop.f32.mrf.mxu0
        %v2882 = vadd.f32 0.0, %v2881
        %v2883 = vpop.f32.mrf.mxu0
        %2884 = vmatprep.mubr.f32.mxu0 0.0
        %2885 = vmatmul.mubr.f32.gmra.mxu0 %v2677
        %v2886 = vpop.f32.mrf.mxu0
        %v2887 = vadd.f32 0.0, %v2886
        %v2888 = vpop.f32.mrf.mxu0
        %2889 = vmatprep.mubr.f32.mxu0 0.0
        %2890 = vmatmul.mubr.f32.gmra.mxu0 %v2680
        %v2891 = vpop.f32.mrf.mxu0
        %v2892 = vadd.f32 0.0, %v2891
        %v2893 = vpop.f32.mrf.mxu0
        %2894 = vmatprep.mubr.f32.mxu0 0.0
        %2895 = vmatmul.mubr.f32.gmra.mxu0 %v2683
        %v2896 = vpop.f32.mrf.mxu0
        %v2897 = vadd.f32 0.0, %v2896
        %v2898 = vpop.f32.mrf.mxu0
        %2899 = vmatprep.mubr.f32.mxu0 0.0
        %2900 = vmatmul.mubr.f32.gmra.mxu0 %v2686
        %v2901 = vpop.f32.mrf.mxu0
        %v2902 = vadd.f32 0.0, %v2901
        %v2903 = vpop.f32.mrf.mxu0
        %2904 = vmatprep.mubr.f32.mxu0 0.0
        %2905 = vmatmul.mubr.f32.gmra.mxu0 %v2689
        %v2906 = vpop.f32.mrf.mxu0
        %v2907 = vadd.f32 0.0, %v2906
        %v2908 = vpop.f32.mrf.mxu0
        %2909 = vmatprep.mubr.f32.mxu0 0.0
        %2910 = vmatmul.mubr.f32.gmra.mxu0 %v2692
        %v2911 = vpop.f32.mrf.mxu0
        %v2912 = vadd.f32 0.0, %v2911
        %v2913 = vpop.f32.mrf.mxu0
        %2914 = vmatprep.mubr.f32.mxu0 0.0
        %2915 = vmatmul.mubr.f32.gmra.mxu0 %v2695
        %v2916 = vpop.f32.mrf.mxu0
        %v2917 = vadd.f32 0.0, %v2916
        %v2918 = vpop.f32.mrf.mxu0
        %2919 = vmatprep.mubr.f32.mxu0 0.0
        %2920 = vmatmul.mubr.f32.gmra.mxu0 %v2698
        %v2921 = vpop.f32.mrf.mxu0
        %v2922 = vadd.f32 0.0, %v2921
        %v2923 = vpop.f32.mrf.mxu0
        %2924 = vdwg.mxu0
        %v2925 = vadd.f32 %v2531, %v2767
        %v2926 = vadd.f32 %v2532, %v2772
        %v2927 = vadd.f32 %v2533, %v2777
        %v2928 = vadd.f32 %v2534, %v2782
        %v2929 = vadd.f32 %v2535, %v2787
        %v2930 = vadd.f32 %v2536, %v2792
        %v2931 = vadd.f32 %v2537, %v2797
        %v2932 = vadd.f32 %v2538, %v2802
        %v2933 = vadd.f32 %v2539, %v2807
        %v2934 = vadd.f32 %v2540, %v2812
        %v2935 = vadd.f32 %v2541, %v2817
        %v2936 = vadd.f32 %v2542, %v2822
        %v2937 = vadd.f32 %v2543, %v2827
        %v2938 = vadd.f32 %v2544, %v2832
        %v2939 = vadd.f32 %v2545, %v2837
        %v2940 = vadd.f32 %v2546, %v2842
        %v2941 = vadd.f32 %v2547, %v2847
        %v2942 = vadd.f32 %v2548, %v2852
        %v2943 = vadd.f32 %v2549, %v2857
        %v2944 = vadd.f32 %v2550, %v2862
        %v2945 = vadd.f32 %v2551, %v2867
        %v2946 = vadd.f32 %v2552, %v2872
        %v2947 = vadd.f32 %v2553, %v2877
        %v2948 = vadd.f32 %v2554, %v2882
        %v2949 = vadd.f32 %v2555, %v2887
        %v2950 = vadd.f32 %v2556, %v2892
        %v2951 = vadd.f32 %v2557, %v2897
        %v2952 = vadd.f32 %v2558, %v2902
        %v2953 = vadd.f32 %v2559, %v2907
        %v2954 = vadd.f32 %v2560, %v2912
        %v2955 = vadd.f32 %v2561, %v2917
        %v2956 = vadd.f32 %v2562, %v2922
        %v2957 = vld [vmem:[%s1413 + $0x8] sm:$0xff]
        %v2958 = vld [vmem:[%s1413 + $0x10] sm:$0xff]
        %v2959 = vld [vmem:[%s1413 + $0x28] sm:$0xff]
        %v2960 = vld [vmem:[%s1413 + $0x30] sm:$0xff]
        %v2961 = vld [vmem:[%s1413 + $0x48] sm:$0xff]
        %v2962 = vld [vmem:[%s1413 + $0x50] sm:$0xff]
        %v2963 = vld [vmem:[%s1413 + $0x68] sm:$0xff]
        %v2964 = vld [vmem:[%s1413 + $0x70] sm:$0xff]
        %v2965 = vld [vmem:[%s1413 + $0x88] sm:$0xff]
        %v2966 = vld [vmem:[%s1413 + $0x90] sm:$0xff]
        %v2967 = vld [vmem:[%s1413 + $0xa8] sm:$0xff]
        %v2968 = vld [vmem:[%s1413 + $0xb0] sm:$0xff]
        %v2969 = vld [vmem:[%s1413 + $0xc8] sm:$0xff]
        %v2970 = vld [vmem:[%s1413 + $0xd0] sm:$0xff]
        %v2971 = vld [vmem:[%s1413 + $0xe8] sm:$0xff]
        %v2972 = vld [vmem:[%s1413 + $0xf0] sm:$0xff]
        %v2973 = vld [vmem:[%s1413 + $0x108] sm:$0xff]
        %v2974 = vld [vmem:[%s1413 + $0x110] sm:$0xff]
        %v2975 = vld [vmem:[%s1413 + $0x128] sm:$0xff]
        %v2976 = vld [vmem:[%s1413 + $0x130] sm:$0xff]
        %v2977 = vld [vmem:[%s1413 + $0x148] sm:$0xff]
        %v2978 = vld [vmem:[%s1413 + $0x150] sm:$0xff]
        %v2979 = vld [vmem:[%s1413 + $0x168] sm:$0xff]
        %v2980 = vld [vmem:[%s1413 + $0x170] sm:$0xff]
        %v2981 = vld [vmem:[%s1413 + $0x188] sm:$0xff]
        %v2982 = vld [vmem:[%s1413 + $0x190] sm:$0xff]
        %v2983 = vld [vmem:[%s1413 + $0x1a8] sm:$0xff]
        %v2984 = vld [vmem:[%s1413 + $0x1b0] sm:$0xff]
        %v2985 = vld [vmem:[%s1413 + $0x1c8] sm:$0xff]
        %v2986 = vld [vmem:[%s1413 + $0x1d0] sm:$0xff]
        %v2987 = vld [vmem:[%s1413 + $0x1e8] sm:$0xff]
        %v2988 = vld [vmem:[%s1413 + $0x1f0] sm:$0xff]
        %s2989 = scalar_lea.vmem %s5, 256
        %v2990 = vld [vmem:[%s2989] sm:$0xff]
        %v2991 = vld [vmem:[%s2989 + $0x8] sm:$0xff]
        %v2992 = vld [vmem:[%s2989 + $0x10] sm:$0xff]
        %v2993 = vld [vmem:[%s2989 + $0x18] sm:$0xff]
        %v2994 = vld [vmem:[%s2989 + $0x20] sm:$0xff]
        %v2995 = vld [vmem:[%s2989 + $0x28] sm:$0xff]
        %v2996 = vld [vmem:[%s2989 + $0x30] sm:$0xff]
        %v2997 = vld [vmem:[%s2989 + $0x38] sm:$0xff]
        %v2999 = vsel %vm1198, %v2957, 0
        %v3002 = vsel %vm1198, %v2958, 0
        %v3005 = vsel %vm1198, %v2959, 0
        %v3008 = vsel %vm1198, %v2960, 0
        %v3011 = vsel %vm1198, %v2961, 0
        %v3014 = vsel %vm1198, %v2962, 0
        %v3017 = vsel %vm1198, %v2963, 0
        %v3020 = vsel %vm1198, %v2964, 0
        %v3023 = vsel %vm1198, %v2965, 0
        %v3026 = vsel %vm1198, %v2966, 0
        %v3029 = vsel %vm1198, %v2967, 0
        %v3032 = vsel %vm1198, %v2968, 0
        %v3035 = vsel %vm1198, %v2969, 0
        %v3038 = vsel %vm1198, %v2970, 0
        %v3041 = vsel %vm1198, %v2971, 0
        %v3044 = vsel %vm1198, %v2972, 0
        %v3047 = vsel %vm1198, %v2973, 0
        %v3050 = vsel %vm1198, %v2974, 0
        %v3053 = vsel %vm1198, %v2975, 0
        %v3056 = vsel %vm1198, %v2976, 0
        %v3059 = vsel %vm1198, %v2977, 0
        %v3062 = vsel %vm1198, %v2978, 0
        %v3065 = vsel %vm1198, %v2979, 0
        %v3068 = vsel %vm1198, %v2980, 0
        %v3071 = vsel %vm1198, %v2981, 0
        %v3074 = vsel %vm1198, %v2982, 0
        %v3077 = vsel %vm1198, %v2983, 0
        %v3080 = vsel %vm1198, %v2984, 0
        %v3083 = vsel %vm1198, %v2985, 0
        %v3086 = vsel %vm1198, %v2986, 0
        %v3089 = vsel %vm1198, %v2987, 0
        %v3092 = vsel %vm1198, %v2988, 0
        %3094 = vmatprep.subr.mxu0 0.0
        %3095 = vmatpush1.msra.mxu0 0.0
        %3096 = vmatprep.subr.mxu0 0.0
        %3097 = vmatpush1.msra.mxu0 0.0
        %3098 = vmatprep.subr.mxu0 0.0
        %3099 = vmatpush1.msra.mxu0 0.0
        %3100 = vmatprep.subr.mxu0 0.0
        %3101 = vmatpush1.msra.mxu0 0.0
        %3102 = vmatprep.subr.mxu0 0.0
        %3103 = vmatpush1.msra.mxu0 0.0
        %3104 = vmatprep.subr.mxu0 0.0
        %3105 = vmatpush1.msra.mxu0 0.0
        %3106 = vmatprep.subr.mxu0 0.0
        %3107 = vmatpush1.msra.mxu0 0.0
        %3108 = vmatprep.subr.mxu0 0.0
        %3109 = vmatpush1.msra.mxu0 0.0
        %3110 = vmatprep.subr.mxu0 0.0
        %3111 = vmatpush1.msra.mxu0 %v2997
        %3112 = vmatprep.subr.mxu0 0.0
        %3113 = vmatpush1.msra.mxu0 %v2996
        %3114 = vmatprep.subr.mxu0 0.0
        %3115 = vmatpush1.msra.mxu0 %v2995
        %3116 = vmatprep.subr.mxu0 0.0
        %3117 = vmatpush1.msra.mxu0 %v2994
        %3118 = vmatprep.subr.mxu0 0.0
        %3119 = vmatpush1.msra.mxu0 %v2993
        %3120 = vmatprep.subr.mxu0 0.0
        %3121 = vmatpush1.msra.mxu0 %v2992
        %3122 = vmatprep.subr.mxu0 0.0
        %3123 = vmatpush1.msra.mxu0 %v2991
        %3124 = vmatprep.subr.mxu0 0.0
        %3125 = vmatpush1.msra.mxu0 %v2990
        %3126 = vmatprep.subr.mxu0 0.0
        %3127 = vmatpush2.msra.mxu0 0.0
        %3128 = vmatprep.subr.mxu0 0.0
        %3129 = vmatpush2.msra.mxu0 0.0
        %3130 = vmatprep.subr.mxu0 0.0
        %3131 = vmatpush2.msra.mxu0 0.0
        %3132 = vmatprep.subr.mxu0 0.0
        %3133 = vmatpush2.msra.mxu0 0.0
        %3134 = vmatprep.subr.mxu0 0.0
        %3135 = vmatpush2.msra.mxu0 0.0
        %3136 = vmatprep.subr.mxu0 0.0
        %3137 = vmatpush2.msra.mxu0 0.0
        %3138 = vmatprep.subr.mxu0 0.0
        %3139 = vmatpush2.msra.mxu0 0.0
        %3140 = vmatprep.subr.mxu0 0.0
        %3141 = vmatpush2.msra.mxu0 0.0
        %3142 = vmatprep.subr.mxu0 0.0
        %3143 = vmatpush2.msra.mxu0 0.0
        %3144 = vmatprep.subr.mxu0 0.0
        %3145 = vmatpush2.msra.mxu0 0.0
        %3146 = vmatprep.subr.mxu0 0.0
        %3147 = vmatpush2.msra.mxu0 0.0
        %3148 = vmatprep.subr.mxu0 0.0
        %3149 = vmatpush2.msra.mxu0 0.0
        %3150 = vmatprep.subr.mxu0 0.0
        %3151 = vmatpush2.msra.mxu0 0.0
        %3152 = vmatprep.subr.mxu0 0.0
        %3153 = vmatpush2.msra.mxu0 0.0
        %3154 = vmatprep.subr.mxu0 0.0
        %3155 = vmatpush2.msra.mxu0 0.0
        %3156 = vmatprep.subr.mxu0 0.0
        %3157 = vmatpush2.msra.mxu0 0.0
        %3158 = vmatprep.mubr.f32.mxu0 0.0
        %3159 = vmatmul.mubr.f32.gmra.mxu0 %v2999
        %v3160 = vpop.f32.mrf.mxu0
        %v3161 = vadd.f32 0.0, %v3160
        %v3162 = vpop.f32.mrf.mxu0
        %3163 = vmatprep.mubr.f32.mxu0 0.0
        %3164 = vmatmul.mubr.f32.gmra.mxu0 %v3002
        %v3165 = vpop.f32.mrf.mxu0
        %v3166 = vadd.f32 0.0, %v3165
        %v3167 = vpop.f32.mrf.mxu0
        %3168 = vmatprep.mubr.f32.mxu0 0.0
        %3169 = vmatmul.mubr.f32.gmra.mxu0 %v3005
        %v3170 = vpop.f32.mrf.mxu0
        %v3171 = vadd.f32 0.0, %v3170
        %v3172 = vpop.f32.mrf.mxu0
        %3173 = vmatprep.mubr.f32.mxu0 0.0
        %3174 = vmatmul.mubr.f32.gmra.mxu0 %v3008
        %v3175 = vpop.f32.mrf.mxu0
        %v3176 = vadd.f32 0.0, %v3175
        %v3177 = vpop.f32.mrf.mxu0
        %3178 = vmatprep.mubr.f32.mxu0 0.0
        %3179 = vmatmul.mubr.f32.gmra.mxu0 %v3011
        %v3180 = vpop.f32.mrf.mxu0
        %v3181 = vadd.f32 0.0, %v3180
        %v3182 = vpop.f32.mrf.mxu0
        %3183 = vmatprep.mubr.f32.mxu0 0.0
        %3184 = vmatmul.mubr.f32.gmra.mxu0 %v3014
        %v3185 = vpop.f32.mrf.mxu0
        %v3186 = vadd.f32 0.0, %v3185
        %v3187 = vpop.f32.mrf.mxu0
        %3188 = vmatprep.mubr.f32.mxu0 0.0
        %3189 = vmatmul.mubr.f32.gmra.mxu0 %v3017
        %v3190 = vpop.f32.mrf.mxu0
        %v3191 = vadd.f32 0.0, %v3190
        %v3192 = vpop.f32.mrf.mxu0
        %3193 = vmatprep.mubr.f32.mxu0 0.0
        %3194 = vmatmul.mubr.f32.gmra.mxu0 %v3020
        %v3195 = vpop.f32.mrf.mxu0
        %v3196 = vadd.f32 0.0, %v3195
        %v3197 = vpop.f32.mrf.mxu0
        %3198 = vmatprep.mubr.f32.mxu0 0.0
        %3199 = vmatmul.mubr.f32.gmra.mxu0 %v3023
        %v3200 = vpop.f32.mrf.mxu0
        %v3201 = vadd.f32 0.0, %v3200
        %v3202 = vpop.f32.mrf.mxu0
        %3203 = vmatprep.mubr.f32.mxu0 0.0
        %3204 = vmatmul.mubr.f32.gmra.mxu0 %v3026
        %v3205 = vpop.f32.mrf.mxu0
        %v3206 = vadd.f32 0.0, %v3205
        %v3207 = vpop.f32.mrf.mxu0
        %3208 = vmatprep.mubr.f32.mxu0 0.0
        %3209 = vmatmul.mubr.f32.gmra.mxu0 %v3029
        %v3210 = vpop.f32.mrf.mxu0
        %v3211 = vadd.f32 0.0, %v3210
        %v3212 = vpop.f32.mrf.mxu0
        %3213 = vmatprep.mubr.f32.mxu0 0.0
        %3214 = vmatmul.mubr.f32.gmra.mxu0 %v3032
        %v3215 = vpop.f32.mrf.mxu0
        %v3216 = vadd.f32 0.0, %v3215
        %v3217 = vpop.f32.mrf.mxu0
        %3218 = vmatprep.mubr.f32.mxu0 0.0
        %3219 = vmatmul.mubr.f32.gmra.mxu0 %v3035
        %v3220 = vpop.f32.mrf.mxu0
        %v3221 = vadd.f32 0.0, %v3220
        %v3222 = vpop.f32.mrf.mxu0
        %3223 = vmatprep.mubr.f32.mxu0 0.0
        %3224 = vmatmul.mubr.f32.gmra.mxu0 %v3038
        %v3225 = vpop.f32.mrf.mxu0
        %v3226 = vadd.f32 0.0, %v3225
        %v3227 = vpop.f32.mrf.mxu0
        %3228 = vmatprep.mubr.f32.mxu0 0.0
        %3229 = vmatmul.mubr.f32.gmra.mxu0 %v3041
        %v3230 = vpop.f32.mrf.mxu0
        %v3231 = vadd.f32 0.0, %v3230
        %v3232 = vpop.f32.mrf.mxu0
        %3233 = vmatprep.mubr.f32.mxu0 0.0
        %3234 = vmatmul.mubr.f32.gmra.mxu0 %v3044
        %v3235 = vpop.f32.mrf.mxu0
        %v3236 = vadd.f32 0.0, %v3235
        %v3237 = vpop.f32.mrf.mxu0
        %3238 = vmatprep.mubr.f32.mxu0 0.0
        %3239 = vmatmul.mubr.f32.gmra.mxu0 %v3047
        %v3240 = vpop.f32.mrf.mxu0
        %v3241 = vadd.f32 0.0, %v3240
        %v3242 = vpop.f32.mrf.mxu0
        %3243 = vmatprep.mubr.f32.mxu0 0.0
        %3244 = vmatmul.mubr.f32.gmra.mxu0 %v3050
        %v3245 = vpop.f32.mrf.mxu0
        %v3246 = vadd.f32 0.0, %v3245
        %v3247 = vpop.f32.mrf.mxu0
        %3248 = vmatprep.mubr.f32.mxu0 0.0
        %3249 = vmatmul.mubr.f32.gmra.mxu0 %v3053
        %v3250 = vpop.f32.mrf.mxu0
        %v3251 = vadd.f32 0.0, %v3250
        %v3252 = vpop.f32.mrf.mxu0
        %3253 = vmatprep.mubr.f32.mxu0 0.0
        %3254 = vmatmul.mubr.f32.gmra.mxu0 %v3056
        %v3255 = vpop.f32.mrf.mxu0
        %v3256 = vadd.f32 0.0, %v3255
        %v3257 = vpop.f32.mrf.mxu0
        %3258 = vmatprep.mubr.f32.mxu0 0.0
        %3259 = vmatmul.mubr.f32.gmra.mxu0 %v3059
        %v3260 = vpop.f32.mrf.mxu0
        %v3261 = vadd.f32 0.0, %v3260
        %v3262 = vpop.f32.mrf.mxu0
        %3263 = vmatprep.mubr.f32.mxu0 0.0
        %3264 = vmatmul.mubr.f32.gmra.mxu0 %v3062
        %v3265 = vpop.f32.mrf.mxu0
        %v3266 = vadd.f32 0.0, %v3265
        %v3267 = vpop.f32.mrf.mxu0
        %3268 = vmatprep.mubr.f32.mxu0 0.0
        %3269 = vmatmul.mubr.f32.gmra.mxu0 %v3065
        %v3270 = vpop.f32.mrf.mxu0
        %v3271 = vadd.f32 0.0, %v3270
        %v3272 = vpop.f32.mrf.mxu0
        %3273 = vmatprep.mubr.f32.mxu0 0.0
        %3274 = vmatmul.mubr.f32.gmra.mxu0 %v3068
        %v3275 = vpop.f32.mrf.mxu0
        %v3276 = vadd.f32 0.0, %v3275
        %v3277 = vpop.f32.mrf.mxu0
        %3278 = vmatprep.mubr.f32.mxu0 0.0
        %3279 = vmatmul.mubr.f32.gmra.mxu0 %v3071
        %v3280 = vpop.f32.mrf.mxu0
        %v3281 = vadd.f32 0.0, %v3280
        %v3282 = vpop.f32.mrf.mxu0
        %3283 = vmatprep.mubr.f32.mxu0 0.0
        %3284 = vmatmul.mubr.f32.gmra.mxu0 %v3074
        %v3285 = vpop.f32.mrf.mxu0
        %v3286 = vadd.f32 0.0, %v3285
        %v3287 = vpop.f32.mrf.mxu0
        %3288 = vmatprep.mubr.f32.mxu0 0.0
        %3289 = vmatmul.mubr.f32.gmra.mxu0 %v3077
        %v3290 = vpop.f32.mrf.mxu0
        %v3291 = vadd.f32 0.0, %v3290
        %v3292 = vpop.f32.mrf.mxu0
        %3293 = vmatprep.mubr.f32.mxu0 0.0
        %3294 = vmatmul.mubr.f32.gmra.mxu0 %v3080
        %v3295 = vpop.f32.mrf.mxu0
        %v3296 = vadd.f32 0.0, %v3295
        %v3297 = vpop.f32.mrf.mxu0
        %3298 = vmatprep.mubr.f32.mxu0 0.0
        %3299 = vmatmul.mubr.f32.gmra.mxu0 %v3083
        %v3300 = vpop.f32.mrf.mxu0
        %v3301 = vadd.f32 0.0, %v3300
        %v3302 = vpop.f32.mrf.mxu0
        %3303 = vmatprep.mubr.f32.mxu0 0.0
        %3304 = vmatmul.mubr.f32.gmra.mxu0 %v3086
        %v3305 = vpop.f32.mrf.mxu0
        %v3306 = vadd.f32 0.0, %v3305
        %v3307 = vpop.f32.mrf.mxu0
        %3308 = vmatprep.mubr.f32.mxu0 0.0
        %3309 = vmatmul.mubr.f32.gmra.mxu0 %v3089
        %v3310 = vpop.f32.mrf.mxu0
        %v3311 = vadd.f32 0.0, %v3310
        %v3312 = vpop.f32.mrf.mxu0
        %3313 = vmatprep.mubr.f32.mxu0 0.0
        %3314 = vmatmul.mubr.f32.gmra.mxu0 %v3092
        %v3315 = vpop.f32.mrf.mxu0
        %v3316 = vadd.f32 0.0, %v3315
        %v3317 = vpop.f32.mrf.mxu0
        %3318 = vdwg.mxu0
        %v3319 = vadd.f32 %v2925, %v3161
        %v3320 = vadd.f32 %v2926, %v3166
        %v3321 = vadd.f32 %v2927, %v3171
        %v3322 = vadd.f32 %v2928, %v3176
        %v3323 = vadd.f32 %v2929, %v3181
        %v3324 = vadd.f32 %v2930, %v3186
        %v3325 = vadd.f32 %v2931, %v3191
        %v3326 = vadd.f32 %v2932, %v3196
        %v3327 = vadd.f32 %v2933, %v3201
        %v3328 = vadd.f32 %v2934, %v3206
        %v3329 = vadd.f32 %v2935, %v3211
        %v3330 = vadd.f32 %v2936, %v3216
        %v3331 = vadd.f32 %v2937, %v3221
        %v3332 = vadd.f32 %v2938, %v3226
        %v3333 = vadd.f32 %v2939, %v3231
        %v3334 = vadd.f32 %v2940, %v3236
        %v3335 = vadd.f32 %v2941, %v3241
        %v3336 = vadd.f32 %v2942, %v3246
        %v3337 = vadd.f32 %v2943, %v3251
        %v3338 = vadd.f32 %v2944, %v3256
        %v3339 = vadd.f32 %v2945, %v3261
        %v3340 = vadd.f32 %v2946, %v3266
        %v3341 = vadd.f32 %v2947, %v3271
        %v3342 = vadd.f32 %v2948, %v3276
        %v3343 = vadd.f32 %v2949, %v3281
        %v3344 = vadd.f32 %v2950, %v3286
        %v3345 = vadd.f32 %v2951, %v3291
        %v3346 = vadd.f32 %v2952, %v3296
        %v3347 = vadd.f32 %v2953, %v3301
        %v3348 = vadd.f32 %v2954, %v3306
        %v3349 = vadd.f32 %v2955, %v3311
        %v3350 = vadd.f32 %v2956, %v3316
        %v3351 = vld [vmem:[%s1413 + $0x9] sm:$0xff]
        %v3352 = vld [vmem:[%s1413 + $0x11] sm:$0xff]
        %v3353 = vld [vmem:[%s1413 + $0x29] sm:$0xff]
        %v3354 = vld [vmem:[%s1413 + $0x31] sm:$0xff]
        %v3355 = vld [vmem:[%s1413 + $0x49] sm:$0xff]
        %v3356 = vld [vmem:[%s1413 + $0x51] sm:$0xff]
        %v3357 = vld [vmem:[%s1413 + $0x69] sm:$0xff]
        %v3358 = vld [vmem:[%s1413 + $0x71] sm:$0xff]
        %v3359 = vld [vmem:[%s1413 + $0x89] sm:$0xff]
        %v3360 = vld [vmem:[%s1413 + $0x91] sm:$0xff]
        %v3361 = vld [vmem:[%s1413 + $0xa9] sm:$0xff]
        %v3362 = vld [vmem:[%s1413 + $0xb1] sm:$0xff]
        %v3363 = vld [vmem:[%s1413 + $0xc9] sm:$0xff]
        %v3364 = vld [vmem:[%s1413 + $0xd1] sm:$0xff]
        %v3365 = vld [vmem:[%s1413 + $0xe9] sm:$0xff]
        %v3366 = vld [vmem:[%s1413 + $0xf1] sm:$0xff]
        %v3367 = vld [vmem:[%s1413 + $0x109] sm:$0xff]
        %v3368 = vld [vmem:[%s1413 + $0x111] sm:$0xff]
        %v3369 = vld [vmem:[%s1413 + $0x129] sm:$0xff]
        %v3370 = vld [vmem:[%s1413 + $0x131] sm:$0xff]
        %v3371 = vld [vmem:[%s1413 + $0x149] sm:$0xff]
        %v3372 = vld [vmem:[%s1413 + $0x151] sm:$0xff]
        %v3373 = vld [vmem:[%s1413 + $0x169] sm:$0xff]
        %v3374 = vld [vmem:[%s1413 + $0x171] sm:$0xff]
        %v3375 = vld [vmem:[%s1413 + $0x189] sm:$0xff]
        %v3376 = vld [vmem:[%s1413 + $0x191] sm:$0xff]
        %v3377 = vld [vmem:[%s1413 + $0x1a9] sm:$0xff]
        %v3378 = vld [vmem:[%s1413 + $0x1b1] sm:$0xff]
        %v3379 = vld [vmem:[%s1413 + $0x1c9] sm:$0xff]
        %v3380 = vld [vmem:[%s1413 + $0x1d1] sm:$0xff]
        %v3381 = vld [vmem:[%s1413 + $0x1e9] sm:$0xff]
        %v3382 = vld [vmem:[%s1413 + $0x1f1] sm:$0xff]
        %s3383 = scalar_lea.vmem %s5, 320
        %v3384 = vld [vmem:[%s3383] sm:$0xff]
        %v3385 = vld [vmem:[%s3383 + $0x8] sm:$0xff]
        %v3386 = vld [vmem:[%s3383 + $0x10] sm:$0xff]
        %v3387 = vld [vmem:[%s3383 + $0x18] sm:$0xff]
        %v3388 = vld [vmem:[%s3383 + $0x20] sm:$0xff]
        %v3389 = vld [vmem:[%s3383 + $0x28] sm:$0xff]
        %v3390 = vld [vmem:[%s3383 + $0x30] sm:$0xff]
        %v3391 = vld [vmem:[%s3383 + $0x38] sm:$0xff]
        %v3393 = vsel %vm1198, %v3351, 0
        %v3396 = vsel %vm1198, %v3352, 0
        %v3399 = vsel %vm1198, %v3353, 0
        %v3402 = vsel %vm1198, %v3354, 0
        %v3405 = vsel %vm1198, %v3355, 0
        %v3408 = vsel %vm1198, %v3356, 0
        %v3411 = vsel %vm1198, %v3357, 0
        %v3414 = vsel %vm1198, %v3358, 0
        %v3417 = vsel %vm1198, %v3359, 0
        %v3420 = vsel %vm1198, %v3360, 0
        %v3423 = vsel %vm1198, %v3361, 0
        %v3426 = vsel %vm1198, %v3362, 0
        %v3429 = vsel %vm1198, %v3363, 0
        %v3432 = vsel %vm1198, %v3364, 0
        %v3435 = vsel %vm1198, %v3365, 0
        %v3438 = vsel %vm1198, %v3366, 0
        %v3441 = vsel %vm1198, %v3367, 0
        %v3444 = vsel %vm1198, %v3368, 0
        %v3447 = vsel %vm1198, %v3369, 0
        %v3450 = vsel %vm1198, %v3370, 0
        %v3453 = vsel %vm1198, %v3371, 0
        %v3456 = vsel %vm1198, %v3372, 0
        %v3459 = vsel %vm1198, %v3373, 0
        %v3462 = vsel %vm1198, %v3374, 0
        %v3465 = vsel %vm1198, %v3375, 0
        %v3468 = vsel %vm1198, %v3376, 0
        %v3471 = vsel %vm1198, %v3377, 0
        %v3474 = vsel %vm1198, %v3378, 0
        %v3477 = vsel %vm1198, %v3379, 0
        %v3480 = vsel %vm1198, %v3380, 0
        %v3483 = vsel %vm1198, %v3381, 0
        %v3486 = vsel %vm1198, %v3382, 0
        %3488 = vmatprep.subr.mxu0 0.0
        %3489 = vmatpush1.msra.mxu0 0.0
        %3490 = vmatprep.subr.mxu0 0.0
        %3491 = vmatpush1.msra.mxu0 0.0
        %3492 = vmatprep.subr.mxu0 0.0
        %3493 = vmatpush1.msra.mxu0 0.0
        %3494 = vmatprep.subr.mxu0 0.0
        %3495 = vmatpush1.msra.mxu0 0.0
        %3496 = vmatprep.subr.mxu0 0.0
        %3497 = vmatpush1.msra.mxu0 0.0
        %3498 = vmatprep.subr.mxu0 0.0
        %3499 = vmatpush1.msra.mxu0 0.0
        %3500 = vmatprep.subr.mxu0 0.0
        %3501 = vmatpush1.msra.mxu0 0.0
        %3502 = vmatprep.subr.mxu0 0.0
        %3503 = vmatpush1.msra.mxu0 0.0
        %3504 = vmatprep.subr.mxu0 0.0
        %3505 = vmatpush1.msra.mxu0 %v3391
        %3506 = vmatprep.subr.mxu0 0.0
        %3507 = vmatpush1.msra.mxu0 %v3390
        %3508 = vmatprep.subr.mxu0 0.0
        %3509 = vmatpush1.msra.mxu0 %v3389
        %3510 = vmatprep.subr.mxu0 0.0
        %3511 = vmatpush1.msra.mxu0 %v3388
        %3512 = vmatprep.subr.mxu0 0.0
        %3513 = vmatpush1.msra.mxu0 %v3387
        %3514 = vmatprep.subr.mxu0 0.0
        %3515 = vmatpush1.msra.mxu0 %v3386
        %3516 = vmatprep.subr.mxu0 0.0
        %3517 = vmatpush1.msra.mxu0 %v3385
        %3518 = vmatprep.subr.mxu0 0.0
        %3519 = vmatpush1.msra.mxu0 %v3384
        %3520 = vmatprep.subr.mxu0 0.0
        %3521 = vmatpush2.msra.mxu0 0.0
        %3522 = vmatprep.subr.mxu0 0.0
        %3523 = vmatpush2.msra.mxu0 0.0
        %3524 = vmatprep.subr.mxu0 0.0
        %3525 = vmatpush2.msra.mxu0 0.0
        %3526 = vmatprep.subr.mxu0 0.0
        %3527 = vmatpush2.msra.mxu0 0.0
        %3528 = vmatprep.subr.mxu0 0.0
        %3529 = vmatpush2.msra.mxu0 0.0
        %3530 = vmatprep.subr.mxu0 0.0
        %3531 = vmatpush2.msra.mxu0 0.0
        %3532 = vmatprep.subr.mxu0 0.0
        %3533 = vmatpush2.msra.mxu0 0.0
        %3534 = vmatprep.subr.mxu0 0.0
        %3535 = vmatpush2.msra.mxu0 0.0
        %3536 = vmatprep.subr.mxu0 0.0
        %3537 = vmatpush2.msra.mxu0 0.0
        %3538 = vmatprep.subr.mxu0 0.0
        %3539 = vmatpush2.msra.mxu0 0.0
        %3540 = vmatprep.subr.mxu0 0.0
        %3541 = vmatpush2.msra.mxu0 0.0
        %3542 = vmatprep.subr.mxu0 0.0
        %3543 = vmatpush2.msra.mxu0 0.0
        %3544 = vmatprep.subr.mxu0 0.0
        %3545 = vmatpush2.msra.mxu0 0.0
        %3546 = vmatprep.subr.mxu0 0.0
        %3547 = vmatpush2.msra.mxu0 0.0
        %3548 = vmatprep.subr.mxu0 0.0
        %3549 = vmatpush2.msra.mxu0 0.0
        %3550 = vmatprep.subr.mxu0 0.0
        %3551 = vmatpush2.msra.mxu0 0.0
        %3552 = vmatprep.mubr.f32.mxu0 0.0
        %3553 = vmatmul.mubr.f32.gmra.mxu0 %v3393
        %v3554 = vpop.f32.mrf.mxu0
        %v3555 = vadd.f32 0.0, %v3554
        %v3556 = vpop.f32.mrf.mxu0
        %3557 = vmatprep.mubr.f32.mxu0 0.0
        %3558 = vmatmul.mubr.f32.gmra.mxu0 %v3396
        %v3559 = vpop.f32.mrf.mxu0
        %v3560 = vadd.f32 0.0, %v3559
        %v3561 = vpop.f32.mrf.mxu0
        %3562 = vmatprep.mubr.f32.mxu0 0.0
        %3563 = vmatmul.mubr.f32.gmra.mxu0 %v3399
        %v3564 = vpop.f32.mrf.mxu0
        %v3565 = vadd.f32 0.0, %v3564
        %v3566 = vpop.f32.mrf.mxu0
        %3567 = vmatprep.mubr.f32.mxu0 0.0
        %3568 = vmatmul.mubr.f32.gmra.mxu0 %v3402
        %v3569 = vpop.f32.mrf.mxu0
        %v3570 = vadd.f32 0.0, %v3569
        %v3571 = vpop.f32.mrf.mxu0
        %3572 = vmatprep.mubr.f32.mxu0 0.0
        %3573 = vmatmul.mubr.f32.gmra.mxu0 %v3405
        %v3574 = vpop.f32.mrf.mxu0
        %v3575 = vadd.f32 0.0, %v3574
        %v3576 = vpop.f32.mrf.mxu0
        %3577 = vmatprep.mubr.f32.mxu0 0.0
        %3578 = vmatmul.mubr.f32.gmra.mxu0 %v3408
        %v3579 = vpop.f32.mrf.mxu0
        %v3580 = vadd.f32 0.0, %v3579
        %v3581 = vpop.f32.mrf.mxu0
        %3582 = vmatprep.mubr.f32.mxu0 0.0
        %3583 = vmatmul.mubr.f32.gmra.mxu0 %v3411
        %v3584 = vpop.f32.mrf.mxu0
        %v3585 = vadd.f32 0.0, %v3584
        %v3586 = vpop.f32.mrf.mxu0
        %3587 = vmatprep.mubr.f32.mxu0 0.0
        %3588 = vmatmul.mubr.f32.gmra.mxu0 %v3414
        %v3589 = vpop.f32.mrf.mxu0
        %v3590 = vadd.f32 0.0, %v3589
        %v3591 = vpop.f32.mrf.mxu0
        %3592 = vmatprep.mubr.f32.mxu0 0.0
        %3593 = vmatmul.mubr.f32.gmra.mxu0 %v3417
        %v3594 = vpop.f32.mrf.mxu0
        %v3595 = vadd.f32 0.0, %v3594
        %v3596 = vpop.f32.mrf.mxu0
        %3597 = vmatprep.mubr.f32.mxu0 0.0
        %3598 = vmatmul.mubr.f32.gmra.mxu0 %v3420
        %v3599 = vpop.f32.mrf.mxu0
        %v3600 = vadd.f32 0.0, %v3599
        %v3601 = vpop.f32.mrf.mxu0
        %3602 = vmatprep.mubr.f32.mxu0 0.0
        %3603 = vmatmul.mubr.f32.gmra.mxu0 %v3423
        %v3604 = vpop.f32.mrf.mxu0
        %v3605 = vadd.f32 0.0, %v3604
        %v3606 = vpop.f32.mrf.mxu0
        %3607 = vmatprep.mubr.f32.mxu0 0.0
        %3608 = vmatmul.mubr.f32.gmra.mxu0 %v3426
        %v3609 = vpop.f32.mrf.mxu0
        %v3610 = vadd.f32 0.0, %v3609
        %v3611 = vpop.f32.mrf.mxu0
        %3612 = vmatprep.mubr.f32.mxu0 0.0
        %3613 = vmatmul.mubr.f32.gmra.mxu0 %v3429
        %v3614 = vpop.f32.mrf.mxu0
        %v3615 = vadd.f32 0.0, %v3614
        %v3616 = vpop.f32.mrf.mxu0
        %3617 = vmatprep.mubr.f32.mxu0 0.0
        %3618 = vmatmul.mubr.f32.gmra.mxu0 %v3432
        %v3619 = vpop.f32.mrf.mxu0
        %v3620 = vadd.f32 0.0, %v3619
        %v3621 = vpop.f32.mrf.mxu0
        %3622 = vmatprep.mubr.f32.mxu0 0.0
        %3623 = vmatmul.mubr.f32.gmra.mxu0 %v3435
        %v3624 = vpop.f32.mrf.mxu0
        %v3625 = vadd.f32 0.0, %v3624
        %v3626 = vpop.f32.mrf.mxu0
        %3627 = vmatprep.mubr.f32.mxu0 0.0
        %3628 = vmatmul.mubr.f32.gmra.mxu0 %v3438
        %v3629 = vpop.f32.mrf.mxu0
        %v3630 = vadd.f32 0.0, %v3629
        %v3631 = vpop.f32.mrf.mxu0
        %3632 = vmatprep.mubr.f32.mxu0 0.0
        %3633 = vmatmul.mubr.f32.gmra.mxu0 %v3441
        %v3634 = vpop.f32.mrf.mxu0
        %v3635 = vadd.f32 0.0, %v3634
        %v3636 = vpop.f32.mrf.mxu0
        %3637 = vmatprep.mubr.f32.mxu0 0.0
        %3638 = vmatmul.mubr.f32.gmra.mxu0 %v3444
        %v3639 = vpop.f32.mrf.mxu0
        %v3640 = vadd.f32 0.0, %v3639
        %v3641 = vpop.f32.mrf.mxu0
        %3642 = vmatprep.mubr.f32.mxu0 0.0
        %3643 = vmatmul.mubr.f32.gmra.mxu0 %v3447
        %v3644 = vpop.f32.mrf.mxu0
        %v3645 = vadd.f32 0.0, %v3644
        %v3646 = vpop.f32.mrf.mxu0
        %3647 = vmatprep.mubr.f32.mxu0 0.0
        %3648 = vmatmul.mubr.f32.gmra.mxu0 %v3450
        %v3649 = vpop.f32.mrf.mxu0
        %v3650 = vadd.f32 0.0, %v3649
        %v3651 = vpop.f32.mrf.mxu0
        %3652 = vmatprep.mubr.f32.mxu0 0.0
        %3653 = vmatmul.mubr.f32.gmra.mxu0 %v3453
        %v3654 = vpop.f32.mrf.mxu0
        %v3655 = vadd.f32 0.0, %v3654
        %v3656 = vpop.f32.mrf.mxu0
        %3657 = vmatprep.mubr.f32.mxu0 0.0
        %3658 = vmatmul.mubr.f32.gmra.mxu0 %v3456
        %v3659 = vpop.f32.mrf.mxu0
        %v3660 = vadd.f32 0.0, %v3659
        %v3661 = vpop.f32.mrf.mxu0
        %3662 = vmatprep.mubr.f32.mxu0 0.0
        %3663 = vmatmul.mubr.f32.gmra.mxu0 %v3459
        %v3664 = vpop.f32.mrf.mxu0
        %v3665 = vadd.f32 0.0, %v3664
        %v3666 = vpop.f32.mrf.mxu0
        %3667 = vmatprep.mubr.f32.mxu0 0.0
        %3668 = vmatmul.mubr.f32.gmra.mxu0 %v3462
        %v3669 = vpop.f32.mrf.mxu0
        %v3670 = vadd.f32 0.0, %v3669
        %v3671 = vpop.f32.mrf.mxu0
        %3672 = vmatprep.mubr.f32.mxu0 0.0
        %3673 = vmatmul.mubr.f32.gmra.mxu0 %v3465
        %v3674 = vpop.f32.mrf.mxu0
        %v3675 = vadd.f32 0.0, %v3674
        %v3676 = vpop.f32.mrf.mxu0
        %3677 = vmatprep.mubr.f32.mxu0 0.0
        %3678 = vmatmul.mubr.f32.gmra.mxu0 %v3468
        %v3679 = vpop.f32.mrf.mxu0
        %v3680 = vadd.f32 0.0, %v3679
        %v3681 = vpop.f32.mrf.mxu0
        %3682 = vmatprep.mubr.f32.mxu0 0.0
        %3683 = vmatmul.mubr.f32.gmra.mxu0 %v3471
        %v3684 = vpop.f32.mrf.mxu0
        %v3685 = vadd.f32 0.0, %v3684
        %v3686 = vpop.f32.mrf.mxu0
        %3687 = vmatprep.mubr.f32.mxu0 0.0
        %3688 = vmatmul.mubr.f32.gmra.mxu0 %v3474
        %v3689 = vpop.f32.mrf.mxu0
        %v3690 = vadd.f32 0.0, %v3689
        %v3691 = vpop.f32.mrf.mxu0
        %3692 = vmatprep.mubr.f32.mxu0 0.0
        %3693 = vmatmul.mubr.f32.gmra.mxu0 %v3477
        %v3694 = vpop.f32.mrf.mxu0
        %v3695 = vadd.f32 0.0, %v3694
        %v3696 = vpop.f32.mrf.mxu0
        %3697 = vmatprep.mubr.f32.mxu0 0.0
        %3698 = vmatmul.mubr.f32.gmra.mxu0 %v3480
        %v3699 = vpop.f32.mrf.mxu0
        %v3700 = vadd.f32 0.0, %v3699
        %v3701 = vpop.f32.mrf.mxu0
        %3702 = vmatprep.mubr.f32.mxu0 0.0
        %3703 = vmatmul.mubr.f32.gmra.mxu0 %v3483
        %v3704 = vpop.f32.mrf.mxu0
        %v3705 = vadd.f32 0.0, %v3704
        %v3706 = vpop.f32.mrf.mxu0
        %3707 = vmatprep.mubr.f32.mxu0 0.0
        %3708 = vmatmul.mubr.f32.gmra.mxu0 %v3486
        %v3709 = vpop.f32.mrf.mxu0
        %v3710 = vadd.f32 0.0, %v3709
        %v3711 = vpop.f32.mrf.mxu0
        %3712 = vdwg.mxu0
        %v3713 = vadd.f32 %v3319, %v3555
        %v3714 = vadd.f32 %v3320, %v3560
        %v3715 = vadd.f32 %v3321, %v3565
        %v3716 = vadd.f32 %v3322, %v3570
        %v3717 = vadd.f32 %v3323, %v3575
        %v3718 = vadd.f32 %v3324, %v3580
        %v3719 = vadd.f32 %v3325, %v3585
        %v3720 = vadd.f32 %v3326, %v3590
        %v3721 = vadd.f32 %v3327, %v3595
        %v3722 = vadd.f32 %v3328, %v3600
        %v3723 = vadd.f32 %v3329, %v3605
        %v3724 = vadd.f32 %v3330, %v3610
        %v3725 = vadd.f32 %v3331, %v3615
        %v3726 = vadd.f32 %v3332, %v3620
        %v3727 = vadd.f32 %v3333, %v3625
        %v3728 = vadd.f32 %v3334, %v3630
        %v3729 = vadd.f32 %v3335, %v3635
        %v3730 = vadd.f32 %v3336, %v3640
        %v3731 = vadd.f32 %v3337, %v3645
        %v3732 = vadd.f32 %v3338, %v3650
        %v3733 = vadd.f32 %v3339, %v3655
        %v3734 = vadd.f32 %v3340, %v3660
        %v3735 = vadd.f32 %v3341, %v3665
        %v3736 = vadd.f32 %v3342, %v3670
        %v3737 = vadd.f32 %v3343, %v3675
        %v3738 = vadd.f32 %v3344, %v3680
        %v3739 = vadd.f32 %v3345, %v3685
        %v3740 = vadd.f32 %v3346, %v3690
        %v3741 = vadd.f32 %v3347, %v3695
        %v3742 = vadd.f32 %v3348, %v3700
        %v3743 = vadd.f32 %v3349, %v3705
        %v3744 = vadd.f32 %v3350, %v3710
        %s3745 = scalar_lea.vmem [#allocation2], 64
        %v3746 = vld [vmem:[%s3745 + $0x7] sm:$0xff]
        %v3747 = vld [vmem:[%s3745 + $0xf] sm:$0xff]
        %v3748 = vld [vmem:[%s3745 + $0x27] sm:$0xff]
        %v3749 = vld [vmem:[%s3745 + $0x2f] sm:$0xff]
        %v3750 = vld [vmem:[%s3745 + $0x47] sm:$0xff]
        %v3751 = vld [vmem:[%s3745 + $0x4f] sm:$0xff]
        %v3752 = vld [vmem:[%s3745 + $0x67] sm:$0xff]
        %v3753 = vld [vmem:[%s3745 + $0x6f] sm:$0xff]
        %v3754 = vld [vmem:[%s3745 + $0x87] sm:$0xff]
        %v3755 = vld [vmem:[%s3745 + $0x8f] sm:$0xff]
        %v3756 = vld [vmem:[%s3745 + $0xa7] sm:$0xff]
        %v3757 = vld [vmem:[%s3745 + $0xaf] sm:$0xff]
        %v3758 = vld [vmem:[%s3745 + $0xc7] sm:$0xff]
        %v3759 = vld [vmem:[%s3745 + $0xcf] sm:$0xff]
        %v3760 = vld [vmem:[%s3745 + $0xe7] sm:$0xff]
        %v3761 = vld [vmem:[%s3745 + $0xef] sm:$0xff]
        %v3762 = vld [vmem:[%s3745 + $0x107] sm:$0xff]
        %v3763 = vld [vmem:[%s3745 + $0x10f] sm:$0xff]
        %v3764 = vld [vmem:[%s3745 + $0x127] sm:$0xff]
        %v3765 = vld [vmem:[%s3745 + $0x12f] sm:$0xff]
        %v3766 = vld [vmem:[%s3745 + $0x147] sm:$0xff]
        %v3767 = vld [vmem:[%s3745 + $0x14f] sm:$0xff]
        %v3768 = vld [vmem:[%s3745 + $0x167] sm:$0xff]
        %v3769 = vld [vmem:[%s3745 + $0x16f] sm:$0xff]
        %v3770 = vld [vmem:[%s3745 + $0x187] sm:$0xff]
        %v3771 = vld [vmem:[%s3745 + $0x18f] sm:$0xff]
        %v3772 = vld [vmem:[%s3745 + $0x1a7] sm:$0xff]
        %v3773 = vld [vmem:[%s3745 + $0x1af] sm:$0xff]
        %v3774 = vld [vmem:[%s3745 + $0x1c7] sm:$0xff]
        %v3775 = vld [vmem:[%s3745 + $0x1cf] sm:$0xff]
        %v3776 = vld [vmem:[%s3745 + $0x1e7] sm:$0xff]
        %v3777 = vld [vmem:[%s3745 + $0x1ef] sm:$0xff]
        %s3778 = scalar_lea.vmem %s5, 384
        %v3779 = vld [vmem:[%s3778] sm:$0xff]
        %v3780 = vld [vmem:[%s3778 + $0x8] sm:$0xff]
        %v3781 = vld [vmem:[%s3778 + $0x10] sm:$0xff]
        %v3782 = vld [vmem:[%s3778 + $0x18] sm:$0xff]
        %v3783 = vld [vmem:[%s3778 + $0x20] sm:$0xff]
        %v3784 = vld [vmem:[%s3778 + $0x28] sm:$0xff]
        %v3785 = vld [vmem:[%s3778 + $0x30] sm:$0xff]
        %v3786 = vld [vmem:[%s3778 + $0x38] sm:$0xff]
        %v3788 = vsel %vm1198, %v3746, 0
        %v3791 = vsel %vm1198, %v3747, 0
        %v3794 = vsel %vm1198, %v3748, 0
        %v3797 = vsel %vm1198, %v3749, 0
        %v3800 = vsel %vm1198, %v3750, 0
        %v3803 = vsel %vm1198, %v3751, 0
        %v3806 = vsel %vm1198, %v3752, 0
        %v3809 = vsel %vm1198, %v3753, 0
        %v3812 = vsel %vm1198, %v3754, 0
        %v3815 = vsel %vm1198, %v3755, 0
        %v3818 = vsel %vm1198, %v3756, 0
        %v3821 = vsel %vm1198, %v3757, 0
        %v3824 = vsel %vm1198, %v3758, 0
        %v3827 = vsel %vm1198, %v3759, 0
        %v3830 = vsel %vm1198, %v3760, 0
        %v3833 = vsel %vm1198, %v3761, 0
        %v3836 = vsel %vm1198, %v3762, 0
        %v3839 = vsel %vm1198, %v3763, 0
        %v3842 = vsel %vm1198, %v3764, 0
        %v3845 = vsel %vm1198, %v3765, 0
        %v3848 = vsel %vm1198, %v3766, 0
        %v3851 = vsel %vm1198, %v3767, 0
        %v3854 = vsel %vm1198, %v3768, 0
        %v3857 = vsel %vm1198, %v3769, 0
        %v3860 = vsel %vm1198, %v3770, 0
        %v3863 = vsel %vm1198, %v3771, 0
        %v3866 = vsel %vm1198, %v3772, 0
        %v3869 = vsel %vm1198, %v3773, 0
        %v3872 = vsel %vm1198, %v3774, 0
        %v3875 = vsel %vm1198, %v3775, 0
        %v3878 = vsel %vm1198, %v3776, 0
        %v3881 = vsel %vm1198, %v3777, 0
        %3883 = vmatprep.subr.mxu0 0.0
        %3884 = vmatpush1.msra.mxu0 0.0
        %3885 = vmatprep.subr.mxu0 0.0
        %3886 = vmatpush1.msra.mxu0 0.0
        %3887 = vmatprep.subr.mxu0 0.0
        %3888 = vmatpush1.msra.mxu0 0.0
        %3889 = vmatprep.subr.mxu0 0.0
        %3890 = vmatpush1.msra.mxu0 0.0
        %3891 = vmatprep.subr.mxu0 0.0
        %3892 = vmatpush1.msra.mxu0 0.0
        %3893 = vmatprep.subr.mxu0 0.0
        %3894 = vmatpush1.msra.mxu0 0.0
        %3895 = vmatprep.subr.mxu0 0.0
        %3896 = vmatpush1.msra.mxu0 0.0
        %3897 = vmatprep.subr.mxu0 0.0
        %3898 = vmatpush1.msra.mxu0 0.0
        %3899 = vmatprep.subr.mxu0 0.0
        %3900 = vmatpush1.msra.mxu0 %v3786
        %3901 = vmatprep.subr.mxu0 0.0
        %3902 = vmatpush1.msra.mxu0 %v3785
        %3903 = vmatprep.subr.mxu0 0.0
        %3904 = vmatpush1.msra.mxu0 %v3784
        %3905 = vmatprep.subr.mxu0 0.0
        %3906 = vmatpush1.msra.mxu0 %v3783
        %3907 = vmatprep.subr.mxu0 0.0
        %3908 = vmatpush1.msra.mxu0 %v3782
        %3909 = vmatprep.subr.mxu0 0.0
        %3910 = vmatpush1.msra.mxu0 %v3781
        %3911 = vmatprep.subr.mxu0 0.0
        %3912 = vmatpush1.msra.mxu0 %v3780
        %3913 = vmatprep.subr.mxu0 0.0
        %3914 = vmatpush1.msra.mxu0 %v3779
        %3915 = vmatprep.subr.mxu0 0.0
        %3916 = vmatpush2.msra.mxu0 0.0
        %3917 = vmatprep.subr.mxu0 0.0
        %3918 = vmatpush2.msra.mxu0 0.0
        %3919 = vmatprep.subr.mxu0 0.0
        %3920 = vmatpush2.msra.mxu0 0.0
        %3921 = vmatprep.subr.mxu0 0.0
        %3922 = vmatpush2.msra.mxu0 0.0
        %3923 = vmatprep.subr.mxu0 0.0
        %3924 = vmatpush2.msra.mxu0 0.0
        %3925 = vmatprep.subr.mxu0 0.0
        %3926 = vmatpush2.msra.mxu0 0.0
        %3927 = vmatprep.subr.mxu0 0.0
        %3928 = vmatpush2.msra.mxu0 0.0
        %3929 = vmatprep.subr.mxu0 0.0
        %3930 = vmatpush2.msra.mxu0 0.0
        %3931 = vmatprep.subr.mxu0 0.0
        %3932 = vmatpush2.msra.mxu0 0.0
        %3933 = vmatprep.subr.mxu0 0.0
        %3934 = vmatpush2.msra.mxu0 0.0
        %3935 = vmatprep.subr.mxu0 0.0
        %3936 = vmatpush2.msra.mxu0 0.0
        %3937 = vmatprep.subr.mxu0 0.0
        %3938 = vmatpush2.msra.mxu0 0.0
        %3939 = vmatprep.subr.mxu0 0.0
        %3940 = vmatpush2.msra.mxu0 0.0
        %3941 = vmatprep.subr.mxu0 0.0
        %3942 = vmatpush2.msra.mxu0 0.0
        %3943 = vmatprep.subr.mxu0 0.0
        %3944 = vmatpush2.msra.mxu0 0.0
        %3945 = vmatprep.subr.mxu0 0.0
        %3946 = vmatpush2.msra.mxu0 0.0
        %3947 = vmatprep.mubr.f32.mxu0 0.0
        %3948 = vmatmul.mubr.f32.gmra.mxu0 %v3788
        %v3949 = vpop.f32.mrf.mxu0
        %v3950 = vadd.f32 0.0, %v3949
        %v3951 = vpop.f32.mrf.mxu0
        %3952 = vmatprep.mubr.f32.mxu0 0.0
        %3953 = vmatmul.mubr.f32.gmra.mxu0 %v3791
        %v3954 = vpop.f32.mrf.mxu0
        %v3955 = vadd.f32 0.0, %v3954
        %v3956 = vpop.f32.mrf.mxu0
        %3957 = vmatprep.mubr.f32.mxu0 0.0
        %3958 = vmatmul.mubr.f32.gmra.mxu0 %v3794
        %v3959 = vpop.f32.mrf.mxu0
        %v3960 = vadd.f32 0.0, %v3959
        %v3961 = vpop.f32.mrf.mxu0
        %3962 = vmatprep.mubr.f32.mxu0 0.0
        %3963 = vmatmul.mubr.f32.gmra.mxu0 %v3797
        %v3964 = vpop.f32.mrf.mxu0
        %v3965 = vadd.f32 0.0, %v3964
        %v3966 = vpop.f32.mrf.mxu0
        %3967 = vmatprep.mubr.f32.mxu0 0.0
        %3968 = vmatmul.mubr.f32.gmra.mxu0 %v3800
        %v3969 = vpop.f32.mrf.mxu0
        %v3970 = vadd.f32 0.0, %v3969
        %v3971 = vpop.f32.mrf.mxu0
        %3972 = vmatprep.mubr.f32.mxu0 0.0
        %3973 = vmatmul.mubr.f32.gmra.mxu0 %v3803
        %v3974 = vpop.f32.mrf.mxu0
        %v3975 = vadd.f32 0.0, %v3974
        %v3976 = vpop.f32.mrf.mxu0
        %3977 = vmatprep.mubr.f32.mxu0 0.0
        %3978 = vmatmul.mubr.f32.gmra.mxu0 %v3806
        %v3979 = vpop.f32.mrf.mxu0
        %v3980 = vadd.f32 0.0, %v3979
        %v3981 = vpop.f32.mrf.mxu0
        %3982 = vmatprep.mubr.f32.mxu0 0.0
        %3983 = vmatmul.mubr.f32.gmra.mxu0 %v3809
        %v3984 = vpop.f32.mrf.mxu0
        %v3985 = vadd.f32 0.0, %v3984
        %v3986 = vpop.f32.mrf.mxu0
        %3987 = vmatprep.mubr.f32.mxu0 0.0
        %3988 = vmatmul.mubr.f32.gmra.mxu0 %v3812
        %v3989 = vpop.f32.mrf.mxu0
        %v3990 = vadd.f32 0.0, %v3989
        %v3991 = vpop.f32.mrf.mxu0
        %3992 = vmatprep.mubr.f32.mxu0 0.0
        %3993 = vmatmul.mubr.f32.gmra.mxu0 %v3815
        %v3994 = vpop.f32.mrf.mxu0
        %v3995 = vadd.f32 0.0, %v3994
        %v3996 = vpop.f32.mrf.mxu0
        %3997 = vmatprep.mubr.f32.mxu0 0.0
        %3998 = vmatmul.mubr.f32.gmra.mxu0 %v3818
        %v3999 = vpop.f32.mrf.mxu0
        %v4000 = vadd.f32 0.0, %v3999
        %v4001 = vpop.f32.mrf.mxu0
        %4002 = vmatprep.mubr.f32.mxu0 0.0
        %4003 = vmatmul.mubr.f32.gmra.mxu0 %v3821
        %v4004 = vpop.f32.mrf.mxu0
        %v4005 = vadd.f32 0.0, %v4004
        %v4006 = vpop.f32.mrf.mxu0
        %4007 = vmatprep.mubr.f32.mxu0 0.0
        %4008 = vmatmul.mubr.f32.gmra.mxu0 %v3824
        %v4009 = vpop.f32.mrf.mxu0
        %v4010 = vadd.f32 0.0, %v4009
        %v4011 = vpop.f32.mrf.mxu0
        %4012 = vmatprep.mubr.f32.mxu0 0.0
        %4013 = vmatmul.mubr.f32.gmra.mxu0 %v3827
        %v4014 = vpop.f32.mrf.mxu0
        %v4015 = vadd.f32 0.0, %v4014
        %v4016 = vpop.f32.mrf.mxu0
        %4017 = vmatprep.mubr.f32.mxu0 0.0
        %4018 = vmatmul.mubr.f32.gmra.mxu0 %v3830
        %v4019 = vpop.f32.mrf.mxu0
        %v4020 = vadd.f32 0.0, %v4019
        %v4021 = vpop.f32.mrf.mxu0
        %4022 = vmatprep.mubr.f32.mxu0 0.0
        %4023 = vmatmul.mubr.f32.gmra.mxu0 %v3833
        %v4024 = vpop.f32.mrf.mxu0
        %v4025 = vadd.f32 0.0, %v4024
        %v4026 = vpop.f32.mrf.mxu0
        %4027 = vmatprep.mubr.f32.mxu0 0.0
        %4028 = vmatmul.mubr.f32.gmra.mxu0 %v3836
        %v4029 = vpop.f32.mrf.mxu0
        %v4030 = vadd.f32 0.0, %v4029
        %v4031 = vpop.f32.mrf.mxu0
        %4032 = vmatprep.mubr.f32.mxu0 0.0
        %4033 = vmatmul.mubr.f32.gmra.mxu0 %v3839
        %v4034 = vpop.f32.mrf.mxu0
        %v4035 = vadd.f32 0.0, %v4034
        %v4036 = vpop.f32.mrf.mxu0
        %4037 = vmatprep.mubr.f32.mxu0 0.0
        %4038 = vmatmul.mubr.f32.gmra.mxu0 %v3842
        %v4039 = vpop.f32.mrf.mxu0
        %v4040 = vadd.f32 0.0, %v4039
        %v4041 = vpop.f32.mrf.mxu0
        %4042 = vmatprep.mubr.f32.mxu0 0.0
        %4043 = vmatmul.mubr.f32.gmra.mxu0 %v3845
        %v4044 = vpop.f32.mrf.mxu0
        %v4045 = vadd.f32 0.0, %v4044
        %v4046 = vpop.f32.mrf.mxu0
        %4047 = vmatprep.mubr.f32.mxu0 0.0
        %4048 = vmatmul.mubr.f32.gmra.mxu0 %v3848
        %v4049 = vpop.f32.mrf.mxu0
        %v4050 = vadd.f32 0.0, %v4049
        %v4051 = vpop.f32.mrf.mxu0
        %4052 = vmatprep.mubr.f32.mxu0 0.0
        %4053 = vmatmul.mubr.f32.gmra.mxu0 %v3851
        %v4054 = vpop.f32.mrf.mxu0
        %v4055 = vadd.f32 0.0, %v4054
        %v4056 = vpop.f32.mrf.mxu0
        %4057 = vmatprep.mubr.f32.mxu0 0.0
        %4058 = vmatmul.mubr.f32.gmra.mxu0 %v3854
        %v4059 = vpop.f32.mrf.mxu0
        %v4060 = vadd.f32 0.0, %v4059
        %v4061 = vpop.f32.mrf.mxu0
        %4062 = vmatprep.mubr.f32.mxu0 0.0
        %4063 = vmatmul.mubr.f32.gmra.mxu0 %v3857
        %v4064 = vpop.f32.mrf.mxu0
        %v4065 = vadd.f32 0.0, %v4064
        %v4066 = vpop.f32.mrf.mxu0
        %4067 = vmatprep.mubr.f32.mxu0 0.0
        %4068 = vmatmul.mubr.f32.gmra.mxu0 %v3860
        %v4069 = vpop.f32.mrf.mxu0
        %v4070 = vadd.f32 0.0, %v4069
        %v4071 = vpop.f32.mrf.mxu0
        %4072 = vmatprep.mubr.f32.mxu0 0.0
        %4073 = vmatmul.mubr.f32.gmra.mxu0 %v3863
        %v4074 = vpop.f32.mrf.mxu0
        %v4075 = vadd.f32 0.0, %v4074
        %v4076 = vpop.f32.mrf.mxu0
        %4077 = vmatprep.mubr.f32.mxu0 0.0
        %4078 = vmatmul.mubr.f32.gmra.mxu0 %v3866
        %v4079 = vpop.f32.mrf.mxu0
        %v4080 = vadd.f32 0.0, %v4079
        %v4081 = vpop.f32.mrf.mxu0
        %4082 = vmatprep.mubr.f32.mxu0 0.0
        %4083 = vmatmul.mubr.f32.gmra.mxu0 %v3869
        %v4084 = vpop.f32.mrf.mxu0
        %v4085 = vadd.f32 0.0, %v4084
        %v4086 = vpop.f32.mrf.mxu0
        %4087 = vmatprep.mubr.f32.mxu0 0.0
        %4088 = vmatmul.mubr.f32.gmra.mxu0 %v3872
        %v4089 = vpop.f32.mrf.mxu0
        %v4090 = vadd.f32 0.0, %v4089
        %v4091 = vpop.f32.mrf.mxu0
        %4092 = vmatprep.mubr.f32.mxu0 0.0
        %4093 = vmatmul.mubr.f32.gmra.mxu0 %v3875
        %v4094 = vpop.f32.mrf.mxu0
        %v4095 = vadd.f32 0.0, %v4094
        %v4096 = vpop.f32.mrf.mxu0
        %4097 = vmatprep.mubr.f32.mxu0 0.0
        %4098 = vmatmul.mubr.f32.gmra.mxu0 %v3878
        %v4099 = vpop.f32.mrf.mxu0
        %v4100 = vadd.f32 0.0, %v4099
        %v4101 = vpop.f32.mrf.mxu0
        %4102 = vmatprep.mubr.f32.mxu0 0.0
        %4103 = vmatmul.mubr.f32.gmra.mxu0 %v3881
        %v4104 = vpop.f32.mrf.mxu0
        %v4105 = vadd.f32 0.0, %v4104
        %v4106 = vpop.f32.mrf.mxu0
        %4107 = vdwg.mxu0
        %v4108 = vadd.f32 %v3713, %v3950
        %v4109 = vadd.f32 %v3714, %v3955
        %v4110 = vadd.f32 %v3715, %v3960
        %v4111 = vadd.f32 %v3716, %v3965
        %v4112 = vadd.f32 %v3717, %v3970
        %v4113 = vadd.f32 %v3718, %v3975
        %v4114 = vadd.f32 %v3719, %v3980
        %v4115 = vadd.f32 %v3720, %v3985
        %v4116 = vadd.f32 %v3721, %v3990
        %v4117 = vadd.f32 %v3722, %v3995
        %v4118 = vadd.f32 %v3723, %v4000
        %v4119 = vadd.f32 %v3724, %v4005
        %v4120 = vadd.f32 %v3725, %v4010
        %v4121 = vadd.f32 %v3726, %v4015
        %v4122 = vadd.f32 %v3727, %v4020
        %v4123 = vadd.f32 %v3728, %v4025
        %v4124 = vadd.f32 %v3729, %v4030
        %v4125 = vadd.f32 %v3730, %v4035
        %v4126 = vadd.f32 %v3731, %v4040
        %v4127 = vadd.f32 %v3732, %v4045
        %v4128 = vadd.f32 %v3733, %v4050
        %v4129 = vadd.f32 %v3734, %v4055
        %v4130 = vadd.f32 %v3735, %v4060
        %v4131 = vadd.f32 %v3736, %v4065
        %v4132 = vadd.f32 %v3737, %v4070
        %v4133 = vadd.f32 %v3738, %v4075
        %v4134 = vadd.f32 %v3739, %v4080
        %v4135 = vadd.f32 %v3740, %v4085
        %v4136 = vadd.f32 %v3741, %v4090
        %v4137 = vadd.f32 %v3742, %v4095
        %v4138 = vadd.f32 %v3743, %v4100
        %v4139 = vadd.f32 %v3744, %v4105
        %v4140 = vld [vmem:[%s3745 + $0x8] sm:$0xff]
        %v4141 = vld [vmem:[%s3745 + $0x10] sm:$0xff]
        %v4142 = vld [vmem:[%s3745 + $0x28] sm:$0xff]
        %v4143 = vld [vmem:[%s3745 + $0x30] sm:$0xff]
        %v4144 = vld [vmem:[%s3745 + $0x48] sm:$0xff]
        %v4145 = vld [vmem:[%s3745 + $0x50] sm:$0xff]
        %v4146 = vld [vmem:[%s3745 + $0x68] sm:$0xff]
        %v4147 = vld [vmem:[%s3745 + $0x70] sm:$0xff]
        %v4148 = vld [vmem:[%s3745 + $0x88] sm:$0xff]
        %v4149 = vld [vmem:[%s3745 + $0x90] sm:$0xff]
        %v4150 = vld [vmem:[%s3745 + $0xa8] sm:$0xff]
        %v4151 = vld [vmem:[%s3745 + $0xb0] sm:$0xff]
        %v4152 = vld [vmem:[%s3745 + $0xc8] sm:$0xff]
        %v4153 = vld [vmem:[%s3745 + $0xd0] sm:$0xff]
        %v4154 = vld [vmem:[%s3745 + $0xe8] sm:$0xff]
        %v4155 = vld [vmem:[%s3745 + $0xf0] sm:$0xff]
        %v4156 = vld [vmem:[%s3745 + $0x108] sm:$0xff]
        %v4157 = vld [vmem:[%s3745 + $0x110] sm:$0xff]
        %v4158 = vld [vmem:[%s3745 + $0x128] sm:$0xff]
        %v4159 = vld [vmem:[%s3745 + $0x130] sm:$0xff]
        %v4160 = vld [vmem:[%s3745 + $0x148] sm:$0xff]
        %v4161 = vld [vmem:[%s3745 + $0x150] sm:$0xff]
        %v4162 = vld [vmem:[%s3745 + $0x168] sm:$0xff]
        %v4163 = vld [vmem:[%s3745 + $0x170] sm:$0xff]
        %v4164 = vld [vmem:[%s3745 + $0x188] sm:$0xff]
        %v4165 = vld [vmem:[%s3745 + $0x190] sm:$0xff]
        %v4166 = vld [vmem:[%s3745 + $0x1a8] sm:$0xff]
        %v4167 = vld [vmem:[%s3745 + $0x1b0] sm:$0xff]
        %v4168 = vld [vmem:[%s3745 + $0x1c8] sm:$0xff]
        %v4169 = vld [vmem:[%s3745 + $0x1d0] sm:$0xff]
        %v4170 = vld [vmem:[%s3745 + $0x1e8] sm:$0xff]
        %v4171 = vld [vmem:[%s3745 + $0x1f0] sm:$0xff]
        %s4172 = scalar_lea.vmem %s5, 448
        %v4173 = vld [vmem:[%s4172] sm:$0xff]
        %v4174 = vld [vmem:[%s4172 + $0x8] sm:$0xff]
        %v4175 = vld [vmem:[%s4172 + $0x10] sm:$0xff]
        %v4176 = vld [vmem:[%s4172 + $0x18] sm:$0xff]
        %v4177 = vld [vmem:[%s4172 + $0x20] sm:$0xff]
        %v4178 = vld [vmem:[%s4172 + $0x28] sm:$0xff]
        %v4179 = vld [vmem:[%s4172 + $0x30] sm:$0xff]
        %v4180 = vld [vmem:[%s4172 + $0x38] sm:$0xff]
        %v4182 = vsel %vm1198, %v4140, 0
        %v4185 = vsel %vm1198, %v4141, 0
        %v4188 = vsel %vm1198, %v4142, 0
        %v4191 = vsel %vm1198, %v4143, 0
        %v4194 = vsel %vm1198, %v4144, 0
        %v4197 = vsel %vm1198, %v4145, 0
        %v4200 = vsel %vm1198, %v4146, 0
        %v4203 = vsel %vm1198, %v4147, 0
        %v4206 = vsel %vm1198, %v4148, 0
        %v4209 = vsel %vm1198, %v4149, 0
        %v4212 = vsel %vm1198, %v4150, 0
        %v4215 = vsel %vm1198, %v4151, 0
        %v4218 = vsel %vm1198, %v4152, 0
        %v4221 = vsel %vm1198, %v4153, 0
        %v4224 = vsel %vm1198, %v4154, 0
        %v4227 = vsel %vm1198, %v4155, 0
        %v4230 = vsel %vm1198, %v4156, 0
        %v4233 = vsel %vm1198, %v4157, 0
        %v4236 = vsel %vm1198, %v4158, 0
        %v4239 = vsel %vm1198, %v4159, 0
        %v4242 = vsel %vm1198, %v4160, 0
        %v4245 = vsel %vm1198, %v4161, 0
        %v4248 = vsel %vm1198, %v4162, 0
        %v4251 = vsel %vm1198, %v4163, 0
        %v4254 = vsel %vm1198, %v4164, 0
        %v4257 = vsel %vm1198, %v4165, 0
        %v4260 = vsel %vm1198, %v4166, 0
        %v4263 = vsel %vm1198, %v4167, 0
        %v4266 = vsel %vm1198, %v4168, 0
        %v4269 = vsel %vm1198, %v4169, 0
        %v4272 = vsel %vm1198, %v4170, 0
        %v4275 = vsel %vm1198, %v4171, 0
        %4277 = vmatprep.subr.mxu0 0.0
        %4278 = vmatpush1.msra.mxu0 0.0
        %4279 = vmatprep.subr.mxu0 0.0
        %4280 = vmatpush1.msra.mxu0 0.0
        %4281 = vmatprep.subr.mxu0 0.0
        %4282 = vmatpush1.msra.mxu0 0.0
        %4283 = vmatprep.subr.mxu0 0.0
        %4284 = vmatpush1.msra.mxu0 0.0
        %4285 = vmatprep.subr.mxu0 0.0
        %4286 = vmatpush1.msra.mxu0 0.0
        %4287 = vmatprep.subr.mxu0 0.0
        %4288 = vmatpush1.msra.mxu0 0.0
        %4289 = vmatprep.subr.mxu0 0.0
        %4290 = vmatpush1.msra.mxu0 0.0
        %4291 = vmatprep.subr.mxu0 0.0
        %4292 = vmatpush1.msra.mxu0 0.0
        %4293 = vmatprep.subr.mxu0 0.0
        %4294 = vmatpush1.msra.mxu0 %v4180
        %4295 = vmatprep.subr.mxu0 0.0
        %4296 = vmatpush1.msra.mxu0 %v4179
        %4297 = vmatprep.subr.mxu0 0.0
        %4298 = vmatpush1.msra.mxu0 %v4178
        %4299 = vmatprep.subr.mxu0 0.0
        %4300 = vmatpush1.msra.mxu0 %v4177
        %4301 = vmatprep.subr.mxu0 0.0
        %4302 = vmatpush1.msra.mxu0 %v4176
        %4303 = vmatprep.subr.mxu0 0.0
        %4304 = vmatpush1.msra.mxu0 %v4175
        %4305 = vmatprep.subr.mxu0 0.0
        %4306 = vmatpush1.msra.mxu0 %v4174
        %4307 = vmatprep.subr.mxu0 0.0
        %4308 = vmatpush1.msra.mxu0 %v4173
        %4309 = vmatprep.subr.mxu0 0.0
        %4310 = vmatpush2.msra.mxu0 0.0
        %4311 = vmatprep.subr.mxu0 0.0
        %4312 = vmatpush2.msra.mxu0 0.0
        %4313 = vmatprep.subr.mxu0 0.0
        %4314 = vmatpush2.msra.mxu0 0.0
        %4315 = vmatprep.subr.mxu0 0.0
        %4316 = vmatpush2.msra.mxu0 0.0
        %4317 = vmatprep.subr.mxu0 0.0
        %4318 = vmatpush2.msra.mxu0 0.0
        %4319 = vmatprep.subr.mxu0 0.0
        %4320 = vmatpush2.msra.mxu0 0.0
        %4321 = vmatprep.subr.mxu0 0.0
        %4322 = vmatpush2.msra.mxu0 0.0
        %4323 = vmatprep.subr.mxu0 0.0
        %4324 = vmatpush2.msra.mxu0 0.0
        %4325 = vmatprep.subr.mxu0 0.0
        %4326 = vmatpush2.msra.mxu0 0.0
        %4327 = vmatprep.subr.mxu0 0.0
        %4328 = vmatpush2.msra.mxu0 0.0
        %4329 = vmatprep.subr.mxu0 0.0
        %4330 = vmatpush2.msra.mxu0 0.0
        %4331 = vmatprep.subr.mxu0 0.0
        %4332 = vmatpush2.msra.mxu0 0.0
        %4333 = vmatprep.subr.mxu0 0.0
        %4334 = vmatpush2.msra.mxu0 0.0
        %4335 = vmatprep.subr.mxu0 0.0
        %4336 = vmatpush2.msra.mxu0 0.0
        %4337 = vmatprep.subr.mxu0 0.0
        %4338 = vmatpush2.msra.mxu0 0.0
        %4339 = vmatprep.subr.mxu0 0.0
        %4340 = vmatpush2.msra.mxu0 0.0
        %4341 = vmatprep.mubr.f32.mxu0 0.0
        %4342 = vmatmul.mubr.f32.gmra.mxu0 %v4182
        %v4343 = vpop.f32.mrf.mxu0
        %v4344 = vadd.f32 0.0, %v4343
        %v4345 = vpop.f32.mrf.mxu0
        %4346 = vmatprep.mubr.f32.mxu0 0.0
        %4347 = vmatmul.mubr.f32.gmra.mxu0 %v4185
        %v4348 = vpop.f32.mrf.mxu0
        %v4349 = vadd.f32 0.0, %v4348
        %v4350 = vpop.f32.mrf.mxu0
        %4351 = vmatprep.mubr.f32.mxu0 0.0
        %4352 = vmatmul.mubr.f32.gmra.mxu0 %v4188
        %v4353 = vpop.f32.mrf.mxu0
        %v4354 = vadd.f32 0.0, %v4353
        %v4355 = vpop.f32.mrf.mxu0
        %4356 = vmatprep.mubr.f32.mxu0 0.0
        %4357 = vmatmul.mubr.f32.gmra.mxu0 %v4191
        %v4358 = vpop.f32.mrf.mxu0
        %v4359 = vadd.f32 0.0, %v4358
        %v4360 = vpop.f32.mrf.mxu0
        %4361 = vmatprep.mubr.f32.mxu0 0.0
        %4362 = vmatmul.mubr.f32.gmra.mxu0 %v4194
        %v4363 = vpop.f32.mrf.mxu0
        %v4364 = vadd.f32 0.0, %v4363
        %v4365 = vpop.f32.mrf.mxu0
        %4366 = vmatprep.mubr.f32.mxu0 0.0
        %4367 = vmatmul.mubr.f32.gmra.mxu0 %v4197
        %v4368 = vpop.f32.mrf.mxu0
        %v4369 = vadd.f32 0.0, %v4368
        %v4370 = vpop.f32.mrf.mxu0
        %4371 = vmatprep.mubr.f32.mxu0 0.0
        %4372 = vmatmul.mubr.f32.gmra.mxu0 %v4200
        %v4373 = vpop.f32.mrf.mxu0
        %v4374 = vadd.f32 0.0, %v4373
        %v4375 = vpop.f32.mrf.mxu0
        %4376 = vmatprep.mubr.f32.mxu0 0.0
        %4377 = vmatmul.mubr.f32.gmra.mxu0 %v4203
        %v4378 = vpop.f32.mrf.mxu0
        %v4379 = vadd.f32 0.0, %v4378
        %v4380 = vpop.f32.mrf.mxu0
        %4381 = vmatprep.mubr.f32.mxu0 0.0
        %4382 = vmatmul.mubr.f32.gmra.mxu0 %v4206
        %v4383 = vpop.f32.mrf.mxu0
        %v4384 = vadd.f32 0.0, %v4383
        %v4385 = vpop.f32.mrf.mxu0
        %4386 = vmatprep.mubr.f32.mxu0 0.0
        %4387 = vmatmul.mubr.f32.gmra.mxu0 %v4209
        %v4388 = vpop.f32.mrf.mxu0
        %v4389 = vadd.f32 0.0, %v4388
        %v4390 = vpop.f32.mrf.mxu0
        %4391 = vmatprep.mubr.f32.mxu0 0.0
        %4392 = vmatmul.mubr.f32.gmra.mxu0 %v4212
        %v4393 = vpop.f32.mrf.mxu0
        %v4394 = vadd.f32 0.0, %v4393
        %v4395 = vpop.f32.mrf.mxu0
        %4396 = vmatprep.mubr.f32.mxu0 0.0
        %4397 = vmatmul.mubr.f32.gmra.mxu0 %v4215
        %v4398 = vpop.f32.mrf.mxu0
        %v4399 = vadd.f32 0.0, %v4398
        %v4400 = vpop.f32.mrf.mxu0
        %4401 = vmatprep.mubr.f32.mxu0 0.0
        %4402 = vmatmul.mubr.f32.gmra.mxu0 %v4218
        %v4403 = vpop.f32.mrf.mxu0
        %v4404 = vadd.f32 0.0, %v4403
        %v4405 = vpop.f32.mrf.mxu0
        %4406 = vmatprep.mubr.f32.mxu0 0.0
        %4407 = vmatmul.mubr.f32.gmra.mxu0 %v4221
        %v4408 = vpop.f32.mrf.mxu0
        %v4409 = vadd.f32 0.0, %v4408
        %v4410 = vpop.f32.mrf.mxu0
        %4411 = vmatprep.mubr.f32.mxu0 0.0
        %4412 = vmatmul.mubr.f32.gmra.mxu0 %v4224
        %v4413 = vpop.f32.mrf.mxu0
        %v4414 = vadd.f32 0.0, %v4413
        %v4415 = vpop.f32.mrf.mxu0
        %4416 = vmatprep.mubr.f32.mxu0 0.0
        %4417 = vmatmul.mubr.f32.gmra.mxu0 %v4227
        %v4418 = vpop.f32.mrf.mxu0
        %v4419 = vadd.f32 0.0, %v4418
        %v4420 = vpop.f32.mrf.mxu0
        %4421 = vmatprep.mubr.f32.mxu0 0.0
        %4422 = vmatmul.mubr.f32.gmra.mxu0 %v4230
        %v4423 = vpop.f32.mrf.mxu0
        %v4424 = vadd.f32 0.0, %v4423
        %v4425 = vpop.f32.mrf.mxu0
        %4426 = vmatprep.mubr.f32.mxu0 0.0
        %4427 = vmatmul.mubr.f32.gmra.mxu0 %v4233
        %v4428 = vpop.f32.mrf.mxu0
        %v4429 = vadd.f32 0.0, %v4428
        %v4430 = vpop.f32.mrf.mxu0
        %4431 = vmatprep.mubr.f32.mxu0 0.0
        %4432 = vmatmul.mubr.f32.gmra.mxu0 %v4236
        %v4433 = vpop.f32.mrf.mxu0
        %v4434 = vadd.f32 0.0, %v4433
        %v4435 = vpop.f32.mrf.mxu0
        %4436 = vmatprep.mubr.f32.mxu0 0.0
        %4437 = vmatmul.mubr.f32.gmra.mxu0 %v4239
        %v4438 = vpop.f32.mrf.mxu0
        %v4439 = vadd.f32 0.0, %v4438
        %v4440 = vpop.f32.mrf.mxu0
        %4441 = vmatprep.mubr.f32.mxu0 0.0
        %4442 = vmatmul.mubr.f32.gmra.mxu0 %v4242
        %v4443 = vpop.f32.mrf.mxu0
        %v4444 = vadd.f32 0.0, %v4443
        %v4445 = vpop.f32.mrf.mxu0
        %4446 = vmatprep.mubr.f32.mxu0 0.0
        %4447 = vmatmul.mubr.f32.gmra.mxu0 %v4245
        %v4448 = vpop.f32.mrf.mxu0
        %v4449 = vadd.f32 0.0, %v4448
        %v4450 = vpop.f32.mrf.mxu0
        %4451 = vmatprep.mubr.f32.mxu0 0.0
        %4452 = vmatmul.mubr.f32.gmra.mxu0 %v4248
        %v4453 = vpop.f32.mrf.mxu0
        %v4454 = vadd.f32 0.0, %v4453
        %v4455 = vpop.f32.mrf.mxu0
        %4456 = vmatprep.mubr.f32.mxu0 0.0
        %4457 = vmatmul.mubr.f32.gmra.mxu0 %v4251
        %v4458 = vpop.f32.mrf.mxu0
        %v4459 = vadd.f32 0.0, %v4458
        %v4460 = vpop.f32.mrf.mxu0
        %4461 = vmatprep.mubr.f32.mxu0 0.0
        %4462 = vmatmul.mubr.f32.gmra.mxu0 %v4254
        %v4463 = vpop.f32.mrf.mxu0
        %v4464 = vadd.f32 0.0, %v4463
        %v4465 = vpop.f32.mrf.mxu0
        %4466 = vmatprep.mubr.f32.mxu0 0.0
        %4467 = vmatmul.mubr.f32.gmra.mxu0 %v4257
        %v4468 = vpop.f32.mrf.mxu0
        %v4469 = vadd.f32 0.0, %v4468
        %v4470 = vpop.f32.mrf.mxu0
        %4471 = vmatprep.mubr.f32.mxu0 0.0
        %4472 = vmatmul.mubr.f32.gmra.mxu0 %v4260
        %v4473 = vpop.f32.mrf.mxu0
        %v4474 = vadd.f32 0.0, %v4473
        %v4475 = vpop.f32.mrf.mxu0
        %4476 = vmatprep.mubr.f32.mxu0 0.0
        %4477 = vmatmul.mubr.f32.gmra.mxu0 %v4263
        %v4478 = vpop.f32.mrf.mxu0
        %v4479 = vadd.f32 0.0, %v4478
        %v4480 = vpop.f32.mrf.mxu0
        %4481 = vmatprep.mubr.f32.mxu0 0.0
        %4482 = vmatmul.mubr.f32.gmra.mxu0 %v4266
        %v4483 = vpop.f32.mrf.mxu0
        %v4484 = vadd.f32 0.0, %v4483
        %v4485 = vpop.f32.mrf.mxu0
        %4486 = vmatprep.mubr.f32.mxu0 0.0
        %4487 = vmatmul.mubr.f32.gmra.mxu0 %v4269
        %v4488 = vpop.f32.mrf.mxu0
        %v4489 = vadd.f32 0.0, %v4488
        %v4490 = vpop.f32.mrf.mxu0
        %4491 = vmatprep.mubr.f32.mxu0 0.0
        %4492 = vmatmul.mubr.f32.gmra.mxu0 %v4272
        %v4493 = vpop.f32.mrf.mxu0
        %v4494 = vadd.f32 0.0, %v4493
        %v4495 = vpop.f32.mrf.mxu0
        %4496 = vmatprep.mubr.f32.mxu0 0.0
        %4497 = vmatmul.mubr.f32.gmra.mxu0 %v4275
        %v4498 = vpop.f32.mrf.mxu0
        %v4499 = vadd.f32 0.0, %v4498
        %v4500 = vpop.f32.mrf.mxu0
        %4501 = vdwg.mxu0
        %v4502 = vadd.f32 %v4108, %v4344
        %v4503 = vadd.f32 %v4109, %v4349
        %v4504 = vadd.f32 %v4110, %v4354
        %v4505 = vadd.f32 %v4111, %v4359
        %v4506 = vadd.f32 %v4112, %v4364
        %v4507 = vadd.f32 %v4113, %v4369
        %v4508 = vadd.f32 %v4114, %v4374
        %v4509 = vadd.f32 %v4115, %v4379
        %v4510 = vadd.f32 %v4116, %v4384
        %v4511 = vadd.f32 %v4117, %v4389
        %v4512 = vadd.f32 %v4118, %v4394
        %v4513 = vadd.f32 %v4119, %v4399
        %v4514 = vadd.f32 %v4120, %v4404
        %v4515 = vadd.f32 %v4121, %v4409
        %v4516 = vadd.f32 %v4122, %v4414
        %v4517 = vadd.f32 %v4123, %v4419
        %v4518 = vadd.f32 %v4124, %v4424
        %v4519 = vadd.f32 %v4125, %v4429
        %v4520 = vadd.f32 %v4126, %v4434
        %v4521 = vadd.f32 %v4127, %v4439
        %v4522 = vadd.f32 %v4128, %v4444
        %v4523 = vadd.f32 %v4129, %v4449
        %v4524 = vadd.f32 %v4130, %v4454
        %v4525 = vadd.f32 %v4131, %v4459
        %v4526 = vadd.f32 %v4132, %v4464
        %v4527 = vadd.f32 %v4133, %v4469
        %v4528 = vadd.f32 %v4134, %v4474
        %v4529 = vadd.f32 %v4135, %v4479
        %v4530 = vadd.f32 %v4136, %v4484
        %v4531 = vadd.f32 %v4137, %v4489
        %v4532 = vadd.f32 %v4138, %v4494
        %v4533 = vadd.f32 %v4139, %v4499
        %v4534 = vld [vmem:[%s3745 + $0x9] sm:$0xff]
        %v4535 = vld [vmem:[%s3745 + $0x11] sm:$0xff]
        %v4536 = vld [vmem:[%s3745 + $0x29] sm:$0xff]
        %v4537 = vld [vmem:[%s3745 + $0x31] sm:$0xff]
        %v4538 = vld [vmem:[%s3745 + $0x49] sm:$0xff]
        %v4539 = vld [vmem:[%s3745 + $0x51] sm:$0xff]
        %v4540 = vld [vmem:[%s3745 + $0x69] sm:$0xff]
        %v4541 = vld [vmem:[%s3745 + $0x71] sm:$0xff]
        %v4542 = vld [vmem:[%s3745 + $0x89] sm:$0xff]
        %v4543 = vld [vmem:[%s3745 + $0x91] sm:$0xff]
        %v4544 = vld [vmem:[%s3745 + $0xa9] sm:$0xff]
        %v4545 = vld [vmem:[%s3745 + $0xb1] sm:$0xff]
        %v4546 = vld [vmem:[%s3745 + $0xc9] sm:$0xff]
        %v4547 = vld [vmem:[%s3745 + $0xd1] sm:$0xff]
        %v4548 = vld [vmem:[%s3745 + $0xe9] sm:$0xff]
        %v4549 = vld [vmem:[%s3745 + $0xf1] sm:$0xff]
        %v4550 = vld [vmem:[%s3745 + $0x109] sm:$0xff]
        %v4551 = vld [vmem:[%s3745 + $0x111] sm:$0xff]
        %v4552 = vld [vmem:[%s3745 + $0x129] sm:$0xff]
        %v4553 = vld [vmem:[%s3745 + $0x131] sm:$0xff]
        %v4554 = vld [vmem:[%s3745 + $0x149] sm:$0xff]
        %v4555 = vld [vmem:[%s3745 + $0x151] sm:$0xff]
        %v4556 = vld [vmem:[%s3745 + $0x169] sm:$0xff]
        %v4557 = vld [vmem:[%s3745 + $0x171] sm:$0xff]
        %v4558 = vld [vmem:[%s3745 + $0x189] sm:$0xff]
        %v4559 = vld [vmem:[%s3745 + $0x191] sm:$0xff]
        %v4560 = vld [vmem:[%s3745 + $0x1a9] sm:$0xff]
        %v4561 = vld [vmem:[%s3745 + $0x1b1] sm:$0xff]
        %v4562 = vld [vmem:[%s3745 + $0x1c9] sm:$0xff]
        %v4563 = vld [vmem:[%s3745 + $0x1d1] sm:$0xff]
        %v4564 = vld [vmem:[%s3745 + $0x1e9] sm:$0xff]
        %v4565 = vld [vmem:[%s3745 + $0x1f1] sm:$0xff]
        %s4566 = scalar_lea.vmem %s5, 512
        %v4567 = vld [vmem:[%s4566] sm:$0xff]
        %v4568 = vld [vmem:[%s4566 + $0x8] sm:$0xff]
        %v4569 = vld [vmem:[%s4566 + $0x10] sm:$0xff]
        %v4570 = vld [vmem:[%s4566 + $0x18] sm:$0xff]
        %v4571 = vld [vmem:[%s4566 + $0x20] sm:$0xff]
        %v4572 = vld [vmem:[%s4566 + $0x28] sm:$0xff]
        %v4573 = vld [vmem:[%s4566 + $0x30] sm:$0xff]
        %v4574 = vld [vmem:[%s4566 + $0x38] sm:$0xff]
        %v4576 = vsel %vm1198, %v4534, 0
        %v4579 = vsel %vm1198, %v4535, 0
        %v4582 = vsel %vm1198, %v4536, 0
        %v4585 = vsel %vm1198, %v4537, 0
        %v4588 = vsel %vm1198, %v4538, 0
        %v4591 = vsel %vm1198, %v4539, 0
        %v4594 = vsel %vm1198, %v4540, 0
        %v4597 = vsel %vm1198, %v4541, 0
        %v4600 = vsel %vm1198, %v4542, 0
        %v4603 = vsel %vm1198, %v4543, 0
        %v4606 = vsel %vm1198, %v4544, 0
        %v4609 = vsel %vm1198, %v4545, 0
        %v4612 = vsel %vm1198, %v4546, 0
        %v4615 = vsel %vm1198, %v4547, 0
        %v4618 = vsel %vm1198, %v4548, 0
        %v4621 = vsel %vm1198, %v4549, 0
        %v4624 = vsel %vm1198, %v4550, 0
        %v4627 = vsel %vm1198, %v4551, 0
        %v4630 = vsel %vm1198, %v4552, 0
        %v4633 = vsel %vm1198, %v4553, 0
        %v4636 = vsel %vm1198, %v4554, 0
        %v4639 = vsel %vm1198, %v4555, 0
        %v4642 = vsel %vm1198, %v4556, 0
        %v4645 = vsel %vm1198, %v4557, 0
        %v4648 = vsel %vm1198, %v4558, 0
        %v4651 = vsel %vm1198, %v4559, 0
        %v4654 = vsel %vm1198, %v4560, 0
        %v4657 = vsel %vm1198, %v4561, 0
        %v4660 = vsel %vm1198, %v4562, 0
        %v4663 = vsel %vm1198, %v4563, 0
        %v4666 = vsel %vm1198, %v4564, 0
        %v4669 = vsel %vm1198, %v4565, 0
        %4671 = vmatprep.subr.mxu0 0.0
        %4672 = vmatpush1.msra.mxu0 0.0
        %4673 = vmatprep.subr.mxu0 0.0
        %4674 = vmatpush1.msra.mxu0 0.0
        %4675 = vmatprep.subr.mxu0 0.0
        %4676 = vmatpush1.msra.mxu0 0.0
        %4677 = vmatprep.subr.mxu0 0.0
        %4678 = vmatpush1.msra.mxu0 0.0
        %4679 = vmatprep.subr.mxu0 0.0
        %4680 = vmatpush1.msra.mxu0 0.0
        %4681 = vmatprep.subr.mxu0 0.0
        %4682 = vmatpush1.msra.mxu0 0.0
        %4683 = vmatprep.subr.mxu0 0.0
        %4684 = vmatpush1.msra.mxu0 0.0
        %4685 = vmatprep.subr.mxu0 0.0
        %4686 = vmatpush1.msra.mxu0 0.0
        %4687 = vmatprep.subr.mxu0 0.0
        %4688 = vmatpush1.msra.mxu0 %v4574
        %4689 = vmatprep.subr.mxu0 0.0
        %4690 = vmatpush1.msra.mxu0 %v4573
        %4691 = vmatprep.subr.mxu0 0.0
        %4692 = vmatpush1.msra.mxu0 %v4572
        %4693 = vmatprep.subr.mxu0 0.0
        %4694 = vmatpush1.msra.mxu0 %v4571
        %4695 = vmatprep.subr.mxu0 0.0
        %4696 = vmatpush1.msra.mxu0 %v4570
        %4697 = vmatprep.subr.mxu0 0.0
        %4698 = vmatpush1.msra.mxu0 %v4569
        %4699 = vmatprep.subr.mxu0 0.0
        %4700 = vmatpush1.msra.mxu0 %v4568
        %4701 = vmatprep.subr.mxu0 0.0
        %4702 = vmatpush1.msra.mxu0 %v4567
        %4703 = vmatprep.subr.mxu0 0.0
        %4704 = vmatpush2.msra.mxu0 0.0
        %4705 = vmatprep.subr.mxu0 0.0
        %4706 = vmatpush2.msra.mxu0 0.0
        %4707 = vmatprep.subr.mxu0 0.0
        %4708 = vmatpush2.msra.mxu0 0.0
        %4709 = vmatprep.subr.mxu0 0.0
        %4710 = vmatpush2.msra.mxu0 0.0
        %4711 = vmatprep.subr.mxu0 0.0
        %4712 = vmatpush2.msra.mxu0 0.0
        %4713 = vmatprep.subr.mxu0 0.0
        %4714 = vmatpush2.msra.mxu0 0.0
        %4715 = vmatprep.subr.mxu0 0.0
        %4716 = vmatpush2.msra.mxu0 0.0
        %4717 = vmatprep.subr.mxu0 0.0
        %4718 = vmatpush2.msra.mxu0 0.0
        %4719 = vmatprep.subr.mxu0 0.0
        %4720 = vmatpush2.msra.mxu0 0.0
        %4721 = vmatprep.subr.mxu0 0.0
        %4722 = vmatpush2.msra.mxu0 0.0
        %4723 = vmatprep.subr.mxu0 0.0
        %4724 = vmatpush2.msra.mxu0 0.0
        %4725 = vmatprep.subr.mxu0 0.0
        %4726 = vmatpush2.msra.mxu0 0.0
        %4727 = vmatprep.subr.mxu0 0.0
        %4728 = vmatpush2.msra.mxu0 0.0
        %4729 = vmatprep.subr.mxu0 0.0
        %4730 = vmatpush2.msra.mxu0 0.0
        %4731 = vmatprep.subr.mxu0 0.0
        %4732 = vmatpush2.msra.mxu0 0.0
        %4733 = vmatprep.subr.mxu0 0.0
        %4734 = vmatpush2.msra.mxu0 0.0
        %4735 = vmatprep.mubr.f32.mxu0 0.0
        %4736 = vmatmul.mubr.f32.gmra.mxu0 %v4576
        %v4737 = vpop.f32.mrf.mxu0
        %v4738 = vadd.f32 0.0, %v4737
        %v4739 = vpop.f32.mrf.mxu0
        %4740 = vmatprep.mubr.f32.mxu0 0.0
        %4741 = vmatmul.mubr.f32.gmra.mxu0 %v4579
        %v4742 = vpop.f32.mrf.mxu0
        %v4743 = vadd.f32 0.0, %v4742
        %v4744 = vpop.f32.mrf.mxu0
        %4745 = vmatprep.mubr.f32.mxu0 0.0
        %4746 = vmatmul.mubr.f32.gmra.mxu0 %v4582
        %v4747 = vpop.f32.mrf.mxu0
        %v4748 = vadd.f32 0.0, %v4747
        %v4749 = vpop.f32.mrf.mxu0
        %4750 = vmatprep.mubr.f32.mxu0 0.0
        %4751 = vmatmul.mubr.f32.gmra.mxu0 %v4585
        %v4752 = vpop.f32.mrf.mxu0
        %v4753 = vadd.f32 0.0, %v4752
        %v4754 = vpop.f32.mrf.mxu0
        %4755 = vmatprep.mubr.f32.mxu0 0.0
        %4756 = vmatmul.mubr.f32.gmra.mxu0 %v4588
        %v4757 = vpop.f32.mrf.mxu0
        %v4758 = vadd.f32 0.0, %v4757
        %v4759 = vpop.f32.mrf.mxu0
        %4760 = vmatprep.mubr.f32.mxu0 0.0
        %4761 = vmatmul.mubr.f32.gmra.mxu0 %v4591
        %v4762 = vpop.f32.mrf.mxu0
        %v4763 = vadd.f32 0.0, %v4762
        %v4764 = vpop.f32.mrf.mxu0
        %4765 = vmatprep.mubr.f32.mxu0 0.0
        %4766 = vmatmul.mubr.f32.gmra.mxu0 %v4594
        %v4767 = vpop.f32.mrf.mxu0
        %v4768 = vadd.f32 0.0, %v4767
        %v4769 = vpop.f32.mrf.mxu0
        %4770 = vmatprep.mubr.f32.mxu0 0.0
        %4771 = vmatmul.mubr.f32.gmra.mxu0 %v4597
        %v4772 = vpop.f32.mrf.mxu0
        %v4773 = vadd.f32 0.0, %v4772
        %v4774 = vpop.f32.mrf.mxu0
        %4775 = vmatprep.mubr.f32.mxu0 0.0
        %4776 = vmatmul.mubr.f32.gmra.mxu0 %v4600
        %v4777 = vpop.f32.mrf.mxu0
        %v4778 = vadd.f32 0.0, %v4777
        %v4779 = vpop.f32.mrf.mxu0
        %4780 = vmatprep.mubr.f32.mxu0 0.0
        %4781 = vmatmul.mubr.f32.gmra.mxu0 %v4603
        %v4782 = vpop.f32.mrf.mxu0
        %v4783 = vadd.f32 0.0, %v4782
        %v4784 = vpop.f32.mrf.mxu0
        %4785 = vmatprep.mubr.f32.mxu0 0.0
        %4786 = vmatmul.mubr.f32.gmra.mxu0 %v4606
        %v4787 = vpop.f32.mrf.mxu0
        %v4788 = vadd.f32 0.0, %v4787
        %v4789 = vpop.f32.mrf.mxu0
        %4790 = vmatprep.mubr.f32.mxu0 0.0
        %4791 = vmatmul.mubr.f32.gmra.mxu0 %v4609
        %v4792 = vpop.f32.mrf.mxu0
        %v4793 = vadd.f32 0.0, %v4792
        %v4794 = vpop.f32.mrf.mxu0
        %4795 = vmatprep.mubr.f32.mxu0 0.0
        %4796 = vmatmul.mubr.f32.gmra.mxu0 %v4612
        %v4797 = vpop.f32.mrf.mxu0
        %v4798 = vadd.f32 0.0, %v4797
        %v4799 = vpop.f32.mrf.mxu0
        %4800 = vmatprep.mubr.f32.mxu0 0.0
        %4801 = vmatmul.mubr.f32.gmra.mxu0 %v4615
        %v4802 = vpop.f32.mrf.mxu0
        %v4803 = vadd.f32 0.0, %v4802
        %v4804 = vpop.f32.mrf.mxu0
        %4805 = vmatprep.mubr.f32.mxu0 0.0
        %4806 = vmatmul.mubr.f32.gmra.mxu0 %v4618
        %v4807 = vpop.f32.mrf.mxu0
        %v4808 = vadd.f32 0.0, %v4807
        %v4809 = vpop.f32.mrf.mxu0
        %4810 = vmatprep.mubr.f32.mxu0 0.0
        %4811 = vmatmul.mubr.f32.gmra.mxu0 %v4621
        %v4812 = vpop.f32.mrf.mxu0
        %v4813 = vadd.f32 0.0, %v4812
        %v4814 = vpop.f32.mrf.mxu0
        %4815 = vmatprep.mubr.f32.mxu0 0.0
        %4816 = vmatmul.mubr.f32.gmra.mxu0 %v4624
        %v4817 = vpop.f32.mrf.mxu0
        %v4818 = vadd.f32 0.0, %v4817
        %v4819 = vpop.f32.mrf.mxu0
        %4820 = vmatprep.mubr.f32.mxu0 0.0
        %4821 = vmatmul.mubr.f32.gmra.mxu0 %v4627
        %v4822 = vpop.f32.mrf.mxu0
        %v4823 = vadd.f32 0.0, %v4822
        %v4824 = vpop.f32.mrf.mxu0
        %4825 = vmatprep.mubr.f32.mxu0 0.0
        %4826 = vmatmul.mubr.f32.gmra.mxu0 %v4630
        %v4827 = vpop.f32.mrf.mxu0
        %v4828 = vadd.f32 0.0, %v4827
        %v4829 = vpop.f32.mrf.mxu0
        %4830 = vmatprep.mubr.f32.mxu0 0.0
        %4831 = vmatmul.mubr.f32.gmra.mxu0 %v4633
        %v4832 = vpop.f32.mrf.mxu0
        %v4833 = vadd.f32 0.0, %v4832
        %v4834 = vpop.f32.mrf.mxu0
        %4835 = vmatprep.mubr.f32.mxu0 0.0
        %4836 = vmatmul.mubr.f32.gmra.mxu0 %v4636
        %v4837 = vpop.f32.mrf.mxu0
        %v4838 = vadd.f32 0.0, %v4837
        %v4839 = vpop.f32.mrf.mxu0
        %4840 = vmatprep.mubr.f32.mxu0 0.0
        %4841 = vmatmul.mubr.f32.gmra.mxu0 %v4639
        %v4842 = vpop.f32.mrf.mxu0
        %v4843 = vadd.f32 0.0, %v4842
        %v4844 = vpop.f32.mrf.mxu0
        %4845 = vmatprep.mubr.f32.mxu0 0.0
        %4846 = vmatmul.mubr.f32.gmra.mxu0 %v4642
        %v4847 = vpop.f32.mrf.mxu0
        %v4848 = vadd.f32 0.0, %v4847
        %v4849 = vpop.f32.mrf.mxu0
        %4850 = vmatprep.mubr.f32.mxu0 0.0
        %4851 = vmatmul.mubr.f32.gmra.mxu0 %v4645
        %v4852 = vpop.f32.mrf.mxu0
        %v4853 = vadd.f32 0.0, %v4852
        %v4854 = vpop.f32.mrf.mxu0
        %4855 = vmatprep.mubr.f32.mxu0 0.0
        %4856 = vmatmul.mubr.f32.gmra.mxu0 %v4648
        %v4857 = vpop.f32.mrf.mxu0
        %v4858 = vadd.f32 0.0, %v4857
        %v4859 = vpop.f32.mrf.mxu0
        %4860 = vmatprep.mubr.f32.mxu0 0.0
        %4861 = vmatmul.mubr.f32.gmra.mxu0 %v4651
        %v4862 = vpop.f32.mrf.mxu0
        %v4863 = vadd.f32 0.0, %v4862
        %v4864 = vpop.f32.mrf.mxu0
        %4865 = vmatprep.mubr.f32.mxu0 0.0
        %4866 = vmatmul.mubr.f32.gmra.mxu0 %v4654
        %v4867 = vpop.f32.mrf.mxu0
        %v4868 = vadd.f32 0.0, %v4867
        %v4869 = vpop.f32.mrf.mxu0
        %4870 = vmatprep.mubr.f32.mxu0 0.0
        %4871 = vmatmul.mubr.f32.gmra.mxu0 %v4657
        %v4872 = vpop.f32.mrf.mxu0
        %v4873 = vadd.f32 0.0, %v4872
        %v4874 = vpop.f32.mrf.mxu0
        %4875 = vmatprep.mubr.f32.mxu0 0.0
        %4876 = vmatmul.mubr.f32.gmra.mxu0 %v4660
        %v4877 = vpop.f32.mrf.mxu0
        %v4878 = vadd.f32 0.0, %v4877
        %v4879 = vpop.f32.mrf.mxu0
        %4880 = vmatprep.mubr.f32.mxu0 0.0
        %4881 = vmatmul.mubr.f32.gmra.mxu0 %v4663
        %v4882 = vpop.f32.mrf.mxu0
        %v4883 = vadd.f32 0.0, %v4882
        %v4884 = vpop.f32.mrf.mxu0
        %4885 = vmatprep.mubr.f32.mxu0 0.0
        %4886 = vmatmul.mubr.f32.gmra.mxu0 %v4666
        %v4887 = vpop.f32.mrf.mxu0
        %v4888 = vadd.f32 0.0, %v4887
        %v4889 = vpop.f32.mrf.mxu0
        %4890 = vmatprep.mubr.f32.mxu0 0.0
        %4891 = vmatmul.mubr.f32.gmra.mxu0 %v4669
        %v4892 = vpop.f32.mrf.mxu0
        %v4893 = vadd.f32 0.0, %v4892
        %v4894 = vpop.f32.mrf.mxu0
        %4895 = vdwg.mxu0
        %v4896 = vadd.f32 %v4502, %v4738
        %v4897 = vadd.f32 %v4503, %v4743
        %v4898 = vadd.f32 %v4504, %v4748
        %v4899 = vadd.f32 %v4505, %v4753
        %v4900 = vadd.f32 %v4506, %v4758
        %v4901 = vadd.f32 %v4507, %v4763
        %v4902 = vadd.f32 %v4508, %v4768
        %v4903 = vadd.f32 %v4509, %v4773
        %v4904 = vadd.f32 %v4510, %v4778
        %v4905 = vadd.f32 %v4511, %v4783
        %v4906 = vadd.f32 %v4512, %v4788
        %v4907 = vadd.f32 %v4513, %v4793
        %v4908 = vadd.f32 %v4514, %v4798
        %v4909 = vadd.f32 %v4515, %v4803
        %v4910 = vadd.f32 %v4516, %v4808
        %v4911 = vadd.f32 %v4517, %v4813
        %v4912 = vadd.f32 %v4518, %v4818
        %v4913 = vadd.f32 %v4519, %v4823
        %v4914 = vadd.f32 %v4520, %v4828
        %v4915 = vadd.f32 %v4521, %v4833
        %v4916 = vadd.f32 %v4522, %v4838
        %v4917 = vadd.f32 %v4523, %v4843
        %v4918 = vadd.f32 %v4524, %v4848
        %v4919 = vadd.f32 %v4525, %v4853
        %v4920 = vadd.f32 %v4526, %v4858
        %v4921 = vadd.f32 %v4527, %v4863
        %v4922 = vadd.f32 %v4528, %v4868
        %v4923 = vadd.f32 %v4529, %v4873
        %v4924 = vadd.f32 %v4530, %v4878
        %v4925 = vadd.f32 %v4531, %v4883
        %v4926 = vadd.f32 %v4532, %v4888
        %v4927 = vadd.f32 %v4533, %v4893
        %v4928 = vld [vmem:[%s6] sm:$0x1]
        %v4930 = vlaneseq
        %v4931 = vshrl.u32 %v4930, 7
        %v4932 = vsub.s32 0, %v4931
        %v4933 = vrot.slane %v4928, %v4932
        %v4935 = vadd.f32 %v4896, %v4933
        %v4936 = vadd.f32 %v4897, %v4933
        %v4937 = vadd.f32 %v4898, %v4933
        %v4938 = vadd.f32 %v4899, %v4933
        %v4939 = vadd.f32 %v4900, %v4933
        %v4940 = vadd.f32 %v4901, %v4933
        %v4941 = vadd.f32 %v4902, %v4933
        %v4942 = vadd.f32 %v4903, %v4933
        %v4943 = vadd.f32 %v4904, %v4933
        %v4944 = vadd.f32 %v4905, %v4933
        %v4945 = vadd.f32 %v4906, %v4933
        %v4946 = vadd.f32 %v4907, %v4933
        %v4947 = vadd.f32 %v4908, %v4933
        %v4948 = vadd.f32 %v4909, %v4933
        %v4949 = vadd.f32 %v4910, %v4933
        %v4950 = vadd.f32 %v4911, %v4933
        %v4951 = vadd.f32 %v4912, %v4933
        %v4952 = vadd.f32 %v4913, %v4933
        %v4953 = vadd.f32 %v4914, %v4933
        %v4954 = vadd.f32 %v4915, %v4933
        %v4955 = vadd.f32 %v4916, %v4933
        %v4956 = vadd.f32 %v4917, %v4933
        %v4957 = vadd.f32 %v4918, %v4933
        %v4958 = vadd.f32 %v4919, %v4933
        %v4959 = vadd.f32 %v4920, %v4933
        %v4960 = vadd.f32 %v4921, %v4933
        %v4961 = vadd.f32 %v4922, %v4933
        %v4962 = vadd.f32 %v4923, %v4933
        %v4963 = vadd.f32 %v4924, %v4933
        %v4964 = vadd.f32 %v4925, %v4933
        %v4965 = vadd.f32 %v4926, %v4933
        %v4966 = vadd.f32 %v4927, %v4933
        %4967 = vst.msk [vmem:[%s801] sm:$0xff] %vm1198, %v4935
        %4968 = vst.msk [vmem:[%s801 + $0x8] sm:$0xff] %vm1198, %v4936
        %4969 = vst.msk [vmem:[%s801 + $0x10] sm:$0xff] %vm1198, %v4937
        %4970 = vst.msk [vmem:[%s801 + $0x18] sm:$0xff] %vm1198, %v4938
        %4971 = vst.msk [vmem:[%s801 + $0x20] sm:$0xff] %vm1198, %v4939
        %4972 = vst.msk [vmem:[%s801 + $0x28] sm:$0xff] %vm1198, %v4940
        %4973 = vst.msk [vmem:[%s801 + $0x30] sm:$0xff] %vm1198, %v4941
        %4974 = vst.msk [vmem:[%s801 + $0x38] sm:$0xff] %vm1198, %v4942
        %4975 = vst.msk [vmem:[%s801 + $0x40] sm:$0xff] %vm1198, %v4943
        %4976 = vst.msk [vmem:[%s801 + $0x48] sm:$0xff] %vm1198, %v4944
        %4977 = vst.msk [vmem:[%s801 + $0x50] sm:$0xff] %vm1198, %v4945
        %4978 = vst.msk [vmem:[%s801 + $0x58] sm:$0xff] %vm1198, %v4946
        %4979 = vst.msk [vmem:[%s801 + $0x60] sm:$0xff] %vm1198, %v4947
        %4980 = vst.msk [vmem:[%s801 + $0x68] sm:$0xff] %vm1198, %v4948
        %4981 = vst.msk [vmem:[%s801 + $0x70] sm:$0xff] %vm1198, %v4949
        %4982 = vst.msk [vmem:[%s801 + $0x78] sm:$0xff] %vm1198, %v4950
        %4983 = vst.msk [vmem:[%s801 + $0x80] sm:$0xff] %vm1198, %v4951
        %4984 = vst.msk [vmem:[%s801 + $0x88] sm:$0xff] %vm1198, %v4952
        %4985 = vst.msk [vmem:[%s801 + $0x90] sm:$0xff] %vm1198, %v4953
        %4986 = vst.msk [vmem:[%s801 + $0x98] sm:$0xff] %vm1198, %v4954
        %4987 = vst.msk [vmem:[%s801 + $0xa0] sm:$0xff] %vm1198, %v4955
        %4988 = vst.msk [vmem:[%s801 + $0xa8] sm:$0xff] %vm1198, %v4956
        %4989 = vst.msk [vmem:[%s801 + $0xb0] sm:$0xff] %vm1198, %v4957
        %4990 = vst.msk [vmem:[%s801 + $0xb8] sm:$0xff] %vm1198, %v4958
        %4991 = vst.msk [vmem:[%s801 + $0xc0] sm:$0xff] %vm1198, %v4959
        %4992 = vst.msk [vmem:[%s801 + $0xc8] sm:$0xff] %vm1198, %v4960
        %4993 = vst.msk [vmem:[%s801 + $0xd0] sm:$0xff] %vm1198, %v4961
        %4994 = vst.msk [vmem:[%s801 + $0xd8] sm:$0xff] %vm1198, %v4962
        %4995 = vst.msk [vmem:[%s801 + $0xe0] sm:$0xff] %vm1198, %v4963
        %4996 = vst.msk [vmem:[%s801 + $0xe8] sm:$0xff] %vm1198, %v4964
        %4997 = vst.msk [vmem:[%s801 + $0xf0] sm:$0xff] %vm1198, %v4965
        %4998 = vst.msk [vmem:[%s801 + $0xf8] sm:$0xff] %vm1198, %v4966
        %v4999 = vld [vmem:[%s7] sm:$0x1]
        %v5001 = vlaneseq
        %v5002 = vshrl.u32 %v5001, 7
        %v5003 = vsub.s32 0, %v5002
        %v5004 = vrot.slane %v4999, %v5003
        %v5006 = vmul.f32 %v4935, %v5004
        %v5007 = vmul.f32 %v4936, %v5004
        %v5008 = vmul.f32 %v4937, %v5004
        %v5009 = vmul.f32 %v4938, %v5004
        %v5010 = vmul.f32 %v4939, %v5004
        %v5011 = vmul.f32 %v4940, %v5004
        %v5012 = vmul.f32 %v4941, %v5004
        %v5013 = vmul.f32 %v4942, %v5004
        %v5014 = vmul.f32 %v4943, %v5004
        %v5015 = vmul.f32 %v4944, %v5004
        %v5016 = vmul.f32 %v4945, %v5004
        %v5017 = vmul.f32 %v4946, %v5004
        %v5018 = vmul.f32 %v4947, %v5004
        %v5019 = vmul.f32 %v4948, %v5004
        %v5020 = vmul.f32 %v4949, %v5004
        %v5021 = vmul.f32 %v4950, %v5004
        %v5022 = vmul.f32 %v4951, %v5004
        %v5023 = vmul.f32 %v4952, %v5004
        %v5024 = vmul.f32 %v4953, %v5004
        %v5025 = vmul.f32 %v4954, %v5004
        %v5026 = vmul.f32 %v4955, %v5004
        %v5027 = vmul.f32 %v4956, %v5004
        %v5028 = vmul.f32 %v4957, %v5004
        %v5029 = vmul.f32 %v4958, %v5004
        %v5030 = vmul.f32 %v4959, %v5004
        %v5031 = vmul.f32 %v4960, %v5004
        %v5032 = vmul.f32 %v4961, %v5004
        %v5033 = vmul.f32 %v4962, %v5004
        %v5034 = vmul.f32 %v4963, %v5004
        %v5035 = vmul.f32 %v4964, %v5004
        %v5036 = vmul.f32 %v4965, %v5004
        %v5037 = vmul.f32 %v4966, %v5004
        %v5038 = vld [vmem:[%s8] sm:$0x1]
        %v5040 = vlaneseq
        %v5041 = vshrl.u32 %v5040, 7
        %v5042 = vsub.s32 0, %v5041
        %v5043 = vrot.slane %v5038, %v5042
        %v5045 = vadd.f32 %v5006, %v5043
        %v5046 = vadd.f32 %v5007, %v5043
        %v5047 = vadd.f32 %v5008, %v5043
        %v5048 = vadd.f32 %v5009, %v5043
        %v5049 = vadd.f32 %v5010, %v5043
        %v5050 = vadd.f32 %v5011, %v5043
        %v5051 = vadd.f32 %v5012, %v5043
        %v5052 = vadd.f32 %v5013, %v5043
        %v5053 = vadd.f32 %v5014, %v5043
        %v5054 = vadd.f32 %v5015, %v5043
        %v5055 = vadd.f32 %v5016, %v5043
        %v5056 = vadd.f32 %v5017, %v5043
        %v5057 = vadd.f32 %v5018, %v5043
        %v5058 = vadd.f32 %v5019, %v5043
        %v5059 = vadd.f32 %v5020, %v5043
        %v5060 = vadd.f32 %v5021, %v5043
        %v5061 = vadd.f32 %v5022, %v5043
        %v5062 = vadd.f32 %v5023, %v5043
        %v5063 = vadd.f32 %v5024, %v5043
        %v5064 = vadd.f32 %v5025, %v5043
        %v5065 = vadd.f32 %v5026, %v5043
        %v5066 = vadd.f32 %v5027, %v5043
        %v5067 = vadd.f32 %v5028, %v5043
        %v5068 = vadd.f32 %v5029, %v5043
        %v5069 = vadd.f32 %v5030, %v5043
        %v5070 = vadd.f32 %v5031, %v5043
        %v5071 = vadd.f32 %v5032, %v5043
        %v5072 = vadd.f32 %v5033, %v5043
        %v5073 = vadd.f32 %v5034, %v5043
        %v5074 = vadd.f32 %v5035, %v5043
        %v5075 = vadd.f32 %v5036, %v5043
        %v5076 = vadd.f32 %v5037, %v5043
        %v5077 = vmax.f32 %v5045, 0.0
        %v5078 = vmax.f32 %v5046, 0.0
        %v5079 = vmax.f32 %v5047, 0.0
        %v5080 = vmax.f32 %v5048, 0.0
        %v5081 = vmax.f32 %v5049, 0.0
        %v5082 = vmax.f32 %v5050, 0.0
        %v5083 = vmax.f32 %v5051, 0.0
        %v5084 = vmax.f32 %v5052, 0.0
        %v5085 = vmax.f32 %v5053, 0.0
        %v5086 = vmax.f32 %v5054, 0.0
        %v5087 = vmax.f32 %v5055, 0.0
        %v5088 = vmax.f32 %v5056, 0.0
        %v5089 = vmax.f32 %v5057, 0.0
        %v5090 = vmax.f32 %v5058, 0.0
        %v5091 = vmax.f32 %v5059, 0.0
        %v5092 = vmax.f32 %v5060, 0.0
        %v5093 = vmax.f32 %v5061, 0.0
        %v5094 = vmax.f32 %v5062, 0.0
        %v5095 = vmax.f32 %v5063, 0.0
        %v5096 = vmax.f32 %v5064, 0.0
        %v5097 = vmax.f32 %v5065, 0.0
        %v5098 = vmax.f32 %v5066, 0.0
        %v5099 = vmax.f32 %v5067, 0.0
        %v5100 = vmax.f32 %v5068, 0.0
        %v5101 = vmax.f32 %v5069, 0.0
        %v5102 = vmax.f32 %v5070, 0.0
        %v5103 = vmax.f32 %v5071, 0.0
        %v5104 = vmax.f32 %v5072, 0.0
        %v5105 = vmax.f32 %v5073, 0.0
        %v5106 = vmax.f32 %v5074, 0.0
        %v5107 = vmax.f32 %v5075, 0.0
        %v5108 = vmax.f32 %v5076, 0.0
        %v5109 = vld [vmem:[#allocation9] sm:$0xff]
        %v5110 = vld [vmem:[#allocation9 + $0x8] sm:$0xff]
        %v5111 = vld [vmem:[#allocation9 + $0x10] sm:$0xff]
        %v5112 = vld [vmem:[#allocation9 + $0x18] sm:$0xff]
        %v5113 = vld [vmem:[#allocation9 + $0x20] sm:$0xff]
        %v5114 = vld [vmem:[#allocation9 + $0x28] sm:$0xff]
        %v5115 = vld [vmem:[#allocation9 + $0x30] sm:$0xff]
        %v5116 = vld [vmem:[#allocation9 + $0x38] sm:$0xff]
        %v5117 = vld [vmem:[#allocation9 + $0x40] sm:$0xff]
        %v5118 = vld [vmem:[#allocation9 + $0x48] sm:$0xff]
        %v5119 = vld [vmem:[#allocation9 + $0x50] sm:$0xff]
        %v5120 = vld [vmem:[#allocation9 + $0x58] sm:$0xff]
        %v5121 = vld [vmem:[#allocation9 + $0x60] sm:$0xff]
        %v5122 = vld [vmem:[#allocation9 + $0x68] sm:$0xff]
        %v5123 = vld [vmem:[#allocation9 + $0x70] sm:$0xff]
        %v5124 = vld [vmem:[#allocation9 + $0x78] sm:$0xff]
        %5125 = vmatprep.subr.mxu0 0.0
        %5126 = vmatpush1.msra.mxu0 %v5092
        %5127 = vmatprep.subr.mxu0 0.0
        %5128 = vmatpush1.msra.mxu0 %v5091
        %5129 = vmatprep.subr.mxu0 0.0
        %5130 = vmatpush1.msra.mxu0 %v5090
        %5131 = vmatprep.subr.mxu0 0.0
        %5132 = vmatpush1.msra.mxu0 %v5089
        %5133 = vmatprep.subr.mxu0 0.0
        %5134 = vmatpush1.msra.mxu0 %v5088
        %5135 = vmatprep.subr.mxu0 0.0
        %5136 = vmatpush1.msra.mxu0 %v5087
        %5137 = vmatprep.subr.mxu0 0.0
        %5138 = vmatpush1.msra.mxu0 %v5086
        %5139 = vmatprep.subr.mxu0 0.0
        %5140 = vmatpush1.msra.mxu0 %v5085
        %5141 = vmatprep.subr.mxu0 0.0
        %5142 = vmatpush1.msra.mxu0 %v5084
        %5143 = vmatprep.subr.mxu0 0.0
        %5144 = vmatpush1.msra.mxu0 %v5083
        %5145 = vmatprep.subr.mxu0 0.0
        %5146 = vmatpush1.msra.mxu0 %v5082
        %5147 = vmatprep.subr.mxu0 0.0
        %5148 = vmatpush1.msra.mxu0 %v5081
        %5149 = vmatprep.subr.mxu0 0.0
        %5150 = vmatpush1.msra.mxu0 %v5080
        %5151 = vmatprep.subr.mxu0 0.0
        %5152 = vmatpush1.msra.mxu0 %v5079
        %5153 = vmatprep.subr.mxu0 0.0
        %5154 = vmatpush1.msra.mxu0 %v5078
        %5155 = vmatprep.subr.mxu0 0.0
        %5156 = vmatpush1.msra.mxu0 %v5077
        %5157 = vmatprep.subr.mxu0 0.0
        %5158 = vmatpush2.msra.mxu0 %v5108
        %5159 = vmatprep.subr.mxu0 0.0
        %5160 = vmatpush2.msra.mxu0 %v5107
        %5161 = vmatprep.subr.mxu0 0.0
        %5162 = vmatpush2.msra.mxu0 %v5106
        %5163 = vmatprep.subr.mxu0 0.0
        %5164 = vmatpush2.msra.mxu0 %v5105
        %5165 = vmatprep.subr.mxu0 0.0
        %5166 = vmatpush2.msra.mxu0 %v5104
        %5167 = vmatprep.subr.mxu0 0.0
        %5168 = vmatpush2.msra.mxu0 %v5103
        %5169 = vmatprep.subr.mxu0 0.0
        %5170 = vmatpush2.msra.mxu0 %v5102
        %5171 = vmatprep.subr.mxu0 0.0
        %5172 = vmatpush2.msra.mxu0 %v5101
        %5173 = vmatprep.subr.mxu0 0.0
        %5174 = vmatpush2.msra.mxu0 %v5100
        %5175 = vmatprep.subr.mxu0 0.0
        %5176 = vmatpush2.msra.mxu0 %v5099
        %5177 = vmatprep.subr.mxu0 0.0
        %5178 = vmatpush2.msra.mxu0 %v5098
        %5179 = vmatprep.subr.mxu0 0.0
        %5180 = vmatpush2.msra.mxu0 %v5097
        %5181 = vmatprep.subr.mxu0 0.0
        %5182 = vmatpush2.msra.mxu0 %v5096
        %5183 = vmatprep.subr.mxu0 0.0
        %5184 = vmatpush2.msra.mxu0 %v5095
        %5185 = vmatprep.subr.mxu0 0.0
        %5186 = vmatpush2.msra.mxu0 %v5094
        %5187 = vmatprep.subr.mxu0 0.0
        %5188 = vmatpush2.msra.mxu0 %v5093
        %5189 = vmatprep.mubr.f32.mxu0 %v5110
        %5190 = vmatmul.mubr.f32.gmra.mxu0 %v5109
        %v5191 = vpop.f32.mrf.mxu0
        %v5192 = vadd.f32 0.0, %v5191
        %v5193 = vpop.f32.mrf.mxu0
        %5194 = vmatprep.mubr.f32.mxu0 %v5112
        %5195 = vmatmul.mubr.f32.gmra.mxu0 %v5111
        %v5196 = vpop.f32.mrf.mxu0
        %v5197 = vadd.f32 0.0, %v5196
        %v5198 = vpop.f32.mrf.mxu0
        %5199 = vmatprep.mubr.f32.mxu0 %v5114
        %5200 = vmatmul.mubr.f32.gmra.mxu0 %v5113
        %v5201 = vpop.f32.mrf.mxu0
        %v5202 = vadd.f32 0.0, %v5201
        %v5203 = vpop.f32.mrf.mxu0
        %5204 = vmatprep.mubr.f32.mxu0 %v5116
        %5205 = vmatmul.mubr.f32.gmra.mxu0 %v5115
        %v5206 = vpop.f32.mrf.mxu0
        %v5207 = vadd.f32 0.0, %v5206
        %v5208 = vpop.f32.mrf.mxu0
        %5209 = vmatprep.mubr.f32.mxu0 %v5118
        %5210 = vmatmul.mubr.f32.gmra.mxu0 %v5117
        %v5211 = vpop.f32.mrf.mxu0
        %v5212 = vadd.f32 0.0, %v5211
        %v5213 = vpop.f32.mrf.mxu0
        %5214 = vmatprep.mubr.f32.mxu0 %v5120
        %5215 = vmatmul.mubr.f32.gmra.mxu0 %v5119
        %v5216 = vpop.f32.mrf.mxu0
        %v5217 = vadd.f32 0.0, %v5216
        %v5218 = vpop.f32.mrf.mxu0
        %5219 = vmatprep.mubr.f32.mxu0 %v5122
        %5220 = vmatmul.mubr.f32.gmra.mxu0 %v5121
        %v5221 = vpop.f32.mrf.mxu0
        %v5222 = vadd.f32 0.0, %v5221
        %v5223 = vpop.f32.mrf.mxu0
        %5224 = vmatprep.mubr.f32.mxu0 %v5124
        %5225 = vmatmul.mubr.f32.gmra.mxu0 %v5123
        %v5226 = vpop.f32.mrf.mxu0
        %v5227 = vadd.f32 0.0, %v5226
        %v5228 = vpop.f32.mrf.mxu0
        %5229 = vdwg.mxu0
        %s5230 = scalar_lea.vmem [#allocation9], 128
        %v5231 = vld [vmem:[%s5230] sm:$0xff]
        %v5232 = vld [vmem:[%s5230 + $0x8] sm:$0xff]
        %v5233 = vld [vmem:[%s5230 + $0x10] sm:$0xff]
        %v5234 = vld [vmem:[%s5230 + $0x18] sm:$0xff]
        %v5235 = vld [vmem:[%s5230 + $0x20] sm:$0xff]
        %v5236 = vld [vmem:[%s5230 + $0x28] sm:$0xff]
        %v5237 = vld [vmem:[%s5230 + $0x30] sm:$0xff]
        %v5238 = vld [vmem:[%s5230 + $0x38] sm:$0xff]
        %v5239 = vld [vmem:[%s5230 + $0x40] sm:$0xff]
        %v5240 = vld [vmem:[%s5230 + $0x48] sm:$0xff]
        %v5241 = vld [vmem:[%s5230 + $0x50] sm:$0xff]
        %v5242 = vld [vmem:[%s5230 + $0x58] sm:$0xff]
        %v5243 = vld [vmem:[%s5230 + $0x60] sm:$0xff]
        %v5244 = vld [vmem:[%s5230 + $0x68] sm:$0xff]
        %v5245 = vld [vmem:[%s5230 + $0x70] sm:$0xff]
        %v5246 = vld [vmem:[%s5230 + $0x78] sm:$0xff]
        %5247 = vmatprep.subr.mxu0 0.0
        %5248 = vmatpush1.msra.mxu0 %v5092
        %5249 = vmatprep.subr.mxu0 0.0
        %5250 = vmatpush1.msra.mxu0 %v5091
        %5251 = vmatprep.subr.mxu0 0.0
        %5252 = vmatpush1.msra.mxu0 %v5090
        %5253 = vmatprep.subr.mxu0 0.0
        %5254 = vmatpush1.msra.mxu0 %v5089
        %5255 = vmatprep.subr.mxu0 0.0
        %5256 = vmatpush1.msra.mxu0 %v5088
        %5257 = vmatprep.subr.mxu0 0.0
        %5258 = vmatpush1.msra.mxu0 %v5087
        %5259 = vmatprep.subr.mxu0 0.0
        %5260 = vmatpush1.msra.mxu0 %v5086
        %5261 = vmatprep.subr.mxu0 0.0
        %5262 = vmatpush1.msra.mxu0 %v5085
        %5263 = vmatprep.subr.mxu0 0.0
        %5264 = vmatpush1.msra.mxu0 %v5084
        %5265 = vmatprep.subr.mxu0 0.0
        %5266 = vmatpush1.msra.mxu0 %v5083
        %5267 = vmatprep.subr.mxu0 0.0
        %5268 = vmatpush1.msra.mxu0 %v5082
        %5269 = vmatprep.subr.mxu0 0.0
        %5270 = vmatpush1.msra.mxu0 %v5081
        %5271 = vmatprep.subr.mxu0 0.0
        %5272 = vmatpush1.msra.mxu0 %v5080
        %5273 = vmatprep.subr.mxu0 0.0
        %5274 = vmatpush1.msra.mxu0 %v5079
        %5275 = vmatprep.subr.mxu0 0.0
        %5276 = vmatpush1.msra.mxu0 %v5078
        %5277 = vmatprep.subr.mxu0 0.0
        %5278 = vmatpush1.msra.mxu0 %v5077
        %5279 = vmatprep.subr.mxu0 0.0
        %5280 = vmatpush2.msra.mxu0 %v5108
        %5281 = vmatprep.subr.mxu0 0.0
        %5282 = vmatpush2.msra.mxu0 %v5107
        %5283 = vmatprep.subr.mxu0 0.0
        %5284 = vmatpush2.msra.mxu0 %v5106
        %5285 = vmatprep.subr.mxu0 0.0
        %5286 = vmatpush2.msra.mxu0 %v5105
        %5287 = vmatprep.subr.mxu0 0.0
        %5288 = vmatpush2.msra.mxu0 %v5104
        %5289 = vmatprep.subr.mxu0 0.0
        %5290 = vmatpush2.msra.mxu0 %v5103
        %5291 = vmatprep.subr.mxu0 0.0
        %5292 = vmatpush2.msra.mxu0 %v5102
        %5293 = vmatprep.subr.mxu0 0.0
        %5294 = vmatpush2.msra.mxu0 %v5101
        %5295 = vmatprep.subr.mxu0 0.0
        %5296 = vmatpush2.msra.mxu0 %v5100
        %5297 = vmatprep.subr.mxu0 0.0
        %5298 = vmatpush2.msra.mxu0 %v5099
        %5299 = vmatprep.subr.mxu0 0.0
        %5300 = vmatpush2.msra.mxu0 %v5098
        %5301 = vmatprep.subr.mxu0 0.0
        %5302 = vmatpush2.msra.mxu0 %v5097
        %5303 = vmatprep.subr.mxu0 0.0
        %5304 = vmatpush2.msra.mxu0 %v5096
        %5305 = vmatprep.subr.mxu0 0.0
        %5306 = vmatpush2.msra.mxu0 %v5095
        %5307 = vmatprep.subr.mxu0 0.0
        %5308 = vmatpush2.msra.mxu0 %v5094
        %5309 = vmatprep.subr.mxu0 0.0
        %5310 = vmatpush2.msra.mxu0 %v5093
        %5311 = vmatprep.mubr.f32.mxu0 %v5232
        %5312 = vmatmul.mubr.f32.gmra.mxu0 %v5231
        %v5313 = vpop.f32.mrf.mxu0
        %v5314 = vadd.f32 0.0, %v5313
        %v5315 = vpop.f32.mrf.mxu0
        %5316 = vmatprep.mubr.f32.mxu0 %v5234
        %5317 = vmatmul.mubr.f32.gmra.mxu0 %v5233
        %v5318 = vpop.f32.mrf.mxu0
        %v5319 = vadd.f32 0.0, %v5318
        %v5320 = vpop.f32.mrf.mxu0
        %5321 = vmatprep.mubr.f32.mxu0 %v5236
        %5322 = vmatmul.mubr.f32.gmra.mxu0 %v5235
        %v5323 = vpop.f32.mrf.mxu0
        %v5324 = vadd.f32 0.0, %v5323
        %v5325 = vpop.f32.mrf.mxu0
        %5326 = vmatprep.mubr.f32.mxu0 %v5238
        %5327 = vmatmul.mubr.f32.gmra.mxu0 %v5237
        %v5328 = vpop.f32.mrf.mxu0
        %v5329 = vadd.f32 0.0, %v5328
        %v5330 = vpop.f32.mrf.mxu0
        %5331 = vmatprep.mubr.f32.mxu0 %v5240
        %5332 = vmatmul.mubr.f32.gmra.mxu0 %v5239
        %v5333 = vpop.f32.mrf.mxu0
        %v5334 = vadd.f32 0.0, %v5333
        %v5335 = vpop.f32.mrf.mxu0
        %5336 = vmatprep.mubr.f32.mxu0 %v5242
        %5337 = vmatmul.mubr.f32.gmra.mxu0 %v5241
        %v5338 = vpop.f32.mrf.mxu0
        %v5339 = vadd.f32 0.0, %v5338
        %v5340 = vpop.f32.mrf.mxu0
        %5341 = vmatprep.mubr.f32.mxu0 %v5244
        %5342 = vmatmul.mubr.f32.gmra.mxu0 %v5243
        %v5343 = vpop.f32.mrf.mxu0
        %v5344 = vadd.f32 0.0, %v5343
        %v5345 = vpop.f32.mrf.mxu0
        %5346 = vmatprep.mubr.f32.mxu0 %v5246
        %5347 = vmatmul.mubr.f32.gmra.mxu0 %v5245
        %v5348 = vpop.f32.mrf.mxu0
        %v5349 = vadd.f32 0.0, %v5348
        %v5350 = vpop.f32.mrf.mxu0
        %5351 = vdwg.mxu0
        %s5352 = scalar_lea.vmem [#allocation9], 256
        %v5353 = vld [vmem:[%s5352] sm:$0xff]
        %v5354 = vld [vmem:[%s5352 + $0x8] sm:$0xff]
        %v5355 = vld [vmem:[%s5352 + $0x10] sm:$0xff]
        %v5356 = vld [vmem:[%s5352 + $0x18] sm:$0xff]
        %v5357 = vld [vmem:[%s5352 + $0x20] sm:$0xff]
        %v5358 = vld [vmem:[%s5352 + $0x28] sm:$0xff]
        %v5359 = vld [vmem:[%s5352 + $0x30] sm:$0xff]
        %v5360 = vld [vmem:[%s5352 + $0x38] sm:$0xff]
        %v5361 = vld [vmem:[%s5352 + $0x40] sm:$0xff]
        %v5362 = vld [vmem:[%s5352 + $0x48] sm:$0xff]
        %v5363 = vld [vmem:[%s5352 + $0x50] sm:$0xff]
        %v5364 = vld [vmem:[%s5352 + $0x58] sm:$0xff]
        %v5365 = vld [vmem:[%s5352 + $0x60] sm:$0xff]
        %v5366 = vld [vmem:[%s5352 + $0x68] sm:$0xff]
        %v5367 = vld [vmem:[%s5352 + $0x70] sm:$0xff]
        %v5368 = vld [vmem:[%s5352 + $0x78] sm:$0xff]
        %5369 = vmatprep.subr.mxu0 0.0
        %5370 = vmatpush1.msra.mxu0 %v5092
        %5371 = vmatprep.subr.mxu0 0.0
        %5372 = vmatpush1.msra.mxu0 %v5091
        %5373 = vmatprep.subr.mxu0 0.0
        %5374 = vmatpush1.msra.mxu0 %v5090
        %5375 = vmatprep.subr.mxu0 0.0
        %5376 = vmatpush1.msra.mxu0 %v5089
        %5377 = vmatprep.subr.mxu0 0.0
        %5378 = vmatpush1.msra.mxu0 %v5088
        %5379 = vmatprep.subr.mxu0 0.0
        %5380 = vmatpush1.msra.mxu0 %v5087
        %5381 = vmatprep.subr.mxu0 0.0
        %5382 = vmatpush1.msra.mxu0 %v5086
        %5383 = vmatprep.subr.mxu0 0.0
        %5384 = vmatpush1.msra.mxu0 %v5085
        %5385 = vmatprep.subr.mxu0 0.0
        %5386 = vmatpush1.msra.mxu0 %v5084
        %5387 = vmatprep.subr.mxu0 0.0
        %5388 = vmatpush1.msra.mxu0 %v5083
        %5389 = vmatprep.subr.mxu0 0.0
        %5390 = vmatpush1.msra.mxu0 %v5082
        %5391 = vmatprep.subr.mxu0 0.0
        %5392 = vmatpush1.msra.mxu0 %v5081
        %5393 = vmatprep.subr.mxu0 0.0
        %5394 = vmatpush1.msra.mxu0 %v5080
        %5395 = vmatprep.subr.mxu0 0.0
        %5396 = vmatpush1.msra.mxu0 %v5079
        %5397 = vmatprep.subr.mxu0 0.0
        %5398 = vmatpush1.msra.mxu0 %v5078
        %5399 = vmatprep.subr.mxu0 0.0
        %5400 = vmatpush1.msra.mxu0 %v5077
        %5401 = vmatprep.subr.mxu0 0.0
        %5402 = vmatpush2.msra.mxu0 %v5108
        %5403 = vmatprep.subr.mxu0 0.0
        %5404 = vmatpush2.msra.mxu0 %v5107
        %5405 = vmatprep.subr.mxu0 0.0
        %5406 = vmatpush2.msra.mxu0 %v5106
        %5407 = vmatprep.subr.mxu0 0.0
        %5408 = vmatpush2.msra.mxu0 %v5105
        %5409 = vmatprep.subr.mxu0 0.0
        %5410 = vmatpush2.msra.mxu0 %v5104
        %5411 = vmatprep.subr.mxu0 0.0
        %5412 = vmatpush2.msra.mxu0 %v5103
        %5413 = vmatprep.subr.mxu0 0.0
        %5414 = vmatpush2.msra.mxu0 %v5102
        %5415 = vmatprep.subr.mxu0 0.0
        %5416 = vmatpush2.msra.mxu0 %v5101
        %5417 = vmatprep.subr.mxu0 0.0
        %5418 = vmatpush2.msra.mxu0 %v5100
        %5419 = vmatprep.subr.mxu0 0.0
        %5420 = vmatpush2.msra.mxu0 %v5099
        %5421 = vmatprep.subr.mxu0 0.0
        %5422 = vmatpush2.msra.mxu0 %v5098
        %5423 = vmatprep.subr.mxu0 0.0
        %5424 = vmatpush2.msra.mxu0 %v5097
        %5425 = vmatprep.subr.mxu0 0.0
        %5426 = vmatpush2.msra.mxu0 %v5096
        %5427 = vmatprep.subr.mxu0 0.0
        %5428 = vmatpush2.msra.mxu0 %v5095
        %5429 = vmatprep.subr.mxu0 0.0
        %5430 = vmatpush2.msra.mxu0 %v5094
        %5431 = vmatprep.subr.mxu0 0.0
        %5432 = vmatpush2.msra.mxu0 %v5093
        %5433 = vmatprep.mubr.f32.mxu0 %v5354
        %5434 = vmatmul.mubr.f32.gmra.mxu0 %v5353
        %v5435 = vpop.f32.mrf.mxu0
        %v5436 = vadd.f32 0.0, %v5435
        %v5437 = vpop.f32.mrf.mxu0
        %5438 = vmatprep.mubr.f32.mxu0 %v5356
        %5439 = vmatmul.mubr.f32.gmra.mxu0 %v5355
        %v5440 = vpop.f32.mrf.mxu0
        %v5441 = vadd.f32 0.0, %v5440
        %v5442 = vpop.f32.mrf.mxu0
        %5443 = vmatprep.mubr.f32.mxu0 %v5358
        %5444 = vmatmul.mubr.f32.gmra.mxu0 %v5357
        %v5445 = vpop.f32.mrf.mxu0
        %v5446 = vadd.f32 0.0, %v5445
        %v5447 = vpop.f32.mrf.mxu0
        %5448 = vmatprep.mubr.f32.mxu0 %v5360
        %5449 = vmatmul.mubr.f32.gmra.mxu0 %v5359
        %v5450 = vpop.f32.mrf.mxu0
        %v5451 = vadd.f32 0.0, %v5450
        %v5452 = vpop.f32.mrf.mxu0
        %5453 = vmatprep.mubr.f32.mxu0 %v5362
        %5454 = vmatmul.mubr.f32.gmra.mxu0 %v5361
        %v5455 = vpop.f32.mrf.mxu0
        %v5456 = vadd.f32 0.0, %v5455
        %v5457 = vpop.f32.mrf.mxu0
        %5458 = vmatprep.mubr.f32.mxu0 %v5364
        %5459 = vmatmul.mubr.f32.gmra.mxu0 %v5363
        %v5460 = vpop.f32.mrf.mxu0
        %v5461 = vadd.f32 0.0, %v5460
        %v5462 = vpop.f32.mrf.mxu0
        %5463 = vmatprep.mubr.f32.mxu0 %v5366
        %5464 = vmatmul.mubr.f32.gmra.mxu0 %v5365
        %v5465 = vpop.f32.mrf.mxu0
        %v5466 = vadd.f32 0.0, %v5465
        %v5467 = vpop.f32.mrf.mxu0
        %5468 = vmatprep.mubr.f32.mxu0 %v5368
        %5469 = vmatmul.mubr.f32.gmra.mxu0 %v5367
        %v5470 = vpop.f32.mrf.mxu0
        %v5471 = vadd.f32 0.0, %v5470
        %v5472 = vpop.f32.mrf.mxu0
        %5473 = vdwg.mxu0
        %s5474 = scalar_lea.vmem [#allocation9], 384
        %v5475 = vld [vmem:[%s5474] sm:$0xff]
        %v5476 = vld [vmem:[%s5474 + $0x8] sm:$0xff]
        %v5477 = vld [vmem:[%s5474 + $0x10] sm:$0xff]
        %v5478 = vld [vmem:[%s5474 + $0x18] sm:$0xff]
        %v5479 = vld [vmem:[%s5474 + $0x20] sm:$0xff]
        %v5480 = vld [vmem:[%s5474 + $0x28] sm:$0xff]
        %v5481 = vld [vmem:[%s5474 + $0x30] sm:$0xff]
        %v5482 = vld [vmem:[%s5474 + $0x38] sm:$0xff]
        %v5483 = vld [vmem:[%s5474 + $0x40] sm:$0xff]
        %v5484 = vld [vmem:[%s5474 + $0x48] sm:$0xff]
        %v5485 = vld [vmem:[%s5474 + $0x50] sm:$0xff]
        %v5486 = vld [vmem:[%s5474 + $0x58] sm:$0xff]
        %v5487 = vld [vmem:[%s5474 + $0x60] sm:$0xff]
        %v5488 = vld [vmem:[%s5474 + $0x68] sm:$0xff]
        %v5489 = vld [vmem:[%s5474 + $0x70] sm:$0xff]
        %v5490 = vld [vmem:[%s5474 + $0x78] sm:$0xff]
        %5491 = vmatprep.subr.mxu0 0.0
        %5492 = vmatpush1.msra.mxu0 %v5092
        %5493 = vmatprep.subr.mxu0 0.0
        %5494 = vmatpush1.msra.mxu0 %v5091
        %5495 = vmatprep.subr.mxu0 0.0
        %5496 = vmatpush1.msra.mxu0 %v5090
        %5497 = vmatprep.subr.mxu0 0.0
        %5498 = vmatpush1.msra.mxu0 %v5089
        %5499 = vmatprep.subr.mxu0 0.0
        %5500 = vmatpush1.msra.mxu0 %v5088
        %5501 = vmatprep.subr.mxu0 0.0
        %5502 = vmatpush1.msra.mxu0 %v5087
        %5503 = vmatprep.subr.mxu0 0.0
        %5504 = vmatpush1.msra.mxu0 %v5086
        %5505 = vmatprep.subr.mxu0 0.0
        %5506 = vmatpush1.msra.mxu0 %v5085
        %5507 = vmatprep.subr.mxu0 0.0
        %5508 = vmatpush1.msra.mxu0 %v5084
        %5509 = vmatprep.subr.mxu0 0.0
        %5510 = vmatpush1.msra.mxu0 %v5083
        %5511 = vmatprep.subr.mxu0 0.0
        %5512 = vmatpush1.msra.mxu0 %v5082
        %5513 = vmatprep.subr.mxu0 0.0
        %5514 = vmatpush1.msra.mxu0 %v5081
        %5515 = vmatprep.subr.mxu0 0.0
        %5516 = vmatpush1.msra.mxu0 %v5080
        %5517 = vmatprep.subr.mxu0 0.0
        %5518 = vmatpush1.msra.mxu0 %v5079
        %5519 = vmatprep.subr.mxu0 0.0
        %5520 = vmatpush1.msra.mxu0 %v5078
        %5521 = vmatprep.subr.mxu0 0.0
        %5522 = vmatpush1.msra.mxu0 %v5077
        %5523 = vmatprep.subr.mxu0 0.0
        %5524 = vmatpush2.msra.mxu0 %v5108
        %5525 = vmatprep.subr.mxu0 0.0
        %5526 = vmatpush2.msra.mxu0 %v5107
        %5527 = vmatprep.subr.mxu0 0.0
        %5528 = vmatpush2.msra.mxu0 %v5106
        %5529 = vmatprep.subr.mxu0 0.0
        %5530 = vmatpush2.msra.mxu0 %v5105
        %5531 = vmatprep.subr.mxu0 0.0
        %5532 = vmatpush2.msra.mxu0 %v5104
        %5533 = vmatprep.subr.mxu0 0.0
        %5534 = vmatpush2.msra.mxu0 %v5103
        %5535 = vmatprep.subr.mxu0 0.0
        %5536 = vmatpush2.msra.mxu0 %v5102
        %5537 = vmatprep.subr.mxu0 0.0
        %5538 = vmatpush2.msra.mxu0 %v5101
        %5539 = vmatprep.subr.mxu0 0.0
        %5540 = vmatpush2.msra.mxu0 %v5100
        %5541 = vmatprep.subr.mxu0 0.0
        %5542 = vmatpush2.msra.mxu0 %v5099
        %5543 = vmatprep.subr.mxu0 0.0
        %5544 = vmatpush2.msra.mxu0 %v5098
        %5545 = vmatprep.subr.mxu0 0.0
        %5546 = vmatpush2.msra.mxu0 %v5097
        %5547 = vmatprep.subr.mxu0 0.0
        %5548 = vmatpush2.msra.mxu0 %v5096
        %5549 = vmatprep.subr.mxu0 0.0
        %5550 = vmatpush2.msra.mxu0 %v5095
        %5551 = vmatprep.subr.mxu0 0.0
        %5552 = vmatpush2.msra.mxu0 %v5094
        %5553 = vmatprep.subr.mxu0 0.0
        %5554 = vmatpush2.msra.mxu0 %v5093
        %5555 = vmatprep.mubr.f32.mxu0 %v5476
        %5556 = vmatmul.mubr.f32.gmra.mxu0 %v5475
        %v5557 = vpop.f32.mrf.mxu0
        %v5558 = vadd.f32 0.0, %v5557
        %v5559 = vpop.f32.mrf.mxu0
        %5560 = vmatprep.mubr.f32.mxu0 %v5478
        %5561 = vmatmul.mubr.f32.gmra.mxu0 %v5477
        %v5562 = vpop.f32.mrf.mxu0
        %v5563 = vadd.f32 0.0, %v5562
        %v5564 = vpop.f32.mrf.mxu0
        %5565 = vmatprep.mubr.f32.mxu0 %v5480
        %5566 = vmatmul.mubr.f32.gmra.mxu0 %v5479
        %v5567 = vpop.f32.mrf.mxu0
        %v5568 = vadd.f32 0.0, %v5567
        %v5569 = vpop.f32.mrf.mxu0
        %5570 = vmatprep.mubr.f32.mxu0 %v5482
        %5571 = vmatmul.mubr.f32.gmra.mxu0 %v5481
        %v5572 = vpop.f32.mrf.mxu0
        %v5573 = vadd.f32 0.0, %v5572
        %v5574 = vpop.f32.mrf.mxu0
        %5575 = vmatprep.mubr.f32.mxu0 %v5484
        %5576 = vmatmul.mubr.f32.gmra.mxu0 %v5483
        %v5577 = vpop.f32.mrf.mxu0
        %v5578 = vadd.f32 0.0, %v5577
        %v5579 = vpop.f32.mrf.mxu0
        %5580 = vmatprep.mubr.f32.mxu0 %v5486
        %5581 = vmatmul.mubr.f32.gmra.mxu0 %v5485
        %v5582 = vpop.f32.mrf.mxu0
        %v5583 = vadd.f32 0.0, %v5582
        %v5584 = vpop.f32.mrf.mxu0
        %5585 = vmatprep.mubr.f32.mxu0 %v5488
        %5586 = vmatmul.mubr.f32.gmra.mxu0 %v5487
        %v5587 = vpop.f32.mrf.mxu0
        %v5588 = vadd.f32 0.0, %v5587
        %v5589 = vpop.f32.mrf.mxu0
        %5590 = vmatprep.mubr.f32.mxu0 %v5490
        %5591 = vmatmul.mubr.f32.gmra.mxu0 %v5489
        %v5592 = vpop.f32.mrf.mxu0
        %v5593 = vadd.f32 0.0, %v5592
        %v5594 = vpop.f32.mrf.mxu0
        %5595 = vdwg.mxu0
        %v5596 = vmax.f32 %v5192, %v5314
        %v5597 = vmax.f32 %v5197, %v5319
        %v5598 = vmax.f32 %v5202, %v5324
        %v5599 = vmax.f32 %v5207, %v5329
        %v5600 = vmax.f32 %v5212, %v5334
        %v5601 = vmax.f32 %v5217, %v5339
        %v5602 = vmax.f32 %v5222, %v5344
        %v5603 = vmax.f32 %v5227, %v5349
        %v5604 = vmax.f32 %v5436, %v5558
        %v5605 = vmax.f32 %v5441, %v5563
        %v5606 = vmax.f32 %v5446, %v5568
        %v5607 = vmax.f32 %v5451, %v5573
        %v5608 = vmax.f32 %v5456, %v5578
        %v5609 = vmax.f32 %v5461, %v5583
        %v5610 = vmax.f32 %v5466, %v5588
        %v5611 = vmax.f32 %v5471, %v5593
        %v5612 = vmax.f32 %v5596, %v5604
        %v5613 = vmax.f32 %v5597, %v5605
        %v5614 = vmax.f32 %v5598, %v5606
        %v5615 = vmax.f32 %v5599, %v5607
        %v5616 = vmax.f32 %v5600, %v5608
        %v5617 = vmax.f32 %v5601, %v5609
        %v5618 = vmax.f32 %v5602, %v5610
        %v5619 = vmax.f32 %v5603, %v5611
        %5620 = vst.msk [vmem:[#allocation3] sm:$0xff] %vm1198, 0.0
        %5621 = vst.msk [vmem:[#allocation3 + $0x8] sm:$0xff] %vm1198, 0.0
        %5622 = vst.msk [vmem:[#allocation3 + $0x10] sm:$0xff] %vm1198, 0.0
        %5623 = vst.msk [vmem:[#allocation3 + $0x18] sm:$0xff] %vm1198, 0.0
        %5624 = vst.msk [vmem:[#allocation3 + $0x20] sm:$0xff] %vm1198, 0.0
        %5625 = vst.msk [vmem:[#allocation3 + $0x28] sm:$0xff] %vm1198, 0.0
        %5626 = vst.msk [vmem:[#allocation3 + $0x30] sm:$0xff] %vm1198, 0.0
        %5627 = vst.msk [vmem:[#allocation3 + $0x38] sm:$0xff] %vm1198, 0.0
        %5628 = vst.msk [vmem:[#allocation3 + $0x40] sm:$0xff] %vm1198, 0.0
        %5629 = vst.msk [vmem:[#allocation3 + $0x48] sm:$0xff] %vm1198, 0.0
        %5630 = vst.msk [vmem:[#allocation3 + $0x50] sm:$0xff] %vm1198, 0.0
        %5631 = vst.msk [vmem:[#allocation3 + $0x58] sm:$0xff] %vm1198, 0.0
        %5632 = vst.msk [vmem:[#allocation3 + $0x60] sm:$0xff] %vm1198, 0.0
        %5633 = vst.msk [vmem:[#allocation3 + $0x68] sm:$0xff] %vm1198, 0.0
        %5634 = vst.msk [vmem:[#allocation3 + $0x70] sm:$0xff] %vm1198, 0.0
        %5635 = vst.msk [vmem:[#allocation3 + $0x78] sm:$0xff] %vm1198, 0.0
        %5636 = vst.msk [vmem:[#allocation3 + $0x80] sm:$0xff] %vm1198, 0.0
        %5637 = vst.msk [vmem:[#allocation3 + $0x88] sm:$0xff] %vm1198, 0.0
        %5638 = vst.msk [vmem:[#allocation3 + $0x90] sm:$0xff] %vm1198, 0.0
        %5639 = vst.msk [vmem:[#allocation3 + $0x98] sm:$0xff] %vm1198, 0.0
        %5640 = vst.msk [vmem:[#allocation3 + $0xa0] sm:$0xff] %vm1198, 0.0
        %5641 = vst.msk [vmem:[#allocation3 + $0xa8] sm:$0xff] %vm1198, 0.0
        %5642 = vst.msk [vmem:[#allocation3 + $0xb0] sm:$0xff] %vm1198, 0.0
        %5643 = vst.msk [vmem:[#allocation3 + $0xb8] sm:$0xff] %vm1198, 0.0
        %5644 = vst.msk [vmem:[#allocation3 + $0xc0] sm:$0xff] %vm1198, 0.0
        %5645 = vst.msk [vmem:[#allocation3 + $0xc8] sm:$0xff] %vm1198, 0.0
        %5646 = vst.msk [vmem:[#allocation3 + $0xd0] sm:$0xff] %vm1198, 0.0
        %5647 = vst.msk [vmem:[#allocation3 + $0xd8] sm:$0xff] %vm1198, 0.0
        %5648 = vst.msk [vmem:[#allocation3 + $0xe0] sm:$0xff] %vm1198, 0.0
        %5649 = vst.msk [vmem:[#allocation3 + $0xe8] sm:$0xff] %vm1198, 0.0
        %s5650 = scalar_lea.vmem [#allocation3], 24
        %5651 = vst.msk [vmem:[%s5650 + $0x8] sm:$0xff] %vm1198, %v5612
        %5652 = vst.msk [vmem:[%s5650 + $0x20] sm:$0xff] %vm1198, %v5613
        %5653 = vst.msk [vmem:[%s5650 + $0x38] sm:$0xff] %vm1198, %v5614
        %5654 = vst.msk [vmem:[%s5650 + $0x50] sm:$0xff] %vm1198, %v5615
        %5655 = vst.msk [vmem:[%s5650 + $0x68] sm:$0xff] %vm1198, %v5616
        %5656 = vst.msk [vmem:[%s5650 + $0x80] sm:$0xff] %vm1198, %v5617
        %5657 = vst.msk [vmem:[%s5650 + $0x98] sm:$0xff] %vm1198, %v5618
        %5658 = vst.msk [vmem:[%s5650 + $0xb0] sm:$0xff] %vm1198, %v5619
        %v5659 = vld [vmem:[#allocation3 + $0x7] sm:$0xff]
        %v5660 = vld [vmem:[#allocation3 + $0x1f] sm:$0xff]
        %v5661 = vld [vmem:[#allocation3 + $0x37] sm:$0xff]
        %v5662 = vld [vmem:[#allocation3 + $0x4f] sm:$0xff]
        %v5663 = vld [vmem:[#allocation3 + $0x67] sm:$0xff]
        %v5664 = vld [vmem:[#allocation3 + $0x7f] sm:$0xff]
        %v5665 = vld [vmem:[#allocation3 + $0x97] sm:$0xff]
        %v5666 = vld [vmem:[#allocation3 + $0xaf] sm:$0xff]
        %v5667 = vld [vmem:[#allocation6] sm:$0xff]
        %v5668 = vld [vmem:[#allocation6 + $0x8] sm:$0xff]
        %v5669 = vld [vmem:[#allocation6 + $0x10] sm:$0xff]
        %v5670 = vld [vmem:[#allocation6 + $0x18] sm:$0xff]
        %v5671 = vld [vmem:[#allocation6 + $0x20] sm:$0xff]
        %v5672 = vld [vmem:[#allocation6 + $0x28] sm:$0xff]
        %v5673 = vld [vmem:[#allocation6 + $0x30] sm:$0xff]
        %v5674 = vld [vmem:[#allocation6 + $0x38] sm:$0xff]
        %v5675 = vld [vmem:[#allocation3 + $0x8] sm:$0xff]
        %v5676 = vld [vmem:[#allocation3 + $0x20] sm:$0xff]
        %v5677 = vld [vmem:[#allocation3 + $0x38] sm:$0xff]
        %v5678 = vld [vmem:[#allocation3 + $0x50] sm:$0xff]
        %v5679 = vld [vmem:[#allocation3 + $0x68] sm:$0xff]
        %v5680 = vld [vmem:[#allocation3 + $0x80] sm:$0xff]
        %v5681 = vld [vmem:[#allocation3 + $0x98] sm:$0xff]
        %v5682 = vld [vmem:[#allocation3 + $0xb0] sm:$0xff]
        %s5683 = scalar_lea.vmem [#allocation6], 64
        %v5684 = vld [vmem:[%s5683] sm:$0xff]
        %v5685 = vld [vmem:[%s5683 + $0x8] sm:$0xff]
        %v5686 = vld [vmem:[%s5683 + $0x10] sm:$0xff]
        %v5687 = vld [vmem:[%s5683 + $0x18] sm:$0xff]
        %v5688 = vld [vmem:[%s5683 + $0x20] sm:$0xff]
        %v5689 = vld [vmem:[%s5683 + $0x28] sm:$0xff]
        %v5690 = vld [vmem:[%s5683 + $0x30] sm:$0xff]
        %v5691 = vld [vmem:[%s5683 + $0x38] sm:$0xff]
        %v5693 = vsel %vm1198, %v5675, 0
        %v5696 = vsel %vm1198, %v5676, 0
        %v5699 = vsel %vm1198, %v5677, 0
        %v5702 = vsel %vm1198, %v5678, 0
        %v5705 = vsel %vm1198, %v5679, 0
        %v5708 = vsel %vm1198, %v5680, 0
        %v5711 = vsel %vm1198, %v5681, 0
        %v5714 = vsel %vm1198, %v5682, 0
        %5716 = vmatprep.subr.mxu0 0.0
        %5717 = vmatpush1.msra.mxu0 0.0
        %5718 = vmatprep.subr.mxu0 0.0
        %5719 = vmatpush1.msra.mxu0 0.0
        %5720 = vmatprep.subr.mxu0 0.0
        %5721 = vmatpush1.msra.mxu0 0.0
        %5722 = vmatprep.subr.mxu0 0.0
        %5723 = vmatpush1.msra.mxu0 0.0
        %5724 = vmatprep.subr.mxu0 0.0
        %5725 = vmatpush1.msra.mxu0 0.0
        %5726 = vmatprep.subr.mxu0 0.0
        %5727 = vmatpush1.msra.mxu0 0.0
        %5728 = vmatprep.subr.mxu0 0.0
        %5729 = vmatpush1.msra.mxu0 0.0
        %5730 = vmatprep.subr.mxu0 0.0
        %5731 = vmatpush1.msra.mxu0 0.0
        %5732 = vmatprep.subr.mxu0 0.0
        %5733 = vmatpush1.msra.mxu0 %v5691
        %5734 = vmatprep.subr.mxu0 0.0
        %5735 = vmatpush1.msra.mxu0 %v5690
        %5736 = vmatprep.subr.mxu0 0.0
        %5737 = vmatpush1.msra.mxu0 %v5689
        %5738 = vmatprep.subr.mxu0 0.0
        %5739 = vmatpush1.msra.mxu0 %v5688
        %5740 = vmatprep.subr.mxu0 0.0
        %5741 = vmatpush1.msra.mxu0 %v5687
        %5742 = vmatprep.subr.mxu0 0.0
        %5743 = vmatpush1.msra.mxu0 %v5686
        %5744 = vmatprep.subr.mxu0 0.0
        %5745 = vmatpush1.msra.mxu0 %v5685
        %5746 = vmatprep.subr.mxu0 0.0
        %5747 = vmatpush1.msra.mxu0 %v5684
        %5748 = vmatprep.subr.mxu0 0.0
        %5749 = vmatpush2.msra.mxu0 0.0
        %5750 = vmatprep.subr.mxu0 0.0
        %5751 = vmatpush2.msra.mxu0 0.0
        %5752 = vmatprep.subr.mxu0 0.0
        %5753 = vmatpush2.msra.mxu0 0.0
        %5754 = vmatprep.subr.mxu0 0.0
        %5755 = vmatpush2.msra.mxu0 0.0
        %5756 = vmatprep.subr.mxu0 0.0
        %5757 = vmatpush2.msra.mxu0 0.0
        %5758 = vmatprep.subr.mxu0 0.0
        %5759 = vmatpush2.msra.mxu0 0.0
        %5760 = vmatprep.subr.mxu0 0.0
        %5761 = vmatpush2.msra.mxu0 0.0
        %5762 = vmatprep.subr.mxu0 0.0
        %5763 = vmatpush2.msra.mxu0 0.0
        %5764 = vmatprep.subr.mxu0 0.0
        %5765 = vmatpush2.msra.mxu0 0.0
        %5766 = vmatprep.subr.mxu0 0.0
        %5767 = vmatpush2.msra.mxu0 0.0
        %5768 = vmatprep.subr.mxu0 0.0
        %5769 = vmatpush2.msra.mxu0 0.0
        %5770 = vmatprep.subr.mxu0 0.0
        %5771 = vmatpush2.msra.mxu0 0.0
        %5772 = vmatprep.subr.mxu0 0.0
        %5773 = vmatpush2.msra.mxu0 0.0
        %5774 = vmatprep.subr.mxu0 0.0
        %5775 = vmatpush2.msra.mxu0 0.0
        %5776 = vmatprep.subr.mxu0 0.0
        %5777 = vmatpush2.msra.mxu0 0.0
        %5778 = vmatprep.subr.mxu0 0.0
        %5779 = vmatpush2.msra.mxu0 0.0
        %5780 = vmatprep.mubr.f32.mxu0 0.0
        %5781 = vmatmul.mubr.f32.gmra.mxu0 %v5693
        %v5782 = vpop.f32.mrf.mxu0
        %v5783 = vadd.f32 0.0, %v5782
        %v5784 = vpop.f32.mrf.mxu0
        %5785 = vmatprep.mubr.f32.mxu0 0.0
        %5786 = vmatmul.mubr.f32.gmra.mxu0 %v5696
        %v5787 = vpop.f32.mrf.mxu0
        %v5788 = vadd.f32 0.0, %v5787
        %v5789 = vpop.f32.mrf.mxu0
        %5790 = vmatprep.mubr.f32.mxu0 0.0
        %5791 = vmatmul.mubr.f32.gmra.mxu0 %v5699
        %v5792 = vpop.f32.mrf.mxu0
        %v5793 = vadd.f32 0.0, %v5792
        %v5794 = vpop.f32.mrf.mxu0
        %5795 = vmatprep.mubr.f32.mxu0 0.0
        %5796 = vmatmul.mubr.f32.gmra.mxu0 %v5702
        %v5797 = vpop.f32.mrf.mxu0
        %v5798 = vadd.f32 0.0, %v5797
        %v5799 = vpop.f32.mrf.mxu0
        %5800 = vmatprep.mubr.f32.mxu0 0.0
        %5801 = vmatmul.mubr.f32.gmra.mxu0 %v5705
        %v5802 = vpop.f32.mrf.mxu0
        %v5803 = vadd.f32 0.0, %v5802
        %v5804 = vpop.f32.mrf.mxu0
        %5805 = vmatprep.mubr.f32.mxu0 0.0
        %5806 = vmatmul.mubr.f32.gmra.mxu0 %v5708
        %v5807 = vpop.f32.mrf.mxu0
        %v5808 = vadd.f32 0.0, %v5807
        %v5809 = vpop.f32.mrf.mxu0
        %5810 = vmatprep.mubr.f32.mxu0 0.0
        %5811 = vmatmul.mubr.f32.gmra.mxu0 %v5711
        %v5812 = vpop.f32.mrf.mxu0
        %v5813 = vadd.f32 0.0, %v5812
        %v5814 = vpop.f32.mrf.mxu0
        %5815 = vmatprep.mubr.f32.mxu0 0.0
        %5816 = vmatmul.mubr.f32.gmra.mxu0 %v5714
        %v5817 = vpop.f32.mrf.mxu0
        %v5818 = vadd.f32 0.0, %v5817
        %v5819 = vpop.f32.mrf.mxu0
        %5820 = vdwg.mxu0
        %v5822 = vsel %vm1198, %v5659, 0
        %v5825 = vsel %vm1198, %v5660, 0
        %v5828 = vsel %vm1198, %v5661, 0
        %v5831 = vsel %vm1198, %v5662, 0
        %v5834 = vsel %vm1198, %v5663, 0
        %v5837 = vsel %vm1198, %v5664, 0
        %v5840 = vsel %vm1198, %v5665, 0
        %v5843 = vsel %vm1198, %v5666, 0
        %5845 = vmatprep.subr.mxu0 0.0
        %5846 = vmatpush1.msra.mxu0 0.0
        %5847 = vmatprep.subr.mxu0 0.0
        %5848 = vmatpush1.msra.mxu0 0.0
        %5849 = vmatprep.subr.mxu0 0.0
        %5850 = vmatpush1.msra.mxu0 0.0
        %5851 = vmatprep.subr.mxu0 0.0
        %5852 = vmatpush1.msra.mxu0 0.0
        %5853 = vmatprep.subr.mxu0 0.0
        %5854 = vmatpush1.msra.mxu0 0.0
        %5855 = vmatprep.subr.mxu0 0.0
        %5856 = vmatpush1.msra.mxu0 0.0
        %5857 = vmatprep.subr.mxu0 0.0
        %5858 = vmatpush1.msra.mxu0 0.0
        %5859 = vmatprep.subr.mxu0 0.0
        %5860 = vmatpush1.msra.mxu0 0.0
        %5861 = vmatprep.subr.mxu0 0.0
        %5862 = vmatpush1.msra.mxu0 %v5674
        %5863 = vmatprep.subr.mxu0 0.0
        %5864 = vmatpush1.msra.mxu0 %v5673
        %5865 = vmatprep.subr.mxu0 0.0
        %5866 = vmatpush1.msra.mxu0 %v5672
        %5867 = vmatprep.subr.mxu0 0.0
        %5868 = vmatpush1.msra.mxu0 %v5671
        %5869 = vmatprep.subr.mxu0 0.0
        %5870 = vmatpush1.msra.mxu0 %v5670
        %5871 = vmatprep.subr.mxu0 0.0
        %5872 = vmatpush1.msra.mxu0 %v5669
        %5873 = vmatprep.subr.mxu0 0.0
        %5874 = vmatpush1.msra.mxu0 %v5668
        %5875 = vmatprep.subr.mxu0 0.0
        %5876 = vmatpush1.msra.mxu0 %v5667
        %5877 = vmatprep.subr.mxu0 0.0
        %5878 = vmatpush2.msra.mxu0 0.0
        %5879 = vmatprep.subr.mxu0 0.0
        %5880 = vmatpush2.msra.mxu0 0.0
        %5881 = vmatprep.subr.mxu0 0.0
        %5882 = vmatpush2.msra.mxu0 0.0
        %5883 = vmatprep.subr.mxu0 0.0
        %5884 = vmatpush2.msra.mxu0 0.0
        %5885 = vmatprep.subr.mxu0 0.0
        %5886 = vmatpush2.msra.mxu0 0.0
        %5887 = vmatprep.subr.mxu0 0.0
        %5888 = vmatpush2.msra.mxu0 0.0
        %5889 = vmatprep.subr.mxu0 0.0
        %5890 = vmatpush2.msra.mxu0 0.0
        %5891 = vmatprep.subr.mxu0 0.0
        %5892 = vmatpush2.msra.mxu0 0.0
        %5893 = vmatprep.subr.mxu0 0.0
        %5894 = vmatpush2.msra.mxu0 0.0
        %5895 = vmatprep.subr.mxu0 0.0
        %5896 = vmatpush2.msra.mxu0 0.0
        %5897 = vmatprep.subr.mxu0 0.0
        %5898 = vmatpush2.msra.mxu0 0.0
        %5899 = vmatprep.subr.mxu0 0.0
        %5900 = vmatpush2.msra.mxu0 0.0
        %5901 = vmatprep.subr.mxu0 0.0
        %5902 = vmatpush2.msra.mxu0 0.0
        %5903 = vmatprep.subr.mxu0 0.0
        %5904 = vmatpush2.msra.mxu0 0.0
        %5905 = vmatprep.subr.mxu0 0.0
        %5906 = vmatpush2.msra.mxu0 0.0
        %5907 = vmatprep.subr.mxu0 0.0
        %5908 = vmatpush2.msra.mxu0 0.0
        %5909 = vmatprep.mubr.f32.mxu0 0.0
        %5910 = vmatmul.mubr.f32.gmra.mxu0 %v5822
        %v5911 = vpop.f32.mrf.mxu0
        %v5912 = vadd.f32 %v5783, %v5911
        %v5913 = vpop.f32.mrf.mxu0
        %5914 = vmatprep.mubr.f32.mxu0 0.0
        %5915 = vmatmul.mubr.f32.gmra.mxu0 %v5825
        %v5916 = vpop.f32.mrf.mxu0
        %v5917 = vadd.f32 %v5788, %v5916
        %v5918 = vpop.f32.mrf.mxu0
        %5919 = vmatprep.mubr.f32.mxu0 0.0
        %5920 = vmatmul.mubr.f32.gmra.mxu0 %v5828
        %v5921 = vpop.f32.mrf.mxu0
        %v5922 = vadd.f32 %v5793, %v5921
        %v5923 = vpop.f32.mrf.mxu0
        %5924 = vmatprep.mubr.f32.mxu0 0.0
        %5925 = vmatmul.mubr.f32.gmra.mxu0 %v5831
        %v5926 = vpop.f32.mrf.mxu0
        %v5927 = vadd.f32 %v5798, %v5926
        %v5928 = vpop.f32.mrf.mxu0
        %5929 = vmatprep.mubr.f32.mxu0 0.0
        %5930 = vmatmul.mubr.f32.gmra.mxu0 %v5834
        %v5931 = vpop.f32.mrf.mxu0
        %v5932 = vadd.f32 %v5803, %v5931
        %v5933 = vpop.f32.mrf.mxu0
        %5934 = vmatprep.mubr.f32.mxu0 0.0
        %5935 = vmatmul.mubr.f32.gmra.mxu0 %v5837
        %v5936 = vpop.f32.mrf.mxu0
        %v5937 = vadd.f32 %v5808, %v5936
        %v5938 = vpop.f32.mrf.mxu0
        %5939 = vmatprep.mubr.f32.mxu0 0.0
        %5940 = vmatmul.mubr.f32.gmra.mxu0 %v5840
        %v5941 = vpop.f32.mrf.mxu0
        %v5942 = vadd.f32 %v5813, %v5941
        %v5943 = vpop.f32.mrf.mxu0
        %5944 = vmatprep.mubr.f32.mxu0 0.0
        %5945 = vmatmul.mubr.f32.gmra.mxu0 %v5843
        %v5946 = vpop.f32.mrf.mxu0
        %v5947 = vadd.f32 %v5818, %v5946
        %v5948 = vpop.f32.mrf.mxu0
        %5949 = vdwg.mxu0
        %v5950 = vld [vmem:[#allocation3 + $0x9] sm:$0xff]
        %v5951 = vld [vmem:[#allocation3 + $0x21] sm:$0xff]
        %v5952 = vld [vmem:[#allocation3 + $0x39] sm:$0xff]
        %v5953 = vld [vmem:[#allocation3 + $0x51] sm:$0xff]
        %v5954 = vld [vmem:[#allocation3 + $0x69] sm:$0xff]
        %v5955 = vld [vmem:[#allocation3 + $0x81] sm:$0xff]
        %v5956 = vld [vmem:[#allocation3 + $0x99] sm:$0xff]
        %v5957 = vld [vmem:[#allocation3 + $0xb1] sm:$0xff]
        %s5958 = scalar_lea.vmem [#allocation6], 128
        %v5959 = vld [vmem:[%s5958] sm:$0xff]
        %v5960 = vld [vmem:[%s5958 + $0x8] sm:$0xff]
        %v5961 = vld [vmem:[%s5958 + $0x10] sm:$0xff]
        %v5962 = vld [vmem:[%s5958 + $0x18] sm:$0xff]
        %v5963 = vld [vmem:[%s5958 + $0x20] sm:$0xff]
        %v5964 = vld [vmem:[%s5958 + $0x28] sm:$0xff]
        %v5965 = vld [vmem:[%s5958 + $0x30] sm:$0xff]
        %v5966 = vld [vmem:[%s5958 + $0x38] sm:$0xff]
        %v5968 = vsel %vm1198, %v5950, 0
        %v5971 = vsel %vm1198, %v5951, 0
        %v5974 = vsel %vm1198, %v5952, 0
        %v5977 = vsel %vm1198, %v5953, 0
        %v5980 = vsel %vm1198, %v5954, 0
        %v5983 = vsel %vm1198, %v5955, 0
        %v5986 = vsel %vm1198, %v5956, 0
        %v5989 = vsel %vm1198, %v5957, 0
        %5991 = vmatprep.subr.mxu0 0.0
        %5992 = vmatpush1.msra.mxu0 0.0
        %5993 = vmatprep.subr.mxu0 0.0
        %5994 = vmatpush1.msra.mxu0 0.0
        %5995 = vmatprep.subr.mxu0 0.0
        %5996 = vmatpush1.msra.mxu0 0.0
        %5997 = vmatprep.subr.mxu0 0.0
        %5998 = vmatpush1.msra.mxu0 0.0
        %5999 = vmatprep.subr.mxu0 0.0
        %6000 = vmatpush1.msra.mxu0 0.0
        %6001 = vmatprep.subr.mxu0 0.0
        %6002 = vmatpush1.msra.mxu0 0.0
        %6003 = vmatprep.subr.mxu0 0.0
        %6004 = vmatpush1.msra.mxu0 0.0
        %6005 = vmatprep.subr.mxu0 0.0
        %6006 = vmatpush1.msra.mxu0 0.0
        %6007 = vmatprep.subr.mxu0 0.0
        %6008 = vmatpush1.msra.mxu0 %v5966
        %6009 = vmatprep.subr.mxu0 0.0
        %6010 = vmatpush1.msra.mxu0 %v5965
        %6011 = vmatprep.subr.mxu0 0.0
        %6012 = vmatpush1.msra.mxu0 %v5964
        %6013 = vmatprep.subr.mxu0 0.0
        %6014 = vmatpush1.msra.mxu0 %v5963
        %6015 = vmatprep.subr.mxu0 0.0
        %6016 = vmatpush1.msra.mxu0 %v5962
        %6017 = vmatprep.subr.mxu0 0.0
        %6018 = vmatpush1.msra.mxu0 %v5961
        %6019 = vmatprep.subr.mxu0 0.0
        %6020 = vmatpush1.msra.mxu0 %v5960
        %6021 = vmatprep.subr.mxu0 0.0
        %6022 = vmatpush1.msra.mxu0 %v5959
        %6023 = vmatprep.subr.mxu0 0.0
        %6024 = vmatpush2.msra.mxu0 0.0
        %6025 = vmatprep.subr.mxu0 0.0
        %6026 = vmatpush2.msra.mxu0 0.0
        %6027 = vmatprep.subr.mxu0 0.0
        %6028 = vmatpush2.msra.mxu0 0.0
        %6029 = vmatprep.subr.mxu0 0.0
        %6030 = vmatpush2.msra.mxu0 0.0
        %6031 = vmatprep.subr.mxu0 0.0
        %6032 = vmatpush2.msra.mxu0 0.0
        %6033 = vmatprep.subr.mxu0 0.0
        %6034 = vmatpush2.msra.mxu0 0.0
        %6035 = vmatprep.subr.mxu0 0.0
        %6036 = vmatpush2.msra.mxu0 0.0
        %6037 = vmatprep.subr.mxu0 0.0
        %6038 = vmatpush2.msra.mxu0 0.0
        %6039 = vmatprep.subr.mxu0 0.0
        %6040 = vmatpush2.msra.mxu0 0.0
        %6041 = vmatprep.subr.mxu0 0.0
        %6042 = vmatpush2.msra.mxu0 0.0
        %6043 = vmatprep.subr.mxu0 0.0
        %6044 = vmatpush2.msra.mxu0 0.0
        %6045 = vmatprep.subr.mxu0 0.0
        %6046 = vmatpush2.msra.mxu0 0.0
        %6047 = vmatprep.subr.mxu0 0.0
        %6048 = vmatpush2.msra.mxu0 0.0
        %6049 = vmatprep.subr.mxu0 0.0
        %6050 = vmatpush2.msra.mxu0 0.0
        %6051 = vmatprep.subr.mxu0 0.0
        %6052 = vmatpush2.msra.mxu0 0.0
        %6053 = vmatprep.subr.mxu0 0.0
        %6054 = vmatpush2.msra.mxu0 0.0
        %6055 = vmatprep.mubr.f32.mxu0 0.0
        %6056 = vmatmul.mubr.f32.gmra.mxu0 %v5968
        %v6057 = vpop.f32.mrf.mxu0
        %v6058 = vadd.f32 0.0, %v6057
        %v6059 = vpop.f32.mrf.mxu0
        %6060 = vmatprep.mubr.f32.mxu0 0.0
        %6061 = vmatmul.mubr.f32.gmra.mxu0 %v5971
        %v6062 = vpop.f32.mrf.mxu0
        %v6063 = vadd.f32 0.0, %v6062
        %v6064 = vpop.f32.mrf.mxu0
        %6065 = vmatprep.mubr.f32.mxu0 0.0
        %6066 = vmatmul.mubr.f32.gmra.mxu0 %v5974
        %v6067 = vpop.f32.mrf.mxu0
        %v6068 = vadd.f32 0.0, %v6067
        %v6069 = vpop.f32.mrf.mxu0
        %6070 = vmatprep.mubr.f32.mxu0 0.0
        %6071 = vmatmul.mubr.f32.gmra.mxu0 %v5977
        %v6072 = vpop.f32.mrf.mxu0
        %v6073 = vadd.f32 0.0, %v6072
        %v6074 = vpop.f32.mrf.mxu0
        %6075 = vmatprep.mubr.f32.mxu0 0.0
        %6076 = vmatmul.mubr.f32.gmra.mxu0 %v5980
        %v6077 = vpop.f32.mrf.mxu0
        %v6078 = vadd.f32 0.0, %v6077
        %v6079 = vpop.f32.mrf.mxu0
        %6080 = vmatprep.mubr.f32.mxu0 0.0
        %6081 = vmatmul.mubr.f32.gmra.mxu0 %v5983
        %v6082 = vpop.f32.mrf.mxu0
        %v6083 = vadd.f32 0.0, %v6082
        %v6084 = vpop.f32.mrf.mxu0
        %6085 = vmatprep.mubr.f32.mxu0 0.0
        %6086 = vmatmul.mubr.f32.gmra.mxu0 %v5986
        %v6087 = vpop.f32.mrf.mxu0
        %v6088 = vadd.f32 0.0, %v6087
        %v6089 = vpop.f32.mrf.mxu0
        %6090 = vmatprep.mubr.f32.mxu0 0.0
        %6091 = vmatmul.mubr.f32.gmra.mxu0 %v5989
        %v6092 = vpop.f32.mrf.mxu0
        %v6093 = vadd.f32 0.0, %v6092
        %v6094 = vpop.f32.mrf.mxu0
        %6095 = vdwg.mxu0
        %v6096 = vadd.f32 %v5912, %v6058
        %v6097 = vadd.f32 %v5917, %v6063
        %v6098 = vadd.f32 %v5922, %v6068
        %v6099 = vadd.f32 %v5927, %v6073
        %v6100 = vadd.f32 %v5932, %v6078
        %v6101 = vadd.f32 %v5937, %v6083
        %v6102 = vadd.f32 %v5942, %v6088
        %v6103 = vadd.f32 %v5947, %v6093
        %v6104 = vld [vmem:[%s5650 + $0x7] sm:$0xff]
        %v6105 = vld [vmem:[%s5650 + $0x1f] sm:$0xff]
        %v6106 = vld [vmem:[%s5650 + $0x37] sm:$0xff]
        %v6107 = vld [vmem:[%s5650 + $0x4f] sm:$0xff]
        %v6108 = vld [vmem:[%s5650 + $0x67] sm:$0xff]
        %v6109 = vld [vmem:[%s5650 + $0x7f] sm:$0xff]
        %v6110 = vld [vmem:[%s5650 + $0x97] sm:$0xff]
        %v6111 = vld [vmem:[%s5650 + $0xaf] sm:$0xff]
        %s6112 = scalar_lea.vmem [#allocation6], 192
        %v6113 = vld [vmem:[%s6112] sm:$0xff]
        %v6114 = vld [vmem:[%s6112 + $0x8] sm:$0xff]
        %v6115 = vld [vmem:[%s6112 + $0x10] sm:$0xff]
        %v6116 = vld [vmem:[%s6112 + $0x18] sm:$0xff]
        %v6117 = vld [vmem:[%s6112 + $0x20] sm:$0xff]
        %v6118 = vld [vmem:[%s6112 + $0x28] sm:$0xff]
        %v6119 = vld [vmem:[%s6112 + $0x30] sm:$0xff]
        %v6120 = vld [vmem:[%s6112 + $0x38] sm:$0xff]
        %v6122 = vsel %vm1198, %v6104, 0
        %v6125 = vsel %vm1198, %v6105, 0
        %v6128 = vsel %vm1198, %v6106, 0
        %v6131 = vsel %vm1198, %v6107, 0
        %v6134 = vsel %vm1198, %v6108, 0
        %v6137 = vsel %vm1198, %v6109, 0
        %v6140 = vsel %vm1198, %v6110, 0
        %v6143 = vsel %vm1198, %v6111, 0
        %6145 = vmatprep.subr.mxu0 0.0
        %6146 = vmatpush1.msra.mxu0 0.0
        %6147 = vmatprep.subr.mxu0 0.0
        %6148 = vmatpush1.msra.mxu0 0.0
        %6149 = vmatprep.subr.mxu0 0.0
        %6150 = vmatpush1.msra.mxu0 0.0
        %6151 = vmatprep.subr.mxu0 0.0
        %6152 = vmatpush1.msra.mxu0 0.0
        %6153 = vmatprep.subr.mxu0 0.0
        %6154 = vmatpush1.msra.mxu0 0.0
        %6155 = vmatprep.subr.mxu0 0.0
        %6156 = vmatpush1.msra.mxu0 0.0
        %6157 = vmatprep.subr.mxu0 0.0
        %6158 = vmatpush1.msra.mxu0 0.0
        %6159 = vmatprep.subr.mxu0 0.0
        %6160 = vmatpush1.msra.mxu0 0.0
        %6161 = vmatprep.subr.mxu0 0.0
        %6162 = vmatpush1.msra.mxu0 %v6120
        %6163 = vmatprep.subr.mxu0 0.0
        %6164 = vmatpush1.msra.mxu0 %v6119
        %6165 = vmatprep.subr.mxu0 0.0
        %6166 = vmatpush1.msra.mxu0 %v6118
        %6167 = vmatprep.subr.mxu0 0.0
        %6168 = vmatpush1.msra.mxu0 %v6117
        %6169 = vmatprep.subr.mxu0 0.0
        %6170 = vmatpush1.msra.mxu0 %v6116
        %6171 = vmatprep.subr.mxu0 0.0
        %6172 = vmatpush1.msra.mxu0 %v6115
        %6173 = vmatprep.subr.mxu0 0.0
        %6174 = vmatpush1.msra.mxu0 %v6114
        %6175 = vmatprep.subr.mxu0 0.0
        %6176 = vmatpush1.msra.mxu0 %v6113
        %6177 = vmatprep.subr.mxu0 0.0
        %6178 = vmatpush2.msra.mxu0 0.0
        %6179 = vmatprep.subr.mxu0 0.0
        %6180 = vmatpush2.msra.mxu0 0.0
        %6181 = vmatprep.subr.mxu0 0.0
        %6182 = vmatpush2.msra.mxu0 0.0
        %6183 = vmatprep.subr.mxu0 0.0
        %6184 = vmatpush2.msra.mxu0 0.0
        %6185 = vmatprep.subr.mxu0 0.0
        %6186 = vmatpush2.msra.mxu0 0.0
        %6187 = vmatprep.subr.mxu0 0.0
        %6188 = vmatpush2.msra.mxu0 0.0
        %6189 = vmatprep.subr.mxu0 0.0
        %6190 = vmatpush2.msra.mxu0 0.0
        %6191 = vmatprep.subr.mxu0 0.0
        %6192 = vmatpush2.msra.mxu0 0.0
        %6193 = vmatprep.subr.mxu0 0.0
        %6194 = vmatpush2.msra.mxu0 0.0
        %6195 = vmatprep.subr.mxu0 0.0
        %6196 = vmatpush2.msra.mxu0 0.0
        %6197 = vmatprep.subr.mxu0 0.0
        %6198 = vmatpush2.msra.mxu0 0.0
        %6199 = vmatprep.subr.mxu0 0.0
        %6200 = vmatpush2.msra.mxu0 0.0
        %6201 = vmatprep.subr.mxu0 0.0
        %6202 = vmatpush2.msra.mxu0 0.0
        %6203 = vmatprep.subr.mxu0 0.0
        %6204 = vmatpush2.msra.mxu0 0.0
        %6205 = vmatprep.subr.mxu0 0.0
        %6206 = vmatpush2.msra.mxu0 0.0
        %6207 = vmatprep.subr.mxu0 0.0
        %6208 = vmatpush2.msra.mxu0 0.0
        %6209 = vmatprep.mubr.f32.mxu0 0.0
        %6210 = vmatmul.mubr.f32.gmra.mxu0 %v6122
        %v6211 = vpop.f32.mrf.mxu0
        %v6212 = vadd.f32 0.0, %v6211
        %v6213 = vpop.f32.mrf.mxu0
        %6214 = vmatprep.mubr.f32.mxu0 0.0
        %6215 = vmatmul.mubr.f32.gmra.mxu0 %v6125
        %v6216 = vpop.f32.mrf.mxu0
        %v6217 = vadd.f32 0.0, %v6216
        %v6218 = vpop.f32.mrf.mxu0
        %6219 = vmatprep.mubr.f32.mxu0 0.0
        %6220 = vmatmul.mubr.f32.gmra.mxu0 %v6128
        %v6221 = vpop.f32.mrf.mxu0
        %v6222 = vadd.f32 0.0, %v6221
        %v6223 = vpop.f32.mrf.mxu0
        %6224 = vmatprep.mubr.f32.mxu0 0.0
        %6225 = vmatmul.mubr.f32.gmra.mxu0 %v6131
        %v6226 = vpop.f32.mrf.mxu0
        %v6227 = vadd.f32 0.0, %v6226
        %v6228 = vpop.f32.mrf.mxu0
        %6229 = vmatprep.mubr.f32.mxu0 0.0
        %6230 = vmatmul.mubr.f32.gmra.mxu0 %v6134
        %v6231 = vpop.f32.mrf.mxu0
        %v6232 = vadd.f32 0.0, %v6231
        %v6233 = vpop.f32.mrf.mxu0
        %6234 = vmatprep.mubr.f32.mxu0 0.0
        %6235 = vmatmul.mubr.f32.gmra.mxu0 %v6137
        %v6236 = vpop.f32.mrf.mxu0
        %v6237 = vadd.f32 0.0, %v6236
        %v6238 = vpop.f32.mrf.mxu0
        %6239 = vmatprep.mubr.f32.mxu0 0.0
        %6240 = vmatmul.mubr.f32.gmra.mxu0 %v6140
        %v6241 = vpop.f32.mrf.mxu0
        %v6242 = vadd.f32 0.0, %v6241
        %v6243 = vpop.f32.mrf.mxu0
        %6244 = vmatprep.mubr.f32.mxu0 0.0
        %6245 = vmatmul.mubr.f32.gmra.mxu0 %v6143
        %v6246 = vpop.f32.mrf.mxu0
        %v6247 = vadd.f32 0.0, %v6246
        %v6248 = vpop.f32.mrf.mxu0
        %6249 = vdwg.mxu0
        %v6250 = vadd.f32 %v6096, %v6212
        %v6251 = vadd.f32 %v6097, %v6217
        %v6252 = vadd.f32 %v6098, %v6222
        %v6253 = vadd.f32 %v6099, %v6227
        %v6254 = vadd.f32 %v6100, %v6232
        %v6255 = vadd.f32 %v6101, %v6237
        %v6256 = vadd.f32 %v6102, %v6242
        %v6257 = vadd.f32 %v6103, %v6247
        %v6258 = vld [vmem:[%s5650 + $0x8] sm:$0xff]
        %v6259 = vld [vmem:[%s5650 + $0x20] sm:$0xff]
        %v6260 = vld [vmem:[%s5650 + $0x38] sm:$0xff]
        %v6261 = vld [vmem:[%s5650 + $0x50] sm:$0xff]
        %v6262 = vld [vmem:[%s5650 + $0x68] sm:$0xff]
        %v6263 = vld [vmem:[%s5650 + $0x80] sm:$0xff]
        %v6264 = vld [vmem:[%s5650 + $0x98] sm:$0xff]
        %v6265 = vld [vmem:[%s5650 + $0xb0] sm:$0xff]
        %s6266 = scalar_lea.vmem [#allocation6], 256
        %v6267 = vld [vmem:[%s6266] sm:$0xff]
        %v6268 = vld [vmem:[%s6266 + $0x8] sm:$0xff]
        %v6269 = vld [vmem:[%s6266 + $0x10] sm:$0xff]
        %v6270 = vld [vmem:[%s6266 + $0x18] sm:$0xff]
        %v6271 = vld [vmem:[%s6266 + $0x20] sm:$0xff]
        %v6272 = vld [vmem:[%s6266 + $0x28] sm:$0xff]
        %v6273 = vld [vmem:[%s6266 + $0x30] sm:$0xff]
        %v6274 = vld [vmem:[%s6266 + $0x38] sm:$0xff]
        %v6276 = vsel %vm1198, %v6258, 0
        %v6279 = vsel %vm1198, %v6259, 0
        %v6282 = vsel %vm1198, %v6260, 0
        %v6285 = vsel %vm1198, %v6261, 0
        %v6288 = vsel %vm1198, %v6262, 0
        %v6291 = vsel %vm1198, %v6263, 0
        %v6294 = vsel %vm1198, %v6264, 0
        %v6297 = vsel %vm1198, %v6265, 0
        %6299 = vmatprep.subr.mxu0 0.0
        %6300 = vmatpush1.msra.mxu0 0.0
        %6301 = vmatprep.subr.mxu0 0.0
        %6302 = vmatpush1.msra.mxu0 0.0
        %6303 = vmatprep.subr.mxu0 0.0
        %6304 = vmatpush1.msra.mxu0 0.0
        %6305 = vmatprep.subr.mxu0 0.0
        %6306 = vmatpush1.msra.mxu0 0.0
        %6307 = vmatprep.subr.mxu0 0.0
        %6308 = vmatpush1.msra.mxu0 0.0
        %6309 = vmatprep.subr.mxu0 0.0
        %6310 = vmatpush1.msra.mxu0 0.0
        %6311 = vmatprep.subr.mxu0 0.0
        %6312 = vmatpush1.msra.mxu0 0.0
        %6313 = vmatprep.subr.mxu0 0.0
        %6314 = vmatpush1.msra.mxu0 0.0
        %6315 = vmatprep.subr.mxu0 0.0
        %6316 = vmatpush1.msra.mxu0 %v6274
        %6317 = vmatprep.subr.mxu0 0.0
        %6318 = vmatpush1.msra.mxu0 %v6273
        %6319 = vmatprep.subr.mxu0 0.0
        %6320 = vmatpush1.msra.mxu0 %v6272
        %6321 = vmatprep.subr.mxu0 0.0
        %6322 = vmatpush1.msra.mxu0 %v6271
        %6323 = vmatprep.subr.mxu0 0.0
        %6324 = vmatpush1.msra.mxu0 %v6270
        %6325 = vmatprep.subr.mxu0 0.0
        %6326 = vmatpush1.msra.mxu0 %v6269
        %6327 = vmatprep.subr.mxu0 0.0
        %6328 = vmatpush1.msra.mxu0 %v6268
        %6329 = vmatprep.subr.mxu0 0.0
        %6330 = vmatpush1.msra.mxu0 %v6267
        %6331 = vmatprep.subr.mxu0 0.0
        %6332 = vmatpush2.msra.mxu0 0.0
        %6333 = vmatprep.subr.mxu0 0.0
        %6334 = vmatpush2.msra.mxu0 0.0
        %6335 = vmatprep.subr.mxu0 0.0
        %6336 = vmatpush2.msra.mxu0 0.0
        %6337 = vmatprep.subr.mxu0 0.0
        %6338 = vmatpush2.msra.mxu0 0.0
        %6339 = vmatprep.subr.mxu0 0.0
        %6340 = vmatpush2.msra.mxu0 0.0
        %6341 = vmatprep.subr.mxu0 0.0
        %6342 = vmatpush2.msra.mxu0 0.0
        %6343 = vmatprep.subr.mxu0 0.0
        %6344 = vmatpush2.msra.mxu0 0.0
        %6345 = vmatprep.subr.mxu0 0.0
        %6346 = vmatpush2.msra.mxu0 0.0
        %6347 = vmatprep.subr.mxu0 0.0
        %6348 = vmatpush2.msra.mxu0 0.0
        %6349 = vmatprep.subr.mxu0 0.0
        %6350 = vmatpush2.msra.mxu0 0.0
        %6351 = vmatprep.subr.mxu0 0.0
        %6352 = vmatpush2.msra.mxu0 0.0
        %6353 = vmatprep.subr.mxu0 0.0
        %6354 = vmatpush2.msra.mxu0 0.0
        %6355 = vmatprep.subr.mxu0 0.0
        %6356 = vmatpush2.msra.mxu0 0.0
        %6357 = vmatprep.subr.mxu0 0.0
        %6358 = vmatpush2.msra.mxu0 0.0
        %6359 = vmatprep.subr.mxu0 0.0
        %6360 = vmatpush2.msra.mxu0 0.0
        %6361 = vmatprep.subr.mxu0 0.0
        %6362 = vmatpush2.msra.mxu0 0.0
        %6363 = vmatprep.mubr.f32.mxu0 0.0
        %6364 = vmatmul.mubr.f32.gmra.mxu0 %v6276
        %v6365 = vpop.f32.mrf.mxu0
        %v6366 = vadd.f32 0.0, %v6365
        %v6367 = vpop.f32.mrf.mxu0
        %6368 = vmatprep.mubr.f32.mxu0 0.0
        %6369 = vmatmul.mubr.f32.gmra.mxu0 %v6279
        %v6370 = vpop.f32.mrf.mxu0
        %v6371 = vadd.f32 0.0, %v6370
        %v6372 = vpop.f32.mrf.mxu0
        %6373 = vmatprep.mubr.f32.mxu0 0.0
        %6374 = vmatmul.mubr.f32.gmra.mxu0 %v6282
        %v6375 = vpop.f32.mrf.mxu0
        %v6376 = vadd.f32 0.0, %v6375
        %v6377 = vpop.f32.mrf.mxu0
        %6378 = vmatprep.mubr.f32.mxu0 0.0
        %6379 = vmatmul.mubr.f32.gmra.mxu0 %v6285
        %v6380 = vpop.f32.mrf.mxu0
        %v6381 = vadd.f32 0.0, %v6380
        %v6382 = vpop.f32.mrf.mxu0
        %6383 = vmatprep.mubr.f32.mxu0 0.0
        %6384 = vmatmul.mubr.f32.gmra.mxu0 %v6288
        %v6385 = vpop.f32.mrf.mxu0
        %v6386 = vadd.f32 0.0, %v6385
        %v6387 = vpop.f32.mrf.mxu0
        %6388 = vmatprep.mubr.f32.mxu0 0.0
        %6389 = vmatmul.mubr.f32.gmra.mxu0 %v6291
        %v6390 = vpop.f32.mrf.mxu0
        %v6391 = vadd.f32 0.0, %v6390
        %v6392 = vpop.f32.mrf.mxu0
        %6393 = vmatprep.mubr.f32.mxu0 0.0
        %6394 = vmatmul.mubr.f32.gmra.mxu0 %v6294
        %v6395 = vpop.f32.mrf.mxu0
        %v6396 = vadd.f32 0.0, %v6395
        %v6397 = vpop.f32.mrf.mxu0
        %6398 = vmatprep.mubr.f32.mxu0 0.0
        %6399 = vmatmul.mubr.f32.gmra.mxu0 %v6297
        %v6400 = vpop.f32.mrf.mxu0
        %v6401 = vadd.f32 0.0, %v6400
        %v6402 = vpop.f32.mrf.mxu0
        %6403 = vdwg.mxu0
        %v6404 = vadd.f32 %v6250, %v6366
        %v6405 = vadd.f32 %v6251, %v6371
        %v6406 = vadd.f32 %v6252, %v6376
        %v6407 = vadd.f32 %v6253, %v6381
        %v6408 = vadd.f32 %v6254, %v6386
        %v6409 = vadd.f32 %v6255, %v6391
        %v6410 = vadd.f32 %v6256, %v6396
        %v6411 = vadd.f32 %v6257, %v6401
        %v6412 = vld [vmem:[%s5650 + $0x9] sm:$0xff]
        %v6413 = vld [vmem:[%s5650 + $0x21] sm:$0xff]
        %v6414 = vld [vmem:[%s5650 + $0x39] sm:$0xff]
        %v6415 = vld [vmem:[%s5650 + $0x51] sm:$0xff]
        %v6416 = vld [vmem:[%s5650 + $0x69] sm:$0xff]
        %v6417 = vld [vmem:[%s5650 + $0x81] sm:$0xff]
        %v6418 = vld [vmem:[%s5650 + $0x99] sm:$0xff]
        %v6419 = vld [vmem:[%s5650 + $0xb1] sm:$0xff]
        %s6420 = scalar_lea.vmem [#allocation6], 320
        %v6421 = vld [vmem:[%s6420] sm:$0xff]
        %v6422 = vld [vmem:[%s6420 + $0x8] sm:$0xff]
        %v6423 = vld [vmem:[%s6420 + $0x10] sm:$0xff]
        %v6424 = vld [vmem:[%s6420 + $0x18] sm:$0xff]
        %v6425 = vld [vmem:[%s6420 + $0x20] sm:$0xff]
        %v6426 = vld [vmem:[%s6420 + $0x28] sm:$0xff]
        %v6427 = vld [vmem:[%s6420 + $0x30] sm:$0xff]
        %v6428 = vld [vmem:[%s6420 + $0x38] sm:$0xff]
        %v6430 = vsel %vm1198, %v6412, 0
        %v6433 = vsel %vm1198, %v6413, 0
        %v6436 = vsel %vm1198, %v6414, 0
        %v6439 = vsel %vm1198, %v6415, 0
        %v6442 = vsel %vm1198, %v6416, 0
        %v6445 = vsel %vm1198, %v6417, 0
        %v6448 = vsel %vm1198, %v6418, 0
        %v6451 = vsel %vm1198, %v6419, 0
        %6453 = vmatprep.subr.mxu0 0.0
        %6454 = vmatpush1.msra.mxu0 0.0
        %6455 = vmatprep.subr.mxu0 0.0
        %6456 = vmatpush1.msra.mxu0 0.0
        %6457 = vmatprep.subr.mxu0 0.0
        %6458 = vmatpush1.msra.mxu0 0.0
        %6459 = vmatprep.subr.mxu0 0.0
        %6460 = vmatpush1.msra.mxu0 0.0
        %6461 = vmatprep.subr.mxu0 0.0
        %6462 = vmatpush1.msra.mxu0 0.0
        %6463 = vmatprep.subr.mxu0 0.0
        %6464 = vmatpush1.msra.mxu0 0.0
        %6465 = vmatprep.subr.mxu0 0.0
        %6466 = vmatpush1.msra.mxu0 0.0
        %6467 = vmatprep.subr.mxu0 0.0
        %6468 = vmatpush1.msra.mxu0 0.0
        %6469 = vmatprep.subr.mxu0 0.0
        %6470 = vmatpush1.msra.mxu0 %v6428
        %6471 = vmatprep.subr.mxu0 0.0
        %6472 = vmatpush1.msra.mxu0 %v6427
        %6473 = vmatprep.subr.mxu0 0.0
        %6474 = vmatpush1.msra.mxu0 %v6426
        %6475 = vmatprep.subr.mxu0 0.0
        %6476 = vmatpush1.msra.mxu0 %v6425
        %6477 = vmatprep.subr.mxu0 0.0
        %6478 = vmatpush1.msra.mxu0 %v6424
        %6479 = vmatprep.subr.mxu0 0.0
        %6480 = vmatpush1.msra.mxu0 %v6423
        %6481 = vmatprep.subr.mxu0 0.0
        %6482 = vmatpush1.msra.mxu0 %v6422
        %6483 = vmatprep.subr.mxu0 0.0
        %6484 = vmatpush1.msra.mxu0 %v6421
        %6485 = vmatprep.subr.mxu0 0.0
        %6486 = vmatpush2.msra.mxu0 0.0
        %6487 = vmatprep.subr.mxu0 0.0
        %6488 = vmatpush2.msra.mxu0 0.0
        %6489 = vmatprep.subr.mxu0 0.0
        %6490 = vmatpush2.msra.mxu0 0.0
        %6491 = vmatprep.subr.mxu0 0.0
        %6492 = vmatpush2.msra.mxu0 0.0
        %6493 = vmatprep.subr.mxu0 0.0
        %6494 = vmatpush2.msra.mxu0 0.0
        %6495 = vmatprep.subr.mxu0 0.0
        %6496 = vmatpush2.msra.mxu0 0.0
        %6497 = vmatprep.subr.mxu0 0.0
        %6498 = vmatpush2.msra.mxu0 0.0
        %6499 = vmatprep.subr.mxu0 0.0
        %6500 = vmatpush2.msra.mxu0 0.0
        %6501 = vmatprep.subr.mxu0 0.0
        %6502 = vmatpush2.msra.mxu0 0.0
        %6503 = vmatprep.subr.mxu0 0.0
        %6504 = vmatpush2.msra.mxu0 0.0
        %6505 = vmatprep.subr.mxu0 0.0
        %6506 = vmatpush2.msra.mxu0 0.0
        %6507 = vmatprep.subr.mxu0 0.0
        %6508 = vmatpush2.msra.mxu0 0.0
        %6509 = vmatprep.subr.mxu0 0.0
        %6510 = vmatpush2.msra.mxu0 0.0
        %6511 = vmatprep.subr.mxu0 0.0
        %6512 = vmatpush2.msra.mxu0 0.0
        %6513 = vmatprep.subr.mxu0 0.0
        %6514 = vmatpush2.msra.mxu0 0.0
        %6515 = vmatprep.subr.mxu0 0.0
        %6516 = vmatpush2.msra.mxu0 0.0
        %6517 = vmatprep.mubr.f32.mxu0 0.0
        %6518 = vmatmul.mubr.f32.gmra.mxu0 %v6430
        %v6519 = vpop.f32.mrf.mxu0
        %v6520 = vadd.f32 0.0, %v6519
        %v6521 = vpop.f32.mrf.mxu0
        %6522 = vmatprep.mubr.f32.mxu0 0.0
        %6523 = vmatmul.mubr.f32.gmra.mxu0 %v6433
        %v6524 = vpop.f32.mrf.mxu0
        %v6525 = vadd.f32 0.0, %v6524
        %v6526 = vpop.f32.mrf.mxu0
        %6527 = vmatprep.mubr.f32.mxu0 0.0
        %6528 = vmatmul.mubr.f32.gmra.mxu0 %v6436
        %v6529 = vpop.f32.mrf.mxu0
        %v6530 = vadd.f32 0.0, %v6529
        %v6531 = vpop.f32.mrf.mxu0
        %6532 = vmatprep.mubr.f32.mxu0 0.0
        %6533 = vmatmul.mubr.f32.gmra.mxu0 %v6439
        %v6534 = vpop.f32.mrf.mxu0
        %v6535 = vadd.f32 0.0, %v6534
        %v6536 = vpop.f32.mrf.mxu0
        %6537 = vmatprep.mubr.f32.mxu0 0.0
        %6538 = vmatmul.mubr.f32.gmra.mxu0 %v6442
        %v6539 = vpop.f32.mrf.mxu0
        %v6540 = vadd.f32 0.0, %v6539
        %v6541 = vpop.f32.mrf.mxu0
        %6542 = vmatprep.mubr.f32.mxu0 0.0
        %6543 = vmatmul.mubr.f32.gmra.mxu0 %v6445
        %v6544 = vpop.f32.mrf.mxu0
        %v6545 = vadd.f32 0.0, %v6544
        %v6546 = vpop.f32.mrf.mxu0
        %6547 = vmatprep.mubr.f32.mxu0 0.0
        %6548 = vmatmul.mubr.f32.gmra.mxu0 %v6448
        %v6549 = vpop.f32.mrf.mxu0
        %v6550 = vadd.f32 0.0, %v6549
        %v6551 = vpop.f32.mrf.mxu0
        %6552 = vmatprep.mubr.f32.mxu0 0.0
        %6553 = vmatmul.mubr.f32.gmra.mxu0 %v6451
        %v6554 = vpop.f32.mrf.mxu0
        %v6555 = vadd.f32 0.0, %v6554
        %v6556 = vpop.f32.mrf.mxu0
        %6557 = vdwg.mxu0
        %v6558 = vadd.f32 %v6404, %v6520
        %v6559 = vadd.f32 %v6405, %v6525
        %v6560 = vadd.f32 %v6406, %v6530
        %v6561 = vadd.f32 %v6407, %v6535
        %v6562 = vadd.f32 %v6408, %v6540
        %v6563 = vadd.f32 %v6409, %v6545
        %v6564 = vadd.f32 %v6410, %v6550
        %v6565 = vadd.f32 %v6411, %v6555
        %s6566 = scalar_lea.vmem [#allocation3], 48
        %v6567 = vld [vmem:[%s6566 + $0x7] sm:$0xff]
        %v6568 = vld [vmem:[%s6566 + $0x1f] sm:$0xff]
        %v6569 = vld [vmem:[%s6566 + $0x37] sm:$0xff]
        %v6570 = vld [vmem:[%s6566 + $0x4f] sm:$0xff]
        %v6571 = vld [vmem:[%s6566 + $0x67] sm:$0xff]
        %v6572 = vld [vmem:[%s6566 + $0x7f] sm:$0xff]
        %v6573 = vld [vmem:[%s6566 + $0x97] sm:$0xff]
        %v6574 = vld [vmem:[%s6566 + $0xaf] sm:$0xff]
        %s6575 = scalar_lea.vmem [#allocation6], 384
        %v6576 = vld [vmem:[%s6575] sm:$0xff]
        %v6577 = vld [vmem:[%s6575 + $0x8] sm:$0xff]
        %v6578 = vld [vmem:[%s6575 + $0x10] sm:$0xff]
        %v6579 = vld [vmem:[%s6575 + $0x18] sm:$0xff]
        %v6580 = vld [vmem:[%s6575 + $0x20] sm:$0xff]
        %v6581 = vld [vmem:[%s6575 + $0x28] sm:$0xff]
        %v6582 = vld [vmem:[%s6575 + $0x30] sm:$0xff]
        %v6583 = vld [vmem:[%s6575 + $0x38] sm:$0xff]
        %v6585 = vsel %vm1198, %v6567, 0
        %v6588 = vsel %vm1198, %v6568, 0
        %v6591 = vsel %vm1198, %v6569, 0
        %v6594 = vsel %vm1198, %v6570, 0
        %v6597 = vsel %vm1198, %v6571, 0
        %v6600 = vsel %vm1198, %v6572, 0
        %v6603 = vsel %vm1198, %v6573, 0
        %v6606 = vsel %vm1198, %v6574, 0
        %6608 = vmatprep.subr.mxu0 0.0
        %6609 = vmatpush1.msra.mxu0 0.0
        %6610 = vmatprep.subr.mxu0 0.0
        %6611 = vmatpush1.msra.mxu0 0.0
        %6612 = vmatprep.subr.mxu0 0.0
        %6613 = vmatpush1.msra.mxu0 0.0
        %6614 = vmatprep.subr.mxu0 0.0
        %6615 = vmatpush1.msra.mxu0 0.0
        %6616 = vmatprep.subr.mxu0 0.0
        %6617 = vmatpush1.msra.mxu0 0.0
        %6618 = vmatprep.subr.mxu0 0.0
        %6619 = vmatpush1.msra.mxu0 0.0
        %6620 = vmatprep.subr.mxu0 0.0
        %6621 = vmatpush1.msra.mxu0 0.0
        %6622 = vmatprep.subr.mxu0 0.0
        %6623 = vmatpush1.msra.mxu0 0.0
        %6624 = vmatprep.subr.mxu0 0.0
        %6625 = vmatpush1.msra.mxu0 %v6583
        %6626 = vmatprep.subr.mxu0 0.0
        %6627 = vmatpush1.msra.mxu0 %v6582
        %6628 = vmatprep.subr.mxu0 0.0
        %6629 = vmatpush1.msra.mxu0 %v6581
        %6630 = vmatprep.subr.mxu0 0.0
        %6631 = vmatpush1.msra.mxu0 %v6580
        %6632 = vmatprep.subr.mxu0 0.0
        %6633 = vmatpush1.msra.mxu0 %v6579
        %6634 = vmatprep.subr.mxu0 0.0
        %6635 = vmatpush1.msra.mxu0 %v6578
        %6636 = vmatprep.subr.mxu0 0.0
        %6637 = vmatpush1.msra.mxu0 %v6577
        %6638 = vmatprep.subr.mxu0 0.0
        %6639 = vmatpush1.msra.mxu0 %v6576
        %6640 = vmatprep.subr.mxu0 0.0
        %6641 = vmatpush2.msra.mxu0 0.0
        %6642 = vmatprep.subr.mxu0 0.0
        %6643 = vmatpush2.msra.mxu0 0.0
        %6644 = vmatprep.subr.mxu0 0.0
        %6645 = vmatpush2.msra.mxu0 0.0
        %6646 = vmatprep.subr.mxu0 0.0
        %6647 = vmatpush2.msra.mxu0 0.0
        %6648 = vmatprep.subr.mxu0 0.0
        %6649 = vmatpush2.msra.mxu0 0.0
        %6650 = vmatprep.subr.mxu0 0.0
        %6651 = vmatpush2.msra.mxu0 0.0
        %6652 = vmatprep.subr.mxu0 0.0
        %6653 = vmatpush2.msra.mxu0 0.0
        %6654 = vmatprep.subr.mxu0 0.0
        %6655 = vmatpush2.msra.mxu0 0.0
        %6656 = vmatprep.subr.mxu0 0.0
        %6657 = vmatpush2.msra.mxu0 0.0
        %6658 = vmatprep.subr.mxu0 0.0
        %6659 = vmatpush2.msra.mxu0 0.0
        %6660 = vmatprep.subr.mxu0 0.0
        %6661 = vmatpush2.msra.mxu0 0.0
        %6662 = vmatprep.subr.mxu0 0.0
        %6663 = vmatpush2.msra.mxu0 0.0
        %6664 = vmatprep.subr.mxu0 0.0
        %6665 = vmatpush2.msra.mxu0 0.0
        %6666 = vmatprep.subr.mxu0 0.0
        %6667 = vmatpush2.msra.mxu0 0.0
        %6668 = vmatprep.subr.mxu0 0.0
        %6669 = vmatpush2.msra.mxu0 0.0
        %6670 = vmatprep.subr.mxu0 0.0
        %6671 = vmatpush2.msra.mxu0 0.0
        %6672 = vmatprep.mubr.f32.mxu0 0.0
        %6673 = vmatmul.mubr.f32.gmra.mxu0 %v6585
        %v6674 = vpop.f32.mrf.mxu0
        %v6675 = vadd.f32 0.0, %v6674
        %v6676 = vpop.f32.mrf.mxu0
        %6677 = vmatprep.mubr.f32.mxu0 0.0
        %6678 = vmatmul.mubr.f32.gmra.mxu0 %v6588
        %v6679 = vpop.f32.mrf.mxu0
        %v6680 = vadd.f32 0.0, %v6679
        %v6681 = vpop.f32.mrf.mxu0
        %6682 = vmatprep.mubr.f32.mxu0 0.0
        %6683 = vmatmul.mubr.f32.gmra.mxu0 %v6591
        %v6684 = vpop.f32.mrf.mxu0
        %v6685 = vadd.f32 0.0, %v6684
        %v6686 = vpop.f32.mrf.mxu0
        %6687 = vmatprep.mubr.f32.mxu0 0.0
        %6688 = vmatmul.mubr.f32.gmra.mxu0 %v6594
        %v6689 = vpop.f32.mrf.mxu0
        %v6690 = vadd.f32 0.0, %v6689
        %v6691 = vpop.f32.mrf.mxu0
        %6692 = vmatprep.mubr.f32.mxu0 0.0
        %6693 = vmatmul.mubr.f32.gmra.mxu0 %v6597
        %v6694 = vpop.f32.mrf.mxu0
        %v6695 = vadd.f32 0.0, %v6694
        %v6696 = vpop.f32.mrf.mxu0
        %6697 = vmatprep.mubr.f32.mxu0 0.0
        %6698 = vmatmul.mubr.f32.gmra.mxu0 %v6600
        %v6699 = vpop.f32.mrf.mxu0
        %v6700 = vadd.f32 0.0, %v6699
        %v6701 = vpop.f32.mrf.mxu0
        %6702 = vmatprep.mubr.f32.mxu0 0.0
        %6703 = vmatmul.mubr.f32.gmra.mxu0 %v6603
        %v6704 = vpop.f32.mrf.mxu0
        %v6705 = vadd.f32 0.0, %v6704
        %v6706 = vpop.f32.mrf.mxu0
        %6707 = vmatprep.mubr.f32.mxu0 0.0
        %6708 = vmatmul.mubr.f32.gmra.mxu0 %v6606
        %v6709 = vpop.f32.mrf.mxu0
        %v6710 = vadd.f32 0.0, %v6709
        %v6711 = vpop.f32.mrf.mxu0
        %6712 = vdwg.mxu0
        %v6713 = vadd.f32 %v6558, %v6675
        %v6714 = vadd.f32 %v6559, %v6680
        %v6715 = vadd.f32 %v6560, %v6685
        %v6716 = vadd.f32 %v6561, %v6690
        %v6717 = vadd.f32 %v6562, %v6695
        %v6718 = vadd.f32 %v6563, %v6700
        %v6719 = vadd.f32 %v6564, %v6705
        %v6720 = vadd.f32 %v6565, %v6710
        %v6721 = vld [vmem:[%s6566 + $0x8] sm:$0xff]
        %v6722 = vld [vmem:[%s6566 + $0x20] sm:$0xff]
        %v6723 = vld [vmem:[%s6566 + $0x38] sm:$0xff]
        %v6724 = vld [vmem:[%s6566 + $0x50] sm:$0xff]
        %v6725 = vld [vmem:[%s6566 + $0x68] sm:$0xff]
        %v6726 = vld [vmem:[%s6566 + $0x80] sm:$0xff]
        %v6727 = vld [vmem:[%s6566 + $0x98] sm:$0xff]
        %v6728 = vld [vmem:[%s6566 + $0xb0] sm:$0xff]
        %s6729 = scalar_lea.vmem [#allocation6], 448
        %v6730 = vld [vmem:[%s6729] sm:$0xff]
        %v6731 = vld [vmem:[%s6729 + $0x8] sm:$0xff]
        %v6732 = vld [vmem:[%s6729 + $0x10] sm:$0xff]
        %v6733 = vld [vmem:[%s6729 + $0x18] sm:$0xff]
        %v6734 = vld [vmem:[%s6729 + $0x20] sm:$0xff]
        %v6735 = vld [vmem:[%s6729 + $0x28] sm:$0xff]
        %v6736 = vld [vmem:[%s6729 + $0x30] sm:$0xff]
        %v6737 = vld [vmem:[%s6729 + $0x38] sm:$0xff]
        %v6739 = vsel %vm1198, %v6721, 0
        %v6742 = vsel %vm1198, %v6722, 0
        %v6745 = vsel %vm1198, %v6723, 0
        %v6748 = vsel %vm1198, %v6724, 0
        %v6751 = vsel %vm1198, %v6725, 0
        %v6754 = vsel %vm1198, %v6726, 0
        %v6757 = vsel %vm1198, %v6727, 0
        %v6760 = vsel %vm1198, %v6728, 0
        %6762 = vmatprep.subr.mxu0 0.0
        %6763 = vmatpush1.msra.mxu0 0.0
        %6764 = vmatprep.subr.mxu0 0.0
        %6765 = vmatpush1.msra.mxu0 0.0
        %6766 = vmatprep.subr.mxu0 0.0
        %6767 = vmatpush1.msra.mxu0 0.0
        %6768 = vmatprep.subr.mxu0 0.0
        %6769 = vmatpush1.msra.mxu0 0.0
        %6770 = vmatprep.subr.mxu0 0.0
        %6771 = vmatpush1.msra.mxu0 0.0
        %6772 = vmatprep.subr.mxu0 0.0
        %6773 = vmatpush1.msra.mxu0 0.0
        %6774 = vmatprep.subr.mxu0 0.0
        %6775 = vmatpush1.msra.mxu0 0.0
        %6776 = vmatprep.subr.mxu0 0.0
        %6777 = vmatpush1.msra.mxu0 0.0
        %6778 = vmatprep.subr.mxu0 0.0
        %6779 = vmatpush1.msra.mxu0 %v6737
        %6780 = vmatprep.subr.mxu0 0.0
        %6781 = vmatpush1.msra.mxu0 %v6736
        %6782 = vmatprep.subr.mxu0 0.0
        %6783 = vmatpush1.msra.mxu0 %v6735
        %6784 = vmatprep.subr.mxu0 0.0
        %6785 = vmatpush1.msra.mxu0 %v6734
        %6786 = vmatprep.subr.mxu0 0.0
        %6787 = vmatpush1.msra.mxu0 %v6733
        %6788 = vmatprep.subr.mxu0 0.0
        %6789 = vmatpush1.msra.mxu0 %v6732
        %6790 = vmatprep.subr.mxu0 0.0
        %6791 = vmatpush1.msra.mxu0 %v6731
        %6792 = vmatprep.subr.mxu0 0.0
        %6793 = vmatpush1.msra.mxu0 %v6730
        %6794 = vmatprep.subr.mxu0 0.0
        %6795 = vmatpush2.msra.mxu0 0.0
        %6796 = vmatprep.subr.mxu0 0.0
        %6797 = vmatpush2.msra.mxu0 0.0
        %6798 = vmatprep.subr.mxu0 0.0
        %6799 = vmatpush2.msra.mxu0 0.0
        %6800 = vmatprep.subr.mxu0 0.0
        %6801 = vmatpush2.msra.mxu0 0.0
        %6802 = vmatprep.subr.mxu0 0.0
        %6803 = vmatpush2.msra.mxu0 0.0
        %6804 = vmatprep.subr.mxu0 0.0
        %6805 = vmatpush2.msra.mxu0 0.0
        %6806 = vmatprep.subr.mxu0 0.0
        %6807 = vmatpush2.msra.mxu0 0.0
        %6808 = vmatprep.subr.mxu0 0.0
        %6809 = vmatpush2.msra.mxu0 0.0
        %6810 = vmatprep.subr.mxu0 0.0
        %6811 = vmatpush2.msra.mxu0 0.0
        %6812 = vmatprep.subr.mxu0 0.0
        %6813 = vmatpush2.msra.mxu0 0.0
        %6814 = vmatprep.subr.mxu0 0.0
        %6815 = vmatpush2.msra.mxu0 0.0
        %6816 = vmatprep.subr.mxu0 0.0
        %6817 = vmatpush2.msra.mxu0 0.0
        %6818 = vmatprep.subr.mxu0 0.0
        %6819 = vmatpush2.msra.mxu0 0.0
        %6820 = vmatprep.subr.mxu0 0.0
        %6821 = vmatpush2.msra.mxu0 0.0
        %6822 = vmatprep.subr.mxu0 0.0
        %6823 = vmatpush2.msra.mxu0 0.0
        %6824 = vmatprep.subr.mxu0 0.0
        %6825 = vmatpush2.msra.mxu0 0.0
        %6826 = vmatprep.mubr.f32.mxu0 0.0
        %6827 = vmatmul.mubr.f32.gmra.mxu0 %v6739
        %v6828 = vpop.f32.mrf.mxu0
        %v6829 = vadd.f32 0.0, %v6828
        %v6830 = vpop.f32.mrf.mxu0
        %6831 = vmatprep.mubr.f32.mxu0 0.0
        %6832 = vmatmul.mubr.f32.gmra.mxu0 %v6742
        %v6833 = vpop.f32.mrf.mxu0
        %v6834 = vadd.f32 0.0, %v6833
        %v6835 = vpop.f32.mrf.mxu0
        %6836 = vmatprep.mubr.f32.mxu0 0.0
        %6837 = vmatmul.mubr.f32.gmra.mxu0 %v6745
        %v6838 = vpop.f32.mrf.mxu0
        %v6839 = vadd.f32 0.0, %v6838
        %v6840 = vpop.f32.mrf.mxu0
        %6841 = vmatprep.mubr.f32.mxu0 0.0
        %6842 = vmatmul.mubr.f32.gmra.mxu0 %v6748
        %v6843 = vpop.f32.mrf.mxu0
        %v6844 = vadd.f32 0.0, %v6843
        %v6845 = vpop.f32.mrf.mxu0
        %6846 = vmatprep.mubr.f32.mxu0 0.0
        %6847 = vmatmul.mubr.f32.gmra.mxu0 %v6751
        %v6848 = vpop.f32.mrf.mxu0
        %v6849 = vadd.f32 0.0, %v6848
        %v6850 = vpop.f32.mrf.mxu0
        %6851 = vmatprep.mubr.f32.mxu0 0.0
        %6852 = vmatmul.mubr.f32.gmra.mxu0 %v6754
        %v6853 = vpop.f32.mrf.mxu0
        %v6854 = vadd.f32 0.0, %v6853
        %v6855 = vpop.f32.mrf.mxu0
        %6856 = vmatprep.mubr.f32.mxu0 0.0
        %6857 = vmatmul.mubr.f32.gmra.mxu0 %v6757
        %v6858 = vpop.f32.mrf.mxu0
        %v6859 = vadd.f32 0.0, %v6858
        %v6860 = vpop.f32.mrf.mxu0
        %6861 = vmatprep.mubr.f32.mxu0 0.0
        %6862 = vmatmul.mubr.f32.gmra.mxu0 %v6760
        %v6863 = vpop.f32.mrf.mxu0
        %v6864 = vadd.f32 0.0, %v6863
        %v6865 = vpop.f32.mrf.mxu0
        %6866 = vdwg.mxu0
        %v6867 = vadd.f32 %v6713, %v6829
        %v6868 = vadd.f32 %v6714, %v6834
        %v6869 = vadd.f32 %v6715, %v6839
        %v6870 = vadd.f32 %v6716, %v6844
        %v6871 = vadd.f32 %v6717, %v6849
        %v6872 = vadd.f32 %v6718, %v6854
        %v6873 = vadd.f32 %v6719, %v6859
        %v6874 = vadd.f32 %v6720, %v6864
        %v6875 = vld [vmem:[%s6566 + $0x9] sm:$0xff]
        %v6876 = vld [vmem:[%s6566 + $0x21] sm:$0xff]
        %v6877 = vld [vmem:[%s6566 + $0x39] sm:$0xff]
        %v6878 = vld [vmem:[%s6566 + $0x51] sm:$0xff]
        %v6879 = vld [vmem:[%s6566 + $0x69] sm:$0xff]
        %v6880 = vld [vmem:[%s6566 + $0x81] sm:$0xff]
        %v6881 = vld [vmem:[%s6566 + $0x99] sm:$0xff]
        %v6882 = vld [vmem:[%s6566 + $0xb1] sm:$0xff]
        %s6883 = scalar_lea.vmem [#allocation6], 512
        %v6884 = vld [vmem:[%s6883] sm:$0xff]
        %v6885 = vld [vmem:[%s6883 + $0x8] sm:$0xff]
        %v6886 = vld [vmem:[%s6883 + $0x10] sm:$0xff]
        %v6887 = vld [vmem:[%s6883 + $0x18] sm:$0xff]
        %v6888 = vld [vmem:[%s6883 + $0x20] sm:$0xff]
        %v6889 = vld [vmem:[%s6883 + $0x28] sm:$0xff]
        %v6890 = vld [vmem:[%s6883 + $0x30] sm:$0xff]
        %v6891 = vld [vmem:[%s6883 + $0x38] sm:$0xff]
        %v6893 = vsel %vm1198, %v6875, 0
        %v6896 = vsel %vm1198, %v6876, 0
        %v6899 = vsel %vm1198, %v6877, 0
        %v6902 = vsel %vm1198, %v6878, 0
        %v6905 = vsel %vm1198, %v6879, 0
        %v6908 = vsel %vm1198, %v6880, 0
        %v6911 = vsel %vm1198, %v6881, 0
        %v6914 = vsel %vm1198, %v6882, 0
        %6916 = vmatprep.subr.mxu0 0.0
        %6917 = vmatpush1.msra.mxu0 0.0
        %6918 = vmatprep.subr.mxu0 0.0
        %6919 = vmatpush1.msra.mxu0 0.0
        %6920 = vmatprep.subr.mxu0 0.0
        %6921 = vmatpush1.msra.mxu0 0.0
        %6922 = vmatprep.subr.mxu0 0.0
        %6923 = vmatpush1.msra.mxu0 0.0
        %6924 = vmatprep.subr.mxu0 0.0
        %6925 = vmatpush1.msra.mxu0 0.0
        %6926 = vmatprep.subr.mxu0 0.0
        %6927 = vmatpush1.msra.mxu0 0.0
        %6928 = vmatprep.subr.mxu0 0.0
        %6929 = vmatpush1.msra.mxu0 0.0
        %6930 = vmatprep.subr.mxu0 0.0
        %6931 = vmatpush1.msra.mxu0 0.0
        %6932 = vmatprep.subr.mxu0 0.0
        %6933 = vmatpush1.msra.mxu0 %v6891
        %6934 = vmatprep.subr.mxu0 0.0
        %6935 = vmatpush1.msra.mxu0 %v6890
        %6936 = vmatprep.subr.mxu0 0.0
        %6937 = vmatpush1.msra.mxu0 %v6889
        %6938 = vmatprep.subr.mxu0 0.0
        %6939 = vmatpush1.msra.mxu0 %v6888
        %6940 = vmatprep.subr.mxu0 0.0
        %6941 = vmatpush1.msra.mxu0 %v6887
        %6942 = vmatprep.subr.mxu0 0.0
        %6943 = vmatpush1.msra.mxu0 %v6886
        %6944 = vmatprep.subr.mxu0 0.0
        %6945 = vmatpush1.msra.mxu0 %v6885
        %6946 = vmatprep.subr.mxu0 0.0
        %6947 = vmatpush1.msra.mxu0 %v6884
        %6948 = vmatprep.subr.mxu0 0.0
        %6949 = vmatpush2.msra.mxu0 0.0
        %6950 = vmatprep.subr.mxu0 0.0
        %6951 = vmatpush2.msra.mxu0 0.0
        %6952 = vmatprep.subr.mxu0 0.0
        %6953 = vmatpush2.msra.mxu0 0.0
        %6954 = vmatprep.subr.mxu0 0.0
        %6955 = vmatpush2.msra.mxu0 0.0
        %6956 = vmatprep.subr.mxu0 0.0
        %6957 = vmatpush2.msra.mxu0 0.0
        %6958 = vmatprep.subr.mxu0 0.0
        %6959 = vmatpush2.msra.mxu0 0.0
        %6960 = vmatprep.subr.mxu0 0.0
        %6961 = vmatpush2.msra.mxu0 0.0
        %6962 = vmatprep.subr.mxu0 0.0
        %6963 = vmatpush2.msra.mxu0 0.0
        %6964 = vmatprep.subr.mxu0 0.0
        %6965 = vmatpush2.msra.mxu0 0.0
        %6966 = vmatprep.subr.mxu0 0.0
        %6967 = vmatpush2.msra.mxu0 0.0
        %6968 = vmatprep.subr.mxu0 0.0
        %6969 = vmatpush2.msra.mxu0 0.0
        %6970 = vmatprep.subr.mxu0 0.0
        %6971 = vmatpush2.msra.mxu0 0.0
        %6972 = vmatprep.subr.mxu0 0.0
        %6973 = vmatpush2.msra.mxu0 0.0
        %6974 = vmatprep.subr.mxu0 0.0
        %6975 = vmatpush2.msra.mxu0 0.0
        %6976 = vmatprep.subr.mxu0 0.0
        %6977 = vmatpush2.msra.mxu0 0.0
        %6978 = vmatprep.subr.mxu0 0.0
        %6979 = vmatpush2.msra.mxu0 0.0
        %6980 = vmatprep.mubr.f32.mxu0 0.0
        %6981 = vmatmul.mubr.f32.gmra.mxu0 %v6893
        %v6982 = vpop.f32.mrf.mxu0
        %v6983 = vadd.f32 0.0, %v6982
        %v6984 = vpop.f32.mrf.mxu0
        %6985 = vmatprep.mubr.f32.mxu0 0.0
        %6986 = vmatmul.mubr.f32.gmra.mxu0 %v6896
        %v6987 = vpop.f32.mrf.mxu0
        %v6988 = vadd.f32 0.0, %v6987
        %v6989 = vpop.f32.mrf.mxu0
        %6990 = vmatprep.mubr.f32.mxu0 0.0
        %6991 = vmatmul.mubr.f32.gmra.mxu0 %v6899
        %v6992 = vpop.f32.mrf.mxu0
        %v6993 = vadd.f32 0.0, %v6992
        %v6994 = vpop.f32.mrf.mxu0
        %6995 = vmatprep.mubr.f32.mxu0 0.0
        %6996 = vmatmul.mubr.f32.gmra.mxu0 %v6902
        %v6997 = vpop.f32.mrf.mxu0
        %v6998 = vadd.f32 0.0, %v6997
        %v6999 = vpop.f32.mrf.mxu0
        %7000 = vmatprep.mubr.f32.mxu0 0.0
        %7001 = vmatmul.mubr.f32.gmra.mxu0 %v6905
        %v7002 = vpop.f32.mrf.mxu0
        %v7003 = vadd.f32 0.0, %v7002
        %v7004 = vpop.f32.mrf.mxu0
        %7005 = vmatprep.mubr.f32.mxu0 0.0
        %7006 = vmatmul.mubr.f32.gmra.mxu0 %v6908
        %v7007 = vpop.f32.mrf.mxu0
        %v7008 = vadd.f32 0.0, %v7007
        %v7009 = vpop.f32.mrf.mxu0
        %7010 = vmatprep.mubr.f32.mxu0 0.0
        %7011 = vmatmul.mubr.f32.gmra.mxu0 %v6911
        %v7012 = vpop.f32.mrf.mxu0
        %v7013 = vadd.f32 0.0, %v7012
        %v7014 = vpop.f32.mrf.mxu0
        %7015 = vmatprep.mubr.f32.mxu0 0.0
        %7016 = vmatmul.mubr.f32.gmra.mxu0 %v6914
        %v7017 = vpop.f32.mrf.mxu0
        %v7018 = vadd.f32 0.0, %v7017
        %v7019 = vpop.f32.mrf.mxu0
        %7020 = vdwg.mxu0
        %v7021 = vadd.f32 %v6867, %v6983
        %v7022 = vadd.f32 %v6868, %v6988
        %v7023 = vadd.f32 %v6869, %v6993
        %v7024 = vadd.f32 %v6870, %v6998
        %v7025 = vadd.f32 %v6871, %v7003
        %v7026 = vadd.f32 %v6872, %v7008
        %v7027 = vadd.f32 %v6873, %v7013
        %v7028 = vadd.f32 %v6874, %v7018
        %v7029 = vld [vmem:[%s10] sm:$0x1]
        %v7031 = vlaneseq
        %v7032 = vshrl.u32 %v7031, 7
        %v7033 = vsub.s32 0, %v7032
        %v7034 = vrot.slane %v7029, %v7033
        %v7036 = vadd.f32 %v7021, %v7034
        %v7037 = vadd.f32 %v7022, %v7034
        %v7038 = vadd.f32 %v7023, %v7034
        %v7039 = vadd.f32 %v7024, %v7034
        %v7040 = vadd.f32 %v7025, %v7034
        %v7041 = vadd.f32 %v7026, %v7034
        %v7042 = vadd.f32 %v7027, %v7034
        %v7043 = vadd.f32 %v7028, %v7034
        %7044 = vst [vmem:[%s808] sm:$0xff] %v7036
        %7045 = vst [vmem:[%s808 + $0x8] sm:$0xff] %v7037
        %7046 = vst [vmem:[%s808 + $0x10] sm:$0xff] %v7038
        %7047 = vst [vmem:[%s808 + $0x18] sm:$0xff] %v7039
        %7048 = vst [vmem:[%s808 + $0x20] sm:$0xff] %v7040
        %7049 = vst [vmem:[%s808 + $0x28] sm:$0xff] %v7041
        %7050 = vst [vmem:[%s808 + $0x30] sm:$0xff] %v7042
        %7051 = vst [vmem:[%s808 + $0x38] sm:$0xff] %v7043
        %v7052 = vld [vmem:[%s11] sm:$0x1]
        %v7054 = vlaneseq
        %v7055 = vshrl.u32 %v7054, 7
        %v7056 = vsub.s32 0, %v7055
        %v7057 = vrot.slane %v7052, %v7056
        %v7059 = vmul.f32 %v7036, %v7057
        %v7060 = vmul.f32 %v7037, %v7057
        %v7061 = vmul.f32 %v7038, %v7057
        %v7062 = vmul.f32 %v7039, %v7057
        %v7063 = vmul.f32 %v7040, %v7057
        %v7064 = vmul.f32 %v7041, %v7057
        %v7065 = vmul.f32 %v7042, %v7057
        %v7066 = vmul.f32 %v7043, %v7057
        %v7067 = vld [vmem:[%s12] sm:$0x1]
        %v7069 = vlaneseq
        %v7070 = vshrl.u32 %v7069, 7
        %v7071 = vsub.s32 0, %v7070
        %v7072 = vrot.slane %v7067, %v7071
        %v7074 = vadd.f32 %v7059, %v7072
        %v7075 = vadd.f32 %v7060, %v7072
        %v7076 = vadd.f32 %v7061, %v7072
        %v7077 = vadd.f32 %v7062, %v7072
        %v7078 = vadd.f32 %v7063, %v7072
        %v7079 = vadd.f32 %v7064, %v7072
        %v7080 = vadd.f32 %v7065, %v7072
        %v7081 = vadd.f32 %v7066, %v7072
        %v7082 = vmax.f32 %v7074, 0.0
        %v7083 = vmax.f32 %v7075, 0.0
        %v7084 = vmax.f32 %v7076, 0.0
        %v7085 = vmax.f32 %v7077, 0.0
        %v7086 = vmax.f32 %v7078, 0.0
        %v7087 = vmax.f32 %v7079, 0.0
        %v7088 = vmax.f32 %v7080, 0.0
        %v7089 = vmax.f32 %v7081, 0.0
        %7090 = vst [vmem:[#allocation4] sm:$0xff] 0.0
        %7091 = vst [vmem:[#allocation4 + $0x8] sm:$0xff] 0.0
        %7092 = vst [vmem:[#allocation4 + $0x10] sm:$0xff] 0.0
        %7093 = vst [vmem:[#allocation4 + $0x18] sm:$0xff] 0.0
        %7094 = vst [vmem:[#allocation4 + $0x20] sm:$0xff] 0.0
        %7095 = vst [vmem:[#allocation4 + $0x28] sm:$0xff] 0.0
        %7096 = vst [vmem:[#allocation4 + $0x30] sm:$0xff] 0.0
        %7097 = vst [vmem:[#allocation4 + $0x38] sm:$0xff] 0.0
        %7098 = vst [vmem:[#allocation4 + $0x40] sm:$0xff] 0.0
        %7099 = vst [vmem:[#allocation4 + $0x48] sm:$0xff] 0.0
        %7100 = vst [vmem:[#allocation4 + $0x50] sm:$0xff] 0.0
        %7101 = vst [vmem:[#allocation4 + $0x58] sm:$0xff] 0.0
        %7102 = vst [vmem:[#allocation4 + $0x60] sm:$0xff] 0.0
        %7103 = vst [vmem:[#allocation4 + $0x68] sm:$0xff] 0.0
        %7104 = vst [vmem:[#allocation4 + $0x70] sm:$0xff] 0.0
        %7105 = vst [vmem:[#allocation4 + $0x78] sm:$0xff] 0.0
        %7106 = vst [vmem:[#allocation4 + $0x80] sm:$0xff] 0.0
        %7107 = vst [vmem:[#allocation4 + $0x88] sm:$0xff] 0.0
        %7108 = vst [vmem:[#allocation4 + $0x90] sm:$0xff] 0.0
        %7109 = vst [vmem:[#allocation4 + $0x98] sm:$0xff] 0.0
        %7110 = vst [vmem:[#allocation4 + $0xa0] sm:$0xff] 0.0
        %7111 = vst [vmem:[#allocation4 + $0xa8] sm:$0xff] 0.0
        %7112 = vst [vmem:[#allocation4 + $0xb0] sm:$0xff] 0.0
        %7113 = vst [vmem:[#allocation4 + $0xb8] sm:$0xff] 0.0
        %7114 = vst [vmem:[#allocation4 + $0xc0] sm:$0xff] 0.0
        %7115 = vst [vmem:[#allocation4 + $0xc8] sm:$0xff] 0.0
        %7116 = vst [vmem:[#allocation4 + $0xd0] sm:$0xff] 0.0
        %7117 = vst [vmem:[#allocation4 + $0xd8] sm:$0xff] 0.0
        %7118 = vst [vmem:[#allocation4 + $0xe0] sm:$0xff] 0.0
        %7119 = vst [vmem:[#allocation4 + $0xe8] sm:$0xff] 0.0
        %s7120 = scalar_lea.vmem [#allocation4], 24
        %7121 = vst [vmem:[%s7120 + $0x8] sm:$0xff] %v7082
        %7122 = vst [vmem:[%s7120 + $0x20] sm:$0xff] %v7083
        %7123 = vst [vmem:[%s7120 + $0x38] sm:$0xff] %v7084
        %7124 = vst [vmem:[%s7120 + $0x50] sm:$0xff] %v7085
        %7125 = vst [vmem:[%s7120 + $0x68] sm:$0xff] %v7086
        %7126 = vst [vmem:[%s7120 + $0x80] sm:$0xff] %v7087
        %7127 = vst [vmem:[%s7120 + $0x98] sm:$0xff] %v7088
        %7128 = vst [vmem:[%s7120 + $0xb0] sm:$0xff] %v7089
        %v7129 = vld [vmem:[#allocation4 + $0x7] sm:$0xff]
        %v7130 = vld [vmem:[#allocation4 + $0x1f] sm:$0xff]
        %v7131 = vld [vmem:[#allocation4 + $0x37] sm:$0xff]
        %v7132 = vld [vmem:[#allocation4 + $0x4f] sm:$0xff]
        %v7133 = vld [vmem:[#allocation4 + $0x67] sm:$0xff]
        %v7134 = vld [vmem:[#allocation4 + $0x7f] sm:$0xff]
        %v7135 = vld [vmem:[#allocation4 + $0x97] sm:$0xff]
        %v7136 = vld [vmem:[#allocation4 + $0xaf] sm:$0xff]
        %v7137 = vld [vmem:[%s13] sm:$0xff]
        %v7138 = vld [vmem:[%s13 + $0x8] sm:$0xff]
        %v7139 = vld [vmem:[%s13 + $0x10] sm:$0xff]
        %v7140 = vld [vmem:[%s13 + $0x18] sm:$0xff]
        %v7141 = vld [vmem:[%s13 + $0x20] sm:$0xff]
        %v7142 = vld [vmem:[%s13 + $0x28] sm:$0xff]
        %v7143 = vld [vmem:[%s13 + $0x30] sm:$0xff]
        %v7144 = vld [vmem:[%s13 + $0x38] sm:$0xff]
        %v7145 = vld [vmem:[%s13 + $0x40] sm:$0xff]
        %v7146 = vld [vmem:[%s13 + $0x48] sm:$0xff]
        %v7147 = vld [vmem:[%s13 + $0x50] sm:$0xff]
        %v7148 = vld [vmem:[%s13 + $0x58] sm:$0xff]
        %v7149 = vld [vmem:[%s13 + $0x60] sm:$0xff]
        %v7150 = vld [vmem:[%s13 + $0x68] sm:$0xff]
        %v7151 = vld [vmem:[%s13 + $0x70] sm:$0xff]
        %v7152 = vld [vmem:[%s13 + $0x78] sm:$0xff]
        %v7153 = vld [vmem:[#allocation4 + $0x8] sm:$0xff]
        %v7154 = vld [vmem:[#allocation4 + $0x20] sm:$0xff]
        %v7155 = vld [vmem:[#allocation4 + $0x38] sm:$0xff]
        %v7156 = vld [vmem:[#allocation4 + $0x50] sm:$0xff]
        %v7157 = vld [vmem:[#allocation4 + $0x68] sm:$0xff]
        %v7158 = vld [vmem:[#allocation4 + $0x80] sm:$0xff]
        %v7159 = vld [vmem:[#allocation4 + $0x98] sm:$0xff]
        %v7160 = vld [vmem:[#allocation4 + $0xb0] sm:$0xff]
        %s7161 = scalar_lea.vmem %s13, 128
        %v7162 = vld [vmem:[%s7161] sm:$0xff]
        %v7163 = vld [vmem:[%s7161 + $0x8] sm:$0xff]
        %v7164 = vld [vmem:[%s7161 + $0x10] sm:$0xff]
        %v7165 = vld [vmem:[%s7161 + $0x18] sm:$0xff]
        %v7166 = vld [vmem:[%s7161 + $0x20] sm:$0xff]
        %v7167 = vld [vmem:[%s7161 + $0x28] sm:$0xff]
        %v7168 = vld [vmem:[%s7161 + $0x30] sm:$0xff]
        %v7169 = vld [vmem:[%s7161 + $0x38] sm:$0xff]
        %v7170 = vld [vmem:[%s7161 + $0x40] sm:$0xff]
        %v7171 = vld [vmem:[%s7161 + $0x48] sm:$0xff]
        %v7172 = vld [vmem:[%s7161 + $0x50] sm:$0xff]
        %v7173 = vld [vmem:[%s7161 + $0x58] sm:$0xff]
        %v7174 = vld [vmem:[%s7161 + $0x60] sm:$0xff]
        %v7175 = vld [vmem:[%s7161 + $0x68] sm:$0xff]
        %v7176 = vld [vmem:[%s7161 + $0x70] sm:$0xff]
        %v7177 = vld [vmem:[%s7161 + $0x78] sm:$0xff]
        %7178 = vmatprep.subr.mxu0 0.0
        %7179 = vmatpush1.msra.mxu0 %v7177
        %7180 = vmatprep.subr.mxu0 0.0
        %7181 = vmatpush1.msra.mxu0 %v7176
        %7182 = vmatprep.subr.mxu0 0.0
        %7183 = vmatpush1.msra.mxu0 %v7175
        %7184 = vmatprep.subr.mxu0 0.0
        %7185 = vmatpush1.msra.mxu0 %v7174
        %7186 = vmatprep.subr.mxu0 0.0
        %7187 = vmatpush1.msra.mxu0 %v7173
        %7188 = vmatprep.subr.mxu0 0.0
        %7189 = vmatpush1.msra.mxu0 %v7172
        %7190 = vmatprep.subr.mxu0 0.0
        %7191 = vmatpush1.msra.mxu0 %v7171
        %7192 = vmatprep.subr.mxu0 0.0
        %7193 = vmatpush1.msra.mxu0 %v7170
        %7194 = vmatprep.subr.mxu0 0.0
        %7195 = vmatpush1.msra.mxu0 %v7169
        %7196 = vmatprep.subr.mxu0 0.0
        %7197 = vmatpush1.msra.mxu0 %v7168
        %7198 = vmatprep.subr.mxu0 0.0
        %7199 = vmatpush1.msra.mxu0 %v7167
        %7200 = vmatprep.subr.mxu0 0.0
        %7201 = vmatpush1.msra.mxu0 %v7166
        %7202 = vmatprep.subr.mxu0 0.0
        %7203 = vmatpush1.msra.mxu0 %v7165
        %7204 = vmatprep.subr.mxu0 0.0
        %7205 = vmatpush1.msra.mxu0 %v7164
        %7206 = vmatprep.subr.mxu0 0.0
        %7207 = vmatpush1.msra.mxu0 %v7163
        %7208 = vmatprep.subr.mxu0 0.0
        %7209 = vmatpush1.msra.mxu0 %v7162
        %7210 = vmatprep.subr.mxu0 0.0
        %7211 = vmatpush2.msra.mxu0 0.0
        %7212 = vmatprep.subr.mxu0 0.0
        %7213 = vmatpush2.msra.mxu0 0.0
        %7214 = vmatprep.subr.mxu0 0.0
        %7215 = vmatpush2.msra.mxu0 0.0
        %7216 = vmatprep.subr.mxu0 0.0
        %7217 = vmatpush2.msra.mxu0 0.0
        %7218 = vmatprep.subr.mxu0 0.0
        %7219 = vmatpush2.msra.mxu0 0.0
        %7220 = vmatprep.subr.mxu0 0.0
        %7221 = vmatpush2.msra.mxu0 0.0
        %7222 = vmatprep.subr.mxu0 0.0
        %7223 = vmatpush2.msra.mxu0 0.0
        %7224 = vmatprep.subr.mxu0 0.0
        %7225 = vmatpush2.msra.mxu0 0.0
        %7226 = vmatprep.subr.mxu0 0.0
        %7227 = vmatpush2.msra.mxu0 0.0
        %7228 = vmatprep.subr.mxu0 0.0
        %7229 = vmatpush2.msra.mxu0 0.0
        %7230 = vmatprep.subr.mxu0 0.0
        %7231 = vmatpush2.msra.mxu0 0.0
        %7232 = vmatprep.subr.mxu0 0.0
        %7233 = vmatpush2.msra.mxu0 0.0
        %7234 = vmatprep.subr.mxu0 0.0
        %7235 = vmatpush2.msra.mxu0 0.0
        %7236 = vmatprep.subr.mxu0 0.0
        %7237 = vmatpush2.msra.mxu0 0.0
        %7238 = vmatprep.subr.mxu0 0.0
        %7239 = vmatpush2.msra.mxu0 0.0
        %7240 = vmatprep.subr.mxu0 0.0
        %7241 = vmatpush2.msra.mxu0 0.0
        %7242 = vmatprep.mubr.f32.mxu0 0.0
        %7243 = vmatmul.mubr.f32.gmra.mxu0 %v7153
        %v7244 = vpop.f32.mrf.mxu0
        %v7245 = vadd.f32 0.0, %v7244
        %v7246 = vpop.f32.mrf.mxu0
        %7247 = vmatprep.mubr.f32.mxu0 0.0
        %7248 = vmatmul.mubr.f32.gmra.mxu0 %v7154
        %v7249 = vpop.f32.mrf.mxu0
        %v7250 = vadd.f32 0.0, %v7249
        %v7251 = vpop.f32.mrf.mxu0
        %7252 = vmatprep.mubr.f32.mxu0 0.0
        %7253 = vmatmul.mubr.f32.gmra.mxu0 %v7155
        %v7254 = vpop.f32.mrf.mxu0
        %v7255 = vadd.f32 0.0, %v7254
        %v7256 = vpop.f32.mrf.mxu0
        %7257 = vmatprep.mubr.f32.mxu0 0.0
        %7258 = vmatmul.mubr.f32.gmra.mxu0 %v7156
        %v7259 = vpop.f32.mrf.mxu0
        %v7260 = vadd.f32 0.0, %v7259
        %v7261 = vpop.f32.mrf.mxu0
        %7262 = vmatprep.mubr.f32.mxu0 0.0
        %7263 = vmatmul.mubr.f32.gmra.mxu0 %v7157
        %v7264 = vpop.f32.mrf.mxu0
        %v7265 = vadd.f32 0.0, %v7264
        %v7266 = vpop.f32.mrf.mxu0
        %7267 = vmatprep.mubr.f32.mxu0 0.0
        %7268 = vmatmul.mubr.f32.gmra.mxu0 %v7158
        %v7269 = vpop.f32.mrf.mxu0
        %v7270 = vadd.f32 0.0, %v7269
        %v7271 = vpop.f32.mrf.mxu0
        %7272 = vmatprep.mubr.f32.mxu0 0.0
        %7273 = vmatmul.mubr.f32.gmra.mxu0 %v7159
        %v7274 = vpop.f32.mrf.mxu0
        %v7275 = vadd.f32 0.0, %v7274
        %v7276 = vpop.f32.mrf.mxu0
        %7277 = vmatprep.mubr.f32.mxu0 0.0
        %7278 = vmatmul.mubr.f32.gmra.mxu0 %v7160
        %v7279 = vpop.f32.mrf.mxu0
        %v7280 = vadd.f32 0.0, %v7279
        %v7281 = vpop.f32.mrf.mxu0
        %7282 = vdwg.mxu0
        %7283 = vmatprep.subr.mxu0 0.0
        %7284 = vmatpush1.msra.mxu0 %v7152
        %7285 = vmatprep.subr.mxu0 0.0
        %7286 = vmatpush1.msra.mxu0 %v7151
        %7287 = vmatprep.subr.mxu0 0.0
        %7288 = vmatpush1.msra.mxu0 %v7150
        %7289 = vmatprep.subr.mxu0 0.0
        %7290 = vmatpush1.msra.mxu0 %v7149
        %7291 = vmatprep.subr.mxu0 0.0
        %7292 = vmatpush1.msra.mxu0 %v7148
        %7293 = vmatprep.subr.mxu0 0.0
        %7294 = vmatpush1.msra.mxu0 %v7147
        %7295 = vmatprep.subr.mxu0 0.0
        %7296 = vmatpush1.msra.mxu0 %v7146
        %7297 = vmatprep.subr.mxu0 0.0
        %7298 = vmatpush1.msra.mxu0 %v7145
        %7299 = vmatprep.subr.mxu0 0.0
        %7300 = vmatpush1.msra.mxu0 %v7144
        %7301 = vmatprep.subr.mxu0 0.0
        %7302 = vmatpush1.msra.mxu0 %v7143
        %7303 = vmatprep.subr.mxu0 0.0
        %7304 = vmatpush1.msra.mxu0 %v7142
        %7305 = vmatprep.subr.mxu0 0.0
        %7306 = vmatpush1.msra.mxu0 %v7141
        %7307 = vmatprep.subr.mxu0 0.0
        %7308 = vmatpush1.msra.mxu0 %v7140
        %7309 = vmatprep.subr.mxu0 0.0
        %7310 = vmatpush1.msra.mxu0 %v7139
        %7311 = vmatprep.subr.mxu0 0.0
        %7312 = vmatpush1.msra.mxu0 %v7138
        %7313 = vmatprep.subr.mxu0 0.0
        %7314 = vmatpush1.msra.mxu0 %v7137
        %7315 = vmatprep.subr.mxu0 0.0
        %7316 = vmatpush2.msra.mxu0 0.0
        %7317 = vmatprep.subr.mxu0 0.0
        %7318 = vmatpush2.msra.mxu0 0.0
        %7319 = vmatprep.subr.mxu0 0.0
        %7320 = vmatpush2.msra.mxu0 0.0
        %7321 = vmatprep.subr.mxu0 0.0
        %7322 = vmatpush2.msra.mxu0 0.0
        %7323 = vmatprep.subr.mxu0 0.0
        %7324 = vmatpush2.msra.mxu0 0.0
        %7325 = vmatprep.subr.mxu0 0.0
        %7326 = vmatpush2.msra.mxu0 0.0
        %7327 = vmatprep.subr.mxu0 0.0
        %7328 = vmatpush2.msra.mxu0 0.0
        %7329 = vmatprep.subr.mxu0 0.0
        %7330 = vmatpush2.msra.mxu0 0.0
        %7331 = vmatprep.subr.mxu0 0.0
        %7332 = vmatpush2.msra.mxu0 0.0
        %7333 = vmatprep.subr.mxu0 0.0
        %7334 = vmatpush2.msra.mxu0 0.0
        %7335 = vmatprep.subr.mxu0 0.0
        %7336 = vmatpush2.msra.mxu0 0.0
        %7337 = vmatprep.subr.mxu0 0.0
        %7338 = vmatpush2.msra.mxu0 0.0
        %7339 = vmatprep.subr.mxu0 0.0
        %7340 = vmatpush2.msra.mxu0 0.0
        %7341 = vmatprep.subr.mxu0 0.0
        %7342 = vmatpush2.msra.mxu0 0.0
        %7343 = vmatprep.subr.mxu0 0.0
        %7344 = vmatpush2.msra.mxu0 0.0
        %7345 = vmatprep.subr.mxu0 0.0
        %7346 = vmatpush2.msra.mxu0 0.0
        %7347 = vmatprep.mubr.f32.mxu0 0.0
        %7348 = vmatmul.mubr.f32.gmra.mxu0 %v7129
        %v7349 = vpop.f32.mrf.mxu0
        %v7350 = vadd.f32 %v7245, %v7349
        %v7351 = vpop.f32.mrf.mxu0
        %7352 = vmatprep.mubr.f32.mxu0 0.0
        %7353 = vmatmul.mubr.f32.gmra.mxu0 %v7130
        %v7354 = vpop.f32.mrf.mxu0
        %v7355 = vadd.f32 %v7250, %v7354
        %v7356 = vpop.f32.mrf.mxu0
        %7357 = vmatprep.mubr.f32.mxu0 0.0
        %7358 = vmatmul.mubr.f32.gmra.mxu0 %v7131
        %v7359 = vpop.f32.mrf.mxu0
        %v7360 = vadd.f32 %v7255, %v7359
        %v7361 = vpop.f32.mrf.mxu0
        %7362 = vmatprep.mubr.f32.mxu0 0.0
        %7363 = vmatmul.mubr.f32.gmra.mxu0 %v7132
        %v7364 = vpop.f32.mrf.mxu0
        %v7365 = vadd.f32 %v7260, %v7364
        %v7366 = vpop.f32.mrf.mxu0
        %7367 = vmatprep.mubr.f32.mxu0 0.0
        %7368 = vmatmul.mubr.f32.gmra.mxu0 %v7133
        %v7369 = vpop.f32.mrf.mxu0
        %v7370 = vadd.f32 %v7265, %v7369
        %v7371 = vpop.f32.mrf.mxu0
        %7372 = vmatprep.mubr.f32.mxu0 0.0
        %7373 = vmatmul.mubr.f32.gmra.mxu0 %v7134
        %v7374 = vpop.f32.mrf.mxu0
        %v7375 = vadd.f32 %v7270, %v7374
        %v7376 = vpop.f32.mrf.mxu0
        %7377 = vmatprep.mubr.f32.mxu0 0.0
        %7378 = vmatmul.mubr.f32.gmra.mxu0 %v7135
        %v7379 = vpop.f32.mrf.mxu0
        %v7380 = vadd.f32 %v7275, %v7379
        %v7381 = vpop.f32.mrf.mxu0
        %7382 = vmatprep.mubr.f32.mxu0 0.0
        %7383 = vmatmul.mubr.f32.gmra.mxu0 %v7136
        %v7384 = vpop.f32.mrf.mxu0
        %v7385 = vadd.f32 %v7280, %v7384
        %v7386 = vpop.f32.mrf.mxu0
        %7387 = vdwg.mxu0
        %v7388 = vld [vmem:[#allocation4 + $0x9] sm:$0xff]
        %v7389 = vld [vmem:[#allocation4 + $0x21] sm:$0xff]
        %v7390 = vld [vmem:[#allocation4 + $0x39] sm:$0xff]
        %v7391 = vld [vmem:[#allocation4 + $0x51] sm:$0xff]
        %v7392 = vld [vmem:[#allocation4 + $0x69] sm:$0xff]
        %v7393 = vld [vmem:[#allocation4 + $0x81] sm:$0xff]
        %v7394 = vld [vmem:[#allocation4 + $0x99] sm:$0xff]
        %v7395 = vld [vmem:[#allocation4 + $0xb1] sm:$0xff]
        %s7396 = scalar_lea.vmem %s13, 256
        %v7397 = vld [vmem:[%s7396] sm:$0xff]
        %v7398 = vld [vmem:[%s7396 + $0x8] sm:$0xff]
        %v7399 = vld [vmem:[%s7396 + $0x10] sm:$0xff]
        %v7400 = vld [vmem:[%s7396 + $0x18] sm:$0xff]
        %v7401 = vld [vmem:[%s7396 + $0x20] sm:$0xff]
        %v7402 = vld [vmem:[%s7396 + $0x28] sm:$0xff]
        %v7403 = vld [vmem:[%s7396 + $0x30] sm:$0xff]
        %v7404 = vld [vmem:[%s7396 + $0x38] sm:$0xff]
        %v7405 = vld [vmem:[%s7396 + $0x40] sm:$0xff]
        %v7406 = vld [vmem:[%s7396 + $0x48] sm:$0xff]
        %v7407 = vld [vmem:[%s7396 + $0x50] sm:$0xff]
        %v7408 = vld [vmem:[%s7396 + $0x58] sm:$0xff]
        %v7409 = vld [vmem:[%s7396 + $0x60] sm:$0xff]
        %v7410 = vld [vmem:[%s7396 + $0x68] sm:$0xff]
        %v7411 = vld [vmem:[%s7396 + $0x70] sm:$0xff]
        %v7412 = vld [vmem:[%s7396 + $0x78] sm:$0xff]
        %7413 = vmatprep.subr.mxu0 0.0
        %7414 = vmatpush1.msra.mxu0 %v7412
        %7415 = vmatprep.subr.mxu0 0.0
        %7416 = vmatpush1.msra.mxu0 %v7411
        %7417 = vmatprep.subr.mxu0 0.0
        %7418 = vmatpush1.msra.mxu0 %v7410
        %7419 = vmatprep.subr.mxu0 0.0
        %7420 = vmatpush1.msra.mxu0 %v7409
        %7421 = vmatprep.subr.mxu0 0.0
        %7422 = vmatpush1.msra.mxu0 %v7408
        %7423 = vmatprep.subr.mxu0 0.0
        %7424 = vmatpush1.msra.mxu0 %v7407
        %7425 = vmatprep.subr.mxu0 0.0
        %7426 = vmatpush1.msra.mxu0 %v7406
        %7427 = vmatprep.subr.mxu0 0.0
        %7428 = vmatpush1.msra.mxu0 %v7405
        %7429 = vmatprep.subr.mxu0 0.0
        %7430 = vmatpush1.msra.mxu0 %v7404
        %7431 = vmatprep.subr.mxu0 0.0
        %7432 = vmatpush1.msra.mxu0 %v7403
        %7433 = vmatprep.subr.mxu0 0.0
        %7434 = vmatpush1.msra.mxu0 %v7402
        %7435 = vmatprep.subr.mxu0 0.0
        %7436 = vmatpush1.msra.mxu0 %v7401
        %7437 = vmatprep.subr.mxu0 0.0
        %7438 = vmatpush1.msra.mxu0 %v7400
        %7439 = vmatprep.subr.mxu0 0.0
        %7440 = vmatpush1.msra.mxu0 %v7399
        %7441 = vmatprep.subr.mxu0 0.0
        %7442 = vmatpush1.msra.mxu0 %v7398
        %7443 = vmatprep.subr.mxu0 0.0
        %7444 = vmatpush1.msra.mxu0 %v7397
        %7445 = vmatprep.subr.mxu0 0.0
        %7446 = vmatpush2.msra.mxu0 0.0
        %7447 = vmatprep.subr.mxu0 0.0
        %7448 = vmatpush2.msra.mxu0 0.0
        %7449 = vmatprep.subr.mxu0 0.0
        %7450 = vmatpush2.msra.mxu0 0.0
        %7451 = vmatprep.subr.mxu0 0.0
        %7452 = vmatpush2.msra.mxu0 0.0
        %7453 = vmatprep.subr.mxu0 0.0
        %7454 = vmatpush2.msra.mxu0 0.0
        %7455 = vmatprep.subr.mxu0 0.0
        %7456 = vmatpush2.msra.mxu0 0.0
        %7457 = vmatprep.subr.mxu0 0.0
        %7458 = vmatpush2.msra.mxu0 0.0
        %7459 = vmatprep.subr.mxu0 0.0
        %7460 = vmatpush2.msra.mxu0 0.0
        %7461 = vmatprep.subr.mxu0 0.0
        %7462 = vmatpush2.msra.mxu0 0.0
        %7463 = vmatprep.subr.mxu0 0.0
        %7464 = vmatpush2.msra.mxu0 0.0
        %7465 = vmatprep.subr.mxu0 0.0
        %7466 = vmatpush2.msra.mxu0 0.0
        %7467 = vmatprep.subr.mxu0 0.0
        %7468 = vmatpush2.msra.mxu0 0.0
        %7469 = vmatprep.subr.mxu0 0.0
        %7470 = vmatpush2.msra.mxu0 0.0
        %7471 = vmatprep.subr.mxu0 0.0
        %7472 = vmatpush2.msra.mxu0 0.0
        %7473 = vmatprep.subr.mxu0 0.0
        %7474 = vmatpush2.msra.mxu0 0.0
        %7475 = vmatprep.subr.mxu0 0.0
        %7476 = vmatpush2.msra.mxu0 0.0
        %7477 = vmatprep.mubr.f32.mxu0 0.0
        %7478 = vmatmul.mubr.f32.gmra.mxu0 %v7388
        %v7479 = vpop.f32.mrf.mxu0
        %v7480 = vadd.f32 0.0, %v7479
        %v7481 = vpop.f32.mrf.mxu0
        %7482 = vmatprep.mubr.f32.mxu0 0.0
        %7483 = vmatmul.mubr.f32.gmra.mxu0 %v7389
        %v7484 = vpop.f32.mrf.mxu0
        %v7485 = vadd.f32 0.0, %v7484
        %v7486 = vpop.f32.mrf.mxu0
        %7487 = vmatprep.mubr.f32.mxu0 0.0
        %7488 = vmatmul.mubr.f32.gmra.mxu0 %v7390
        %v7489 = vpop.f32.mrf.mxu0
        %v7490 = vadd.f32 0.0, %v7489
        %v7491 = vpop.f32.mrf.mxu0
        %7492 = vmatprep.mubr.f32.mxu0 0.0
        %7493 = vmatmul.mubr.f32.gmra.mxu0 %v7391
        %v7494 = vpop.f32.mrf.mxu0
        %v7495 = vadd.f32 0.0, %v7494
        %v7496 = vpop.f32.mrf.mxu0
        %7497 = vmatprep.mubr.f32.mxu0 0.0
        %7498 = vmatmul.mubr.f32.gmra.mxu0 %v7392
        %v7499 = vpop.f32.mrf.mxu0
        %v7500 = vadd.f32 0.0, %v7499
        %v7501 = vpop.f32.mrf.mxu0
        %7502 = vmatprep.mubr.f32.mxu0 0.0
        %7503 = vmatmul.mubr.f32.gmra.mxu0 %v7393
        %v7504 = vpop.f32.mrf.mxu0
        %v7505 = vadd.f32 0.0, %v7504
        %v7506 = vpop.f32.mrf.mxu0
        %7507 = vmatprep.mubr.f32.mxu0 0.0
        %7508 = vmatmul.mubr.f32.gmra.mxu0 %v7394
        %v7509 = vpop.f32.mrf.mxu0
        %v7510 = vadd.f32 0.0, %v7509
        %v7511 = vpop.f32.mrf.mxu0
        %7512 = vmatprep.mubr.f32.mxu0 0.0
        %7513 = vmatmul.mubr.f32.gmra.mxu0 %v7395
        %v7514 = vpop.f32.mrf.mxu0
        %v7515 = vadd.f32 0.0, %v7514
        %v7516 = vpop.f32.mrf.mxu0
        %7517 = vdwg.mxu0
        %v7518 = vadd.f32 %v7350, %v7480
        %v7519 = vadd.f32 %v7355, %v7485
        %v7520 = vadd.f32 %v7360, %v7490
        %v7521 = vadd.f32 %v7365, %v7495
        %v7522 = vadd.f32 %v7370, %v7500
        %v7523 = vadd.f32 %v7375, %v7505
        %v7524 = vadd.f32 %v7380, %v7510
        %v7525 = vadd.f32 %v7385, %v7515
        %v7526 = vld [vmem:[%s7120 + $0x7] sm:$0xff]
        %v7527 = vld [vmem:[%s7120 + $0x1f] sm:$0xff]
        %v7528 = vld [vmem:[%s7120 + $0x37] sm:$0xff]
        %v7529 = vld [vmem:[%s7120 + $0x4f] sm:$0xff]
        %v7530 = vld [vmem:[%s7120 + $0x67] sm:$0xff]
        %v7531 = vld [vmem:[%s7120 + $0x7f] sm:$0xff]
        %v7532 = vld [vmem:[%s7120 + $0x97] sm:$0xff]
        %v7533 = vld [vmem:[%s7120 + $0xaf] sm:$0xff]
        %s7534 = scalar_lea.vmem %s13, 384
        %v7535 = vld [vmem:[%s7534] sm:$0xff]
        %v7536 = vld [vmem:[%s7534 + $0x8] sm:$0xff]
        %v7537 = vld [vmem:[%s7534 + $0x10] sm:$0xff]
        %v7538 = vld [vmem:[%s7534 + $0x18] sm:$0xff]
        %v7539 = vld [vmem:[%s7534 + $0x20] sm:$0xff]
        %v7540 = vld [vmem:[%s7534 + $0x28] sm:$0xff]
        %v7541 = vld [vmem:[%s7534 + $0x30] sm:$0xff]
        %v7542 = vld [vmem:[%s7534 + $0x38] sm:$0xff]
        %v7543 = vld [vmem:[%s7534 + $0x40] sm:$0xff]
        %v7544 = vld [vmem:[%s7534 + $0x48] sm:$0xff]
        %v7545 = vld [vmem:[%s7534 + $0x50] sm:$0xff]
        %v7546 = vld [vmem:[%s7534 + $0x58] sm:$0xff]
        %v7547 = vld [vmem:[%s7534 + $0x60] sm:$0xff]
        %v7548 = vld [vmem:[%s7534 + $0x68] sm:$0xff]
        %v7549 = vld [vmem:[%s7534 + $0x70] sm:$0xff]
        %v7550 = vld [vmem:[%s7534 + $0x78] sm:$0xff]
        %7551 = vmatprep.subr.mxu0 0.0
        %7552 = vmatpush1.msra.mxu0 %v7550
        %7553 = vmatprep.subr.mxu0 0.0
        %7554 = vmatpush1.msra.mxu0 %v7549
        %7555 = vmatprep.subr.mxu0 0.0
        %7556 = vmatpush1.msra.mxu0 %v7548
        %7557 = vmatprep.subr.mxu0 0.0
        %7558 = vmatpush1.msra.mxu0 %v7547
        %7559 = vmatprep.subr.mxu0 0.0
        %7560 = vmatpush1.msra.mxu0 %v7546
        %7561 = vmatprep.subr.mxu0 0.0
        %7562 = vmatpush1.msra.mxu0 %v7545
        %7563 = vmatprep.subr.mxu0 0.0
        %7564 = vmatpush1.msra.mxu0 %v7544
        %7565 = vmatprep.subr.mxu0 0.0
        %7566 = vmatpush1.msra.mxu0 %v7543
        %7567 = vmatprep.subr.mxu0 0.0
        %7568 = vmatpush1.msra.mxu0 %v7542
        %7569 = vmatprep.subr.mxu0 0.0
        %7570 = vmatpush1.msra.mxu0 %v7541
        %7571 = vmatprep.subr.mxu0 0.0
        %7572 = vmatpush1.msra.mxu0 %v7540
        %7573 = vmatprep.subr.mxu0 0.0
        %7574 = vmatpush1.msra.mxu0 %v7539
        %7575 = vmatprep.subr.mxu0 0.0
        %7576 = vmatpush1.msra.mxu0 %v7538
        %7577 = vmatprep.subr.mxu0 0.0
        %7578 = vmatpush1.msra.mxu0 %v7537
        %7579 = vmatprep.subr.mxu0 0.0
        %7580 = vmatpush1.msra.mxu0 %v7536
        %7581 = vmatprep.subr.mxu0 0.0
        %7582 = vmatpush1.msra.mxu0 %v7535
        %7583 = vmatprep.subr.mxu0 0.0
        %7584 = vmatpush2.msra.mxu0 0.0
        %7585 = vmatprep.subr.mxu0 0.0
        %7586 = vmatpush2.msra.mxu0 0.0
        %7587 = vmatprep.subr.mxu0 0.0
        %7588 = vmatpush2.msra.mxu0 0.0
        %7589 = vmatprep.subr.mxu0 0.0
        %7590 = vmatpush2.msra.mxu0 0.0
        %7591 = vmatprep.subr.mxu0 0.0
        %7592 = vmatpush2.msra.mxu0 0.0
        %7593 = vmatprep.subr.mxu0 0.0
        %7594 = vmatpush2.msra.mxu0 0.0
        %7595 = vmatprep.subr.mxu0 0.0
        %7596 = vmatpush2.msra.mxu0 0.0
        %7597 = vmatprep.subr.mxu0 0.0
        %7598 = vmatpush2.msra.mxu0 0.0
        %7599 = vmatprep.subr.mxu0 0.0
        %7600 = vmatpush2.msra.mxu0 0.0
        %7601 = vmatprep.subr.mxu0 0.0
        %7602 = vmatpush2.msra.mxu0 0.0
        %7603 = vmatprep.subr.mxu0 0.0
        %7604 = vmatpush2.msra.mxu0 0.0
        %7605 = vmatprep.subr.mxu0 0.0
        %7606 = vmatpush2.msra.mxu0 0.0
        %7607 = vmatprep.subr.mxu0 0.0
        %7608 = vmatpush2.msra.mxu0 0.0
        %7609 = vmatprep.subr.mxu0 0.0
        %7610 = vmatpush2.msra.mxu0 0.0
        %7611 = vmatprep.subr.mxu0 0.0
        %7612 = vmatpush2.msra.mxu0 0.0
        %7613 = vmatprep.subr.mxu0 0.0
        %7614 = vmatpush2.msra.mxu0 0.0
        %7615 = vmatprep.mubr.f32.mxu0 0.0
        %7616 = vmatmul.mubr.f32.gmra.mxu0 %v7526
        %v7617 = vpop.f32.mrf.mxu0
        %v7618 = vadd.f32 0.0, %v7617
        %v7619 = vpop.f32.mrf.mxu0
        %7620 = vmatprep.mubr.f32.mxu0 0.0
        %7621 = vmatmul.mubr.f32.gmra.mxu0 %v7527
        %v7622 = vpop.f32.mrf.mxu0
        %v7623 = vadd.f32 0.0, %v7622
        %v7624 = vpop.f32.mrf.mxu0
        %7625 = vmatprep.mubr.f32.mxu0 0.0
        %7626 = vmatmul.mubr.f32.gmra.mxu0 %v7528
        %v7627 = vpop.f32.mrf.mxu0
        %v7628 = vadd.f32 0.0, %v7627
        %v7629 = vpop.f32.mrf.mxu0
        %7630 = vmatprep.mubr.f32.mxu0 0.0
        %7631 = vmatmul.mubr.f32.gmra.mxu0 %v7529
        %v7632 = vpop.f32.mrf.mxu0
        %v7633 = vadd.f32 0.0, %v7632
        %v7634 = vpop.f32.mrf.mxu0
        %7635 = vmatprep.mubr.f32.mxu0 0.0
        %7636 = vmatmul.mubr.f32.gmra.mxu0 %v7530
        %v7637 = vpop.f32.mrf.mxu0
        %v7638 = vadd.f32 0.0, %v7637
        %v7639 = vpop.f32.mrf.mxu0
        %7640 = vmatprep.mubr.f32.mxu0 0.0
        %7641 = vmatmul.mubr.f32.gmra.mxu0 %v7531
        %v7642 = vpop.f32.mrf.mxu0
        %v7643 = vadd.f32 0.0, %v7642
        %v7644 = vpop.f32.mrf.mxu0
        %7645 = vmatprep.mubr.f32.mxu0 0.0
        %7646 = vmatmul.mubr.f32.gmra.mxu0 %v7532
        %v7647 = vpop.f32.mrf.mxu0
        %v7648 = vadd.f32 0.0, %v7647
        %v7649 = vpop.f32.mrf.mxu0
        %7650 = vmatprep.mubr.f32.mxu0 0.0
        %7651 = vmatmul.mubr.f32.gmra.mxu0 %v7533
        %v7652 = vpop.f32.mrf.mxu0
        %v7653 = vadd.f32 0.0, %v7652
        %v7654 = vpop.f32.mrf.mxu0
        %7655 = vdwg.mxu0
        %v7656 = vadd.f32 %v7518, %v7618
        %v7657 = vadd.f32 %v7519, %v7623
        %v7658 = vadd.f32 %v7520, %v7628
        %v7659 = vadd.f32 %v7521, %v7633
        %v7660 = vadd.f32 %v7522, %v7638
        %v7661 = vadd.f32 %v7523, %v7643
        %v7662 = vadd.f32 %v7524, %v7648
        %v7663 = vadd.f32 %v7525, %v7653
        %v7664 = vld [vmem:[%s7120 + $0x8] sm:$0xff]
        %v7665 = vld [vmem:[%s7120 + $0x20] sm:$0xff]
        %v7666 = vld [vmem:[%s7120 + $0x38] sm:$0xff]
        %v7667 = vld [vmem:[%s7120 + $0x50] sm:$0xff]
        %v7668 = vld [vmem:[%s7120 + $0x68] sm:$0xff]
        %v7669 = vld [vmem:[%s7120 + $0x80] sm:$0xff]
        %v7670 = vld [vmem:[%s7120 + $0x98] sm:$0xff]
        %v7671 = vld [vmem:[%s7120 + $0xb0] sm:$0xff]
        %s7672 = scalar_lea.vmem %s13, 512
        %v7673 = vld [vmem:[%s7672] sm:$0xff]
        %v7674 = vld [vmem:[%s7672 + $0x8] sm:$0xff]
        %v7675 = vld [vmem:[%s7672 + $0x10] sm:$0xff]
        %v7676 = vld [vmem:[%s7672 + $0x18] sm:$0xff]
        %v7677 = vld [vmem:[%s7672 + $0x20] sm:$0xff]
        %v7678 = vld [vmem:[%s7672 + $0x28] sm:$0xff]
        %v7679 = vld [vmem:[%s7672 + $0x30] sm:$0xff]
        %v7680 = vld [vmem:[%s7672 + $0x38] sm:$0xff]
        %v7681 = vld [vmem:[%s7672 + $0x40] sm:$0xff]
        %v7682 = vld [vmem:[%s7672 + $0x48] sm:$0xff]
        %v7683 = vld [vmem:[%s7672 + $0x50] sm:$0xff]
        %v7684 = vld [vmem:[%s7672 + $0x58] sm:$0xff]
        %v7685 = vld [vmem:[%s7672 + $0x60] sm:$0xff]
        %v7686 = vld [vmem:[%s7672 + $0x68] sm:$0xff]
        %v7687 = vld [vmem:[%s7672 + $0x70] sm:$0xff]
        %v7688 = vld [vmem:[%s7672 + $0x78] sm:$0xff]
        %7689 = vmatprep.subr.mxu0 0.0
        %7690 = vmatpush1.msra.mxu0 %v7688
        %7691 = vmatprep.subr.mxu0 0.0
        %7692 = vmatpush1.msra.mxu0 %v7687
        %7693 = vmatprep.subr.mxu0 0.0
        %7694 = vmatpush1.msra.mxu0 %v7686
        %7695 = vmatprep.subr.mxu0 0.0
        %7696 = vmatpush1.msra.mxu0 %v7685
        %7697 = vmatprep.subr.mxu0 0.0
        %7698 = vmatpush1.msra.mxu0 %v7684
        %7699 = vmatprep.subr.mxu0 0.0
        %7700 = vmatpush1.msra.mxu0 %v7683
        %7701 = vmatprep.subr.mxu0 0.0
        %7702 = vmatpush1.msra.mxu0 %v7682
        %7703 = vmatprep.subr.mxu0 0.0
        %7704 = vmatpush1.msra.mxu0 %v7681
        %7705 = vmatprep.subr.mxu0 0.0
        %7706 = vmatpush1.msra.mxu0 %v7680
        %7707 = vmatprep.subr.mxu0 0.0
        %7708 = vmatpush1.msra.mxu0 %v7679
        %7709 = vmatprep.subr.mxu0 0.0
        %7710 = vmatpush1.msra.mxu0 %v7678
        %7711 = vmatprep.subr.mxu0 0.0
        %7712 = vmatpush1.msra.mxu0 %v7677
        %7713 = vmatprep.subr.mxu0 0.0
        %7714 = vmatpush1.msra.mxu0 %v7676
        %7715 = vmatprep.subr.mxu0 0.0
        %7716 = vmatpush1.msra.mxu0 %v7675
        %7717 = vmatprep.subr.mxu0 0.0
        %7718 = vmatpush1.msra.mxu0 %v7674
        %7719 = vmatprep.subr.mxu0 0.0
        %7720 = vmatpush1.msra.mxu0 %v7673
        %7721 = vmatprep.subr.mxu0 0.0
        %7722 = vmatpush2.msra.mxu0 0.0
        %7723 = vmatprep.subr.mxu0 0.0
        %7724 = vmatpush2.msra.mxu0 0.0
        %7725 = vmatprep.subr.mxu0 0.0
        %7726 = vmatpush2.msra.mxu0 0.0
        %7727 = vmatprep.subr.mxu0 0.0
        %7728 = vmatpush2.msra.mxu0 0.0
        %7729 = vmatprep.subr.mxu0 0.0
        %7730 = vmatpush2.msra.mxu0 0.0
        %7731 = vmatprep.subr.mxu0 0.0
        %7732 = vmatpush2.msra.mxu0 0.0
        %7733 = vmatprep.subr.mxu0 0.0
        %7734 = vmatpush2.msra.mxu0 0.0
        %7735 = vmatprep.subr.mxu0 0.0
        %7736 = vmatpush2.msra.mxu0 0.0
        %7737 = vmatprep.subr.mxu0 0.0
        %7738 = vmatpush2.msra.mxu0 0.0
        %7739 = vmatprep.subr.mxu0 0.0
        %7740 = vmatpush2.msra.mxu0 0.0
        %7741 = vmatprep.subr.mxu0 0.0
        %7742 = vmatpush2.msra.mxu0 0.0
        %7743 = vmatprep.subr.mxu0 0.0
        %7744 = vmatpush2.msra.mxu0 0.0
        %7745 = vmatprep.subr.mxu0 0.0
        %7746 = vmatpush2.msra.mxu0 0.0
        %7747 = vmatprep.subr.mxu0 0.0
        %7748 = vmatpush2.msra.mxu0 0.0
        %7749 = vmatprep.subr.mxu0 0.0
        %7750 = vmatpush2.msra.mxu0 0.0
        %7751 = vmatprep.subr.mxu0 0.0
        %7752 = vmatpush2.msra.mxu0 0.0
        %7753 = vmatprep.mubr.f32.mxu0 0.0
        %7754 = vmatmul.mubr.f32.gmra.mxu0 %v7664
        %v7755 = vpop.f32.mrf.mxu0
        %v7756 = vadd.f32 0.0, %v7755
        %v7757 = vpop.f32.mrf.mxu0
        %7758 = vmatprep.mubr.f32.mxu0 0.0
        %7759 = vmatmul.mubr.f32.gmra.mxu0 %v7665
        %v7760 = vpop.f32.mrf.mxu0
        %v7761 = vadd.f32 0.0, %v7760
        %v7762 = vpop.f32.mrf.mxu0
        %7763 = vmatprep.mubr.f32.mxu0 0.0
        %7764 = vmatmul.mubr.f32.gmra.mxu0 %v7666
        %v7765 = vpop.f32.mrf.mxu0
        %v7766 = vadd.f32 0.0, %v7765
        %v7767 = vpop.f32.mrf.mxu0
        %7768 = vmatprep.mubr.f32.mxu0 0.0
        %7769 = vmatmul.mubr.f32.gmra.mxu0 %v7667
        %v7770 = vpop.f32.mrf.mxu0
        %v7771 = vadd.f32 0.0, %v7770
        %v7772 = vpop.f32.mrf.mxu0
        %7773 = vmatprep.mubr.f32.mxu0 0.0
        %7774 = vmatmul.mubr.f32.gmra.mxu0 %v7668
        %v7775 = vpop.f32.mrf.mxu0
        %v7776 = vadd.f32 0.0, %v7775
        %v7777 = vpop.f32.mrf.mxu0
        %7778 = vmatprep.mubr.f32.mxu0 0.0
        %7779 = vmatmul.mubr.f32.gmra.mxu0 %v7669
        %v7780 = vpop.f32.mrf.mxu0
        %v7781 = vadd.f32 0.0, %v7780
        %v7782 = vpop.f32.mrf.mxu0
        %7783 = vmatprep.mubr.f32.mxu0 0.0
        %7784 = vmatmul.mubr.f32.gmra.mxu0 %v7670
        %v7785 = vpop.f32.mrf.mxu0
        %v7786 = vadd.f32 0.0, %v7785
        %v7787 = vpop.f32.mrf.mxu0
        %7788 = vmatprep.mubr.f32.mxu0 0.0
        %7789 = vmatmul.mubr.f32.gmra.mxu0 %v7671
        %v7790 = vpop.f32.mrf.mxu0
        %v7791 = vadd.f32 0.0, %v7790
        %v7792 = vpop.f32.mrf.mxu0
        %7793 = vdwg.mxu0
        %v7794 = vadd.f32 %v7656, %v7756
        %v7795 = vadd.f32 %v7657, %v7761
        %v7796 = vadd.f32 %v7658, %v7766
        %v7797 = vadd.f32 %v7659, %v7771
        %v7798 = vadd.f32 %v7660, %v7776
        %v7799 = vadd.f32 %v7661, %v7781
        %v7800 = vadd.f32 %v7662, %v7786
        %v7801 = vadd.f32 %v7663, %v7791
        %v7802 = vld [vmem:[%s7120 + $0x9] sm:$0xff]
        %v7803 = vld [vmem:[%s7120 + $0x21] sm:$0xff]
        %v7804 = vld [vmem:[%s7120 + $0x39] sm:$0xff]
        %v7805 = vld [vmem:[%s7120 + $0x51] sm:$0xff]
        %v7806 = vld [vmem:[%s7120 + $0x69] sm:$0xff]
        %v7807 = vld [vmem:[%s7120 + $0x81] sm:$0xff]
        %v7808 = vld [vmem:[%s7120 + $0x99] sm:$0xff]
        %v7809 = vld [vmem:[%s7120 + $0xb1] sm:$0xff]
        %s7810 = scalar_lea.vmem %s13, 640
        %v7811 = vld [vmem:[%s7810] sm:$0xff]
        %v7812 = vld [vmem:[%s7810 + $0x8] sm:$0xff]
        %v7813 = vld [vmem:[%s7810 + $0x10] sm:$0xff]
        %v7814 = vld [vmem:[%s7810 + $0x18] sm:$0xff]
        %v7815 = vld [vmem:[%s7810 + $0x20] sm:$0xff]
        %v7816 = vld [vmem:[%s7810 + $0x28] sm:$0xff]
        %v7817 = vld [vmem:[%s7810 + $0x30] sm:$0xff]
        %v7818 = vld [vmem:[%s7810 + $0x38] sm:$0xff]
        %v7819 = vld [vmem:[%s7810 + $0x40] sm:$0xff]
        %v7820 = vld [vmem:[%s7810 + $0x48] sm:$0xff]
        %v7821 = vld [vmem:[%s7810 + $0x50] sm:$0xff]
        %v7822 = vld [vmem:[%s7810 + $0x58] sm:$0xff]
        %v7823 = vld [vmem:[%s7810 + $0x60] sm:$0xff]
        %v7824 = vld [vmem:[%s7810 + $0x68] sm:$0xff]
        %v7825 = vld [vmem:[%s7810 + $0x70] sm:$0xff]
        %v7826 = vld [vmem:[%s7810 + $0x78] sm:$0xff]
        %7827 = vmatprep.subr.mxu0 0.0
        %7828 = vmatpush1.msra.mxu0 %v7826
        %7829 = vmatprep.subr.mxu0 0.0
        %7830 = vmatpush1.msra.mxu0 %v7825
        %7831 = vmatprep.subr.mxu0 0.0
        %7832 = vmatpush1.msra.mxu0 %v7824
        %7833 = vmatprep.subr.mxu0 0.0
        %7834 = vmatpush1.msra.mxu0 %v7823
        %7835 = vmatprep.subr.mxu0 0.0
        %7836 = vmatpush1.msra.mxu0 %v7822
        %7837 = vmatprep.subr.mxu0 0.0
        %7838 = vmatpush1.msra.mxu0 %v7821
        %7839 = vmatprep.subr.mxu0 0.0
        %7840 = vmatpush1.msra.mxu0 %v7820
        %7841 = vmatprep.subr.mxu0 0.0
        %7842 = vmatpush1.msra.mxu0 %v7819
        %7843 = vmatprep.subr.mxu0 0.0
        %7844 = vmatpush1.msra.mxu0 %v7818
        %7845 = vmatprep.subr.mxu0 0.0
        %7846 = vmatpush1.msra.mxu0 %v7817
        %7847 = vmatprep.subr.mxu0 0.0
        %7848 = vmatpush1.msra.mxu0 %v7816
        %7849 = vmatprep.subr.mxu0 0.0
        %7850 = vmatpush1.msra.mxu0 %v7815
        %7851 = vmatprep.subr.mxu0 0.0
        %7852 = vmatpush1.msra.mxu0 %v7814
        %7853 = vmatprep.subr.mxu0 0.0
        %7854 = vmatpush1.msra.mxu0 %v7813
        %7855 = vmatprep.subr.mxu0 0.0
        %7856 = vmatpush1.msra.mxu0 %v7812
        %7857 = vmatprep.subr.mxu0 0.0
        %7858 = vmatpush1.msra.mxu0 %v7811
        %7859 = vmatprep.subr.mxu0 0.0
        %7860 = vmatpush2.msra.mxu0 0.0
        %7861 = vmatprep.subr.mxu0 0.0
        %7862 = vmatpush2.msra.mxu0 0.0
        %7863 = vmatprep.subr.mxu0 0.0
        %7864 = vmatpush2.msra.mxu0 0.0
        %7865 = vmatprep.subr.mxu0 0.0
        %7866 = vmatpush2.msra.mxu0 0.0
        %7867 = vmatprep.subr.mxu0 0.0
        %7868 = vmatpush2.msra.mxu0 0.0
        %7869 = vmatprep.subr.mxu0 0.0
        %7870 = vmatpush2.msra.mxu0 0.0
        %7871 = vmatprep.subr.mxu0 0.0
        %7872 = vmatpush2.msra.mxu0 0.0
        %7873 = vmatprep.subr.mxu0 0.0
        %7874 = vmatpush2.msra.mxu0 0.0
        %7875 = vmatprep.subr.mxu0 0.0
        %7876 = vmatpush2.msra.mxu0 0.0
        %7877 = vmatprep.subr.mxu0 0.0
        %7878 = vmatpush2.msra.mxu0 0.0
        %7879 = vmatprep.subr.mxu0 0.0
        %7880 = vmatpush2.msra.mxu0 0.0
        %7881 = vmatprep.subr.mxu0 0.0
        %7882 = vmatpush2.msra.mxu0 0.0
        %7883 = vmatprep.subr.mxu0 0.0
        %7884 = vmatpush2.msra.mxu0 0.0
        %7885 = vmatprep.subr.mxu0 0.0
        %7886 = vmatpush2.msra.mxu0 0.0
        %7887 = vmatprep.subr.mxu0 0.0
        %7888 = vmatpush2.msra.mxu0 0.0
        %7889 = vmatprep.subr.mxu0 0.0
        %7890 = vmatpush2.msra.mxu0 0.0
        %7891 = vmatprep.mubr.f32.mxu0 0.0
        %7892 = vmatmul.mubr.f32.gmra.mxu0 %v7802
        %v7893 = vpop.f32.mrf.mxu0
        %v7894 = vadd.f32 0.0, %v7893
        %v7895 = vpop.f32.mrf.mxu0
        %7896 = vmatprep.mubr.f32.mxu0 0.0
        %7897 = vmatmul.mubr.f32.gmra.mxu0 %v7803
        %v7898 = vpop.f32.mrf.mxu0
        %v7899 = vadd.f32 0.0, %v7898
        %v7900 = vpop.f32.mrf.mxu0
        %7901 = vmatprep.mubr.f32.mxu0 0.0
        %7902 = vmatmul.mubr.f32.gmra.mxu0 %v7804
        %v7903 = vpop.f32.mrf.mxu0
        %v7904 = vadd.f32 0.0, %v7903
        %v7905 = vpop.f32.mrf.mxu0
        %7906 = vmatprep.mubr.f32.mxu0 0.0
        %7907 = vmatmul.mubr.f32.gmra.mxu0 %v7805
        %v7908 = vpop.f32.mrf.mxu0
        %v7909 = vadd.f32 0.0, %v7908
        %v7910 = vpop.f32.mrf.mxu0
        %7911 = vmatprep.mubr.f32.mxu0 0.0
        %7912 = vmatmul.mubr.f32.gmra.mxu0 %v7806
        %v7913 = vpop.f32.mrf.mxu0
        %v7914 = vadd.f32 0.0, %v7913
        %v7915 = vpop.f32.mrf.mxu0
        %7916 = vmatprep.mubr.f32.mxu0 0.0
        %7917 = vmatmul.mubr.f32.gmra.mxu0 %v7807
        %v7918 = vpop.f32.mrf.mxu0
        %v7919 = vadd.f32 0.0, %v7918
        %v7920 = vpop.f32.mrf.mxu0
        %7921 = vmatprep.mubr.f32.mxu0 0.0
        %7922 = vmatmul.mubr.f32.gmra.mxu0 %v7808
        %v7923 = vpop.f32.mrf.mxu0
        %v7924 = vadd.f32 0.0, %v7923
        %v7925 = vpop.f32.mrf.mxu0
        %7926 = vmatprep.mubr.f32.mxu0 0.0
        %7927 = vmatmul.mubr.f32.gmra.mxu0 %v7809
        %v7928 = vpop.f32.mrf.mxu0
        %v7929 = vadd.f32 0.0, %v7928
        %v7930 = vpop.f32.mrf.mxu0
        %7931 = vdwg.mxu0
        %v7932 = vadd.f32 %v7794, %v7894
        %v7933 = vadd.f32 %v7795, %v7899
        %v7934 = vadd.f32 %v7796, %v7904
        %v7935 = vadd.f32 %v7797, %v7909
        %v7936 = vadd.f32 %v7798, %v7914
        %v7937 = vadd.f32 %v7799, %v7919
        %v7938 = vadd.f32 %v7800, %v7924
        %v7939 = vadd.f32 %v7801, %v7929
        %s7940 = scalar_lea.vmem [#allocation4], 48
        %v7941 = vld [vmem:[%s7940 + $0x7] sm:$0xff]
        %v7942 = vld [vmem:[%s7940 + $0x1f] sm:$0xff]
        %v7943 = vld [vmem:[%s7940 + $0x37] sm:$0xff]
        %v7944 = vld [vmem:[%s7940 + $0x4f] sm:$0xff]
        %v7945 = vld [vmem:[%s7940 + $0x67] sm:$0xff]
        %v7946 = vld [vmem:[%s7940 + $0x7f] sm:$0xff]
        %v7947 = vld [vmem:[%s7940 + $0x97] sm:$0xff]
        %v7948 = vld [vmem:[%s7940 + $0xaf] sm:$0xff]
        %s7949 = scalar_lea.vmem %s13, 768
        %v7950 = vld [vmem:[%s7949] sm:$0xff]
        %v7951 = vld [vmem:[%s7949 + $0x8] sm:$0xff]
        %v7952 = vld [vmem:[%s7949 + $0x10] sm:$0xff]
        %v7953 = vld [vmem:[%s7949 + $0x18] sm:$0xff]
        %v7954 = vld [vmem:[%s7949 + $0x20] sm:$0xff]
        %v7955 = vld [vmem:[%s7949 + $0x28] sm:$0xff]
        %v7956 = vld [vmem:[%s7949 + $0x30] sm:$0xff]
        %v7957 = vld [vmem:[%s7949 + $0x38] sm:$0xff]
        %v7958 = vld [vmem:[%s7949 + $0x40] sm:$0xff]
        %v7959 = vld [vmem:[%s7949 + $0x48] sm:$0xff]
        %v7960 = vld [vmem:[%s7949 + $0x50] sm:$0xff]
        %v7961 = vld [vmem:[%s7949 + $0x58] sm:$0xff]
        %v7962 = vld [vmem:[%s7949 + $0x60] sm:$0xff]
        %v7963 = vld [vmem:[%s7949 + $0x68] sm:$0xff]
        %v7964 = vld [vmem:[%s7949 + $0x70] sm:$0xff]
        %v7965 = vld [vmem:[%s7949 + $0x78] sm:$0xff]
        %7966 = vmatprep.subr.mxu0 0.0
        %7967 = vmatpush1.msra.mxu0 %v7965
        %7968 = vmatprep.subr.mxu0 0.0
        %7969 = vmatpush1.msra.mxu0 %v7964
        %7970 = vmatprep.subr.mxu0 0.0
        %7971 = vmatpush1.msra.mxu0 %v7963
        %7972 = vmatprep.subr.mxu0 0.0
        %7973 = vmatpush1.msra.mxu0 %v7962
        %7974 = vmatprep.subr.mxu0 0.0
        %7975 = vmatpush1.msra.mxu0 %v7961
        %7976 = vmatprep.subr.mxu0 0.0
        %7977 = vmatpush1.msra.mxu0 %v7960
        %7978 = vmatprep.subr.mxu0 0.0
        %7979 = vmatpush1.msra.mxu0 %v7959
        %7980 = vmatprep.subr.mxu0 0.0
        %7981 = vmatpush1.msra.mxu0 %v7958
        %7982 = vmatprep.subr.mxu0 0.0
        %7983 = vmatpush1.msra.mxu0 %v7957
        %7984 = vmatprep.subr.mxu0 0.0
        %7985 = vmatpush1.msra.mxu0 %v7956
        %7986 = vmatprep.subr.mxu0 0.0
        %7987 = vmatpush1.msra.mxu0 %v7955
        %7988 = vmatprep.subr.mxu0 0.0
        %7989 = vmatpush1.msra.mxu0 %v7954
        %7990 = vmatprep.subr.mxu0 0.0
        %7991 = vmatpush1.msra.mxu0 %v7953
        %7992 = vmatprep.subr.mxu0 0.0
        %7993 = vmatpush1.msra.mxu0 %v7952
        %7994 = vmatprep.subr.mxu0 0.0
        %7995 = vmatpush1.msra.mxu0 %v7951
        %7996 = vmatprep.subr.mxu0 0.0
        %7997 = vmatpush1.msra.mxu0 %v7950
        %7998 = vmatprep.subr.mxu0 0.0
        %7999 = vmatpush2.msra.mxu0 0.0
        %8000 = vmatprep.subr.mxu0 0.0
        %8001 = vmatpush2.msra.mxu0 0.0
        %8002 = vmatprep.subr.mxu0 0.0
        %8003 = vmatpush2.msra.mxu0 0.0
        %8004 = vmatprep.subr.mxu0 0.0
        %8005 = vmatpush2.msra.mxu0 0.0
        %8006 = vmatprep.subr.mxu0 0.0
        %8007 = vmatpush2.msra.mxu0 0.0
        %8008 = vmatprep.subr.mxu0 0.0
        %8009 = vmatpush2.msra.mxu0 0.0
        %8010 = vmatprep.subr.mxu0 0.0
        %8011 = vmatpush2.msra.mxu0 0.0
        %8012 = vmatprep.subr.mxu0 0.0
        %8013 = vmatpush2.msra.mxu0 0.0
        %8014 = vmatprep.subr.mxu0 0.0
        %8015 = vmatpush2.msra.mxu0 0.0
        %8016 = vmatprep.subr.mxu0 0.0
        %8017 = vmatpush2.msra.mxu0 0.0
        %8018 = vmatprep.subr.mxu0 0.0
        %8019 = vmatpush2.msra.mxu0 0.0
        %8020 = vmatprep.subr.mxu0 0.0
        %8021 = vmatpush2.msra.mxu0 0.0
        %8022 = vmatprep.subr.mxu0 0.0
        %8023 = vmatpush2.msra.mxu0 0.0
        %8024 = vmatprep.subr.mxu0 0.0
        %8025 = vmatpush2.msra.mxu0 0.0
        %8026 = vmatprep.subr.mxu0 0.0
        %8027 = vmatpush2.msra.mxu0 0.0
        %8028 = vmatprep.subr.mxu0 0.0
        %8029 = vmatpush2.msra.mxu0 0.0
        %8030 = vmatprep.mubr.f32.mxu0 0.0
        %8031 = vmatmul.mubr.f32.gmra.mxu0 %v7941
        %v8032 = vpop.f32.mrf.mxu0
        %v8033 = vadd.f32 0.0, %v8032
        %v8034 = vpop.f32.mrf.mxu0
        %8035 = vmatprep.mubr.f32.mxu0 0.0
        %8036 = vmatmul.mubr.f32.gmra.mxu0 %v7942
        %v8037 = vpop.f32.mrf.mxu0
        %v8038 = vadd.f32 0.0, %v8037
        %v8039 = vpop.f32.mrf.mxu0
        %8040 = vmatprep.mubr.f32.mxu0 0.0
        %8041 = vmatmul.mubr.f32.gmra.mxu0 %v7943
        %v8042 = vpop.f32.mrf.mxu0
        %v8043 = vadd.f32 0.0, %v8042
        %v8044 = vpop.f32.mrf.mxu0
        %8045 = vmatprep.mubr.f32.mxu0 0.0
        %8046 = vmatmul.mubr.f32.gmra.mxu0 %v7944
        %v8047 = vpop.f32.mrf.mxu0
        %v8048 = vadd.f32 0.0, %v8047
        %v8049 = vpop.f32.mrf.mxu0
        %8050 = vmatprep.mubr.f32.mxu0 0.0
        %8051 = vmatmul.mubr.f32.gmra.mxu0 %v7945
        %v8052 = vpop.f32.mrf.mxu0
        %v8053 = vadd.f32 0.0, %v8052
        %v8054 = vpop.f32.mrf.mxu0
        %8055 = vmatprep.mubr.f32.mxu0 0.0
        %8056 = vmatmul.mubr.f32.gmra.mxu0 %v7946
        %v8057 = vpop.f32.mrf.mxu0
        %v8058 = vadd.f32 0.0, %v8057
        %v8059 = vpop.f32.mrf.mxu0
        %8060 = vmatprep.mubr.f32.mxu0 0.0
        %8061 = vmatmul.mubr.f32.gmra.mxu0 %v7947
        %v8062 = vpop.f32.mrf.mxu0
        %v8063 = vadd.f32 0.0, %v8062
        %v8064 = vpop.f32.mrf.mxu0
        %8065 = vmatprep.mubr.f32.mxu0 0.0
        %8066 = vmatmul.mubr.f32.gmra.mxu0 %v7948
        %v8067 = vpop.f32.mrf.mxu0
        %v8068 = vadd.f32 0.0, %v8067
        %v8069 = vpop.f32.mrf.mxu0
        %8070 = vdwg.mxu0
        %v8071 = vadd.f32 %v7932, %v8033
        %v8072 = vadd.f32 %v7933, %v8038
        %v8073 = vadd.f32 %v7934, %v8043
        %v8074 = vadd.f32 %v7935, %v8048
        %v8075 = vadd.f32 %v7936, %v8053
        %v8076 = vadd.f32 %v7937, %v8058
        %v8077 = vadd.f32 %v7938, %v8063
        %v8078 = vadd.f32 %v7939, %v8068
        %v8079 = vld [vmem:[%s7940 + $0x8] sm:$0xff]
        %v8080 = vld [vmem:[%s7940 + $0x20] sm:$0xff]
        %v8081 = vld [vmem:[%s7940 + $0x38] sm:$0xff]
        %v8082 = vld [vmem:[%s7940 + $0x50] sm:$0xff]
        %v8083 = vld [vmem:[%s7940 + $0x68] sm:$0xff]
        %v8084 = vld [vmem:[%s7940 + $0x80] sm:$0xff]
        %v8085 = vld [vmem:[%s7940 + $0x98] sm:$0xff]
        %v8086 = vld [vmem:[%s7940 + $0xb0] sm:$0xff]
        %s8087 = scalar_lea.vmem %s13, 896
        %v8088 = vld [vmem:[%s8087] sm:$0xff]
        %v8089 = vld [vmem:[%s8087 + $0x8] sm:$0xff]
        %v8090 = vld [vmem:[%s8087 + $0x10] sm:$0xff]
        %v8091 = vld [vmem:[%s8087 + $0x18] sm:$0xff]
        %v8092 = vld [vmem:[%s8087 + $0x20] sm:$0xff]
        %v8093 = vld [vmem:[%s8087 + $0x28] sm:$0xff]
        %v8094 = vld [vmem:[%s8087 + $0x30] sm:$0xff]
        %v8095 = vld [vmem:[%s8087 + $0x38] sm:$0xff]
        %v8096 = vld [vmem:[%s8087 + $0x40] sm:$0xff]
        %v8097 = vld [vmem:[%s8087 + $0x48] sm:$0xff]
        %v8098 = vld [vmem:[%s8087 + $0x50] sm:$0xff]
        %v8099 = vld [vmem:[%s8087 + $0x58] sm:$0xff]
        %v8100 = vld [vmem:[%s8087 + $0x60] sm:$0xff]
        %v8101 = vld [vmem:[%s8087 + $0x68] sm:$0xff]
        %v8102 = vld [vmem:[%s8087 + $0x70] sm:$0xff]
        %v8103 = vld [vmem:[%s8087 + $0x78] sm:$0xff]
        %8104 = vmatprep.subr.mxu0 0.0
        %8105 = vmatpush1.msra.mxu0 %v8103
        %8106 = vmatprep.subr.mxu0 0.0
        %8107 = vmatpush1.msra.mxu0 %v8102
        %8108 = vmatprep.subr.mxu0 0.0
        %8109 = vmatpush1.msra.mxu0 %v8101
        %8110 = vmatprep.subr.mxu0 0.0
        %8111 = vmatpush1.msra.mxu0 %v8100
        %8112 = vmatprep.subr.mxu0 0.0
        %8113 = vmatpush1.msra.mxu0 %v8099
        %8114 = vmatprep.subr.mxu0 0.0
        %8115 = vmatpush1.msra.mxu0 %v8098
        %8116 = vmatprep.subr.mxu0 0.0
        %8117 = vmatpush1.msra.mxu0 %v8097
        %8118 = vmatprep.subr.mxu0 0.0
        %8119 = vmatpush1.msra.mxu0 %v8096
        %8120 = vmatprep.subr.mxu0 0.0
        %8121 = vmatpush1.msra.mxu0 %v8095
        %8122 = vmatprep.subr.mxu0 0.0
        %8123 = vmatpush1.msra.mxu0 %v8094
        %8124 = vmatprep.subr.mxu0 0.0
        %8125 = vmatpush1.msra.mxu0 %v8093
        %8126 = vmatprep.subr.mxu0 0.0
        %8127 = vmatpush1.msra.mxu0 %v8092
        %8128 = vmatprep.subr.mxu0 0.0
        %8129 = vmatpush1.msra.mxu0 %v8091
        %8130 = vmatprep.subr.mxu0 0.0
        %8131 = vmatpush1.msra.mxu0 %v8090
        %8132 = vmatprep.subr.mxu0 0.0
        %8133 = vmatpush1.msra.mxu0 %v8089
        %8134 = vmatprep.subr.mxu0 0.0
        %8135 = vmatpush1.msra.mxu0 %v8088
        %8136 = vmatprep.subr.mxu0 0.0
        %8137 = vmatpush2.msra.mxu0 0.0
        %8138 = vmatprep.subr.mxu0 0.0
        %8139 = vmatpush2.msra.mxu0 0.0
        %8140 = vmatprep.subr.mxu0 0.0
        %8141 = vmatpush2.msra.mxu0 0.0
        %8142 = vmatprep.subr.mxu0 0.0
        %8143 = vmatpush2.msra.mxu0 0.0
        %8144 = vmatprep.subr.mxu0 0.0
        %8145 = vmatpush2.msra.mxu0 0.0
        %8146 = vmatprep.subr.mxu0 0.0
        %8147 = vmatpush2.msra.mxu0 0.0
        %8148 = vmatprep.subr.mxu0 0.0
        %8149 = vmatpush2.msra.mxu0 0.0
        %8150 = vmatprep.subr.mxu0 0.0
        %8151 = vmatpush2.msra.mxu0 0.0
        %8152 = vmatprep.subr.mxu0 0.0
        %8153 = vmatpush2.msra.mxu0 0.0
        %8154 = vmatprep.subr.mxu0 0.0
        %8155 = vmatpush2.msra.mxu0 0.0
        %8156 = vmatprep.subr.mxu0 0.0
        %8157 = vmatpush2.msra.mxu0 0.0
        %8158 = vmatprep.subr.mxu0 0.0
        %8159 = vmatpush2.msra.mxu0 0.0
        %8160 = vmatprep.subr.mxu0 0.0
        %8161 = vmatpush2.msra.mxu0 0.0
        %8162 = vmatprep.subr.mxu0 0.0
        %8163 = vmatpush2.msra.mxu0 0.0
        %8164 = vmatprep.subr.mxu0 0.0
        %8165 = vmatpush2.msra.mxu0 0.0
        %8166 = vmatprep.subr.mxu0 0.0
        %8167 = vmatpush2.msra.mxu0 0.0
        %8168 = vmatprep.mubr.f32.mxu0 0.0
        %8169 = vmatmul.mubr.f32.gmra.mxu0 %v8079
        %v8170 = vpop.f32.mrf.mxu0
        %v8171 = vadd.f32 0.0, %v8170
        %v8172 = vpop.f32.mrf.mxu0
        %8173 = vmatprep.mubr.f32.mxu0 0.0
        %8174 = vmatmul.mubr.f32.gmra.mxu0 %v8080
        %v8175 = vpop.f32.mrf.mxu0
        %v8176 = vadd.f32 0.0, %v8175
        %v8177 = vpop.f32.mrf.mxu0
        %8178 = vmatprep.mubr.f32.mxu0 0.0
        %8179 = vmatmul.mubr.f32.gmra.mxu0 %v8081
        %v8180 = vpop.f32.mrf.mxu0
        %v8181 = vadd.f32 0.0, %v8180
        %v8182 = vpop.f32.mrf.mxu0
        %8183 = vmatprep.mubr.f32.mxu0 0.0
        %8184 = vmatmul.mubr.f32.gmra.mxu0 %v8082
        %v8185 = vpop.f32.mrf.mxu0
        %v8186 = vadd.f32 0.0, %v8185
        %v8187 = vpop.f32.mrf.mxu0
        %8188 = vmatprep.mubr.f32.mxu0 0.0
        %8189 = vmatmul.mubr.f32.gmra.mxu0 %v8083
        %v8190 = vpop.f32.mrf.mxu0
        %v8191 = vadd.f32 0.0, %v8190
        %v8192 = vpop.f32.mrf.mxu0
        %8193 = vmatprep.mubr.f32.mxu0 0.0
        %8194 = vmatmul.mubr.f32.gmra.mxu0 %v8084
        %v8195 = vpop.f32.mrf.mxu0
        %v8196 = vadd.f32 0.0, %v8195
        %v8197 = vpop.f32.mrf.mxu0
        %8198 = vmatprep.mubr.f32.mxu0 0.0
        %8199 = vmatmul.mubr.f32.gmra.mxu0 %v8085
        %v8200 = vpop.f32.mrf.mxu0
        %v8201 = vadd.f32 0.0, %v8200
        %v8202 = vpop.f32.mrf.mxu0
        %8203 = vmatprep.mubr.f32.mxu0 0.0
        %8204 = vmatmul.mubr.f32.gmra.mxu0 %v8086
        %v8205 = vpop.f32.mrf.mxu0
        %v8206 = vadd.f32 0.0, %v8205
        %v8207 = vpop.f32.mrf.mxu0
        %8208 = vdwg.mxu0
        %v8209 = vadd.f32 %v8071, %v8171
        %v8210 = vadd.f32 %v8072, %v8176
        %v8211 = vadd.f32 %v8073, %v8181
        %v8212 = vadd.f32 %v8074, %v8186
        %v8213 = vadd.f32 %v8075, %v8191
        %v8214 = vadd.f32 %v8076, %v8196
        %v8215 = vadd.f32 %v8077, %v8201
        %v8216 = vadd.f32 %v8078, %v8206
        %v8217 = vld [vmem:[%s7940 + $0x9] sm:$0xff]
        %v8218 = vld [vmem:[%s7940 + $0x21] sm:$0xff]
        %v8219 = vld [vmem:[%s7940 + $0x39] sm:$0xff]
        %v8220 = vld [vmem:[%s7940 + $0x51] sm:$0xff]
        %v8221 = vld [vmem:[%s7940 + $0x69] sm:$0xff]
        %v8222 = vld [vmem:[%s7940 + $0x81] sm:$0xff]
        %v8223 = vld [vmem:[%s7940 + $0x99] sm:$0xff]
        %v8224 = vld [vmem:[%s7940 + $0xb1] sm:$0xff]
        %s8225 = scalar_lea.vmem %s13, 1024
        %v8226 = vld [vmem:[%s8225] sm:$0xff]
        %v8227 = vld [vmem:[%s8225 + $0x8] sm:$0xff]
        %v8228 = vld [vmem:[%s8225 + $0x10] sm:$0xff]
        %v8229 = vld [vmem:[%s8225 + $0x18] sm:$0xff]
        %v8230 = vld [vmem:[%s8225 + $0x20] sm:$0xff]
        %v8231 = vld [vmem:[%s8225 + $0x28] sm:$0xff]
        %v8232 = vld [vmem:[%s8225 + $0x30] sm:$0xff]
        %v8233 = vld [vmem:[%s8225 + $0x38] sm:$0xff]
        %v8234 = vld [vmem:[%s8225 + $0x40] sm:$0xff]
        %v8235 = vld [vmem:[%s8225 + $0x48] sm:$0xff]
        %v8236 = vld [vmem:[%s8225 + $0x50] sm:$0xff]
        %v8237 = vld [vmem:[%s8225 + $0x58] sm:$0xff]
        %v8238 = vld [vmem:[%s8225 + $0x60] sm:$0xff]
        %v8239 = vld [vmem:[%s8225 + $0x68] sm:$0xff]
        %v8240 = vld [vmem:[%s8225 + $0x70] sm:$0xff]
        %v8241 = vld [vmem:[%s8225 + $0x78] sm:$0xff]
        %8242 = vmatprep.subr.mxu0 0.0
        %8243 = vmatpush1.msra.mxu0 %v8241
        %8244 = vmatprep.subr.mxu0 0.0
        %8245 = vmatpush1.msra.mxu0 %v8240
        %8246 = vmatprep.subr.mxu0 0.0
        %8247 = vmatpush1.msra.mxu0 %v8239
        %8248 = vmatprep.subr.mxu0 0.0
        %8249 = vmatpush1.msra.mxu0 %v8238
        %8250 = vmatprep.subr.mxu0 0.0
        %8251 = vmatpush1.msra.mxu0 %v8237
        %8252 = vmatprep.subr.mxu0 0.0
        %8253 = vmatpush1.msra.mxu0 %v8236
        %8254 = vmatprep.subr.mxu0 0.0
        %8255 = vmatpush1.msra.mxu0 %v8235
        %8256 = vmatprep.subr.mxu0 0.0
        %8257 = vmatpush1.msra.mxu0 %v8234
        %8258 = vmatprep.subr.mxu0 0.0
        %8259 = vmatpush1.msra.mxu0 %v8233
        %8260 = vmatprep.subr.mxu0 0.0
        %8261 = vmatpush1.msra.mxu0 %v8232
        %8262 = vmatprep.subr.mxu0 0.0
        %8263 = vmatpush1.msra.mxu0 %v8231
        %8264 = vmatprep.subr.mxu0 0.0
        %8265 = vmatpush1.msra.mxu0 %v8230
        %8266 = vmatprep.subr.mxu0 0.0
        %8267 = vmatpush1.msra.mxu0 %v8229
        %8268 = vmatprep.subr.mxu0 0.0
        %8269 = vmatpush1.msra.mxu0 %v8228
        %8270 = vmatprep.subr.mxu0 0.0
        %8271 = vmatpush1.msra.mxu0 %v8227
        %8272 = vmatprep.subr.mxu0 0.0
        %8273 = vmatpush1.msra.mxu0 %v8226
        %8274 = vmatprep.subr.mxu0 0.0
        %8275 = vmatpush2.msra.mxu0 0.0
        %8276 = vmatprep.subr.mxu0 0.0
        %8277 = vmatpush2.msra.mxu0 0.0
        %8278 = vmatprep.subr.mxu0 0.0
        %8279 = vmatpush2.msra.mxu0 0.0
        %8280 = vmatprep.subr.mxu0 0.0
        %8281 = vmatpush2.msra.mxu0 0.0
        %8282 = vmatprep.subr.mxu0 0.0
        %8283 = vmatpush2.msra.mxu0 0.0
        %8284 = vmatprep.subr.mxu0 0.0
        %8285 = vmatpush2.msra.mxu0 0.0
        %8286 = vmatprep.subr.mxu0 0.0
        %8287 = vmatpush2.msra.mxu0 0.0
        %8288 = vmatprep.subr.mxu0 0.0
        %8289 = vmatpush2.msra.mxu0 0.0
        %8290 = vmatprep.subr.mxu0 0.0
        %8291 = vmatpush2.msra.mxu0 0.0
        %8292 = vmatprep.subr.mxu0 0.0
        %8293 = vmatpush2.msra.mxu0 0.0
        %8294 = vmatprep.subr.mxu0 0.0
        %8295 = vmatpush2.msra.mxu0 0.0
        %8296 = vmatprep.subr.mxu0 0.0
        %8297 = vmatpush2.msra.mxu0 0.0
        %8298 = vmatprep.subr.mxu0 0.0
        %8299 = vmatpush2.msra.mxu0 0.0
        %8300 = vmatprep.subr.mxu0 0.0
        %8301 = vmatpush2.msra.mxu0 0.0
        %8302 = vmatprep.subr.mxu0 0.0
        %8303 = vmatpush2.msra.mxu0 0.0
        %8304 = vmatprep.subr.mxu0 0.0
        %8305 = vmatpush2.msra.mxu0 0.0
        %8306 = vmatprep.mubr.f32.mxu0 0.0
        %8307 = vmatmul.mubr.f32.gmra.mxu0 %v8217
        %v8308 = vpop.f32.mrf.mxu0
        %v8309 = vadd.f32 0.0, %v8308
        %v8310 = vpop.f32.mrf.mxu0
        %8311 = vmatprep.mubr.f32.mxu0 0.0
        %8312 = vmatmul.mubr.f32.gmra.mxu0 %v8218
        %v8313 = vpop.f32.mrf.mxu0
        %v8314 = vadd.f32 0.0, %v8313
        %v8315 = vpop.f32.mrf.mxu0
        %8316 = vmatprep.mubr.f32.mxu0 0.0
        %8317 = vmatmul.mubr.f32.gmra.mxu0 %v8219
        %v8318 = vpop.f32.mrf.mxu0
        %v8319 = vadd.f32 0.0, %v8318
        %v8320 = vpop.f32.mrf.mxu0
        %8321 = vmatprep.mubr.f32.mxu0 0.0
        %8322 = vmatmul.mubr.f32.gmra.mxu0 %v8220
        %v8323 = vpop.f32.mrf.mxu0
        %v8324 = vadd.f32 0.0, %v8323
        %v8325 = vpop.f32.mrf.mxu0
        %8326 = vmatprep.mubr.f32.mxu0 0.0
        %8327 = vmatmul.mubr.f32.gmra.mxu0 %v8221
        %v8328 = vpop.f32.mrf.mxu0
        %v8329 = vadd.f32 0.0, %v8328
        %v8330 = vpop.f32.mrf.mxu0
        %8331 = vmatprep.mubr.f32.mxu0 0.0
        %8332 = vmatmul.mubr.f32.gmra.mxu0 %v8222
        %v8333 = vpop.f32.mrf.mxu0
        %v8334 = vadd.f32 0.0, %v8333
        %v8335 = vpop.f32.mrf.mxu0
        %8336 = vmatprep.mubr.f32.mxu0 0.0
        %8337 = vmatmul.mubr.f32.gmra.mxu0 %v8223
        %v8338 = vpop.f32.mrf.mxu0
        %v8339 = vadd.f32 0.0, %v8338
        %v8340 = vpop.f32.mrf.mxu0
        %8341 = vmatprep.mubr.f32.mxu0 0.0
        %8342 = vmatmul.mubr.f32.gmra.mxu0 %v8224
        %v8343 = vpop.f32.mrf.mxu0
        %v8344 = vadd.f32 0.0, %v8343
        %v8345 = vpop.f32.mrf.mxu0
        %8346 = vdwg.mxu0
        %v8347 = vadd.f32 %v8209, %v8309
        %v8348 = vadd.f32 %v8210, %v8314
        %v8349 = vadd.f32 %v8211, %v8319
        %v8350 = vadd.f32 %v8212, %v8324
        %v8351 = vadd.f32 %v8213, %v8329
        %v8352 = vadd.f32 %v8214, %v8334
        %v8353 = vadd.f32 %v8215, %v8339
        %v8354 = vadd.f32 %v8216, %v8344
        %v8355 = vld [vmem:[%s14] sm:$0x1]
        %v8357 = vlaneseq
        %v8358 = vshrl.u32 %v8357, 7
        %v8359 = vsub.s32 0, %v8358
        %v8360 = vrot.slane %v8355, %v8359
        %v8362 = vadd.f32 %v8347, %v8360
        %v8363 = vadd.f32 %v8348, %v8360
        %v8364 = vadd.f32 %v8349, %v8360
        %v8365 = vadd.f32 %v8350, %v8360
        %v8366 = vadd.f32 %v8351, %v8360
        %v8367 = vadd.f32 %v8352, %v8360
        %v8368 = vadd.f32 %v8353, %v8360
        %v8369 = vadd.f32 %v8354, %v8360
        %8370 = vst [vmem:[%s815] sm:$0xff] %v8362
        %8371 = vst [vmem:[%s815 + $0x8] sm:$0xff] %v8363
        %8372 = vst [vmem:[%s815 + $0x10] sm:$0xff] %v8364
        %8373 = vst [vmem:[%s815 + $0x18] sm:$0xff] %v8365
        %8374 = vst [vmem:[%s815 + $0x20] sm:$0xff] %v8366
        %8375 = vst [vmem:[%s815 + $0x28] sm:$0xff] %v8367
        %8376 = vst [vmem:[%s815 + $0x30] sm:$0xff] %v8368
        %8377 = vst [vmem:[%s815 + $0x38] sm:$0xff] %v8369
        %v8378 = vld [vmem:[%s15] sm:$0x1]
        %v8380 = vlaneseq
        %v8381 = vshrl.u32 %v8380, 7
        %v8382 = vsub.s32 0, %v8381
        %v8383 = vrot.slane %v8378, %v8382
        %v8385 = vmul.f32 %v8362, %v8383
        %v8386 = vmul.f32 %v8363, %v8383
        %v8387 = vmul.f32 %v8364, %v8383
        %v8388 = vmul.f32 %v8365, %v8383
        %v8389 = vmul.f32 %v8366, %v8383
        %v8390 = vmul.f32 %v8367, %v8383
        %v8391 = vmul.f32 %v8368, %v8383
        %v8392 = vmul.f32 %v8369, %v8383
        %v8393 = vld [vmem:[%s16] sm:$0x1]
        %v8395 = vlaneseq
        %v8396 = vshrl.u32 %v8395, 7
        %v8397 = vsub.s32 0, %v8396
        %v8398 = vrot.slane %v8393, %v8397
        %v8400 = vadd.f32 %v8385, %v8398
        %v8401 = vadd.f32 %v8386, %v8398
        %v8402 = vadd.f32 %v8387, %v8398
        %v8403 = vadd.f32 %v8388, %v8398
        %v8404 = vadd.f32 %v8389, %v8398
        %v8405 = vadd.f32 %v8390, %v8398
        %v8406 = vadd.f32 %v8391, %v8398
        %v8407 = vadd.f32 %v8392, %v8398
        %v8408 = vmax.f32 %v8400, 0.0
        %v8409 = vmax.f32 %v8401, 0.0
        %v8410 = vmax.f32 %v8402, 0.0
        %v8411 = vmax.f32 %v8403, 0.0
        %v8412 = vmax.f32 %v8404, 0.0
        %v8413 = vmax.f32 %v8405, 0.0
        %v8414 = vmax.f32 %v8406, 0.0
        %v8415 = vmax.f32 %v8407, 0.0
        %v8416 = vld [vmem:[%s20] sm:$0xff]
        %v8417 = vld [vmem:[%s20 + $0x8] sm:$0xff]
        %v8419 = vsel %vm1198, %v8416, 0
        %v8422 = vsel %vm1198, %v8417, 0
        %8424 = vmatprep.subr.mxu0 0.0
        %8425 = vmatpush1.msra.mxu0 0.0
        %8426 = vmatprep.subr.mxu0 0.0
        %8427 = vmatpush1.msra.mxu0 0.0
        %8428 = vmatprep.subr.mxu0 0.0
        %8429 = vmatpush1.msra.mxu0 0.0
        %8430 = vmatprep.subr.mxu0 0.0
        %8431 = vmatpush1.msra.mxu0 0.0
        %8432 = vmatprep.subr.mxu0 0.0
        %8433 = vmatpush1.msra.mxu0 0.0
        %8434 = vmatprep.subr.mxu0 0.0
        %8435 = vmatpush1.msra.mxu0 0.0
        %8436 = vmatprep.subr.mxu0 0.0
        %8437 = vmatpush1.msra.mxu0 0.0
        %8438 = vmatprep.subr.mxu0 0.0
        %8439 = vmatpush1.msra.mxu0 0.0
        %8440 = vmatprep.subr.mxu0 0.0
        %8441 = vmatpush1.msra.mxu0 %v8415
        %8442 = vmatprep.subr.mxu0 0.0
        %8443 = vmatpush1.msra.mxu0 %v8414
        %8444 = vmatprep.subr.mxu0 0.0
        %8445 = vmatpush1.msra.mxu0 %v8413
        %8446 = vmatprep.subr.mxu0 0.0
        %8447 = vmatpush1.msra.mxu0 %v8412
        %8448 = vmatprep.subr.mxu0 0.0
        %8449 = vmatpush1.msra.mxu0 %v8411
        %8450 = vmatprep.subr.mxu0 0.0
        %8451 = vmatpush1.msra.mxu0 %v8410
        %8452 = vmatprep.subr.mxu0 0.0
        %8453 = vmatpush1.msra.mxu0 %v8409
        %8454 = vmatprep.subr.mxu0 0.0
        %8455 = vmatpush1.msra.mxu0 %v8408
        %8456 = vmatprep.subr.mxu0 0.0
        %8457 = vmatpush2.msra.mxu0 0.0
        %8458 = vmatprep.subr.mxu0 0.0
        %8459 = vmatpush2.msra.mxu0 0.0
        %8460 = vmatprep.subr.mxu0 0.0
        %8461 = vmatpush2.msra.mxu0 0.0
        %8462 = vmatprep.subr.mxu0 0.0
        %8463 = vmatpush2.msra.mxu0 0.0
        %8464 = vmatprep.subr.mxu0 0.0
        %8465 = vmatpush2.msra.mxu0 0.0
        %8466 = vmatprep.subr.mxu0 0.0
        %8467 = vmatpush2.msra.mxu0 0.0
        %8468 = vmatprep.subr.mxu0 0.0
        %8469 = vmatpush2.msra.mxu0 0.0
        %8470 = vmatprep.subr.mxu0 0.0
        %8471 = vmatpush2.msra.mxu0 0.0
        %8472 = vmatprep.subr.mxu0 0.0
        %8473 = vmatpush2.msra.mxu0 0.0
        %8474 = vmatprep.subr.mxu0 0.0
        %8475 = vmatpush2.msra.mxu0 0.0
        %8476 = vmatprep.subr.mxu0 0.0
        %8477 = vmatpush2.msra.mxu0 0.0
        %8478 = vmatprep.subr.mxu0 0.0
        %8479 = vmatpush2.msra.mxu0 0.0
        %8480 = vmatprep.subr.mxu0 0.0
        %8481 = vmatpush2.msra.mxu0 0.0
        %8482 = vmatprep.subr.mxu0 0.0
        %8483 = vmatpush2.msra.mxu0 0.0
        %8484 = vmatprep.subr.mxu0 0.0
        %8485 = vmatpush2.msra.mxu0 0.0
        %8486 = vmatprep.subr.mxu0 0.0
        %8487 = vmatpush2.msra.mxu0 0.0
        %8488 = vmatprep.mubr.f32.mxu0 0.0
        %8489 = vmatmul.mubr.f32.gmra.mxu0 %v8419
        %v8490 = vpop.f32.mrf.mxu0
        %v8491 = vadd.f32 0.0, %v8490
        %v8492 = vpop.f32.mrf.mxu0
        %8493 = vmatprep.mubr.f32.mxu0 0.0
        %8494 = vmatmul.mubr.f32.gmra.mxu0 %v8422
        %v8495 = vpop.f32.mrf.mxu0
        %v8496 = vadd.f32 0.0, %v8495
        %v8497 = vpop.f32.mrf.mxu0
        %8498 = vdwg.mxu0
        %s8499 = scalar_lea.vmem %s20, 16
        %v8500 = vld [vmem:[%s8499] sm:$0xff]
        %v8501 = vld [vmem:[%s8499 + $0x8] sm:$0xff]
        %v8503 = vsel %vm1198, %v8500, 0
        %v8506 = vsel %vm1198, %v8501, 0
        %8508 = vmatprep.subr.mxu0 0.0
        %8509 = vmatpush1.msra.mxu0 0.0
        %8510 = vmatprep.subr.mxu0 0.0
        %8511 = vmatpush1.msra.mxu0 0.0
        %8512 = vmatprep.subr.mxu0 0.0
        %8513 = vmatpush1.msra.mxu0 0.0
        %8514 = vmatprep.subr.mxu0 0.0
        %8515 = vmatpush1.msra.mxu0 0.0
        %8516 = vmatprep.subr.mxu0 0.0
        %8517 = vmatpush1.msra.mxu0 0.0
        %8518 = vmatprep.subr.mxu0 0.0
        %8519 = vmatpush1.msra.mxu0 0.0
        %8520 = vmatprep.subr.mxu0 0.0
        %8521 = vmatpush1.msra.mxu0 0.0
        %8522 = vmatprep.subr.mxu0 0.0
        %8523 = vmatpush1.msra.mxu0 0.0
        %8524 = vmatprep.subr.mxu0 0.0
        %8525 = vmatpush1.msra.mxu0 %v8415
        %8526 = vmatprep.subr.mxu0 0.0
        %8527 = vmatpush1.msra.mxu0 %v8414
        %8528 = vmatprep.subr.mxu0 0.0
        %8529 = vmatpush1.msra.mxu0 %v8413
        %8530 = vmatprep.subr.mxu0 0.0
        %8531 = vmatpush1.msra.mxu0 %v8412
        %8532 = vmatprep.subr.mxu0 0.0
        %8533 = vmatpush1.msra.mxu0 %v8411
        %8534 = vmatprep.subr.mxu0 0.0
        %8535 = vmatpush1.msra.mxu0 %v8410
        %8536 = vmatprep.subr.mxu0 0.0
        %8537 = vmatpush1.msra.mxu0 %v8409
        %8538 = vmatprep.subr.mxu0 0.0
        %8539 = vmatpush1.msra.mxu0 %v8408
        %8540 = vmatprep.subr.mxu0 0.0
        %8541 = vmatpush2.msra.mxu0 0.0
        %8542 = vmatprep.subr.mxu0 0.0
        %8543 = vmatpush2.msra.mxu0 0.0
        %8544 = vmatprep.subr.mxu0 0.0
        %8545 = vmatpush2.msra.mxu0 0.0
        %8546 = vmatprep.subr.mxu0 0.0
        %8547 = vmatpush2.msra.mxu0 0.0
        %8548 = vmatprep.subr.mxu0 0.0
        %8549 = vmatpush2.msra.mxu0 0.0
        %8550 = vmatprep.subr.mxu0 0.0
        %8551 = vmatpush2.msra.mxu0 0.0
        %8552 = vmatprep.subr.mxu0 0.0
        %8553 = vmatpush2.msra.mxu0 0.0
        %8554 = vmatprep.subr.mxu0 0.0
        %8555 = vmatpush2.msra.mxu0 0.0
        %8556 = vmatprep.subr.mxu0 0.0
        %8557 = vmatpush2.msra.mxu0 0.0
        %8558 = vmatprep.subr.mxu0 0.0
        %8559 = vmatpush2.msra.mxu0 0.0
        %8560 = vmatprep.subr.mxu0 0.0
        %8561 = vmatpush2.msra.mxu0 0.0
        %8562 = vmatprep.subr.mxu0 0.0
        %8563 = vmatpush2.msra.mxu0 0.0
        %8564 = vmatprep.subr.mxu0 0.0
        %8565 = vmatpush2.msra.mxu0 0.0
        %8566 = vmatprep.subr.mxu0 0.0
        %8567 = vmatpush2.msra.mxu0 0.0
        %8568 = vmatprep.subr.mxu0 0.0
        %8569 = vmatpush2.msra.mxu0 0.0
        %8570 = vmatprep.subr.mxu0 0.0
        %8571 = vmatpush2.msra.mxu0 0.0
        %8572 = vmatprep.mubr.f32.mxu0 0.0
        %8573 = vmatmul.mubr.f32.gmra.mxu0 %v8503
        %v8574 = vpop.f32.mrf.mxu0
        %v8575 = vadd.f32 0.0, %v8574
        %v8576 = vpop.f32.mrf.mxu0
        %8577 = vmatprep.mubr.f32.mxu0 0.0
        %8578 = vmatmul.mubr.f32.gmra.mxu0 %v8506
        %v8579 = vpop.f32.mrf.mxu0
        %v8580 = vadd.f32 0.0, %v8579
        %v8581 = vpop.f32.mrf.mxu0
        %8582 = vdwg.mxu0
        %s8583 = scalar_lea.vmem %s20, 32
        %v8584 = vld [vmem:[%s8583] sm:$0xff]
        %v8585 = vld [vmem:[%s8583 + $0x8] sm:$0xff]
        %v8587 = vsel %vm1198, %v8584, 0
        %v8590 = vsel %vm1198, %v8585, 0
        %8592 = vmatprep.subr.mxu0 0.0
        %8593 = vmatpush1.msra.mxu0 0.0
        %8594 = vmatprep.subr.mxu0 0.0
        %8595 = vmatpush1.msra.mxu0 0.0
        %8596 = vmatprep.subr.mxu0 0.0
        %8597 = vmatpush1.msra.mxu0 0.0
        %8598 = vmatprep.subr.mxu0 0.0
        %8599 = vmatpush1.msra.mxu0 0.0
        %8600 = vmatprep.subr.mxu0 0.0
        %8601 = vmatpush1.msra.mxu0 0.0
        %8602 = vmatprep.subr.mxu0 0.0
        %8603 = vmatpush1.msra.mxu0 0.0
        %8604 = vmatprep.subr.mxu0 0.0
        %8605 = vmatpush1.msra.mxu0 0.0
        %8606 = vmatprep.subr.mxu0 0.0
        %8607 = vmatpush1.msra.mxu0 0.0
        %8608 = vmatprep.subr.mxu0 0.0
        %8609 = vmatpush1.msra.mxu0 %v8415
        %8610 = vmatprep.subr.mxu0 0.0
        %8611 = vmatpush1.msra.mxu0 %v8414
        %8612 = vmatprep.subr.mxu0 0.0
        %8613 = vmatpush1.msra.mxu0 %v8413
        %8614 = vmatprep.subr.mxu0 0.0
        %8615 = vmatpush1.msra.mxu0 %v8412
        %8616 = vmatprep.subr.mxu0 0.0
        %8617 = vmatpush1.msra.mxu0 %v8411
        %8618 = vmatprep.subr.mxu0 0.0
        %8619 = vmatpush1.msra.mxu0 %v8410
        %8620 = vmatprep.subr.mxu0 0.0
        %8621 = vmatpush1.msra.mxu0 %v8409
        %8622 = vmatprep.subr.mxu0 0.0
        %8623 = vmatpush1.msra.mxu0 %v8408
        %8624 = vmatprep.subr.mxu0 0.0
        %8625 = vmatpush2.msra.mxu0 0.0
        %8626 = vmatprep.subr.mxu0 0.0
        %8627 = vmatpush2.msra.mxu0 0.0
        %8628 = vmatprep.subr.mxu0 0.0
        %8629 = vmatpush2.msra.mxu0 0.0
        %8630 = vmatprep.subr.mxu0 0.0
        %8631 = vmatpush2.msra.mxu0 0.0
        %8632 = vmatprep.subr.mxu0 0.0
        %8633 = vmatpush2.msra.mxu0 0.0
        %8634 = vmatprep.subr.mxu0 0.0
        %8635 = vmatpush2.msra.mxu0 0.0
        %8636 = vmatprep.subr.mxu0 0.0
        %8637 = vmatpush2.msra.mxu0 0.0
        %8638 = vmatprep.subr.mxu0 0.0
        %8639 = vmatpush2.msra.mxu0 0.0
        %8640 = vmatprep.subr.mxu0 0.0
        %8641 = vmatpush2.msra.mxu0 0.0
        %8642 = vmatprep.subr.mxu0 0.0
        %8643 = vmatpush2.msra.mxu0 0.0
        %8644 = vmatprep.subr.mxu0 0.0
        %8645 = vmatpush2.msra.mxu0 0.0
        %8646 = vmatprep.subr.mxu0 0.0
        %8647 = vmatpush2.msra.mxu0 0.0
        %8648 = vmatprep.subr.mxu0 0.0
        %8649 = vmatpush2.msra.mxu0 0.0
        %8650 = vmatprep.subr.mxu0 0.0
        %8651 = vmatpush2.msra.mxu0 0.0
        %8652 = vmatprep.subr.mxu0 0.0
        %8653 = vmatpush2.msra.mxu0 0.0
        %8654 = vmatprep.subr.mxu0 0.0
        %8655 = vmatpush2.msra.mxu0 0.0
        %8656 = vmatprep.mubr.f32.mxu0 0.0
        %8657 = vmatmul.mubr.f32.gmra.mxu0 %v8587
        %v8658 = vpop.f32.mrf.mxu0
        %v8659 = vadd.f32 0.0, %v8658
        %v8660 = vpop.f32.mrf.mxu0
        %8661 = vmatprep.mubr.f32.mxu0 0.0
        %8662 = vmatmul.mubr.f32.gmra.mxu0 %v8590
        %v8663 = vpop.f32.mrf.mxu0
        %v8664 = vadd.f32 0.0, %v8663
        %v8665 = vpop.f32.mrf.mxu0
        %8666 = vdwg.mxu0
        %s8667 = scalar_lea.vmem %s20, 48
        %v8668 = vld [vmem:[%s8667] sm:$0xff]
        %v8669 = vld [vmem:[%s8667 + $0x8] sm:$0xff]
        %v8671 = vsel %vm1198, %v8668, 0
        %v8674 = vsel %vm1198, %v8669, 0
        %8676 = vmatprep.subr.mxu0 0.0
        %8677 = vmatpush1.msra.mxu0 0.0
        %8678 = vmatprep.subr.mxu0 0.0
        %8679 = vmatpush1.msra.mxu0 0.0
        %8680 = vmatprep.subr.mxu0 0.0
        %8681 = vmatpush1.msra.mxu0 0.0
        %8682 = vmatprep.subr.mxu0 0.0
        %8683 = vmatpush1.msra.mxu0 0.0
        %8684 = vmatprep.subr.mxu0 0.0
        %8685 = vmatpush1.msra.mxu0 0.0
        %8686 = vmatprep.subr.mxu0 0.0
        %8687 = vmatpush1.msra.mxu0 0.0
        %8688 = vmatprep.subr.mxu0 0.0
        %8689 = vmatpush1.msra.mxu0 0.0
        %8690 = vmatprep.subr.mxu0 0.0
        %8691 = vmatpush1.msra.mxu0 0.0
        %8692 = vmatprep.subr.mxu0 0.0
        %8693 = vmatpush1.msra.mxu0 %v8415
        %8694 = vmatprep.subr.mxu0 0.0
        %8695 = vmatpush1.msra.mxu0 %v8414
        %8696 = vmatprep.subr.mxu0 0.0
        %8697 = vmatpush1.msra.mxu0 %v8413
        %8698 = vmatprep.subr.mxu0 0.0
        %8699 = vmatpush1.msra.mxu0 %v8412
        %8700 = vmatprep.subr.mxu0 0.0
        %8701 = vmatpush1.msra.mxu0 %v8411
        %8702 = vmatprep.subr.mxu0 0.0
        %8703 = vmatpush1.msra.mxu0 %v8410
        %8704 = vmatprep.subr.mxu0 0.0
        %8705 = vmatpush1.msra.mxu0 %v8409
        %8706 = vmatprep.subr.mxu0 0.0
        %8707 = vmatpush1.msra.mxu0 %v8408
        %8708 = vmatprep.subr.mxu0 0.0
        %8709 = vmatpush2.msra.mxu0 0.0
        %8710 = vmatprep.subr.mxu0 0.0
        %8711 = vmatpush2.msra.mxu0 0.0
        %8712 = vmatprep.subr.mxu0 0.0
        %8713 = vmatpush2.msra.mxu0 0.0
        %8714 = vmatprep.subr.mxu0 0.0
        %8715 = vmatpush2.msra.mxu0 0.0
        %8716 = vmatprep.subr.mxu0 0.0
        %8717 = vmatpush2.msra.mxu0 0.0
        %8718 = vmatprep.subr.mxu0 0.0
        %8719 = vmatpush2.msra.mxu0 0.0
        %8720 = vmatprep.subr.mxu0 0.0
        %8721 = vmatpush2.msra.mxu0 0.0
        %8722 = vmatprep.subr.mxu0 0.0
        %8723 = vmatpush2.msra.mxu0 0.0
        %8724 = vmatprep.subr.mxu0 0.0
        %8725 = vmatpush2.msra.mxu0 0.0
        %8726 = vmatprep.subr.mxu0 0.0
        %8727 = vmatpush2.msra.mxu0 0.0
        %8728 = vmatprep.subr.mxu0 0.0
        %8729 = vmatpush2.msra.mxu0 0.0
        %8730 = vmatprep.subr.mxu0 0.0
        %8731 = vmatpush2.msra.mxu0 0.0
        %8732 = vmatprep.subr.mxu0 0.0
        %8733 = vmatpush2.msra.mxu0 0.0
        %8734 = vmatprep.subr.mxu0 0.0
        %8735 = vmatpush2.msra.mxu0 0.0
        %8736 = vmatprep.subr.mxu0 0.0
        %8737 = vmatpush2.msra.mxu0 0.0
        %8738 = vmatprep.subr.mxu0 0.0
        %8739 = vmatpush2.msra.mxu0 0.0
        %8740 = vmatprep.mubr.f32.mxu0 0.0
        %8741 = vmatmul.mubr.f32.gmra.mxu0 %v8671
        %v8742 = vpop.f32.mrf.mxu0
        %v8743 = vadd.f32 0.0, %v8742
        %v8744 = vpop.f32.mrf.mxu0
        %8745 = vmatprep.mubr.f32.mxu0 0.0
        %8746 = vmatmul.mubr.f32.gmra.mxu0 %v8674
        %v8747 = vpop.f32.mrf.mxu0
        %v8748 = vadd.f32 0.0, %v8747
        %v8749 = vpop.f32.mrf.mxu0
        %8750 = vdwg.mxu0
        %v8751 = vmax.f32 %v8491, %v8575
        %v8752 = vmax.f32 %v8496, %v8580
        %v8753 = vmax.f32 %v8659, %v8743
        %v8754 = vmax.f32 %v8664, %v8748
        %v8755 = vmax.f32 %v8751, %v8753
        %v8756 = vmax.f32 %v8752, %v8754
        %8757 = vst [vmem:[#allocation5] sm:$0xff] 0.0
        %8758 = vst [vmem:[#allocation5 + $0x8] sm:$0xff] 0.0
        %8759 = vst [vmem:[#allocation5 + $0x10] sm:$0xf] 0.0
        %8760 = vst [vmem:[#allocation5 + $0x18] sm:$0xff] 0.0
        %8761 = vst [vmem:[#allocation5 + $0x20] sm:$0xff] 0.0
        %8762 = vst [vmem:[#allocation5 + $0x28] sm:$0xf] 0.0
        %8763 = vst [vmem:[#allocation5 + $0x30] sm:$0xff] 0.0
        %8764 = vst [vmem:[#allocation5 + $0x38] sm:$0xff] 0.0
        %8765 = vst [vmem:[#allocation5 + $0x40] sm:$0xf] 0.0
        %8766 = vst [vmem:[#allocation5 + $0x48] sm:$0xff] 0.0
        %8767 = vst [vmem:[#allocation5 + $0x50] sm:$0xff] 0.0
        %8768 = vst [vmem:[#allocation5 + $0x58] sm:$0xf] 0.0
        %8769 = vst [vmem:[#allocation5 + $0x60] sm:$0xff] 0.0
        %8770 = vst [vmem:[#allocation5 + $0x68] sm:$0xff] 0.0
        %8771 = vst [vmem:[#allocation5 + $0x70] sm:$0xf] 0.0
        %8772 = vst [vmem:[#allocation5 + $0x78] sm:$0xff] 0.0
        %8773 = vst [vmem:[#allocation5 + $0x80] sm:$0xff] 0.0
        %8774 = vst [vmem:[#allocation5 + $0x88] sm:$0xf] 0.0
        %v8777 = vcombine.high %v8755, %v8755
        %v8778 = vcombine.high %v8756, %v8756
        %s8781 = scalar_lea.vmem [#allocation5], 24
        %8782 = vst [vmem:[%s8781 + $0x8] sm:$0xf] %v8755
        %8783 = vst [vmem:[%s8781 + $0x20] sm:$0xf] %v8777
        %8784 = vst [vmem:[%s8781 + $0x38] sm:$0xf] %v8756
        %8785 = vst [vmem:[%s8781 + $0x50] sm:$0xf] %v8778
        %v8786 = vld [vmem:[#allocation5 + $0x7] sm:$0xf]
        %v8787 = vld [vmem:[#allocation5 + $0x1f] sm:$0xf]
        %v8788 = vld [vmem:[#allocation5 + $0x37] sm:$0xf]
        %v8789 = vld [vmem:[#allocation5 + $0x4f] sm:$0xf]
        %v8790 = vld [vmem:[%s17] sm:$0xff]
        %v8791 = vld [vmem:[%s17 + $0x8] sm:$0xff]
        %v8792 = vld [vmem:[%s17 + $0x10] sm:$0xff]
        %v8793 = vld [vmem:[%s17 + $0x18] sm:$0xff]
        %v8794 = vld [vmem:[%s17 + $0x20] sm:$0xff]
        %v8795 = vld [vmem:[%s17 + $0x28] sm:$0xff]
        %v8796 = vld [vmem:[%s17 + $0x30] sm:$0xff]
        %v8797 = vld [vmem:[%s17 + $0x38] sm:$0xff]
        %v8798 = vld [vmem:[%s17 + $0x40] sm:$0xff]
        %v8799 = vld [vmem:[%s17 + $0x48] sm:$0xff]
        %v8800 = vld [vmem:[%s17 + $0x50] sm:$0xff]
        %v8801 = vld [vmem:[%s17 + $0x58] sm:$0xff]
        %v8802 = vld [vmem:[%s17 + $0x60] sm:$0xff]
        %v8803 = vld [vmem:[%s17 + $0x68] sm:$0xff]
        %v8804 = vld [vmem:[%s17 + $0x70] sm:$0xff]
        %v8805 = vld [vmem:[%s17 + $0x78] sm:$0xff]
        %v8806 = vld [vmem:[%s17 + $0x80] sm:$0xff]
        %v8807 = vld [vmem:[%s17 + $0x88] sm:$0xff]
        %v8808 = vld [vmem:[%s17 + $0x90] sm:$0xff]
        %v8809 = vld [vmem:[%s17 + $0x98] sm:$0xff]
        %v8810 = vld [vmem:[%s17 + $0xa0] sm:$0xff]
        %v8811 = vld [vmem:[%s17 + $0xa8] sm:$0xff]
        %v8812 = vld [vmem:[%s17 + $0xb0] sm:$0xff]
        %v8813 = vld [vmem:[%s17 + $0xb8] sm:$0xff]
        %v8814 = vld [vmem:[%s17 + $0xc0] sm:$0xff]
        %v8815 = vld [vmem:[%s17 + $0xc8] sm:$0xff]
        %v8816 = vld [vmem:[%s17 + $0xd0] sm:$0xff]
        %v8817 = vld [vmem:[%s17 + $0xd8] sm:$0xff]
        %v8818 = vld [vmem:[%s17 + $0xe0] sm:$0xff]
        %v8819 = vld [vmem:[%s17 + $0xe8] sm:$0xff]
        %v8820 = vld [vmem:[%s17 + $0xf0] sm:$0xff]
        %v8821 = vld [vmem:[%s17 + $0xf8] sm:$0xff]
        %v8822 = vld [vmem:[#allocation5 + $0x8] sm:$0xf]
        %v8823 = vld [vmem:[#allocation5 + $0x20] sm:$0xf]
        %v8824 = vld [vmem:[#allocation5 + $0x38] sm:$0xf]
        %v8825 = vld [vmem:[#allocation5 + $0x50] sm:$0xf]
        %s8826 = scalar_lea.vmem %s17, 256
        %v8827 = vld [vmem:[%s8826] sm:$0xff]
        %v8828 = vld [vmem:[%s8826 + $0x8] sm:$0xff]
        %v8829 = vld [vmem:[%s8826 + $0x10] sm:$0xff]
        %v8830 = vld [vmem:[%s8826 + $0x18] sm:$0xff]
        %v8831 = vld [vmem:[%s8826 + $0x20] sm:$0xff]
        %v8832 = vld [vmem:[%s8826 + $0x28] sm:$0xff]
        %v8833 = vld [vmem:[%s8826 + $0x30] sm:$0xff]
        %v8834 = vld [vmem:[%s8826 + $0x38] sm:$0xff]
        %v8835 = vld [vmem:[%s8826 + $0x40] sm:$0xff]
        %v8836 = vld [vmem:[%s8826 + $0x48] sm:$0xff]
        %v8837 = vld [vmem:[%s8826 + $0x50] sm:$0xff]
        %v8838 = vld [vmem:[%s8826 + $0x58] sm:$0xff]
        %v8839 = vld [vmem:[%s8826 + $0x60] sm:$0xff]
        %v8840 = vld [vmem:[%s8826 + $0x68] sm:$0xff]
        %v8841 = vld [vmem:[%s8826 + $0x70] sm:$0xff]
        %v8842 = vld [vmem:[%s8826 + $0x78] sm:$0xff]
        %v8843 = vld [vmem:[%s8826 + $0x80] sm:$0xff]
        %v8844 = vld [vmem:[%s8826 + $0x88] sm:$0xff]
        %v8845 = vld [vmem:[%s8826 + $0x90] sm:$0xff]
        %v8846 = vld [vmem:[%s8826 + $0x98] sm:$0xff]
        %v8847 = vld [vmem:[%s8826 + $0xa0] sm:$0xff]
        %v8848 = vld [vmem:[%s8826 + $0xa8] sm:$0xff]
        %v8849 = vld [vmem:[%s8826 + $0xb0] sm:$0xff]
        %v8850 = vld [vmem:[%s8826 + $0xb8] sm:$0xff]
        %v8851 = vld [vmem:[%s8826 + $0xc0] sm:$0xff]
        %v8852 = vld [vmem:[%s8826 + $0xc8] sm:$0xff]
        %v8853 = vld [vmem:[%s8826 + $0xd0] sm:$0xff]
        %v8854 = vld [vmem:[%s8826 + $0xd8] sm:$0xff]
        %v8855 = vld [vmem:[%s8826 + $0xe0] sm:$0xff]
        %v8856 = vld [vmem:[%s8826 + $0xe8] sm:$0xff]
        %v8857 = vld [vmem:[%s8826 + $0xf0] sm:$0xff]
        %v8858 = vld [vmem:[%s8826 + $0xf8] sm:$0xff]
        %v8863 = vcombine.low %v8822, %v8823
        %v8864 = vcombine.low %v8824, %v8825
        %8867 = vmatprep.subr.mxu0 %v8858
        %8868 = vmatpush1.msra.mxu0 %v8857
        %8869 = vmatprep.subr.mxu0 %v8856
        %8870 = vmatpush1.msra.mxu0 %v8855
        %8871 = vmatprep.subr.mxu0 %v8854
        %8872 = vmatpush1.msra.mxu0 %v8853
        %8873 = vmatprep.subr.mxu0 %v8852
        %8874 = vmatpush1.msra.mxu0 %v8851
        %8875 = vmatprep.subr.mxu0 %v8850
        %8876 = vmatpush1.msra.mxu0 %v8849
        %8877 = vmatprep.subr.mxu0 %v8848
        %8878 = vmatpush1.msra.mxu0 %v8847
        %8879 = vmatprep.subr.mxu0 %v8846
        %8880 = vmatpush1.msra.mxu0 %v8845
        %8881 = vmatprep.subr.mxu0 %v8844
        %8882 = vmatpush1.msra.mxu0 %v8843
        %8883 = vmatprep.subr.mxu0 %v8842
        %8884 = vmatpush1.msra.mxu0 %v8841
        %8885 = vmatprep.subr.mxu0 %v8840
        %8886 = vmatpush1.msra.mxu0 %v8839
        %8887 = vmatprep.subr.mxu0 %v8838
        %8888 = vmatpush1.msra.mxu0 %v8837
        %8889 = vmatprep.subr.mxu0 %v8836
        %8890 = vmatpush1.msra.mxu0 %v8835
        %8891 = vmatprep.subr.mxu0 %v8834
        %8892 = vmatpush1.msra.mxu0 %v8833
        %8893 = vmatprep.subr.mxu0 %v8832
        %8894 = vmatpush1.msra.mxu0 %v8831
        %8895 = vmatprep.subr.mxu0 %v8830
        %8896 = vmatpush1.msra.mxu0 %v8829
        %8897 = vmatprep.subr.mxu0 %v8828
        %8898 = vmatpush1.msra.mxu0 %v8827
        %8899 = vmatprep.subr.mxu0 0.0
        %8900 = vmatpush2.msra.mxu0 0.0
        %8901 = vmatprep.subr.mxu0 0.0
        %8902 = vmatpush2.msra.mxu0 0.0
        %8903 = vmatprep.subr.mxu0 0.0
        %8904 = vmatpush2.msra.mxu0 0.0
        %8905 = vmatprep.subr.mxu0 0.0
        %8906 = vmatpush2.msra.mxu0 0.0
        %8907 = vmatprep.subr.mxu0 0.0
        %8908 = vmatpush2.msra.mxu0 0.0
        %8909 = vmatprep.subr.mxu0 0.0
        %8910 = vmatpush2.msra.mxu0 0.0
        %8911 = vmatprep.subr.mxu0 0.0
        %8912 = vmatpush2.msra.mxu0 0.0
        %8913 = vmatprep.subr.mxu0 0.0
        %8914 = vmatpush2.msra.mxu0 0.0
        %8915 = vmatprep.subr.mxu0 0.0
        %8916 = vmatpush2.msra.mxu0 0.0
        %8917 = vmatprep.subr.mxu0 0.0
        %8918 = vmatpush2.msra.mxu0 0.0
        %8919 = vmatprep.subr.mxu0 0.0
        %8920 = vmatpush2.msra.mxu0 0.0
        %8921 = vmatprep.subr.mxu0 0.0
        %8922 = vmatpush2.msra.mxu0 0.0
        %8923 = vmatprep.subr.mxu0 0.0
        %8924 = vmatpush2.msra.mxu0 0.0
        %8925 = vmatprep.subr.mxu0 0.0
        %8926 = vmatpush2.msra.mxu0 0.0
        %8927 = vmatprep.subr.mxu0 0.0
        %8928 = vmatpush2.msra.mxu0 0.0
        %8929 = vmatprep.subr.mxu0 0.0
        %8930 = vmatpush2.msra.mxu0 0.0
        %8931 = vmatprep.mubr.f32.mxu0 0.0
        %8932 = vmatmul.mubr.f32.gmra.mxu0 %v8863
        %v8933 = vpop.f32.mrf.mxu0
        %v8934 = vadd.f32 0.0, %v8933
        %v8935 = vpop.f32.mrf.mxu0
        %v8936 = vadd.f32 0.0, %v8935
        %8937 = vmatprep.mubr.f32.mxu0 0.0
        %8938 = vmatmul.mubr.f32.gmra.mxu0 %v8864
        %v8939 = vpop.f32.mrf.mxu0
        %v8940 = vadd.f32 0.0, %v8939
        %v8941 = vpop.f32.mrf.mxu0
        %v8942 = vadd.f32 0.0, %v8941
        %8943 = vdwg.mxu0
        %v8948 = vcombine.low %v8786, %v8787
        %v8949 = vcombine.low %v8788, %v8789
        %8952 = vmatprep.subr.mxu0 %v8821
        %8953 = vmatpush1.msra.mxu0 %v8820
        %8954 = vmatprep.subr.mxu0 %v8819
        %8955 = vmatpush1.msra.mxu0 %v8818
        %8956 = vmatprep.subr.mxu0 %v8817
        %8957 = vmatpush1.msra.mxu0 %v8816
        %8958 = vmatprep.subr.mxu0 %v8815
        %8959 = vmatpush1.msra.mxu0 %v8814
        %8960 = vmatprep.subr.mxu0 %v8813
        %8961 = vmatpush1.msra.mxu0 %v8812
        %8962 = vmatprep.subr.mxu0 %v8811
        %8963 = vmatpush1.msra.mxu0 %v8810
        %8964 = vmatprep.subr.mxu0 %v8809
        %8965 = vmatpush1.msra.mxu0 %v8808
        %8966 = vmatprep.subr.mxu0 %v8807
        %8967 = vmatpush1.msra.mxu0 %v8806
        %8968 = vmatprep.subr.mxu0 %v8805
        %8969 = vmatpush1.msra.mxu0 %v8804
        %8970 = vmatprep.subr.mxu0 %v8803
        %8971 = vmatpush1.msra.mxu0 %v8802
        %8972 = vmatprep.subr.mxu0 %v8801
        %8973 = vmatpush1.msra.mxu0 %v8800
        %8974 = vmatprep.subr.mxu0 %v8799
        %8975 = vmatpush1.msra.mxu0 %v8798
        %8976 = vmatprep.subr.mxu0 %v8797
        %8977 = vmatpush1.msra.mxu0 %v8796
        %8978 = vmatprep.subr.mxu0 %v8795
        %8979 = vmatpush1.msra.mxu0 %v8794
        %8980 = vmatprep.subr.mxu0 %v8793
        %8981 = vmatpush1.msra.mxu0 %v8792
        %8982 = vmatprep.subr.mxu0 %v8791
        %8983 = vmatpush1.msra.mxu0 %v8790
        %8984 = vmatprep.subr.mxu0 0.0
        %8985 = vmatpush2.msra.mxu0 0.0
        %8986 = vmatprep.subr.mxu0 0.0
        %8987 = vmatpush2.msra.mxu0 0.0
        %8988 = vmatprep.subr.mxu0 0.0
        %8989 = vmatpush2.msra.mxu0 0.0
        %8990 = vmatprep.subr.mxu0 0.0
        %8991 = vmatpush2.msra.mxu0 0.0
        %8992 = vmatprep.subr.mxu0 0.0
        %8993 = vmatpush2.msra.mxu0 0.0
        %8994 = vmatprep.subr.mxu0 0.0
        %8995 = vmatpush2.msra.mxu0 0.0
        %8996 = vmatprep.subr.mxu0 0.0
        %8997 = vmatpush2.msra.mxu0 0.0
        %8998 = vmatprep.subr.mxu0 0.0
        %8999 = vmatpush2.msra.mxu0 0.0
        %9000 = vmatprep.subr.mxu0 0.0
        %9001 = vmatpush2.msra.mxu0 0.0
        %9002 = vmatprep.subr.mxu0 0.0
        %9003 = vmatpush2.msra.mxu0 0.0
        %9004 = vmatprep.subr.mxu0 0.0
        %9005 = vmatpush2.msra.mxu0 0.0
        %9006 = vmatprep.subr.mxu0 0.0
        %9007 = vmatpush2.msra.mxu0 0.0
        %9008 = vmatprep.subr.mxu0 0.0
        %9009 = vmatpush2.msra.mxu0 0.0
        %9010 = vmatprep.subr.mxu0 0.0
        %9011 = vmatpush2.msra.mxu0 0.0
        %9012 = vmatprep.subr.mxu0 0.0
        %9013 = vmatpush2.msra.mxu0 0.0
        %9014 = vmatprep.subr.mxu0 0.0
        %9015 = vmatpush2.msra.mxu0 0.0
        %9016 = vmatprep.mubr.f32.mxu0 0.0
        %9017 = vmatmul.mubr.f32.gmra.mxu0 %v8948
        %v9018 = vpop.f32.mrf.mxu0
        %v9019 = vadd.f32 %v8934, %v9018
        %v9020 = vpop.f32.mrf.mxu0
        %v9021 = vadd.f32 %v8936, %v9020
        %9022 = vmatprep.mubr.f32.mxu0 0.0
        %9023 = vmatmul.mubr.f32.gmra.mxu0 %v8949
        %v9024 = vpop.f32.mrf.mxu0
        %v9025 = vadd.f32 %v8940, %v9024
        %v9026 = vpop.f32.mrf.mxu0
        %v9027 = vadd.f32 %v8942, %v9026
        %9028 = vdwg.mxu0
        %v9029 = vld [vmem:[#allocation5 + $0x9] sm:$0xf]
        %v9030 = vld [vmem:[#allocation5 + $0x21] sm:$0xf]
        %v9031 = vld [vmem:[#allocation5 + $0x39] sm:$0xf]
        %v9032 = vld [vmem:[#allocation5 + $0x51] sm:$0xf]
        %s9033 = scalar_lea.vmem %s17, 512
        %v9034 = vld [vmem:[%s9033] sm:$0xff]
        %v9035 = vld [vmem:[%s9033 + $0x8] sm:$0xff]
        %v9036 = vld [vmem:[%s9033 + $0x10] sm:$0xff]
        %v9037 = vld [vmem:[%s9033 + $0x18] sm:$0xff]
        %v9038 = vld [vmem:[%s9033 + $0x20] sm:$0xff]
        %v9039 = vld [vmem:[%s9033 + $0x28] sm:$0xff]
        %v9040 = vld [vmem:[%s9033 + $0x30] sm:$0xff]
        %v9041 = vld [vmem:[%s9033 + $0x38] sm:$0xff]
        %v9042 = vld [vmem:[%s9033 + $0x40] sm:$0xff]
        %v9043 = vld [vmem:[%s9033 + $0x48] sm:$0xff]
        %v9044 = vld [vmem:[%s9033 + $0x50] sm:$0xff]
        %v9045 = vld [vmem:[%s9033 + $0x58] sm:$0xff]
        %v9046 = vld [vmem:[%s9033 + $0x60] sm:$0xff]
        %v9047 = vld [vmem:[%s9033 + $0x68] sm:$0xff]
        %v9048 = vld [vmem:[%s9033 + $0x70] sm:$0xff]
        %v9049 = vld [vmem:[%s9033 + $0x78] sm:$0xff]
        %v9050 = vld [vmem:[%s9033 + $0x80] sm:$0xff]
        %v9051 = vld [vmem:[%s9033 + $0x88] sm:$0xff]
        %v9052 = vld [vmem:[%s9033 + $0x90] sm:$0xff]
        %v9053 = vld [vmem:[%s9033 + $0x98] sm:$0xff]
        %v9054 = vld [vmem:[%s9033 + $0xa0] sm:$0xff]
        %v9055 = vld [vmem:[%s9033 + $0xa8] sm:$0xff]
        %v9056 = vld [vmem:[%s9033 + $0xb0] sm:$0xff]
        %v9057 = vld [vmem:[%s9033 + $0xb8] sm:$0xff]
        %v9058 = vld [vmem:[%s9033 + $0xc0] sm:$0xff]
        %v9059 = vld [vmem:[%s9033 + $0xc8] sm:$0xff]
        %v9060 = vld [vmem:[%s9033 + $0xd0] sm:$0xff]
        %v9061 = vld [vmem:[%s9033 + $0xd8] sm:$0xff]
        %v9062 = vld [vmem:[%s9033 + $0xe0] sm:$0xff]
        %v9063 = vld [vmem:[%s9033 + $0xe8] sm:$0xff]
        %v9064 = vld [vmem:[%s9033 + $0xf0] sm:$0xff]
        %v9065 = vld [vmem:[%s9033 + $0xf8] sm:$0xff]
        %v9070 = vcombine.low %v9029, %v9030
        %v9071 = vcombine.low %v9031, %v9032
        %9074 = vmatprep.subr.mxu0 %v9065
        %9075 = vmatpush1.msra.mxu0 %v9064
        %9076 = vmatprep.subr.mxu0 %v9063
        %9077 = vmatpush1.msra.mxu0 %v9062
        %9078 = vmatprep.subr.mxu0 %v9061
        %9079 = vmatpush1.msra.mxu0 %v9060
        %9080 = vmatprep.subr.mxu0 %v9059
        %9081 = vmatpush1.msra.mxu0 %v9058
        %9082 = vmatprep.subr.mxu0 %v9057
        %9083 = vmatpush1.msra.mxu0 %v9056
        %9084 = vmatprep.subr.mxu0 %v9055
        %9085 = vmatpush1.msra.mxu0 %v9054
        %9086 = vmatprep.subr.mxu0 %v9053
        %9087 = vmatpush1.msra.mxu0 %v9052
        %9088 = vmatprep.subr.mxu0 %v9051
        %9089 = vmatpush1.msra.mxu0 %v9050
        %9090 = vmatprep.subr.mxu0 %v9049
        %9091 = vmatpush1.msra.mxu0 %v9048
        %9092 = vmatprep.subr.mxu0 %v9047
        %9093 = vmatpush1.msra.mxu0 %v9046
        %9094 = vmatprep.subr.mxu0 %v9045
        %9095 = vmatpush1.msra.mxu0 %v9044
        %9096 = vmatprep.subr.mxu0 %v9043
        %9097 = vmatpush1.msra.mxu0 %v9042
        %9098 = vmatprep.subr.mxu0 %v9041
        %9099 = vmatpush1.msra.mxu0 %v9040
        %9100 = vmatprep.subr.mxu0 %v9039
        %9101 = vmatpush1.msra.mxu0 %v9038
        %9102 = vmatprep.subr.mxu0 %v9037
        %9103 = vmatpush1.msra.mxu0 %v9036
        %9104 = vmatprep.subr.mxu0 %v9035
        %9105 = vmatpush1.msra.mxu0 %v9034
        %9106 = vmatprep.subr.mxu0 0.0
        %9107 = vmatpush2.msra.mxu0 0.0
        %9108 = vmatprep.subr.mxu0 0.0
        %9109 = vmatpush2.msra.mxu0 0.0
        %9110 = vmatprep.subr.mxu0 0.0
        %9111 = vmatpush2.msra.mxu0 0.0
        %9112 = vmatprep.subr.mxu0 0.0
        %9113 = vmatpush2.msra.mxu0 0.0
        %9114 = vmatprep.subr.mxu0 0.0
        %9115 = vmatpush2.msra.mxu0 0.0
        %9116 = vmatprep.subr.mxu0 0.0
        %9117 = vmatpush2.msra.mxu0 0.0
        %9118 = vmatprep.subr.mxu0 0.0
        %9119 = vmatpush2.msra.mxu0 0.0
        %9120 = vmatprep.subr.mxu0 0.0
        %9121 = vmatpush2.msra.mxu0 0.0
        %9122 = vmatprep.subr.mxu0 0.0
        %9123 = vmatpush2.msra.mxu0 0.0
        %9124 = vmatprep.subr.mxu0 0.0
        %9125 = vmatpush2.msra.mxu0 0.0
        %9126 = vmatprep.subr.mxu0 0.0
        %9127 = vmatpush2.msra.mxu0 0.0
        %9128 = vmatprep.subr.mxu0 0.0
        %9129 = vmatpush2.msra.mxu0 0.0
        %9130 = vmatprep.subr.mxu0 0.0
        %9131 = vmatpush2.msra.mxu0 0.0
        %9132 = vmatprep.subr.mxu0 0.0
        %9133 = vmatpush2.msra.mxu0 0.0
        %9134 = vmatprep.subr.mxu0 0.0
        %9135 = vmatpush2.msra.mxu0 0.0
        %9136 = vmatprep.subr.mxu0 0.0
        %9137 = vmatpush2.msra.mxu0 0.0
        %9138 = vmatprep.mubr.f32.mxu0 0.0
        %9139 = vmatmul.mubr.f32.gmra.mxu0 %v9070
        %v9140 = vpop.f32.mrf.mxu0
        %v9141 = vadd.f32 0.0, %v9140
        %v9142 = vpop.f32.mrf.mxu0
        %v9143 = vadd.f32 0.0, %v9142
        %9144 = vmatprep.mubr.f32.mxu0 0.0
        %9145 = vmatmul.mubr.f32.gmra.mxu0 %v9071
        %v9146 = vpop.f32.mrf.mxu0
        %v9147 = vadd.f32 0.0, %v9146
        %v9148 = vpop.f32.mrf.mxu0
        %v9149 = vadd.f32 0.0, %v9148
        %9150 = vdwg.mxu0
        %v9151 = vadd.f32 %v9019, %v9141
        %v9152 = vadd.f32 %v9021, %v9143
        %v9153 = vadd.f32 %v9025, %v9147
        %v9154 = vadd.f32 %v9027, %v9149
        %v9155 = vld [vmem:[%s8781 + $0x7] sm:$0xf]
        %v9156 = vld [vmem:[%s8781 + $0x1f] sm:$0xf]
        %v9157 = vld [vmem:[%s8781 + $0x37] sm:$0xf]
        %v9158 = vld [vmem:[%s8781 + $0x4f] sm:$0xf]
        %s9159 = scalar_lea.vmem %s17, 768
        %v9160 = vld [vmem:[%s9159] sm:$0xff]
        %v9161 = vld [vmem:[%s9159 + $0x8] sm:$0xff]
        %v9162 = vld [vmem:[%s9159 + $0x10] sm:$0xff]
        %v9163 = vld [vmem:[%s9159 + $0x18] sm:$0xff]
        %v9164 = vld [vmem:[%s9159 + $0x20] sm:$0xff]
        %v9165 = vld [vmem:[%s9159 + $0x28] sm:$0xff]
        %v9166 = vld [vmem:[%s9159 + $0x30] sm:$0xff]
        %v9167 = vld [vmem:[%s9159 + $0x38] sm:$0xff]
        %v9168 = vld [vmem:[%s9159 + $0x40] sm:$0xff]
        %v9169 = vld [vmem:[%s9159 + $0x48] sm:$0xff]
        %v9170 = vld [vmem:[%s9159 + $0x50] sm:$0xff]
        %v9171 = vld [vmem:[%s9159 + $0x58] sm:$0xff]
        %v9172 = vld [vmem:[%s9159 + $0x60] sm:$0xff]
        %v9173 = vld [vmem:[%s9159 + $0x68] sm:$0xff]
        %v9174 = vld [vmem:[%s9159 + $0x70] sm:$0xff]
        %v9175 = vld [vmem:[%s9159 + $0x78] sm:$0xff]
        %v9176 = vld [vmem:[%s9159 + $0x80] sm:$0xff]
        %v9177 = vld [vmem:[%s9159 + $0x88] sm:$0xff]
        %v9178 = vld [vmem:[%s9159 + $0x90] sm:$0xff]
        %v9179 = vld [vmem:[%s9159 + $0x98] sm:$0xff]
        %v9180 = vld [vmem:[%s9159 + $0xa0] sm:$0xff]
        %v9181 = vld [vmem:[%s9159 + $0xa8] sm:$0xff]
        %v9182 = vld [vmem:[%s9159 + $0xb0] sm:$0xff]
        %v9183 = vld [vmem:[%s9159 + $0xb8] sm:$0xff]
        %v9184 = vld [vmem:[%s9159 + $0xc0] sm:$0xff]
        %v9185 = vld [vmem:[%s9159 + $0xc8] sm:$0xff]
        %v9186 = vld [vmem:[%s9159 + $0xd0] sm:$0xff]
        %v9187 = vld [vmem:[%s9159 + $0xd8] sm:$0xff]
        %v9188 = vld [vmem:[%s9159 + $0xe0] sm:$0xff]
        %v9189 = vld [vmem:[%s9159 + $0xe8] sm:$0xff]
        %v9190 = vld [vmem:[%s9159 + $0xf0] sm:$0xff]
        %v9191 = vld [vmem:[%s9159 + $0xf8] sm:$0xff]
        %v9196 = vcombine.low %v9155, %v9156
        %v9197 = vcombine.low %v9157, %v9158
        %9200 = vmatprep.subr.mxu0 %v9191
        %9201 = vmatpush1.msra.mxu0 %v9190
        %9202 = vmatprep.subr.mxu0 %v9189
        %9203 = vmatpush1.msra.mxu0 %v9188
        %9204 = vmatprep.subr.mxu0 %v9187
        %9205 = vmatpush1.msra.mxu0 %v9186
        %9206 = vmatprep.subr.mxu0 %v9185
        %9207 = vmatpush1.msra.mxu0 %v9184
        %9208 = vmatprep.subr.mxu0 %v9183
        %9209 = vmatpush1.msra.mxu0 %v9182
        %9210 = vmatprep.subr.mxu0 %v9181
        %9211 = vmatpush1.msra.mxu0 %v9180
        %9212 = vmatprep.subr.mxu0 %v9179
        %9213 = vmatpush1.msra.mxu0 %v9178
        %9214 = vmatprep.subr.mxu0 %v9177
        %9215 = vmatpush1.msra.mxu0 %v9176
        %9216 = vmatprep.subr.mxu0 %v9175
        %9217 = vmatpush1.msra.mxu0 %v9174
        %9218 = vmatprep.subr.mxu0 %v9173
        %9219 = vmatpush1.msra.mxu0 %v9172
        %9220 = vmatprep.subr.mxu0 %v9171
        %9221 = vmatpush1.msra.mxu0 %v9170
        %9222 = vmatprep.subr.mxu0 %v9169
        %9223 = vmatpush1.msra.mxu0 %v9168
        %9224 = vmatprep.subr.mxu0 %v9167
        %9225 = vmatpush1.msra.mxu0 %v9166
        %9226 = vmatprep.subr.mxu0 %v9165
        %9227 = vmatpush1.msra.mxu0 %v9164
        %9228 = vmatprep.subr.mxu0 %v9163
        %9229 = vmatpush1.msra.mxu0 %v9162
        %9230 = vmatprep.subr.mxu0 %v9161
        %9231 = vmatpush1.msra.mxu0 %v9160
        %9232 = vmatprep.subr.mxu0 0.0
        %9233 = vmatpush2.msra.mxu0 0.0
        %9234 = vmatprep.subr.mxu0 0.0
        %9235 = vmatpush2.msra.mxu0 0.0
        %9236 = vmatprep.subr.mxu0 0.0
        %9237 = vmatpush2.msra.mxu0 0.0
        %9238 = vmatprep.subr.mxu0 0.0
        %9239 = vmatpush2.msra.mxu0 0.0
        %9240 = vmatprep.subr.mxu0 0.0
        %9241 = vmatpush2.msra.mxu0 0.0
        %9242 = vmatprep.subr.mxu0 0.0
        %9243 = vmatpush2.msra.mxu0 0.0
        %9244 = vmatprep.subr.mxu0 0.0
        %9245 = vmatpush2.msra.mxu0 0.0
        %9246 = vmatprep.subr.mxu0 0.0
        %9247 = vmatpush2.msra.mxu0 0.0
        %9248 = vmatprep.subr.mxu0 0.0
        %9249 = vmatpush2.msra.mxu0 0.0
        %9250 = vmatprep.subr.mxu0 0.0
        %9251 = vmatpush2.msra.mxu0 0.0
        %9252 = vmatprep.subr.mxu0 0.0
        %9253 = vmatpush2.msra.mxu0 0.0
        %9254 = vmatprep.subr.mxu0 0.0
        %9255 = vmatpush2.msra.mxu0 0.0
        %9256 = vmatprep.subr.mxu0 0.0
        %9257 = vmatpush2.msra.mxu0 0.0
        %9258 = vmatprep.subr.mxu0 0.0
        %9259 = vmatpush2.msra.mxu0 0.0
        %9260 = vmatprep.subr.mxu0 0.0
        %9261 = vmatpush2.msra.mxu0 0.0
        %9262 = vmatprep.subr.mxu0 0.0
        %9263 = vmatpush2.msra.mxu0 0.0
        %9264 = vmatprep.mubr.f32.mxu0 0.0
        %9265 = vmatmul.mubr.f32.gmra.mxu0 %v9196
        %v9266 = vpop.f32.mrf.mxu0
        %v9267 = vadd.f32 0.0, %v9266
        %v9268 = vpop.f32.mrf.mxu0
        %v9269 = vadd.f32 0.0, %v9268
        %9270 = vmatprep.mubr.f32.mxu0 0.0
        %9271 = vmatmul.mubr.f32.gmra.mxu0 %v9197
        %v9272 = vpop.f32.mrf.mxu0
        %v9273 = vadd.f32 0.0, %v9272
        %v9274 = vpop.f32.mrf.mxu0
        %v9275 = vadd.f32 0.0, %v9274
        %9276 = vdwg.mxu0
        %v9277 = vadd.f32 %v9151, %v9267
        %v9278 = vadd.f32 %v9152, %v9269
        %v9279 = vadd.f32 %v9153, %v9273
        %v9280 = vadd.f32 %v9154, %v9275
        %v9281 = vld [vmem:[%s8781 + $0x8] sm:$0xf]
        %v9282 = vld [vmem:[%s8781 + $0x20] sm:$0xf]
        %v9283 = vld [vmem:[%s8781 + $0x38] sm:$0xf]
        %v9284 = vld [vmem:[%s8781 + $0x50] sm:$0xf]
        %s9285 = scalar_lea.vmem %s17, 1024
        %v9286 = vld [vmem:[%s9285] sm:$0xff]
        %v9287 = vld [vmem:[%s9285 + $0x8] sm:$0xff]
        %v9288 = vld [vmem:[%s9285 + $0x10] sm:$0xff]
        %v9289 = vld [vmem:[%s9285 + $0x18] sm:$0xff]
        %v9290 = vld [vmem:[%s9285 + $0x20] sm:$0xff]
        %v9291 = vld [vmem:[%s9285 + $0x28] sm:$0xff]
        %v9292 = vld [vmem:[%s9285 + $0x30] sm:$0xff]
        %v9293 = vld [vmem:[%s9285 + $0x38] sm:$0xff]
        %v9294 = vld [vmem:[%s9285 + $0x40] sm:$0xff]
        %v9295 = vld [vmem:[%s9285 + $0x48] sm:$0xff]
        %v9296 = vld [vmem:[%s9285 + $0x50] sm:$0xff]
        %v9297 = vld [vmem:[%s9285 + $0x58] sm:$0xff]
        %v9298 = vld [vmem:[%s9285 + $0x60] sm:$0xff]
        %v9299 = vld [vmem:[%s9285 + $0x68] sm:$0xff]
        %v9300 = vld [vmem:[%s9285 + $0x70] sm:$0xff]
        %v9301 = vld [vmem:[%s9285 + $0x78] sm:$0xff]
        %v9302 = vld [vmem:[%s9285 + $0x80] sm:$0xff]
        %v9303 = vld [vmem:[%s9285 + $0x88] sm:$0xff]
        %v9304 = vld [vmem:[%s9285 + $0x90] sm:$0xff]
        %v9305 = vld [vmem:[%s9285 + $0x98] sm:$0xff]
        %v9306 = vld [vmem:[%s9285 + $0xa0] sm:$0xff]
        %v9307 = vld [vmem:[%s9285 + $0xa8] sm:$0xff]
        %v9308 = vld [vmem:[%s9285 + $0xb0] sm:$0xff]
        %v9309 = vld [vmem:[%s9285 + $0xb8] sm:$0xff]
        %v9310 = vld [vmem:[%s9285 + $0xc0] sm:$0xff]
        %v9311 = vld [vmem:[%s9285 + $0xc8] sm:$0xff]
        %v9312 = vld [vmem:[%s9285 + $0xd0] sm:$0xff]
        %v9313 = vld [vmem:[%s9285 + $0xd8] sm:$0xff]
        %v9314 = vld [vmem:[%s9285 + $0xe0] sm:$0xff]
        %v9315 = vld [vmem:[%s9285 + $0xe8] sm:$0xff]
        %v9316 = vld [vmem:[%s9285 + $0xf0] sm:$0xff]
        %v9317 = vld [vmem:[%s9285 + $0xf8] sm:$0xff]
        %v9322 = vcombine.low %v9281, %v9282
        %v9323 = vcombine.low %v9283, %v9284
        %9326 = vmatprep.subr.mxu0 %v9317
        %9327 = vmatpush1.msra.mxu0 %v9316
        %9328 = vmatprep.subr.mxu0 %v9315
        %9329 = vmatpush1.msra.mxu0 %v9314
        %9330 = vmatprep.subr.mxu0 %v9313
        %9331 = vmatpush1.msra.mxu0 %v9312
        %9332 = vmatprep.subr.mxu0 %v9311
        %9333 = vmatpush1.msra.mxu0 %v9310
        %9334 = vmatprep.subr.mxu0 %v9309
        %9335 = vmatpush1.msra.mxu0 %v9308
        %9336 = vmatprep.subr.mxu0 %v9307
        %9337 = vmatpush1.msra.mxu0 %v9306
        %9338 = vmatprep.subr.mxu0 %v9305
        %9339 = vmatpush1.msra.mxu0 %v9304
        %9340 = vmatprep.subr.mxu0 %v9303
        %9341 = vmatpush1.msra.mxu0 %v9302
        %9342 = vmatprep.subr.mxu0 %v9301
        %9343 = vmatpush1.msra.mxu0 %v9300
        %9344 = vmatprep.subr.mxu0 %v9299
        %9345 = vmatpush1.msra.mxu0 %v9298
        %9346 = vmatprep.subr.mxu0 %v9297
        %9347 = vmatpush1.msra.mxu0 %v9296
        %9348 = vmatprep.subr.mxu0 %v9295
        %9349 = vmatpush1.msra.mxu0 %v9294
        %9350 = vmatprep.subr.mxu0 %v9293
        %9351 = vmatpush1.msra.mxu0 %v9292
        %9352 = vmatprep.subr.mxu0 %v9291
        %9353 = vmatpush1.msra.mxu0 %v9290
        %9354 = vmatprep.subr.mxu0 %v9289
        %9355 = vmatpush1.msra.mxu0 %v9288
        %9356 = vmatprep.subr.mxu0 %v9287
        %9357 = vmatpush1.msra.mxu0 %v9286
        %9358 = vmatprep.subr.mxu0 0.0
        %9359 = vmatpush2.msra.mxu0 0.0
        %9360 = vmatprep.subr.mxu0 0.0
        %9361 = vmatpush2.msra.mxu0 0.0
        %9362 = vmatprep.subr.mxu0 0.0
        %9363 = vmatpush2.msra.mxu0 0.0
        %9364 = vmatprep.subr.mxu0 0.0
        %9365 = vmatpush2.msra.mxu0 0.0
        %9366 = vmatprep.subr.mxu0 0.0
        %9367 = vmatpush2.msra.mxu0 0.0
        %9368 = vmatprep.subr.mxu0 0.0
        %9369 = vmatpush2.msra.mxu0 0.0
        %9370 = vmatprep.subr.mxu0 0.0
        %9371 = vmatpush2.msra.mxu0 0.0
        %9372 = vmatprep.subr.mxu0 0.0
        %9373 = vmatpush2.msra.mxu0 0.0
        %9374 = vmatprep.subr.mxu0 0.0
        %9375 = vmatpush2.msra.mxu0 0.0
        %9376 = vmatprep.subr.mxu0 0.0
        %9377 = vmatpush2.msra.mxu0 0.0
        %9378 = vmatprep.subr.mxu0 0.0
        %9379 = vmatpush2.msra.mxu0 0.0
        %9380 = vmatprep.subr.mxu0 0.0
        %9381 = vmatpush2.msra.mxu0 0.0
        %9382 = vmatprep.subr.mxu0 0.0
        %9383 = vmatpush2.msra.mxu0 0.0
        %9384 = vmatprep.subr.mxu0 0.0
        %9385 = vmatpush2.msra.mxu0 0.0
        %9386 = vmatprep.subr.mxu0 0.0
        %9387 = vmatpush2.msra.mxu0 0.0
        %9388 = vmatprep.subr.mxu0 0.0
        %9389 = vmatpush2.msra.mxu0 0.0
        %9390 = vmatprep.mubr.f32.mxu0 0.0
        %9391 = vmatmul.mubr.f32.gmra.mxu0 %v9322
        %v9392 = vpop.f32.mrf.mxu0
        %v9393 = vadd.f32 0.0, %v9392
        %v9394 = vpop.f32.mrf.mxu0
        %v9395 = vadd.f32 0.0, %v9394
        %9396 = vmatprep.mubr.f32.mxu0 0.0
        %9397 = vmatmul.mubr.f32.gmra.mxu0 %v9323
        %v9398 = vpop.f32.mrf.mxu0
        %v9399 = vadd.f32 0.0, %v9398
        %v9400 = vpop.f32.mrf.mxu0
        %v9401 = vadd.f32 0.0, %v9400
        %9402 = vdwg.mxu0
        %v9403 = vadd.f32 %v9277, %v9393
        %v9404 = vadd.f32 %v9278, %v9395
        %v9405 = vadd.f32 %v9279, %v9399
        %v9406 = vadd.f32 %v9280, %v9401
        %v9407 = vld [vmem:[%s8781 + $0x9] sm:$0xf]
        %v9408 = vld [vmem:[%s8781 + $0x21] sm:$0xf]
        %v9409 = vld [vmem:[%s8781 + $0x39] sm:$0xf]
        %v9410 = vld [vmem:[%s8781 + $0x51] sm:$0xf]
        %s9411 = scalar_lea.vmem %s17, 1280
        %v9412 = vld [vmem:[%s9411] sm:$0xff]
        %v9413 = vld [vmem:[%s9411 + $0x8] sm:$0xff]
        %v9414 = vld [vmem:[%s9411 + $0x10] sm:$0xff]
        %v9415 = vld [vmem:[%s9411 + $0x18] sm:$0xff]
        %v9416 = vld [vmem:[%s9411 + $0x20] sm:$0xff]
        %v9417 = vld [vmem:[%s9411 + $0x28] sm:$0xff]
        %v9418 = vld [vmem:[%s9411 + $0x30] sm:$0xff]
        %v9419 = vld [vmem:[%s9411 + $0x38] sm:$0xff]
        %v9420 = vld [vmem:[%s9411 + $0x40] sm:$0xff]
        %v9421 = vld [vmem:[%s9411 + $0x48] sm:$0xff]
        %v9422 = vld [vmem:[%s9411 + $0x50] sm:$0xff]
        %v9423 = vld [vmem:[%s9411 + $0x58] sm:$0xff]
        %v9424 = vld [vmem:[%s9411 + $0x60] sm:$0xff]
        %v9425 = vld [vmem:[%s9411 + $0x68] sm:$0xff]
        %v9426 = vld [vmem:[%s9411 + $0x70] sm:$0xff]
        %v9427 = vld [vmem:[%s9411 + $0x78] sm:$0xff]
        %v9428 = vld [vmem:[%s9411 + $0x80] sm:$0xff]
        %v9429 = vld [vmem:[%s9411 + $0x88] sm:$0xff]
        %v9430 = vld [vmem:[%s9411 + $0x90] sm:$0xff]
        %v9431 = vld [vmem:[%s9411 + $0x98] sm:$0xff]
        %v9432 = vld [vmem:[%s9411 + $0xa0] sm:$0xff]
        %v9433 = vld [vmem:[%s9411 + $0xa8] sm:$0xff]
        %v9434 = vld [vmem:[%s9411 + $0xb0] sm:$0xff]
        %v9435 = vld [vmem:[%s9411 + $0xb8] sm:$0xff]
        %v9436 = vld [vmem:[%s9411 + $0xc0] sm:$0xff]
        %v9437 = vld [vmem:[%s9411 + $0xc8] sm:$0xff]
        %v9438 = vld [vmem:[%s9411 + $0xd0] sm:$0xff]
        %v9439 = vld [vmem:[%s9411 + $0xd8] sm:$0xff]
        %v9440 = vld [vmem:[%s9411 + $0xe0] sm:$0xff]
        %v9441 = vld [vmem:[%s9411 + $0xe8] sm:$0xff]
        %v9442 = vld [vmem:[%s9411 + $0xf0] sm:$0xff]
        %v9443 = vld [vmem:[%s9411 + $0xf8] sm:$0xff]
        %v9448 = vcombine.low %v9407, %v9408
        %v9449 = vcombine.low %v9409, %v9410
        %9452 = vmatprep.subr.mxu0 %v9443
        %9453 = vmatpush1.msra.mxu0 %v9442
        %9454 = vmatprep.subr.mxu0 %v9441
        %9455 = vmatpush1.msra.mxu0 %v9440
        %9456 = vmatprep.subr.mxu0 %v9439
        %9457 = vmatpush1.msra.mxu0 %v9438
        %9458 = vmatprep.subr.mxu0 %v9437
        %9459 = vmatpush1.msra.mxu0 %v9436
        %9460 = vmatprep.subr.mxu0 %v9435
        %9461 = vmatpush1.msra.mxu0 %v9434
        %9462 = vmatprep.subr.mxu0 %v9433
        %9463 = vmatpush1.msra.mxu0 %v9432
        %9464 = vmatprep.subr.mxu0 %v9431
        %9465 = vmatpush1.msra.mxu0 %v9430
        %9466 = vmatprep.subr.mxu0 %v9429
        %9467 = vmatpush1.msra.mxu0 %v9428
        %9468 = vmatprep.subr.mxu0 %v9427
        %9469 = vmatpush1.msra.mxu0 %v9426
        %9470 = vmatprep.subr.mxu0 %v9425
        %9471 = vmatpush1.msra.mxu0 %v9424
        %9472 = vmatprep.subr.mxu0 %v9423
        %9473 = vmatpush1.msra.mxu0 %v9422
        %9474 = vmatprep.subr.mxu0 %v9421
        %9475 = vmatpush1.msra.mxu0 %v9420
        %9476 = vmatprep.subr.mxu0 %v9419
        %9477 = vmatpush1.msra.mxu0 %v9418
        %9478 = vmatprep.subr.mxu0 %v9417
        %9479 = vmatpush1.msra.mxu0 %v9416
        %9480 = vmatprep.subr.mxu0 %v9415
        %9481 = vmatpush1.msra.mxu0 %v9414
        %9482 = vmatprep.subr.mxu0 %v9413
        %9483 = vmatpush1.msra.mxu0 %v9412
        %9484 = vmatprep.subr.mxu0 0.0
        %9485 = vmatpush2.msra.mxu0 0.0
        %9486 = vmatprep.subr.mxu0 0.0
        %9487 = vmatpush2.msra.mxu0 0.0
        %9488 = vmatprep.subr.mxu0 0.0
        %9489 = vmatpush2.msra.mxu0 0.0
        %9490 = vmatprep.subr.mxu0 0.0
        %9491 = vmatpush2.msra.mxu0 0.0
        %9492 = vmatprep.subr.mxu0 0.0
        %9493 = vmatpush2.msra.mxu0 0.0
        %9494 = vmatprep.subr.mxu0 0.0
        %9495 = vmatpush2.msra.mxu0 0.0
        %9496 = vmatprep.subr.mxu0 0.0
        %9497 = vmatpush2.msra.mxu0 0.0
        %9498 = vmatprep.subr.mxu0 0.0
        %9499 = vmatpush2.msra.mxu0 0.0
        %9500 = vmatprep.subr.mxu0 0.0
        %9501 = vmatpush2.msra.mxu0 0.0
        %9502 = vmatprep.subr.mxu0 0.0
        %9503 = vmatpush2.msra.mxu0 0.0
        %9504 = vmatprep.subr.mxu0 0.0
        %9505 = vmatpush2.msra.mxu0 0.0
        %9506 = vmatprep.subr.mxu0 0.0
        %9507 = vmatpush2.msra.mxu0 0.0
        %9508 = vmatprep.subr.mxu0 0.0
        %9509 = vmatpush2.msra.mxu0 0.0
        %9510 = vmatprep.subr.mxu0 0.0
        %9511 = vmatpush2.msra.mxu0 0.0
        %9512 = vmatprep.subr.mxu0 0.0
        %9513 = vmatpush2.msra.mxu0 0.0
        %9514 = vmatprep.subr.mxu0 0.0
        %9515 = vmatpush2.msra.mxu0 0.0
        %9516 = vmatprep.mubr.f32.mxu0 0.0
        %9517 = vmatmul.mubr.f32.gmra.mxu0 %v9448
        %v9518 = vpop.f32.mrf.mxu0
        %v9519 = vadd.f32 0.0, %v9518
        %v9520 = vpop.f32.mrf.mxu0
        %v9521 = vadd.f32 0.0, %v9520
        %9522 = vmatprep.mubr.f32.mxu0 0.0
        %9523 = vmatmul.mubr.f32.gmra.mxu0 %v9449
        %v9524 = vpop.f32.mrf.mxu0
        %v9525 = vadd.f32 0.0, %v9524
        %v9526 = vpop.f32.mrf.mxu0
        %v9527 = vadd.f32 0.0, %v9526
        %9528 = vdwg.mxu0
        %v9529 = vadd.f32 %v9403, %v9519
        %v9530 = vadd.f32 %v9404, %v9521
        %v9531 = vadd.f32 %v9405, %v9525
        %v9532 = vadd.f32 %v9406, %v9527
        %s9533 = scalar_lea.vmem [#allocation5], 48
        %v9534 = vld [vmem:[%s9533 + $0x7] sm:$0xf]
        %v9535 = vld [vmem:[%s9533 + $0x1f] sm:$0xf]
        %v9536 = vld [vmem:[%s9533 + $0x37] sm:$0xf]
        %v9537 = vld [vmem:[%s9533 + $0x4f] sm:$0xf]
        %s9538 = scalar_lea.vmem %s17, 1536
        %v9539 = vld [vmem:[%s9538] sm:$0xff]
        %v9540 = vld [vmem:[%s9538 + $0x8] sm:$0xff]
        %v9541 = vld [vmem:[%s9538 + $0x10] sm:$0xff]
        %v9542 = vld [vmem:[%s9538 + $0x18] sm:$0xff]
        %v9543 = vld [vmem:[%s9538 + $0x20] sm:$0xff]
        %v9544 = vld [vmem:[%s9538 + $0x28] sm:$0xff]
        %v9545 = vld [vmem:[%s9538 + $0x30] sm:$0xff]
        %v9546 = vld [vmem:[%s9538 + $0x38] sm:$0xff]
        %v9547 = vld [vmem:[%s9538 + $0x40] sm:$0xff]
        %v9548 = vld [vmem:[%s9538 + $0x48] sm:$0xff]
        %v9549 = vld [vmem:[%s9538 + $0x50] sm:$0xff]
        %v9550 = vld [vmem:[%s9538 + $0x58] sm:$0xff]
        %v9551 = vld [vmem:[%s9538 + $0x60] sm:$0xff]
        %v9552 = vld [vmem:[%s9538 + $0x68] sm:$0xff]
        %v9553 = vld [vmem:[%s9538 + $0x70] sm:$0xff]
        %v9554 = vld [vmem:[%s9538 + $0x78] sm:$0xff]
        %v9555 = vld [vmem:[%s9538 + $0x80] sm:$0xff]
        %v9556 = vld [vmem:[%s9538 + $0x88] sm:$0xff]
        %v9557 = vld [vmem:[%s9538 + $0x90] sm:$0xff]
        %v9558 = vld [vmem:[%s9538 + $0x98] sm:$0xff]
        %v9559 = vld [vmem:[%s9538 + $0xa0] sm:$0xff]
        %v9560 = vld [vmem:[%s9538 + $0xa8] sm:$0xff]
        %v9561 = vld [vmem:[%s9538 + $0xb0] sm:$0xff]
        %v9562 = vld [vmem:[%s9538 + $0xb8] sm:$0xff]
        %v9563 = vld [vmem:[%s9538 + $0xc0] sm:$0xff]
        %v9564 = vld [vmem:[%s9538 + $0xc8] sm:$0xff]
        %v9565 = vld [vmem:[%s9538 + $0xd0] sm:$0xff]
        %v9566 = vld [vmem:[%s9538 + $0xd8] sm:$0xff]
        %v9567 = vld [vmem:[%s9538 + $0xe0] sm:$0xff]
        %v9568 = vld [vmem:[%s9538 + $0xe8] sm:$0xff]
        %v9569 = vld [vmem:[%s9538 + $0xf0] sm:$0xff]
        %v9570 = vld [vmem:[%s9538 + $0xf8] sm:$0xff]
        %v9575 = vcombine.low %v9534, %v9535
        %v9576 = vcombine.low %v9536, %v9537
        %9579 = vmatprep.subr.mxu0 %v9570
        %9580 = vmatpush1.msra.mxu0 %v9569
        %9581 = vmatprep.subr.mxu0 %v9568
        %9582 = vmatpush1.msra.mxu0 %v9567
        %9583 = vmatprep.subr.mxu0 %v9566
        %9584 = vmatpush1.msra.mxu0 %v9565
        %9585 = vmatprep.subr.mxu0 %v9564
        %9586 = vmatpush1.msra.mxu0 %v9563
        %9587 = vmatprep.subr.mxu0 %v9562
        %9588 = vmatpush1.msra.mxu0 %v9561
        %9589 = vmatprep.subr.mxu0 %v9560
        %9590 = vmatpush1.msra.mxu0 %v9559
        %9591 = vmatprep.subr.mxu0 %v9558
        %9592 = vmatpush1.msra.mxu0 %v9557
        %9593 = vmatprep.subr.mxu0 %v9556
        %9594 = vmatpush1.msra.mxu0 %v9555
        %9595 = vmatprep.subr.mxu0 %v9554
        %9596 = vmatpush1.msra.mxu0 %v9553
        %9597 = vmatprep.subr.mxu0 %v9552
        %9598 = vmatpush1.msra.mxu0 %v9551
        %9599 = vmatprep.subr.mxu0 %v9550
        %9600 = vmatpush1.msra.mxu0 %v9549
        %9601 = vmatprep.subr.mxu0 %v9548
        %9602 = vmatpush1.msra.mxu0 %v9547
        %9603 = vmatprep.subr.mxu0 %v9546
        %9604 = vmatpush1.msra.mxu0 %v9545
        %9605 = vmatprep.subr.mxu0 %v9544
        %9606 = vmatpush1.msra.mxu0 %v9543
        %9607 = vmatprep.subr.mxu0 %v9542
        %9608 = vmatpush1.msra.mxu0 %v9541
        %9609 = vmatprep.subr.mxu0 %v9540
        %9610 = vmatpush1.msra.mxu0 %v9539
        %9611 = vmatprep.subr.mxu0 0.0
        %9612 = vmatpush2.msra.mxu0 0.0
        %9613 = vmatprep.subr.mxu0 0.0
        %9614 = vmatpush2.msra.mxu0 0.0
        %9615 = vmatprep.subr.mxu0 0.0
        %9616 = vmatpush2.msra.mxu0 0.0
        %9617 = vmatprep.subr.mxu0 0.0
        %9618 = vmatpush2.msra.mxu0 0.0
        %9619 = vmatprep.subr.mxu0 0.0
        %9620 = vmatpush2.msra.mxu0 0.0
        %9621 = vmatprep.subr.mxu0 0.0
        %9622 = vmatpush2.msra.mxu0 0.0
        %9623 = vmatprep.subr.mxu0 0.0
        %9624 = vmatpush2.msra.mxu0 0.0
        %9625 = vmatprep.subr.mxu0 0.0
        %9626 = vmatpush2.msra.mxu0 0.0
        %9627 = vmatprep.subr.mxu0 0.0
        %9628 = vmatpush2.msra.mxu0 0.0
        %9629 = vmatprep.subr.mxu0 0.0
        %9630 = vmatpush2.msra.mxu0 0.0
        %9631 = vmatprep.subr.mxu0 0.0
        %9632 = vmatpush2.msra.mxu0 0.0
        %9633 = vmatprep.subr.mxu0 0.0
        %9634 = vmatpush2.msra.mxu0 0.0
        %9635 = vmatprep.subr.mxu0 0.0
        %9636 = vmatpush2.msra.mxu0 0.0
        %9637 = vmatprep.subr.mxu0 0.0
        %9638 = vmatpush2.msra.mxu0 0.0
        %9639 = vmatprep.subr.mxu0 0.0
        %9640 = vmatpush2.msra.mxu0 0.0
        %9641 = vmatprep.subr.mxu0 0.0
        %9642 = vmatpush2.msra.mxu0 0.0
        %9643 = vmatprep.mubr.f32.mxu0 0.0
        %9644 = vmatmul.mubr.f32.gmra.mxu0 %v9575
        %v9645 = vpop.f32.mrf.mxu0
        %v9646 = vadd.f32 0.0, %v9645
        %v9647 = vpop.f32.mrf.mxu0
        %v9648 = vadd.f32 0.0, %v9647
        %9649 = vmatprep.mubr.f32.mxu0 0.0
        %9650 = vmatmul.mubr.f32.gmra.mxu0 %v9576
        %v9651 = vpop.f32.mrf.mxu0
        %v9652 = vadd.f32 0.0, %v9651
        %v9653 = vpop.f32.mrf.mxu0
        %v9654 = vadd.f32 0.0, %v9653
        %9655 = vdwg.mxu0
        %v9656 = vadd.f32 %v9529, %v9646
        %v9657 = vadd.f32 %v9530, %v9648
        %v9658 = vadd.f32 %v9531, %v9652
        %v9659 = vadd.f32 %v9532, %v9654
        %v9660 = vld [vmem:[%s9533 + $0x8] sm:$0xf]
        %v9661 = vld [vmem:[%s9533 + $0x20] sm:$0xf]
        %v9662 = vld [vmem:[%s9533 + $0x38] sm:$0xf]
        %v9663 = vld [vmem:[%s9533 + $0x50] sm:$0xf]
        %s9664 = scalar_lea.vmem %s17, 1792
        %v9665 = vld [vmem:[%s9664] sm:$0xff]
        %v9666 = vld [vmem:[%s9664 + $0x8] sm:$0xff]
        %v9667 = vld [vmem:[%s9664 + $0x10] sm:$0xff]
        %v9668 = vld [vmem:[%s9664 + $0x18] sm:$0xff]
        %v9669 = vld [vmem:[%s9664 + $0x20] sm:$0xff]
        %v9670 = vld [vmem:[%s9664 + $0x28] sm:$0xff]
        %v9671 = vld [vmem:[%s9664 + $0x30] sm:$0xff]
        %v9672 = vld [vmem:[%s9664 + $0x38] sm:$0xff]
        %v9673 = vld [vmem:[%s9664 + $0x40] sm:$0xff]
        %v9674 = vld [vmem:[%s9664 + $0x48] sm:$0xff]
        %v9675 = vld [vmem:[%s9664 + $0x50] sm:$0xff]
        %v9676 = vld [vmem:[%s9664 + $0x58] sm:$0xff]
        %v9677 = vld [vmem:[%s9664 + $0x60] sm:$0xff]
        %v9678 = vld [vmem:[%s9664 + $0x68] sm:$0xff]
        %v9679 = vld [vmem:[%s9664 + $0x70] sm:$0xff]
        %v9680 = vld [vmem:[%s9664 + $0x78] sm:$0xff]
        %v9681 = vld [vmem:[%s9664 + $0x80] sm:$0xff]
        %v9682 = vld [vmem:[%s9664 + $0x88] sm:$0xff]
        %v9683 = vld [vmem:[%s9664 + $0x90] sm:$0xff]
        %v9684 = vld [vmem:[%s9664 + $0x98] sm:$0xff]
        %v9685 = vld [vmem:[%s9664 + $0xa0] sm:$0xff]
        %v9686 = vld [vmem:[%s9664 + $0xa8] sm:$0xff]
        %v9687 = vld [vmem:[%s9664 + $0xb0] sm:$0xff]
        %v9688 = vld [vmem:[%s9664 + $0xb8] sm:$0xff]
        %v9689 = vld [vmem:[%s9664 + $0xc0] sm:$0xff]
        %v9690 = vld [vmem:[%s9664 + $0xc8] sm:$0xff]
        %v9691 = vld [vmem:[%s9664 + $0xd0] sm:$0xff]
        %v9692 = vld [vmem:[%s9664 + $0xd8] sm:$0xff]
        %v9693 = vld [vmem:[%s9664 + $0xe0] sm:$0xff]
        %v9694 = vld [vmem:[%s9664 + $0xe8] sm:$0xff]
        %v9695 = vld [vmem:[%s9664 + $0xf0] sm:$0xff]
        %v9696 = vld [vmem:[%s9664 + $0xf8] sm:$0xff]
        %v9701 = vcombine.low %v9660, %v9661
        %v9702 = vcombine.low %v9662, %v9663
        %9705 = vmatprep.subr.mxu0 %v9696
        %9706 = vmatpush1.msra.mxu0 %v9695
        %9707 = vmatprep.subr.mxu0 %v9694
        %9708 = vmatpush1.msra.mxu0 %v9693
        %9709 = vmatprep.subr.mxu0 %v9692
        %9710 = vmatpush1.msra.mxu0 %v9691
        %9711 = vmatprep.subr.mxu0 %v9690
        %9712 = vmatpush1.msra.mxu0 %v9689
        %9713 = vmatprep.subr.mxu0 %v9688
        %9714 = vmatpush1.msra.mxu0 %v9687
        %9715 = vmatprep.subr.mxu0 %v9686
        %9716 = vmatpush1.msra.mxu0 %v9685
        %9717 = vmatprep.subr.mxu0 %v9684
        %9718 = vmatpush1.msra.mxu0 %v9683
        %9719 = vmatprep.subr.mxu0 %v9682
        %9720 = vmatpush1.msra.mxu0 %v9681
        %9721 = vmatprep.subr.mxu0 %v9680
        %9722 = vmatpush1.msra.mxu0 %v9679
        %9723 = vmatprep.subr.mxu0 %v9678
        %9724 = vmatpush1.msra.mxu0 %v9677
        %9725 = vmatprep.subr.mxu0 %v9676
        %9726 = vmatpush1.msra.mxu0 %v9675
        %9727 = vmatprep.subr.mxu0 %v9674
        %9728 = vmatpush1.msra.mxu0 %v9673
        %9729 = vmatprep.subr.mxu0 %v9672
        %9730 = vmatpush1.msra.mxu0 %v9671
        %9731 = vmatprep.subr.mxu0 %v9670
        %9732 = vmatpush1.msra.mxu0 %v9669
        %9733 = vmatprep.subr.mxu0 %v9668
        %9734 = vmatpush1.msra.mxu0 %v9667
        %9735 = vmatprep.subr.mxu0 %v9666
        %9736 = vmatpush1.msra.mxu0 %v9665
        %9737 = vmatprep.subr.mxu0 0.0
        %9738 = vmatpush2.msra.mxu0 0.0
        %9739 = vmatprep.subr.mxu0 0.0
        %9740 = vmatpush2.msra.mxu0 0.0
        %9741 = vmatprep.subr.mxu0 0.0
        %9742 = vmatpush2.msra.mxu0 0.0
        %9743 = vmatprep.subr.mxu0 0.0
        %9744 = vmatpush2.msra.mxu0 0.0
        %9745 = vmatprep.subr.mxu0 0.0
        %9746 = vmatpush2.msra.mxu0 0.0
        %9747 = vmatprep.subr.mxu0 0.0
        %9748 = vmatpush2.msra.mxu0 0.0
        %9749 = vmatprep.subr.mxu0 0.0
        %9750 = vmatpush2.msra.mxu0 0.0
        %9751 = vmatprep.subr.mxu0 0.0
        %9752 = vmatpush2.msra.mxu0 0.0
        %9753 = vmatprep.subr.mxu0 0.0
        %9754 = vmatpush2.msra.mxu0 0.0
        %9755 = vmatprep.subr.mxu0 0.0
        %9756 = vmatpush2.msra.mxu0 0.0
        %9757 = vmatprep.subr.mxu0 0.0
        %9758 = vmatpush2.msra.mxu0 0.0
        %9759 = vmatprep.subr.mxu0 0.0
        %9760 = vmatpush2.msra.mxu0 0.0
        %9761 = vmatprep.subr.mxu0 0.0
        %9762 = vmatpush2.msra.mxu0 0.0
        %9763 = vmatprep.subr.mxu0 0.0
        %9764 = vmatpush2.msra.mxu0 0.0
        %9765 = vmatprep.subr.mxu0 0.0
        %9766 = vmatpush2.msra.mxu0 0.0
        %9767 = vmatprep.subr.mxu0 0.0
        %9768 = vmatpush2.msra.mxu0 0.0
        %9769 = vmatprep.mubr.f32.mxu0 0.0
        %9770 = vmatmul.mubr.f32.gmra.mxu0 %v9701
        %v9771 = vpop.f32.mrf.mxu0
        %v9772 = vadd.f32 0.0, %v9771
        %v9773 = vpop.f32.mrf.mxu0
        %v9774 = vadd.f32 0.0, %v9773
        %9775 = vmatprep.mubr.f32.mxu0 0.0
        %9776 = vmatmul.mubr.f32.gmra.mxu0 %v9702
        %v9777 = vpop.f32.mrf.mxu0
        %v9778 = vadd.f32 0.0, %v9777
        %v9779 = vpop.f32.mrf.mxu0
        %v9780 = vadd.f32 0.0, %v9779
        %9781 = vdwg.mxu0
        %v9782 = vadd.f32 %v9656, %v9772
        %v9783 = vadd.f32 %v9657, %v9774
        %v9784 = vadd.f32 %v9658, %v9778
        %v9785 = vadd.f32 %v9659, %v9780
        %v9786 = vld [vmem:[%s9533 + $0x9] sm:$0xf]
        %v9787 = vld [vmem:[%s9533 + $0x21] sm:$0xf]
        %v9788 = vld [vmem:[%s9533 + $0x39] sm:$0xf]
        %v9789 = vld [vmem:[%s9533 + $0x51] sm:$0xf]
        %s9790 = scalar_lea.vmem %s17, 2048
        %v9791 = vld [vmem:[%s9790] sm:$0xff]
        %v9792 = vld [vmem:[%s9790 + $0x8] sm:$0xff]
        %v9793 = vld [vmem:[%s9790 + $0x10] sm:$0xff]
        %v9794 = vld [vmem:[%s9790 + $0x18] sm:$0xff]
        %v9795 = vld [vmem:[%s9790 + $0x20] sm:$0xff]
        %v9796 = vld [vmem:[%s9790 + $0x28] sm:$0xff]
        %v9797 = vld [vmem:[%s9790 + $0x30] sm:$0xff]
        %v9798 = vld [vmem:[%s9790 + $0x38] sm:$0xff]
        %v9799 = vld [vmem:[%s9790 + $0x40] sm:$0xff]
        %v9800 = vld [vmem:[%s9790 + $0x48] sm:$0xff]
        %v9801 = vld [vmem:[%s9790 + $0x50] sm:$0xff]
        %v9802 = vld [vmem:[%s9790 + $0x58] sm:$0xff]
        %v9803 = vld [vmem:[%s9790 + $0x60] sm:$0xff]
        %v9804 = vld [vmem:[%s9790 + $0x68] sm:$0xff]
        %v9805 = vld [vmem:[%s9790 + $0x70] sm:$0xff]
        %v9806 = vld [vmem:[%s9790 + $0x78] sm:$0xff]
        %v9807 = vld [vmem:[%s9790 + $0x80] sm:$0xff]
        %v9808 = vld [vmem:[%s9790 + $0x88] sm:$0xff]
        %v9809 = vld [vmem:[%s9790 + $0x90] sm:$0xff]
        %v9810 = vld [vmem:[%s9790 + $0x98] sm:$0xff]
        %v9811 = vld [vmem:[%s9790 + $0xa0] sm:$0xff]
        %v9812 = vld [vmem:[%s9790 + $0xa8] sm:$0xff]
        %v9813 = vld [vmem:[%s9790 + $0xb0] sm:$0xff]
        %v9814 = vld [vmem:[%s9790 + $0xb8] sm:$0xff]
        %v9815 = vld [vmem:[%s9790 + $0xc0] sm:$0xff]
        %v9816 = vld [vmem:[%s9790 + $0xc8] sm:$0xff]
        %v9817 = vld [vmem:[%s9790 + $0xd0] sm:$0xff]
        %v9818 = vld [vmem:[%s9790 + $0xd8] sm:$0xff]
        %v9819 = vld [vmem:[%s9790 + $0xe0] sm:$0xff]
        %v9820 = vld [vmem:[%s9790 + $0xe8] sm:$0xff]
        %v9821 = vld [vmem:[%s9790 + $0xf0] sm:$0xff]
        %v9822 = vld [vmem:[%s9790 + $0xf8] sm:$0xff]
        %v9827 = vcombine.low %v9786, %v9787
        %v9828 = vcombine.low %v9788, %v9789
        %9831 = vmatprep.subr.mxu0 %v9822
        %9832 = vmatpush1.msra.mxu0 %v9821
        %9833 = vmatprep.subr.mxu0 %v9820
        %9834 = vmatpush1.msra.mxu0 %v9819
        %9835 = vmatprep.subr.mxu0 %v9818
        %9836 = vmatpush1.msra.mxu0 %v9817
        %9837 = vmatprep.subr.mxu0 %v9816
        %9838 = vmatpush1.msra.mxu0 %v9815
        %9839 = vmatprep.subr.mxu0 %v9814
        %9840 = vmatpush1.msra.mxu0 %v9813
        %9841 = vmatprep.subr.mxu0 %v9812
        %9842 = vmatpush1.msra.mxu0 %v9811
        %9843 = vmatprep.subr.mxu0 %v9810
        %9844 = vmatpush1.msra.mxu0 %v9809
        %9845 = vmatprep.subr.mxu0 %v9808
        %9846 = vmatpush1.msra.mxu0 %v9807
        %9847 = vmatprep.subr.mxu0 %v9806
        %9848 = vmatpush1.msra.mxu0 %v9805
        %9849 = vmatprep.subr.mxu0 %v9804
        %9850 = vmatpush1.msra.mxu0 %v9803
        %9851 = vmatprep.subr.mxu0 %v9802
        %9852 = vmatpush1.msra.mxu0 %v9801
        %9853 = vmatprep.subr.mxu0 %v9800
        %9854 = vmatpush1.msra.mxu0 %v9799
        %9855 = vmatprep.subr.mxu0 %v9798
        %9856 = vmatpush1.msra.mxu0 %v9797
        %9857 = vmatprep.subr.mxu0 %v9796
        %9858 = vmatpush1.msra.mxu0 %v9795
        %9859 = vmatprep.subr.mxu0 %v9794
        %9860 = vmatpush1.msra.mxu0 %v9793
        %9861 = vmatprep.subr.mxu0 %v9792
        %9862 = vmatpush1.msra.mxu0 %v9791
        %9863 = vmatprep.subr.mxu0 0.0
        %9864 = vmatpush2.msra.mxu0 0.0
        %9865 = vmatprep.subr.mxu0 0.0
        %9866 = vmatpush2.msra.mxu0 0.0
        %9867 = vmatprep.subr.mxu0 0.0
        %9868 = vmatpush2.msra.mxu0 0.0
        %9869 = vmatprep.subr.mxu0 0.0
        %9870 = vmatpush2.msra.mxu0 0.0
        %9871 = vmatprep.subr.mxu0 0.0
        %9872 = vmatpush2.msra.mxu0 0.0
        %9873 = vmatprep.subr.mxu0 0.0
        %9874 = vmatpush2.msra.mxu0 0.0
        %9875 = vmatprep.subr.mxu0 0.0
        %9876 = vmatpush2.msra.mxu0 0.0
        %9877 = vmatprep.subr.mxu0 0.0
        %9878 = vmatpush2.msra.mxu0 0.0
        %9879 = vmatprep.subr.mxu0 0.0
        %9880 = vmatpush2.msra.mxu0 0.0
        %9881 = vmatprep.subr.mxu0 0.0
        %9882 = vmatpush2.msra.mxu0 0.0
        %9883 = vmatprep.subr.mxu0 0.0
        %9884 = vmatpush2.msra.mxu0 0.0
        %9885 = vmatprep.subr.mxu0 0.0
        %9886 = vmatpush2.msra.mxu0 0.0
        %9887 = vmatprep.subr.mxu0 0.0
        %9888 = vmatpush2.msra.mxu0 0.0
        %9889 = vmatprep.subr.mxu0 0.0
        %9890 = vmatpush2.msra.mxu0 0.0
        %9891 = vmatprep.subr.mxu0 0.0
        %9892 = vmatpush2.msra.mxu0 0.0
        %9893 = vmatprep.subr.mxu0 0.0
        %9894 = vmatpush2.msra.mxu0 0.0
        %9895 = vmatprep.mubr.f32.mxu0 0.0
        %9896 = vmatmul.mubr.f32.gmra.mxu0 %v9827
        %v9897 = vpop.f32.mrf.mxu0
        %v9898 = vadd.f32 0.0, %v9897
        %v9899 = vpop.f32.mrf.mxu0
        %v9900 = vadd.f32 0.0, %v9899
        %9901 = vmatprep.mubr.f32.mxu0 0.0
        %9902 = vmatmul.mubr.f32.gmra.mxu0 %v9828
        %v9903 = vpop.f32.mrf.mxu0
        %v9904 = vadd.f32 0.0, %v9903
        %v9905 = vpop.f32.mrf.mxu0
        %v9906 = vadd.f32 0.0, %v9905
        %9907 = vdwg.mxu0
        %v9908 = vadd.f32 %v9782, %v9898
        %v9909 = vadd.f32 %v9783, %v9900
        %v9910 = vadd.f32 %v9784, %v9904
        %v9911 = vadd.f32 %v9785, %v9906
        %v9912 = vld [vmem:[%s18] sm:$0x3]
        %v9914 = vlaneseq
        %v9915 = vshrl.u32 %v9914, 7
        %v9916 = vsub.s32 0, %v9915
        %v9917 = vrot.slane %v9912, %v9916
        %v9918 = vlaneseq
        %v9919 = vshrl.u32 %v9918, 7
        %v9920 = vsub.s32 1, %v9919
        %v9921 = vrot.slane %v9912, %v9920
        %v9924 = vadd.f32 %v9908, %v9917
        %v9925 = vadd.f32 %v9909, %v9921
        %v9926 = vadd.f32 %v9910, %v9917
        %v9927 = vadd.f32 %v9911, %v9921
        %9928 = vst [vmem:[%s832] sm:$0xff] %v9924
        %9929 = vst [vmem:[%s832 + $0x8] sm:$0xff] %v9925
        %9930 = vst [vmem:[%s832 + $0x10] sm:$0xff] %v9926
        %9931 = vst [vmem:[%s832 + $0x18] sm:$0xff] %v9927
        %s9932 = sand.u32 %s502, 1
        %s9933 = scalar_lea.sflag [#allocation8], %s9932
        %s9934 = sand.u32 %s502, 1
        %s9935 = smul.addr %s9934, 256
        %s9936 = scalar_lea.vmem [#allocation11], %s9935
        %s9937 = sand.u32 %s48, 1
        %s9938 = scalar_lea.sflag [#allocation13], %s9937
        %s9939 = sand.u32 %s528, 1
        %s9940 = smul.addr %s9939, 256
        %s9941 = scalar_lea.vmem [#allocation12], %s9940
        %s9942 = sand.u32 %s48, 1
        %s9943 = scalar_lea.sflag [#allocation13], %s9942
        %s9944 = sand.u32 %s554, 1
        %s9945 = smul.addr %s9944, 64
        %s9946 = scalar_lea.vmem [#allocation14], %s9945
        %s9947 = sand.u32 %s580, 1
        %s9948 = scalar_lea.sflag [#allocation16], %s9947
        %s9949 = sand.u32 %s580, 1
        %s9950 = smul.addr %s9949, 64
        %s9951 = scalar_lea.vmem [#allocation15], %s9950
        %p9952 = scmp.lt.s32.totalorder %s48, 1
        %s9953 = scalar_select %p9952, %s48, 1
        %s9954 = smul.addr %s9953, 4
        %s9955 = smul.addr %s9954, 8
        %s9956 = scalar_lea.vmem %s25, %s9955
        // Predicated region
        $region113: #{similarity_vgg_bn_forward.1} parent=103 // pred_check
          %p9957 = pneg %p512
        $region114: #{similarity_vgg_bn_forward.1} parent=103 // pred_check_branch
          %9959 = sbr.rel (%p9957) target = $region116
        $region115: #{similarity_vgg_bn_forward.1} parent=103 // pred_region
          %s9961 = ssub.s32 4096, 4096
          %9962 = vsyncadd %s9933, %s9961
          %s9963 = smul.addr %s48, 32
          %s9964 = smul.addr %s9963, 128
          %s9965 = scalar_lea.hbm %s21, %s9964
          %s9966 = sshll.u32 %s9936, 4
          %s9967 = int_to_ptr.vmem [resolvable:$true] %s9966
          %9972 = dma.vmem_to_hbm [thread:$0]  %s9967, 4096, %s9965, %s9933, 128, 128, 8
        $region116: #{similarity_vgg_bn_forward.1} parent=103 // pred_fallthru
          _
        // Predicated region
        $region117: #{similarity_vgg_bn_forward.1} parent=103 // pred_check
          %p9973 = pneg %p538
        $region118: #{similarity_vgg_bn_forward.1} parent=103 // pred_check_branch
          %9975 = sbr.rel (%p9973) target = $region120
        $region119: #{similarity_vgg_bn_forward.1} parent=103 // pred_region
          %s9977 = ssub.s32 4096, 4096
          %9978 = vsyncadd %s9938, %s9977
          %s9979 = smul.addr %s48, 32
          %s9980 = smul.addr %s9979, 128
          %s9981 = scalar_lea.hbm %s22, %s9980
          %s9982 = sshll.u32 %s9941, 4
          %s9983 = int_to_ptr.vmem [resolvable:$true] %s9982
          %9988 = dma.vmem_to_hbm [thread:$0]  %s9983, 4096, %s9981, %s9938, 128, 128, 8
        $region120: #{similarity_vgg_bn_forward.1} parent=103 // pred_fallthru
          _
        // Predicated region
        $region121: #{similarity_vgg_bn_forward.1} parent=103 // pred_check
          %p9989 = pneg %p564
        $region122: #{similarity_vgg_bn_forward.1} parent=103 // pred_check_branch
          %9991 = sbr.rel (%p9989) target = $region124
        $region123: #{similarity_vgg_bn_forward.1} parent=103 // pred_region
          %s9993 = ssub.s32 1024, 1024
          %9994 = vsyncadd %s9943, %s9993
          %s9995 = smul.addr %s48, 8
          %s9996 = smul.addr %s9995, 128
          %s9997 = scalar_lea.hbm %s23, %s9996
          %s9998 = sshll.u32 %s9946, 4
          %s9999 = int_to_ptr.vmem [resolvable:$true] %s9998
          %10004 = dma.vmem_to_hbm [thread:$0]  %s9999, 1024, %s9997, %s9943, 128, 128, 8
        $region124: #{similarity_vgg_bn_forward.1} parent=103 // pred_fallthru
          _
        // Predicated region
        $region125: #{similarity_vgg_bn_forward.1} parent=103 // pred_check
          %p10005 = pneg %p590
        $region126: #{similarity_vgg_bn_forward.1} parent=103 // pred_check_branch
          %10007 = sbr.rel (%p10005) target = $region128
        $region127: #{similarity_vgg_bn_forward.1} parent=103 // pred_region
          %s10009 = ssub.s32 1024, 1024
          %10010 = vsyncadd %s9948, %s10009
          %s10011 = smul.addr %s48, 8
          %s10012 = smul.addr %s10011, 128
          %s10013 = scalar_lea.hbm %s24, %s10012
          %s10014 = sshll.u32 %s9951, 4
          %s10015 = int_to_ptr.vmem [resolvable:$true] %s10014
          %10020 = dma.vmem_to_hbm [thread:$0]  %s10015, 1024, %s10013, %s9948, 128, 128, 8
        $region128: #{similarity_vgg_bn_forward.1} parent=103 // pred_fallthru
          _
        // Predicated region
        $region129: #{similarity_vgg_bn_forward.1} parent=103 // pred_check
          %p10021 = pneg %p616
        $region130: #{similarity_vgg_bn_forward.1} parent=103 // pred_check_branch
          %10023 = sbr.rel (%p10021) target = $region132
        $region131: #{similarity_vgg_bn_forward.1} parent=103 // pred_region
          _
        $region132: #{similarity_vgg_bn_forward.1} parent=103 // pred_fallthru
          _
      $region104: #{similarity_vgg_bn_forward.1} parent=5 // pred_fallthru
        _
      %p10024 = scmp.le.s32.totalorder 2, %s43
      // Predicated region
      $region133: #{similarity_vgg_bn_forward.1} parent=5 // pred_check
        %p10025 = pneg %p10024
      $region134: #{similarity_vgg_bn_forward.1} parent=5 // pred_check_branch
        %10027 = sbr.rel (%p10025) target = $region136
      $region135: #{similarity_vgg_bn_forward.1} parent=5 // pred_region
        %s10028 = ssub.s32 %s43, 2
        // Predicated region
        $region137: #{similarity_vgg_bn_forward.1} parent=135 // pred_check
          %p10029 = pneg %p518
        $region138: #{similarity_vgg_bn_forward.1} parent=135 // pred_check_branch
          %10031 = sbr.rel (%p10029) target = $region140
        $region139: #{similarity_vgg_bn_forward.1} parent=135 // pred_region
          %s10032 = sand.u32 %s503, 1
          %s10033 = scalar_lea.sflag [#allocation8], %s10032
          %s10034 = sand.u32 %s503, 1
          %s10035 = smul.addr %s10034, 256
          %s10036 = scalar_lea.vmem [#allocation11], %s10035
          %10037 = dma.done %s10033, 4096
        $region140: #{similarity_vgg_bn_forward.1} parent=135 // pred_fallthru
          _
        // Predicated region
        $region141: #{similarity_vgg_bn_forward.1} parent=135 // pred_check
          %p10038 = pneg %p544
        $region142: #{similarity_vgg_bn_forward.1} parent=135 // pred_check_branch
          %10040 = sbr.rel (%p10038) target = $region144
        $region143: #{similarity_vgg_bn_forward.1} parent=135 // pred_region
          %s10041 = sand.u32 %s49, 1
          %s10042 = scalar_lea.sflag [#allocation13], %s10041
          %s10043 = sand.u32 %s529, 1
          %s10044 = smul.addr %s10043, 256
          %s10045 = scalar_lea.vmem [#allocation12], %s10044
          %10046 = dma.done %s10042, 4096
        $region144: #{similarity_vgg_bn_forward.1} parent=135 // pred_fallthru
          _
        // Predicated region
        $region145: #{similarity_vgg_bn_forward.1} parent=135 // pred_check
          %p10047 = pneg %p570
        $region146: #{similarity_vgg_bn_forward.1} parent=135 // pred_check_branch
          %10049 = sbr.rel (%p10047) target = $region148
        $region147: #{similarity_vgg_bn_forward.1} parent=135 // pred_region
          %s10050 = sand.u32 %s49, 1
          %s10051 = scalar_lea.sflag [#allocation13], %s10050
          %s10052 = sand.u32 %s555, 1
          %s10053 = smul.addr %s10052, 64
          %s10054 = scalar_lea.vmem [#allocation14], %s10053
          %10055 = dma.done %s10051, 1024
        $region148: #{similarity_vgg_bn_forward.1} parent=135 // pred_fallthru
          _
        // Predicated region
        $region149: #{similarity_vgg_bn_forward.1} parent=135 // pred_check
          %p10056 = pneg %p596
        $region150: #{similarity_vgg_bn_forward.1} parent=135 // pred_check_branch
          %10058 = sbr.rel (%p10056) target = $region152
        $region151: #{similarity_vgg_bn_forward.1} parent=135 // pred_region
          %s10059 = sand.u32 %s581, 1
          %s10060 = scalar_lea.sflag [#allocation16], %s10059
          %s10061 = sand.u32 %s581, 1
          %s10062 = smul.addr %s10061, 64
          %s10063 = scalar_lea.vmem [#allocation15], %s10062
          %10064 = dma.done %s10060, 1024
        $region152: #{similarity_vgg_bn_forward.1} parent=135 // pred_fallthru
          _
        // Predicated region
        $region153: #{similarity_vgg_bn_forward.1} parent=135 // pred_check
          %p10065 = pneg %p622
        $region154: #{similarity_vgg_bn_forward.1} parent=135 // pred_check_branch
          %10067 = sbr.rel (%p10065) target = $region156
        $region155: #{similarity_vgg_bn_forward.1} parent=135 // pred_region
          %p10068 = scmp.lt.s32.totalorder %s49, 1
          %s10069 = scalar_select %p10068, %s49, 1
          %s10070 = smul.addr %s10069, 4
          %s10071 = smul.addr %s10070, 8
          %s10072 = scalar_lea.vmem %s25, %s10071
        $region156: #{similarity_vgg_bn_forward.1} parent=135 // pred_fallthru
          _
      $region136: #{similarity_vgg_bn_forward.1} parent=5 // pred_fallthru
        _
    $region6: #{similarity_vgg_bn_forward.1} parent=1 // loop_footer
      %s47 = sadd.s32 1, %s43
    $region7: #{similarity_vgg_bn_forward.1} parent=1 // loop_footer_branch
      %42 = sbr.rel target = $region3
    $region8: #{similarity_vgg_bn_forward.1} parent=1 // loop_exit
      _
    %10073 = vsyncpa [#allocation7], 1
    %s10074 = scalar_lea.sflag [#allocation7], 1
    %10075 = vsyncpa %s10074, 1
    %10076 = vsyncpa [#allocation10], 1
    %10077 = vsyncpa [#allocation8], 1
    %s10078 = scalar_lea.sflag [#allocation8], 1
    %10079 = vsyncpa %s10078, 1
    %10080 = vsyncpa [#allocation13], 1
    %s10081 = scalar_lea.sflag [#allocation13], 1
    %10082 = vsyncpa %s10081, 1
    %10083 = vsyncpa [#allocation16], 1
    %s10084 = scalar_lea.sflag [#allocation16], 1
    %10085 = vsyncpa %s10084, 1

</llo_original>
